<compile_context>
chip_gen: v6e
topology: v6e:2x2x1
jax: 0.10.0
libtpu: 0.0.40
codegen_flags: <defaults>
</compile_context>

<pallas_src>
import functools

import jax
import jax.numpy as jnp
from jax import lax
from jax.experimental import pallas as pl
from jax.experimental.pallas import tpu as pltpu

_PAD = 32   # zero margin (lanes) each side of the flattened spatial axis;
            # must be >= W+1 of the largest feature map (28+1 = 29).


# ----------------------------------------------------------------------------
# In-kernel building blocks (operate on values resident in VMEM/vregs).
# ----------------------------------------------------------------------------
def _extend(a, pad):
    """Zero-pad the flattened spatial (lane) axis on both sides."""
    c = a.shape[0]
    z = jnp.zeros((c, pad), a.dtype)
    return jnp.concatenate([z, a, z], axis=1)


def _conv3x3_relu(a, w_ref, b_ref, mask_ref, width):
    """3x3 stride-1 pad-1 conv + bias + ReLU, channels-first flat layout.

    a:        (Cin, P) f32, P = H*W (row-major, W fastest).
    w_ref:    (9, Cout, Cin) bf16; tap t = dy*3+dx holds w[dy, dx].T.
    b_ref:    (Cout, 1) f32.
    mask_ref: (2, P) f32; row 0 kills x==0 wrap, row 1 kills x==W-1 wrap.
    """
    cin, p = a.shape
    cout = w_ref.shape[1]
    a_ext = _extend(a, _PAD)                       # (Cin, P + 2*_PAD)
    mask = mask_ref[...]
    mask_l = mask[0:1, :]
    mask_r = mask[1:2, :]
    acc = jnp.zeros((cout, p), jnp.float32)
    for dy in range(3):
        for dx in range(3):
            off = (dy - 1) * width + (dx - 1)
            tap = a_ext[:, _PAD + off:_PAD + off + p]      # shifted window
            if dx == 0:
                tap = tap * mask_l
            elif dx == 2:
                tap = tap * mask_r
            acc = acc + jnp.dot(w_ref[3 * dy + dx], tap.astype(jnp.bfloat16),
                                preferred_element_type=jnp.float32)
    return jnp.maximum(acc + b_ref[...], 0.0)      # (Cout, P) f32


def _maxpool2x2(a, sel_ref, width):
    """2x2 stride-2 maxpool: max of 4 shifted taps, then one-hot select matmul.

    a: (C, P) f32; sel_ref: (P, P//4) bf16 with one-hot columns (downsample).
    """
    c, p = a.shape
    a_ext = _extend(a, _PAD)
    m = a
    for off in (1, width, width + 1):
        m = jnp.maximum(m, a_ext[:, _PAD + off:_PAD + off + p])
    return jnp.dot(m.astype(jnp.bfloat16), sel_ref[...],
                   preferred_element_type=jnp.float32)     # (C, P//4) f32


def _linear(a, wl_ref, bl_ref):
    """Classifier.  a: (hidden, S) f32; wl_ref: (hidden, S, n_out) bf16;
    bl_ref: (1, n_out) f32.  Flatten order (C, H, W) matches PyTorch."""
    hidden, s = a.shape
    logits = bl_ref[...]
    for c in range(hidden):
        row = a[c:c + 1, :].astype(jnp.bfloat16)           # (1, S)
        logits = logits + jnp.dot(row, wl_ref[c],
                                  preferred_element_type=jnp.float32)
    return logits                                          # (1, n_out) f32


def _fused_forward_kernel(x_ref, w1_ref, b1_ref, w2_ref, b2_ref,
                          w3_ref, b3_ref, w4_ref, b4_ref,
                          wl_ref, bl_ref, m1_ref, m2_ref, s1_ref, s2_ref,
                          o_ref, *, width):
    a = x_ref[...]                                         # (Cin, H*W) f32
    # block_1
    a = _conv3x3_relu(a, w1_ref, b1_ref, m1_ref, width)
    a = _conv3x3_relu(a, w2_ref, b2_ref, m1_ref, width)
    a = _maxpool2x2(a, s1_ref, width)                      # (hidden, P/4)
    # block_2
    a = _conv3x3_relu(a, w3_ref, b3_ref, m2_ref, width // 2)
    a = _conv3x3_relu(a, w4_ref, b4_ref, m2_ref, width // 2)
    a = _maxpool2x2(a, s2_ref, width // 2)                 # (hidden, P/16)
    # classifier
    o_ref[...] = _linear(a, wl_ref, bl_ref)                # (1, n_classes)


# ----------------------------------------------------------------------------
# Host-side helpers (tiny, shape-only constants).
# ----------------------------------------------------------------------------
def _make_col_masks(width, p):
    col = jnp.arange(p, dtype=jnp.int32) % width
    left = (col != 0).astype(jnp.float32)           # invalid left neighbor
    right = (col != width - 1).astype(jnp.float32)  # invalid right neighbor
    return jnp.stack([left, right], axis=0)         # (2, P)


def _make_pool_select(h, w):
    q = jnp.arange((h // 2) * (w // 2), dtype=jnp.int32)
    y, x = q // (w // 2), q % (w // 2)
    src = (2 * y) * w + 2 * x                       # top-left index of window
    return jax.nn.one_hot(src, h * w, dtype=jnp.bfloat16).T   # (h*w, h*w//4)


# ----------------------------------------------------------------------------
# Parameters + forward pass (mirrors Classification.forward).
# ----------------------------------------------------------------------------
def init_params(key, input_channels, hidden_units, output_shape):
    ks = jax.random.split(key, 10)

    def conv_w(k, cin, cout):
        return jax.random.normal(k, (3, 3, cin, cout), jnp.float32) * 0.1

    return {
        "w1": conv_w(ks[0], input_channels, hidden_units),
        "b1": jax.random.normal(ks[1], (hidden_units,), jnp.float32) * 0.01,
        "w2": conv_w(ks[2], hidden_units, hidden_units),
        "b2": jax.random.normal(ks[3], (hidden_units,), jnp.float32) * 0.01,
        "w3": conv_w(ks[4], hidden_units, hidden_units),
        "b3": jax.random.normal(ks[5], (hidden_units,), jnp.float32) * 0.01,
        "w4": conv_w(ks[6], hidden_units, hidden_units),
        "b4": jax.random.normal(ks[7], (hidden_units,), jnp.float32) * 0.01,
        "wl": jax.random.normal(ks[8], (hidden_units * 7 * 7, output_shape),
                                jnp.float32) * 0.05,
        "bl": jax.random.normal(ks[9], (output_shape,), jnp.float32) * 0.01,
    }


@jax.jit
def classification_forward(params, x_nchw):
    # x_nchw: (N, C, 28, 28) float32 — PyTorch NCHW layout.
    n, cin, h, w = x_nchw.shape
    hidden = params["b1"].shape[0]
    n_classes = params["bl"].shape[0]
    p1 = h * w
    p2 = (h // 2) * (w // 2)
    p3 = (h // 4) * (w // 4)

    # NCHW -> channels-first flat (N, C, H*W): a free, contiguous reshape.
    x_flat = x_nchw.reshape(n, cin, p1).astype(jnp.float32)

    def conv_w(wk):   # (3,3,Ci,Co) HWIO -> (9, Co, Ci) bf16, tap-major
        ci, co = wk.shape[2], wk.shape[3]
        return jnp.transpose(wk, (0, 1, 3, 2)).reshape(9, co, ci).astype(jnp.bfloat16)

    def conv_b(bk):
        return bk.reshape(-1, 1).astype(jnp.float32)

    wts = [conv_w(params[k]) for k in ("w1", "w2", "w3", "w4")]
    bts = [conv_b(params[k]) for k in ("b1", "b2", "b3", "b4")]
    wl3 = params["wl"].reshape(hidden, p3, n_classes).astype(jnp.bfloat16)
    bl2 = params["bl"].reshape(1, n_classes).astype(jnp.float32)
    m1 = _make_col_masks(w, p1)
    m2 = _make_col_masks(w // 2, p2)
    s1 = _make_pool_select(h, w)
    s2 = _make_pool_select(h // 2, w // 2)

    def full_spec(arr):
        zeros = (0,) * arr.ndim
        return pl.BlockSpec(arr.shape, lambda i: zeros)

    out = pl.pallas_call(
        functools.partial(_fused_forward_kernel, width=w),
        out_shape=jax.ShapeDtypeStruct((n, 1, n_classes), jnp.float32),
        grid_spec=pltpu.PrefetchScalarGridSpec(
            num_scalar_prefetch=0,
            grid=(n,),
            in_specs=[
                pl.BlockSpec((None, cin, p1), lambda i: (i, 0, 0)),
                full_spec(wts[0]), full_spec(bts[0]),
                full_spec(wts[1]), full_spec(bts[1]),
                full_spec(wts[2]), full_spec(bts[2]),
                full_spec(wts[3]), full_spec(bts[3]),
                full_spec(wl3), full_spec(bl2),
                full_spec(m1), full_spec(m2),
                full_spec(s1), full_spec(s2),
            ],
            out_specs=pl.BlockSpec((None, 1, n_classes), lambda i: (i, 0, 0)),
        ),
        compiler_params=pltpu.CompilerParams(
            dimension_semantics=("parallel",)),
    )(x_flat, wts[0], bts[0], wts[1], bts[1], wts[2], bts[2], wts[3], bts[3],
      wl3, bl2, m1, m2, s1, s2)
    return out.reshape(n, n_classes)


# ----------------------------------------------------------------------------
# Pure-JAX reference (for correctness check only).
# ----------------------------------------------------------------------------
def _reference_forward(params, x_nchw):
    x = jnp.transpose(x_nchw, (0, 2, 3, 1))

    def conv(x, w, b):
        y = lax.conv_general_dilated(
            x, w, window_strides=(1, 1), padding="SAME",
            dimension_numbers=("NHWC", "HWIO", "NHWC"))
        return jax.nn.relu(y + b)

    def pool(x):
        return lax.reduce_window(x, -jnp.inf, lax.max,
                                 (1, 2, 2, 1), (1, 2, 2, 1), "VALID")

    x = pool(conv(conv(x, params["w1"], params["b1"]),
                  params["w2"], params["b2"]))
    x = pool(conv(conv(x, params["w3"], params["b3"]),
                  params["w4"], params["b4"]))
    n = x.shape[0]
    flat = jnp.transpose(x, (0, 3, 1, 2)).reshape(n, -1)
    return flat @ params["wl"] + params["bl"]


if __name__ == "__main__":
    batch, in_ch, hidden, n_classes = 2, 4, 8, 10
    key = jax.random.PRNGKey(0)
    kx, kp = jax.random.split(key)
    # Spatial must be 28x28 so two 2x2 maxpools yield the 7x7 the classifier expects.
    x = jax.random.normal(kx, (batch, in_ch, 28, 28), jnp.float32)
    params = init_params(kp, in_ch, hidden, n_classes)

    logits = jax.block_until_ready(classification_forward(params, x))
    assert logits.shape == (batch, n_classes), logits.shape

    ref = jax.block_until_ready(_reference_forward(params, x))
    if not jnp.allclose(logits, ref, rtol=5e-2, atol=5e-2):
        raise AssertionError("Pallas output mismatch vs JAX reference")

    print("KERNEL_OK")
</pallas_src>

<mosaic_0001>
module attributes {stable_mosaic.version = 11 : i64} {
  func.func @_fused_forward_kernel(%arg0: i32, %arg1: memref<1x4x784xf32, #tpu.memory_space<vmem>>, %arg2: memref<9x8x4xbf16, #tpu.memory_space<vmem>>, %arg3: memref<8x1xf32, #tpu.memory_space<vmem>>, %arg4: memref<9x8x8xbf16, #tpu.memory_space<vmem>>, %arg5: memref<8x1xf32, #tpu.memory_space<vmem>>, %arg6: memref<9x8x8xbf16, #tpu.memory_space<vmem>>, %arg7: memref<8x1xf32, #tpu.memory_space<vmem>>, %arg8: memref<9x8x8xbf16, #tpu.memory_space<vmem>>, %arg9: memref<8x1xf32, #tpu.memory_space<vmem>>, %arg10: memref<8x49x10xbf16, #tpu.memory_space<vmem>>, %arg11: memref<1x10xf32, #tpu.memory_space<vmem>>, %arg12: memref<2x784xf32, #tpu.memory_space<vmem>>, %arg13: memref<2x196xf32, #tpu.memory_space<vmem>>, %arg14: memref<784x196xbf16, #tpu.memory_space<vmem>>, %arg15: memref<196x49xbf16, #tpu.memory_space<vmem>>, %arg16: memref<1x1x10xf32, #tpu.memory_space<vmem>>) attributes {dimension_semantics = [#tpu.dimension_semantics<parallel>], iteration_bounds = array<i64: 2>, scalar_prefetch = 0 : i64, scratch_operands = 0 : i64, tpu.core_type = #tpu.core_type<tc>, window_params = [{transform_indices = @transform_0, window_bounds = array<i64: 1, 4, 784>}, {pipeline_mode = #tpu.pipeline_mode<synchronous>, transform_indices = @transform_1, window_bounds = array<i64: 9, 8, 4>}, {pipeline_mode = #tpu.pipeline_mode<synchronous>, transform_indices = @transform_2, window_bounds = array<i64: 8, 1>}, {pipeline_mode = #tpu.pipeline_mode<synchronous>, transform_indices = @transform_3, window_bounds = array<i64: 9, 8, 8>}, {pipeline_mode = #tpu.pipeline_mode<synchronous>, transform_indices = @transform_4, window_bounds = array<i64: 8, 1>}, {pipeline_mode = #tpu.pipeline_mode<synchronous>, transform_indices = @transform_5, window_bounds = array<i64: 9, 8, 8>}, {pipeline_mode = #tpu.pipeline_mode<synchronous>, transform_indices = @transform_6, window_bounds = array<i64: 8, 1>}, {pipeline_mode = #tpu.pipeline_mode<synchronous>, transform_indices = @transform_7, window_bounds = array<i64: 9, 8, 8>}, {pipeline_mode = #tpu.pipeline_mode<synchronous>, transform_indices = @transform_8, window_bounds = array<i64: 8, 1>}, {pipeline_mode = #tpu.pipeline_mode<synchronous>, transform_indices = @transform_9, window_bounds = array<i64: 8, 49, 10>}, {pipeline_mode = #tpu.pipeline_mode<synchronous>, transform_indices = @transform_10, window_bounds = array<i64: 1, 10>}, {pipeline_mode = #tpu.pipeline_mode<synchronous>, transform_indices = @transform_11, window_bounds = array<i64: 2, 784>}, {pipeline_mode = #tpu.pipeline_mode<synchronous>, transform_indices = @transform_12, window_bounds = array<i64: 2, 196>}, {pipeline_mode = #tpu.pipeline_mode<synchronous>, transform_indices = @transform_13, window_bounds = array<i64: 784, 196>}, {pipeline_mode = #tpu.pipeline_mode<synchronous>, transform_indices = @transform_14, window_bounds = array<i64: 196, 49>}, {transform_indices = @transform_15, window_bounds = array<i64: 1, 1, 10>}]} {
    %c0 = arith.constant 0 : index
    %c0_0 = arith.constant 0 : index
    %c0_1 = arith.constant 0 : index
    %0 = vector.load %arg1[%c0, %c0_0, %c0_1] : memref<1x4x784xf32, #tpu.memory_space<vmem>>, vector<1x4x784xf32>
    %1 = vector.shape_cast %0 : vector<1x4x784xf32> to vector<4x784xf32>
    %cst = arith.constant 0.000000e+00 : f32
    %2 = vector.broadcast %cst : f32 to vector<4x32xf32>
    %3 = tpu.concatenate %2, %1, %2 in 1 : vector<4x32xf32>, vector<4x784xf32>, vector<4x32xf32> -> vector<4x848xf32>
    %c0_2 = arith.constant 0 : index
    %c0_3 = arith.constant 0 : index
    %4 = vector.load %arg12[%c0_2, %c0_3] : memref<2x784xf32, #tpu.memory_space<vmem>>, vector<2x784xf32>
    %5 = vector.extract_strided_slice %4 {offsets = [0, 0], sizes = [1, 784], strides = [1, 1]} : vector<2x784xf32> to vector<1x784xf32>
    %6 = vector.extract_strided_slice %4 {offsets = [1, 0], sizes = [1, 784], strides = [1, 1]} : vector<2x784xf32> to vector<1x784xf32>
    %cst_4 = arith.constant 0.000000e+00 : f32
    %7 = vector.broadcast %cst_4 : f32 to vector<8x784xf32>
    %8 = vector.extract_strided_slice %3 {offsets = [0, 3], sizes = [4, 784], strides = [1, 1]} : vector<4x848xf32> to vector<4x784xf32>
    %9 = vector.broadcast %5 : vector<1x784xf32> to vector<4x784xf32>
    %10 = arith.mulf %8, %9 : vector<4x784xf32>
    %c0_5 = arith.constant 0 : index
    %c0_6 = arith.constant 0 : index
    %c0_7 = arith.constant 0 : index
    %11 = vector.load %arg2[%c0_5, %c0_6, %c0_7] : memref<9x8x4xbf16, #tpu.memory_space<vmem>>, vector<1x8x4xbf16>
    %12 = vector.shape_cast %11 : vector<1x8x4xbf16> to vector<8x4xbf16>
    %13 = arith.truncf %10 : vector<4x784xf32> to vector<4x784xbf16>
    %cst_8 = arith.constant dense<0.000000e+00> : vector<8x784xf32>
    %14 = tpu.matmul %12, %13, %cst_8 {dimension_numbers = #tpu.dot_dimension_numbers<[1], [0], [0], [1], [0, 0, 1, 1], [], []>} : vector<8x4xbf16>, vector<4x784xbf16>, vector<8x784xf32> -> vector<8x784xf32>
    %15 = arith.addf %7, %14 : vector<8x784xf32>
    %16 = vector.extract_strided_slice %3 {offsets = [0, 4], sizes = [4, 784], strides = [1, 1]} : vector<4x848xf32> to vector<4x784xf32>
    %c1 = arith.constant 1 : index
    %c0_9 = arith.constant 0 : index
    %c0_10 = arith.constant 0 : index
    %17 = vector.load %arg2[%c1, %c0_9, %c0_10] : memref<9x8x4xbf16, #tpu.memory_space<vmem>>, vector<1x8x4xbf16>
    %18 = vector.shape_cast %17 : vector<1x8x4xbf16> to vector<8x4xbf16>
    %19 = arith.truncf %16 : vector<4x784xf32> to vector<4x784xbf16>
    %cst_11 = arith.constant dense<0.000000e+00> : vector<8x784xf32>
    %20 = tpu.matmul %18, %19, %cst_11 {dimension_numbers = #tpu.dot_dimension_numbers<[1], [0], [0], [1], [0, 0, 1, 1], [], []>} : vector<8x4xbf16>, vector<4x784xbf16>, vector<8x784xf32> -> vector<8x784xf32>
    %21 = arith.addf %15, %20 : vector<8x784xf32>
    %22 = vector.extract_strided_slice %3 {offsets = [0, 5], sizes = [4, 784], strides = [1, 1]} : vector<4x848xf32> to vector<4x784xf32>
    %23 = vector.broadcast %6 : vector<1x784xf32> to vector<4x784xf32>
    %24 = arith.mulf %22, %23 : vector<4x784xf32>
    %c2 = arith.constant 2 : index
    %c0_12 = arith.constant 0 : index
    %c0_13 = arith.constant 0 : index
    %25 = vector.load %arg2[%c2, %c0_12, %c0_13] : memref<9x8x4xbf16, #tpu.memory_space<vmem>>, vector<1x8x4xbf16>
    %26 = vector.shape_cast %25 : vector<1x8x4xbf16> to vector<8x4xbf16>
    %27 = arith.truncf %24 : vector<4x784xf32> to vector<4x784xbf16>
    %cst_14 = arith.constant dense<0.000000e+00> : vector<8x784xf32>
    %28 = tpu.matmul %26, %27, %cst_14 {dimension_numbers = #tpu.dot_dimension_numbers<[1], [0], [0], [1], [0, 0, 1, 1], [], []>} : vector<8x4xbf16>, vector<4x784xbf16>, vector<8x784xf32> -> vector<8x784xf32>
    %29 = arith.addf %21, %28 : vector<8x784xf32>
    %30 = vector.extract_strided_slice %3 {offsets = [0, 31], sizes = [4, 784], strides = [1, 1]} : vector<4x848xf32> to vector<4x784xf32>
    %31 = vector.broadcast %5 : vector<1x784xf32> to vector<4x784xf32>
    %32 = arith.mulf %30, %31 : vector<4x784xf32>
    %c3 = arith.constant 3 : index
    %c0_15 = arith.constant 0 : index
    %c0_16 = arith.constant 0 : index
    %33 = vector.load %arg2[%c3, %c0_15, %c0_16] : memref<9x8x4xbf16, #tpu.memory_space<vmem>>, vector<1x8x4xbf16>
    %34 = vector.shape_cast %33 : vector<1x8x4xbf16> to vector<8x4xbf16>
    %35 = arith.truncf %32 : vector<4x784xf32> to vector<4x784xbf16>
    %cst_17 = arith.constant dense<0.000000e+00> : vector<8x784xf32>
    %36 = tpu.matmul %34, %35, %cst_17 {dimension_numbers = #tpu.dot_dimension_numbers<[1], [0], [0], [1], [0, 0, 1, 1], [], []>} : vector<8x4xbf16>, vector<4x784xbf16>, vector<8x784xf32> -> vector<8x784xf32>
    %37 = arith.addf %29, %36 : vector<8x784xf32>
    %38 = vector.extract_strided_slice %3 {offsets = [0, 32], sizes = [4, 784], strides = [1, 1]} : vector<4x848xf32> to vector<4x784xf32>
    %c4 = arith.constant 4 : index
    %c0_18 = arith.constant 0 : index
    %c0_19 = arith.constant 0 : index
    %39 = vector.load %arg2[%c4, %c0_18, %c0_19] : memref<9x8x4xbf16, #tpu.memory_space<vmem>>, vector<1x8x4xbf16>
    %40 = vector.shape_cast %39 : vector<1x8x4xbf16> to vector<8x4xbf16>
    %41 = arith.truncf %38 : vector<4x784xf32> to vector<4x784xbf16>
    %cst_20 = arith.constant dense<0.000000e+00> : vector<8x784xf32>
    %42 = tpu.matmul %40, %41, %cst_20 {dimension_numbers = #tpu.dot_dimension_numbers<[1], [0], [0], [1], [0, 0, 1, 1], [], []>} : vector<8x4xbf16>, vector<4x784xbf16>, vector<8x784xf32> -> vector<8x784xf32>
    %43 = arith.addf %37, %42 : vector<8x784xf32>
    %44 = vector.extract_strided_slice %3 {offsets = [0, 33], sizes = [4, 784], strides = [1, 1]} : vector<4x848xf32> to vector<4x784xf32>
    %45 = vector.broadcast %6 : vector<1x784xf32> to vector<4x784xf32>
    %46 = arith.mulf %44, %45 : vector<4x784xf32>
    %c5 = arith.constant 5 : index
    %c0_21 = arith.constant 0 : index
    %c0_22 = arith.constant 0 : index
    %47 = vector.load %arg2[%c5, %c0_21, %c0_22] : memref<9x8x4xbf16, #tpu.memory_space<vmem>>, vector<1x8x4xbf16>
    %48 = vector.shape_cast %47 : vector<1x8x4xbf16> to vector<8x4xbf16>
    %49 = arith.truncf %46 : vector<4x784xf32> to vector<4x784xbf16>
    %cst_23 = arith.constant dense<0.000000e+00> : vector<8x784xf32>
    %50 = tpu.matmul %48, %49, %cst_23 {dimension_numbers = #tpu.dot_dimension_numbers<[1], [0], [0], [1], [0, 0, 1, 1], [], []>} : vector<8x4xbf16>, vector<4x784xbf16>, vector<8x784xf32> -> vector<8x784xf32>
    %51 = arith.addf %43, %50 : vector<8x784xf32>
    %52 = vector.extract_strided_slice %3 {offsets = [0, 59], sizes = [4, 784], strides = [1, 1]} : vector<4x848xf32> to vector<4x784xf32>
    %53 = vector.broadcast %5 : vector<1x784xf32> to vector<4x784xf32>
    %54 = arith.mulf %52, %53 : vector<4x784xf32>
    %c6 = arith.constant 6 : index
    %c0_24 = arith.constant 0 : index
    %c0_25 = arith.constant 0 : index
    %55 = vector.load %arg2[%c6, %c0_24, %c0_25] : memref<9x8x4xbf16, #tpu.memory_space<vmem>>, vector<1x8x4xbf16>
    %56 = vector.shape_cast %55 : vector<1x8x4xbf16> to vector<8x4xbf16>
    %57 = arith.truncf %54 : vector<4x784xf32> to vector<4x784xbf16>
    %cst_26 = arith.constant dense<0.000000e+00> : vector<8x784xf32>
    %58 = tpu.matmul %56, %57, %cst_26 {dimension_numbers = #tpu.dot_dimension_numbers<[1], [0], [0], [1], [0, 0, 1, 1], [], []>} : vector<8x4xbf16>, vector<4x784xbf16>, vector<8x784xf32> -> vector<8x784xf32>
    %59 = arith.addf %51, %58 : vector<8x784xf32>
    %60 = vector.extract_strided_slice %3 {offsets = [0, 60], sizes = [4, 784], strides = [1, 1]} : vector<4x848xf32> to vector<4x784xf32>
    %c7 = arith.constant 7 : index
    %c0_27 = arith.constant 0 : index
    %c0_28 = arith.constant 0 : index
    %61 = vector.load %arg2[%c7, %c0_27, %c0_28] : memref<9x8x4xbf16, #tpu.memory_space<vmem>>, vector<1x8x4xbf16>
    %62 = vector.shape_cast %61 : vector<1x8x4xbf16> to vector<8x4xbf16>
    %63 = arith.truncf %60 : vector<4x784xf32> to vector<4x784xbf16>
    %cst_29 = arith.constant dense<0.000000e+00> : vector<8x784xf32>
    %64 = tpu.matmul %62, %63, %cst_29 {dimension_numbers = #tpu.dot_dimension_numbers<[1], [0], [0], [1], [0, 0, 1, 1], [], []>} : vector<8x4xbf16>, vector<4x784xbf16>, vector<8x784xf32> -> vector<8x784xf32>
    %65 = arith.addf %59, %64 : vector<8x784xf32>
    %66 = vector.extract_strided_slice %3 {offsets = [0, 61], sizes = [4, 784], strides = [1, 1]} : vector<4x848xf32> to vector<4x784xf32>
    %67 = vector.broadcast %6 : vector<1x784xf32> to vector<4x784xf32>
    %68 = arith.mulf %66, %67 : vector<4x784xf32>
    %c8 = arith.constant 8 : index
    %c0_30 = arith.constant 0 : index
    %c0_31 = arith.constant 0 : index
    %69 = vector.load %arg2[%c8, %c0_30, %c0_31] : memref<9x8x4xbf16, #tpu.memory_space<vmem>>, vector<1x8x4xbf16>
    %70 = vector.shape_cast %69 : vector<1x8x4xbf16> to vector<8x4xbf16>
    %71 = arith.truncf %68 : vector<4x784xf32> to vector<4x784xbf16>
    %cst_32 = arith.constant dense<0.000000e+00> : vector<8x784xf32>
    %72 = tpu.matmul %70, %71, %cst_32 {dimension_numbers = #tpu.dot_dimension_numbers<[1], [0], [0], [1], [0, 0, 1, 1], [], []>} : vector<8x4xbf16>, vector<4x784xbf16>, vector<8x784xf32> -> vector<8x784xf32>
    %73 = arith.addf %65, %72 : vector<8x784xf32>
    %c0_33 = arith.constant 0 : index
    %c0_34 = arith.constant 0 : index
    %74 = vector.load %arg3[%c0_33, %c0_34] : memref<8x1xf32, #tpu.memory_space<vmem>>, vector<8x1xf32>
    %75 = vector.broadcast %74 : vector<8x1xf32> to vector<8x784xf32>
    %76 = arith.addf %73, %75 : vector<8x784xf32>
    %cst_35 = arith.constant 0.000000e+00 : f32
    %77 = vector.broadcast %cst_35 : f32 to vector<8x784xf32>
    %78 = arith.maximumf %76, %77 : vector<8x784xf32>
    %cst_36 = arith.constant 0.000000e+00 : f32
    %79 = vector.broadcast %cst_36 : f32 to vector<8x32xf32>
    %80 = tpu.concatenate %79, %78, %79 in 1 : vector<8x32xf32>, vector<8x784xf32>, vector<8x32xf32> -> vector<8x848xf32>
    %c0_37 = arith.constant 0 : index
    %c0_38 = arith.constant 0 : index
    %81 = vector.load %arg12[%c0_37, %c0_38] : memref<2x784xf32, #tpu.memory_space<vmem>>, vector<2x784xf32>
    %82 = vector.extract_strided_slice %81 {offsets = [0, 0], sizes = [1, 784], strides = [1, 1]} : vector<2x784xf32> to vector<1x784xf32>
    %83 = vector.extract_strided_slice %81 {offsets = [1, 0], sizes = [1, 784], strides = [1, 1]} : vector<2x784xf32> to vector<1x784xf32>
    %cst_39 = arith.constant 0.000000e+00 : f32
    %84 = vector.broadcast %cst_39 : f32 to vector<8x784xf32>
    %85 = vector.extract_strided_slice %80 {offsets = [0, 3], sizes = [8, 784], strides = [1, 1]} : vector<8x848xf32> to vector<8x784xf32>
    %86 = vector.broadcast %82 : vector<1x784xf32> to vector<8x784xf32>
    %87 = arith.mulf %85, %86 : vector<8x784xf32>
    %c0_40 = arith.constant 0 : index
    %c0_41 = arith.constant 0 : index
    %c0_42 = arith.constant 0 : index
    %88 = vector.load %arg4[%c0_40, %c0_41, %c0_42] : memref<9x8x8xbf16, #tpu.memory_space<vmem>>, vector<1x8x8xbf16>
    %89 = vector.shape_cast %88 : vector<1x8x8xbf16> to vector<8x8xbf16>
    %90 = arith.truncf %87 : vector<8x784xf32> to vector<8x784xbf16>
    %cst_43 = arith.constant dense<0.000000e+00> : vector<8x784xf32>
    %91 = tpu.matmul %89, %90, %cst_43 {dimension_numbers = #tpu.dot_dimension_numbers<[1], [0], [0], [1], [0, 0, 1, 1], [], []>} : vector<8x8xbf16>, vector<8x784xbf16>, vector<8x784xf32> -> vector<8x784xf32>
    %92 = arith.addf %84, %91 : vector<8x784xf32>
    %93 = vector.extract_strided_slice %80 {offsets = [0, 4], sizes = [8, 784], strides = [1, 1]} : vector<8x848xf32> to vector<8x784xf32>
    %c1_44 = arith.constant 1 : index
    %c0_45 = arith.constant 0 : index
    %c0_46 = arith.constant 0 : index
    %94 = vector.load %arg4[%c1_44, %c0_45, %c0_46] : memref<9x8x8xbf16, #tpu.memory_space<vmem>>, vector<1x8x8xbf16>
    %95 = vector.shape_cast %94 : vector<1x8x8xbf16> to vector<8x8xbf16>
    %96 = arith.truncf %93 : vector<8x784xf32> to vector<8x784xbf16>
    %cst_47 = arith.constant dense<0.000000e+00> : vector<8x784xf32>
    %97 = tpu.matmul %95, %96, %cst_47 {dimension_numbers = #tpu.dot_dimension_numbers<[1], [0], [0], [1], [0, 0, 1, 1], [], []>} : vector<8x8xbf16>, vector<8x784xbf16>, vector<8x784xf32> -> vector<8x784xf32>
    %98 = arith.addf %92, %97 : vector<8x784xf32>
    %99 = vector.extract_strided_slice %80 {offsets = [0, 5], sizes = [8, 784], strides = [1, 1]} : vector<8x848xf32> to vector<8x784xf32>
    %100 = vector.broadcast %83 : vector<1x784xf32> to vector<8x784xf32>
    %101 = arith.mulf %99, %100 : vector<8x784xf32>
    %c2_48 = arith.constant 2 : index
    %c0_49 = arith.constant 0 : index
    %c0_50 = arith.constant 0 : index
    %102 = vector.load %arg4[%c2_48, %c0_49, %c0_50] : memref<9x8x8xbf16, #tpu.memory_space<vmem>>, vector<1x8x8xbf16>
    %103 = vector.shape_cast %102 : vector<1x8x8xbf16> to vector<8x8xbf16>
    %104 = arith.truncf %101 : vector<8x784xf32> to vector<8x784xbf16>
    %cst_51 = arith.constant dense<0.000000e+00> : vector<8x784xf32>
    %105 = tpu.matmul %103, %104, %cst_51 {dimension_numbers = #tpu.dot_dimension_numbers<[1], [0], [0], [1], [0, 0, 1, 1], [], []>} : vector<8x8xbf16>, vector<8x784xbf16>, vector<8x784xf32> -> vector<8x784xf32>
    %106 = arith.addf %98, %105 : vector<8x784xf32>
    %107 = vector.extract_strided_slice %80 {offsets = [0, 31], sizes = [8, 784], strides = [1, 1]} : vector<8x848xf32> to vector<8x784xf32>
    %108 = vector.broadcast %82 : vector<1x784xf32> to vector<8x784xf32>
    %109 = arith.mulf %107, %108 : vector<8x784xf32>
    %c3_52 = arith.constant 3 : index
    %c0_53 = arith.constant 0 : index
    %c0_54 = arith.constant 0 : index
    %110 = vector.load %arg4[%c3_52, %c0_53, %c0_54] : memref<9x8x8xbf16, #tpu.memory_space<vmem>>, vector<1x8x8xbf16>
    %111 = vector.shape_cast %110 : vector<1x8x8xbf16> to vector<8x8xbf16>
    %112 = arith.truncf %109 : vector<8x784xf32> to vector<8x784xbf16>
    %cst_55 = arith.constant dense<0.000000e+00> : vector<8x784xf32>
    %113 = tpu.matmul %111, %112, %cst_55 {dimension_numbers = #tpu.dot_dimension_numbers<[1], [0], [0], [1], [0, 0, 1, 1], [], []>} : vector<8x8xbf16>, vector<8x784xbf16>, vector<8x784xf32> -> vector<8x784xf32>
    %114 = arith.addf %106, %113 : vector<8x784xf32>
    %115 = vector.extract_strided_slice %80 {offsets = [0, 32], sizes = [8, 784], strides = [1, 1]} : vector<8x848xf32> to vector<8x784xf32>
    %c4_56 = arith.constant 4 : index
    %c0_57 = arith.constant 0 : index
    %c0_58 = arith.constant 0 : index
    %116 = vector.load %arg4[%c4_56, %c0_57, %c0_58] : memref<9x8x8xbf16, #tpu.memory_space<vmem>>, vector<1x8x8xbf16>
    %117 = vector.shape_cast %116 : vector<1x8x8xbf16> to vector<8x8xbf16>
    %118 = arith.truncf %115 : vector<8x784xf32> to vector<8x784xbf16>
    %cst_59 = arith.constant dense<0.000000e+00> : vector<8x784xf32>
    %119 = tpu.matmul %117, %118, %cst_59 {dimension_numbers = #tpu.dot_dimension_numbers<[1], [0], [0], [1], [0, 0, 1, 1], [], []>} : vector<8x8xbf16>, vector<8x784xbf16>, vector<8x784xf32> -> vector<8x784xf32>
    %120 = arith.addf %114, %119 : vector<8x784xf32>
    %121 = vector.extract_strided_slice %80 {offsets = [0, 33], sizes = [8, 784], strides = [1, 1]} : vector<8x848xf32> to vector<8x784xf32>
    %122 = vector.broadcast %83 : vector<1x784xf32> to vector<8x784xf32>
    %123 = arith.mulf %121, %122 : vector<8x784xf32>
    %c5_60 = arith.constant 5 : index
    %c0_61 = arith.constant 0 : index
    %c0_62 = arith.constant 0 : index
    %124 = vector.load %arg4[%c5_60, %c0_61, %c0_62] : memref<9x8x8xbf16, #tpu.memory_space<vmem>>, vector<1x8x8xbf16>
    %125 = vector.shape_cast %124 : vector<1x8x8xbf16> to vector<8x8xbf16>
    %126 = arith.truncf %123 : vector<8x784xf32> to vector<8x784xbf16>
    %cst_63 = arith.constant dense<0.000000e+00> : vector<8x784xf32>
    %127 = tpu.matmul %125, %126, %cst_63 {dimension_numbers = #tpu.dot_dimension_numbers<[1], [0], [0], [1], [0, 0, 1, 1], [], []>} : vector<8x8xbf16>, vector<8x784xbf16>, vector<8x784xf32> -> vector<8x784xf32>
    %128 = arith.addf %120, %127 : vector<8x784xf32>
    %129 = vector.extract_strided_slice %80 {offsets = [0, 59], sizes = [8, 784], strides = [1, 1]} : vector<8x848xf32> to vector<8x784xf32>
    %130 = vector.broadcast %82 : vector<1x784xf32> to vector<8x784xf32>
    %131 = arith.mulf %129, %130 : vector<8x784xf32>
    %c6_64 = arith.constant 6 : index
    %c0_65 = arith.constant 0 : index
    %c0_66 = arith.constant 0 : index
    %132 = vector.load %arg4[%c6_64, %c0_65, %c0_66] : memref<9x8x8xbf16, #tpu.memory_space<vmem>>, vector<1x8x8xbf16>
    %133 = vector.shape_cast %132 : vector<1x8x8xbf16> to vector<8x8xbf16>
    %134 = arith.truncf %131 : vector<8x784xf32> to vector<8x784xbf16>
    %cst_67 = arith.constant dense<0.000000e+00> : vector<8x784xf32>
    %135 = tpu.matmul %133, %134, %cst_67 {dimension_numbers = #tpu.dot_dimension_numbers<[1], [0], [0], [1], [0, 0, 1, 1], [], []>} : vector<8x8xbf16>, vector<8x784xbf16>, vector<8x784xf32> -> vector<8x784xf32>
    %136 = arith.addf %128, %135 : vector<8x784xf32>
    %137 = vector.extract_strided_slice %80 {offsets = [0, 60], sizes = [8, 784], strides = [1, 1]} : vector<8x848xf32> to vector<8x784xf32>
    %c7_68 = arith.constant 7 : index
    %c0_69 = arith.constant 0 : index
    %c0_70 = arith.constant 0 : index
    %138 = vector.load %arg4[%c7_68, %c0_69, %c0_70] : memref<9x8x8xbf16, #tpu.memory_space<vmem>>, vector<1x8x8xbf16>
    %139 = vector.shape_cast %138 : vector<1x8x8xbf16> to vector<8x8xbf16>
    %140 = arith.truncf %137 : vector<8x784xf32> to vector<8x784xbf16>
    %cst_71 = arith.constant dense<0.000000e+00> : vector<8x784xf32>
    %141 = tpu.matmul %139, %140, %cst_71 {dimension_numbers = #tpu.dot_dimension_numbers<[1], [0], [0], [1], [0, 0, 1, 1], [], []>} : vector<8x8xbf16>, vector<8x784xbf16>, vector<8x784xf32> -> vector<8x784xf32>
    %142 = arith.addf %136, %141 : vector<8x784xf32>
    %143 = vector.extract_strided_slice %80 {offsets = [0, 61], sizes = [8, 784], strides = [1, 1]} : vector<8x848xf32> to vector<8x784xf32>
    %144 = vector.broadcast %83 : vector<1x784xf32> to vector<8x784xf32>
    %145 = arith.mulf %143, %144 : vector<8x784xf32>
    %c8_72 = arith.constant 8 : index
    %c0_73 = arith.constant 0 : index
    %c0_74 = arith.constant 0 : index
    %146 = vector.load %arg4[%c8_72, %c0_73, %c0_74] : memref<9x8x8xbf16, #tpu.memory_space<vmem>>, vector<1x8x8xbf16>
    %147 = vector.shape_cast %146 : vector<1x8x8xbf16> to vector<8x8xbf16>
    %148 = arith.truncf %145 : vector<8x784xf32> to vector<8x784xbf16>
    %cst_75 = arith.constant dense<0.000000e+00> : vector<8x784xf32>
    %149 = tpu.matmul %147, %148, %cst_75 {dimension_numbers = #tpu.dot_dimension_numbers<[1], [0], [0], [1], [0, 0, 1, 1], [], []>} : vector<8x8xbf16>, vector<8x784xbf16>, vector<8x784xf32> -> vector<8x784xf32>
    %150 = arith.addf %142, %149 : vector<8x784xf32>
    %c0_76 = arith.constant 0 : index
    %c0_77 = arith.constant 0 : index
    %151 = vector.load %arg5[%c0_76, %c0_77] : memref<8x1xf32, #tpu.memory_space<vmem>>, vector<8x1xf32>
    %152 = vector.broadcast %151 : vector<8x1xf32> to vector<8x784xf32>
    %153 = arith.addf %150, %152 : vector<8x784xf32>
    %cst_78 = arith.constant 0.000000e+00 : f32
    %154 = vector.broadcast %cst_78 : f32 to vector<8x784xf32>
    %155 = arith.maximumf %153, %154 : vector<8x784xf32>
    %cst_79 = arith.constant 0.000000e+00 : f32
    %156 = vector.broadcast %cst_79 : f32 to vector<8x32xf32>
    %157 = tpu.concatenate %156, %155, %156 in 1 : vector<8x32xf32>, vector<8x784xf32>, vector<8x32xf32> -> vector<8x848xf32>
    %158 = vector.extract_strided_slice %157 {offsets = [0, 33], sizes = [8, 784], strides = [1, 1]} : vector<8x848xf32> to vector<8x784xf32>
    %159 = arith.maximumf %155, %158 : vector<8x784xf32>
    %160 = vector.extract_strided_slice %157 {offsets = [0, 60], sizes = [8, 784], strides = [1, 1]} : vector<8x848xf32> to vector<8x784xf32>
    %161 = arith.maximumf %159, %160 : vector<8x784xf32>
    %162 = vector.extract_strided_slice %157 {offsets = [0, 61], sizes = [8, 784], strides = [1, 1]} : vector<8x848xf32> to vector<8x784xf32>
    %163 = arith.maximumf %161, %162 : vector<8x784xf32>
    %164 = arith.truncf %163 : vector<8x784xf32> to vector<8x784xbf16>
    %c0_80 = arith.constant 0 : index
    %c0_81 = arith.constant 0 : index
    %165 = vector.load %arg14[%c0_80, %c0_81] : memref<784x196xbf16, #tpu.memory_space<vmem>>, vector<784x196xbf16>
    %cst_82 = arith.constant dense<0.000000e+00> : vector<8x196xf32>
    %166 = tpu.matmul %164, %165, %cst_82 {dimension_numbers = #tpu.dot_dimension_numbers<[1], [0], [0], [1], [0, 0, 1, 1], [], []>} : vector<8x784xbf16>, vector<784x196xbf16>, vector<8x196xf32> -> vector<8x196xf32>
    %cst_83 = arith.constant 0.000000e+00 : f32
    %167 = vector.broadcast %cst_83 : f32 to vector<8x32xf32>
    %168 = tpu.concatenate %167, %166, %167 in 1 : vector<8x32xf32>, vector<8x196xf32>, vector<8x32xf32> -> vector<8x260xf32>
    %c0_84 = arith.constant 0 : index
    %c0_85 = arith.constant 0 : index
    %169 = vector.load %arg13[%c0_84, %c0_85] : memref<2x196xf32, #tpu.memory_space<vmem>>, vector<2x196xf32>
    %170 = vector.extract_strided_slice %169 {offsets = [0, 0], sizes = [1, 196], strides = [1, 1]} : vector<2x196xf32> to vector<1x196xf32>
    %171 = vector.extract_strided_slice %169 {offsets = [1, 0], sizes = [1, 196], strides = [1, 1]} : vector<2x196xf32> to vector<1x196xf32>
    %cst_86 = arith.constant 0.000000e+00 : f32
    %172 = vector.broadcast %cst_86 : f32 to vector<8x196xf32>
    %173 = vector.extract_strided_slice %168 {offsets = [0, 17], sizes = [8, 196], strides = [1, 1]} : vector<8x260xf32> to vector<8x196xf32>
    %174 = vector.broadcast %170 : vector<1x196xf32> to vector<8x196xf32>
    %175 = arith.mulf %173, %174 : vector<8x196xf32>
    %c0_87 = arith.constant 0 : index
    %c0_88 = arith.constant 0 : index
    %c0_89 = arith.constant 0 : index
    %176 = vector.load %arg6[%c0_87, %c0_88, %c0_89] : memref<9x8x8xbf16, #tpu.memory_space<vmem>>, vector<1x8x8xbf16>
    %177 = vector.shape_cast %176 : vector<1x8x8xbf16> to vector<8x8xbf16>
    %178 = arith.truncf %175 : vector<8x196xf32> to vector<8x196xbf16>
    %cst_90 = arith.constant dense<0.000000e+00> : vector<8x196xf32>
    %179 = tpu.matmul %177, %178, %cst_90 {dimension_numbers = #tpu.dot_dimension_numbers<[1], [0], [0], [1], [0, 0, 1, 1], [], []>} : vector<8x8xbf16>, vector<8x196xbf16>, vector<8x196xf32> -> vector<8x196xf32>
    %180 = arith.addf %172, %179 : vector<8x196xf32>
    %181 = vector.extract_strided_slice %168 {offsets = [0, 18], sizes = [8, 196], strides = [1, 1]} : vector<8x260xf32> to vector<8x196xf32>
    %c1_91 = arith.constant 1 : index
    %c0_92 = arith.constant 0 : index
    %c0_93 = arith.constant 0 : index
    %182 = vector.load %arg6[%c1_91, %c0_92, %c0_93] : memref<9x8x8xbf16, #tpu.memory_space<vmem>>, vector<1x8x8xbf16>
    %183 = vector.shape_cast %182 : vector<1x8x8xbf16> to vector<8x8xbf16>
    %184 = arith.truncf %181 : vector<8x196xf32> to vector<8x196xbf16>
    %cst_94 = arith.constant dense<0.000000e+00> : vector<8x196xf32>
    %185 = tpu.matmul %183, %184, %cst_94 {dimension_numbers = #tpu.dot_dimension_numbers<[1], [0], [0], [1], [0, 0, 1, 1], [], []>} : vector<8x8xbf16>, vector<8x196xbf16>, vector<8x196xf32> -> vector<8x196xf32>
    %186 = arith.addf %180, %185 : vector<8x196xf32>
    %187 = vector.extract_strided_slice %168 {offsets = [0, 19], sizes = [8, 196], strides = [1, 1]} : vector<8x260xf32> to vector<8x196xf32>
    %188 = vector.broadcast %171 : vector<1x196xf32> to vector<8x196xf32>
    %189 = arith.mulf %187, %188 : vector<8x196xf32>
    %c2_95 = arith.constant 2 : index
    %c0_96 = arith.constant 0 : index
    %c0_97 = arith.constant 0 : index
    %190 = vector.load %arg6[%c2_95, %c0_96, %c0_97] : memref<9x8x8xbf16, #tpu.memory_space<vmem>>, vector<1x8x8xbf16>
    %191 = vector.shape_cast %190 : vector<1x8x8xbf16> to vector<8x8xbf16>
    %192 = arith.truncf %189 : vector<8x196xf32> to vector<8x196xbf16>
    %cst_98 = arith.constant dense<0.000000e+00> : vector<8x196xf32>
    %193 = tpu.matmul %191, %192, %cst_98 {dimension_numbers = #tpu.dot_dimension_numbers<[1], [0], [0], [1], [0, 0, 1, 1], [], []>} : vector<8x8xbf16>, vector<8x196xbf16>, vector<8x196xf32> -> vector<8x196xf32>
    %194 = arith.addf %186, %193 : vector<8x196xf32>
    %195 = vector.extract_strided_slice %168 {offsets = [0, 31], sizes = [8, 196], strides = [1, 1]} : vector<8x260xf32> to vector<8x196xf32>
    %196 = vector.broadcast %170 : vector<1x196xf32> to vector<8x196xf32>
    %197 = arith.mulf %195, %196 : vector<8x196xf32>
    %c3_99 = arith.constant 3 : index
    %c0_100 = arith.constant 0 : index
    %c0_101 = arith.constant 0 : index
    %198 = vector.load %arg6[%c3_99, %c0_100, %c0_101] : memref<9x8x8xbf16, #tpu.memory_space<vmem>>, vector<1x8x8xbf16>
    %199 = vector.shape_cast %198 : vector<1x8x8xbf16> to vector<8x8xbf16>
    %200 = arith.truncf %197 : vector<8x196xf32> to vector<8x196xbf16>
    %cst_102 = arith.constant dense<0.000000e+00> : vector<8x196xf32>
    %201 = tpu.matmul %199, %200, %cst_102 {dimension_numbers = #tpu.dot_dimension_numbers<[1], [0], [0], [1], [0, 0, 1, 1], [], []>} : vector<8x8xbf16>, vector<8x196xbf16>, vector<8x196xf32> -> vector<8x196xf32>
    %202 = arith.addf %194, %201 : vector<8x196xf32>
    %203 = vector.extract_strided_slice %168 {offsets = [0, 32], sizes = [8, 196], strides = [1, 1]} : vector<8x260xf32> to vector<8x196xf32>
    %c4_103 = arith.constant 4 : index
    %c0_104 = arith.constant 0 : index
    %c0_105 = arith.constant 0 : index
    %204 = vector.load %arg6[%c4_103, %c0_104, %c0_105] : memref<9x8x8xbf16, #tpu.memory_space<vmem>>, vector<1x8x8xbf16>
    %205 = vector.shape_cast %204 : vector<1x8x8xbf16> to vector<8x8xbf16>
    %206 = arith.truncf %203 : vector<8x196xf32> to vector<8x196xbf16>
    %cst_106 = arith.constant dense<0.000000e+00> : vector<8x196xf32>
    %207 = tpu.matmul %205, %206, %cst_106 {dimension_numbers = #tpu.dot_dimension_numbers<[1], [0], [0], [1], [0, 0, 1, 1], [], []>} : vector<8x8xbf16>, vector<8x196xbf16>, vector<8x196xf32> -> vector<8x196xf32>
    %208 = arith.addf %202, %207 : vector<8x196xf32>
    %209 = vector.extract_strided_slice %168 {offsets = [0, 33], sizes = [8, 196], strides = [1, 1]} : vector<8x260xf32> to vector<8x196xf32>
    %210 = vector.broadcast %171 : vector<1x196xf32> to vector<8x196xf32>
    %211 = arith.mulf %209, %210 : vector<8x196xf32>
    %c5_107 = arith.constant 5 : index
    %c0_108 = arith.constant 0 : index
    %c0_109 = arith.constant 0 : index
    %212 = vector.load %arg6[%c5_107, %c0_108, %c0_109] : memref<9x8x8xbf16, #tpu.memory_space<vmem>>, vector<1x8x8xbf16>
    %213 = vector.shape_cast %212 : vector<1x8x8xbf16> to vector<8x8xbf16>
    %214 = arith.truncf %211 : vector<8x196xf32> to vector<8x196xbf16>
    %cst_110 = arith.constant dense<0.000000e+00> : vector<8x196xf32>
    %215 = tpu.matmul %213, %214, %cst_110 {dimension_numbers = #tpu.dot_dimension_numbers<[1], [0], [0], [1], [0, 0, 1, 1], [], []>} : vector<8x8xbf16>, vector<8x196xbf16>, vector<8x196xf32> -> vector<8x196xf32>
    %216 = arith.addf %208, %215 : vector<8x196xf32>
    %217 = vector.extract_strided_slice %168 {offsets = [0, 45], sizes = [8, 196], strides = [1, 1]} : vector<8x260xf32> to vector<8x196xf32>
    %218 = vector.broadcast %170 : vector<1x196xf32> to vector<8x196xf32>
    %219 = arith.mulf %217, %218 : vector<8x196xf32>
    %c6_111 = arith.constant 6 : index
    %c0_112 = arith.constant 0 : index
    %c0_113 = arith.constant 0 : index
    %220 = vector.load %arg6[%c6_111, %c0_112, %c0_113] : memref<9x8x8xbf16, #tpu.memory_space<vmem>>, vector<1x8x8xbf16>
    %221 = vector.shape_cast %220 : vector<1x8x8xbf16> to vector<8x8xbf16>
    %222 = arith.truncf %219 : vector<8x196xf32> to vector<8x196xbf16>
    %cst_114 = arith.constant dense<0.000000e+00> : vector<8x196xf32>
    %223 = tpu.matmul %221, %222, %cst_114 {dimension_numbers = #tpu.dot_dimension_numbers<[1], [0], [0], [1], [0, 0, 1, 1], [], []>} : vector<8x8xbf16>, vector<8x196xbf16>, vector<8x196xf32> -> vector<8x196xf32>
    %224 = arith.addf %216, %223 : vector<8x196xf32>
    %225 = vector.extract_strided_slice %168 {offsets = [0, 46], sizes = [8, 196], strides = [1, 1]} : vector<8x260xf32> to vector<8x196xf32>
    %c7_115 = arith.constant 7 : index
    %c0_116 = arith.constant 0 : index
    %c0_117 = arith.constant 0 : index
    %226 = vector.load %arg6[%c7_115, %c0_116, %c0_117] : memref<9x8x8xbf16, #tpu.memory_space<vmem>>, vector<1x8x8xbf16>
    %227 = vector.shape_cast %226 : vector<1x8x8xbf16> to vector<8x8xbf16>
    %228 = arith.truncf %225 : vector<8x196xf32> to vector<8x196xbf16>
    %cst_118 = arith.constant dense<0.000000e+00> : vector<8x196xf32>
    %229 = tpu.matmul %227, %228, %cst_118 {dimension_numbers = #tpu.dot_dimension_numbers<[1], [0], [0], [1], [0, 0, 1, 1], [], []>} : vector<8x8xbf16>, vector<8x196xbf16>, vector<8x196xf32> -> vector<8x196xf32>
    %230 = arith.addf %224, %229 : vector<8x196xf32>
    %231 = vector.extract_strided_slice %168 {offsets = [0, 47], sizes = [8, 196], strides = [1, 1]} : vector<8x260xf32> to vector<8x196xf32>
    %232 = vector.broadcast %171 : vector<1x196xf32> to vector<8x196xf32>
    %233 = arith.mulf %231, %232 : vector<8x196xf32>
    %c8_119 = arith.constant 8 : index
    %c0_120 = arith.constant 0 : index
    %c0_121 = arith.constant 0 : index
    %234 = vector.load %arg6[%c8_119, %c0_120, %c0_121] : memref<9x8x8xbf16, #tpu.memory_space<vmem>>, vector<1x8x8xbf16>
    %235 = vector.shape_cast %234 : vector<1x8x8xbf16> to vector<8x8xbf16>
    %236 = arith.truncf %233 : vector<8x196xf32> to vector<8x196xbf16>
    %cst_122 = arith.constant dense<0.000000e+00> : vector<8x196xf32>
    %237 = tpu.matmul %235, %236, %cst_122 {dimension_numbers = #tpu.dot_dimension_numbers<[1], [0], [0], [1], [0, 0, 1, 1], [], []>} : vector<8x8xbf16>, vector<8x196xbf16>, vector<8x196xf32> -> vector<8x196xf32>
    %238 = arith.addf %230, %237 : vector<8x196xf32>
    %c0_123 = arith.constant 0 : index
    %c0_124 = arith.constant 0 : index
    %239 = vector.load %arg7[%c0_123, %c0_124] : memref<8x1xf32, #tpu.memory_space<vmem>>, vector<8x1xf32>
    %240 = vector.broadcast %239 : vector<8x1xf32> to vector<8x196xf32>
    %241 = arith.addf %238, %240 : vector<8x196xf32>
    %cst_125 = arith.constant 0.000000e+00 : f32
    %242 = vector.broadcast %cst_125 : f32 to vector<8x196xf32>
    %243 = arith.maximumf %241, %242 : vector<8x196xf32>
    %cst_126 = arith.constant 0.000000e+00 : f32
    %244 = vector.broadcast %cst_126 : f32 to vector<8x32xf32>
    %245 = tpu.concatenate %244, %243, %244 in 1 : vector<8x32xf32>, vector<8x196xf32>, vector<8x32xf32> -> vector<8x260xf32>
    %c0_127 = arith.constant 0 : index
    %c0_128 = arith.constant 0 : index
    %246 = vector.load %arg13[%c0_127, %c0_128] : memref<2x196xf32, #tpu.memory_space<vmem>>, vector<2x196xf32>
    %247 = vector.extract_strided_slice %246 {offsets = [0, 0], sizes = [1, 196], strides = [1, 1]} : vector<2x196xf32> to vector<1x196xf32>
    %248 = vector.extract_strided_slice %246 {offsets = [1, 0], sizes = [1, 196], strides = [1, 1]} : vector<2x196xf32> to vector<1x196xf32>
    %cst_129 = arith.constant 0.000000e+00 : f32
    %249 = vector.broadcast %cst_129 : f32 to vector<8x196xf32>
    %250 = vector.extract_strided_slice %245 {offsets = [0, 17], sizes = [8, 196], strides = [1, 1]} : vector<8x260xf32> to vector<8x196xf32>
    %251 = vector.broadcast %247 : vector<1x196xf32> to vector<8x196xf32>
    %252 = arith.mulf %250, %251 : vector<8x196xf32>
    %c0_130 = arith.constant 0 : index
    %c0_131 = arith.constant 0 : index
    %c0_132 = arith.constant 0 : index
    %253 = vector.load %arg8[%c0_130, %c0_131, %c0_132] : memref<9x8x8xbf16, #tpu.memory_space<vmem>>, vector<1x8x8xbf16>
    %254 = vector.shape_cast %253 : vector<1x8x8xbf16> to vector<8x8xbf16>
    %255 = arith.truncf %252 : vector<8x196xf32> to vector<8x196xbf16>
    %cst_133 = arith.constant dense<0.000000e+00> : vector<8x196xf32>
    %256 = tpu.matmul %254, %255, %cst_133 {dimension_numbers = #tpu.dot_dimension_numbers<[1], [0], [0], [1], [0, 0, 1, 1], [], []>} : vector<8x8xbf16>, vector<8x196xbf16>, vector<8x196xf32> -> vector<8x196xf32>
    %257 = arith.addf %249, %256 : vector<8x196xf32>
    %258 = vector.extract_strided_slice %245 {offsets = [0, 18], sizes = [8, 196], strides = [1, 1]} : vector<8x260xf32> to vector<8x196xf32>
    %c1_134 = arith.constant 1 : index
    %c0_135 = arith.constant 0 : index
    %c0_136 = arith.constant 0 : index
    %259 = vector.load %arg8[%c1_134, %c0_135, %c0_136] : memref<9x8x8xbf16, #tpu.memory_space<vmem>>, vector<1x8x8xbf16>
    %260 = vector.shape_cast %259 : vector<1x8x8xbf16> to vector<8x8xbf16>
    %261 = arith.truncf %258 : vector<8x196xf32> to vector<8x196xbf16>
    %cst_137 = arith.constant dense<0.000000e+00> : vector<8x196xf32>
    %262 = tpu.matmul %260, %261, %cst_137 {dimension_numbers = #tpu.dot_dimension_numbers<[1], [0], [0], [1], [0, 0, 1, 1], [], []>} : vector<8x8xbf16>, vector<8x196xbf16>, vector<8x196xf32> -> vector<8x196xf32>
    %263 = arith.addf %257, %262 : vector<8x196xf32>
    %264 = vector.extract_strided_slice %245 {offsets = [0, 19], sizes = [8, 196], strides = [1, 1]} : vector<8x260xf32> to vector<8x196xf32>
    %265 = vector.broadcast %248 : vector<1x196xf32> to vector<8x196xf32>
    %266 = arith.mulf %264, %265 : vector<8x196xf32>
    %c2_138 = arith.constant 2 : index
    %c0_139 = arith.constant 0 : index
    %c0_140 = arith.constant 0 : index
    %267 = vector.load %arg8[%c2_138, %c0_139, %c0_140] : memref<9x8x8xbf16, #tpu.memory_space<vmem>>, vector<1x8x8xbf16>
    %268 = vector.shape_cast %267 : vector<1x8x8xbf16> to vector<8x8xbf16>
    %269 = arith.truncf %266 : vector<8x196xf32> to vector<8x196xbf16>
    %cst_141 = arith.constant dense<0.000000e+00> : vector<8x196xf32>
    %270 = tpu.matmul %268, %269, %cst_141 {dimension_numbers = #tpu.dot_dimension_numbers<[1], [0], [0], [1], [0, 0, 1, 1], [], []>} : vector<8x8xbf16>, vector<8x196xbf16>, vector<8x196xf32> -> vector<8x196xf32>
    %271 = arith.addf %263, %270 : vector<8x196xf32>
    %272 = vector.extract_strided_slice %245 {offsets = [0, 31], sizes = [8, 196], strides = [1, 1]} : vector<8x260xf32> to vector<8x196xf32>
    %273 = vector.broadcast %247 : vector<1x196xf32> to vector<8x196xf32>
    %274 = arith.mulf %272, %273 : vector<8x196xf32>
    %c3_142 = arith.constant 3 : index
    %c0_143 = arith.constant 0 : index
    %c0_144 = arith.constant 0 : index
    %275 = vector.load %arg8[%c3_142, %c0_143, %c0_144] : memref<9x8x8xbf16, #tpu.memory_space<vmem>>, vector<1x8x8xbf16>
    %276 = vector.shape_cast %275 : vector<1x8x8xbf16> to vector<8x8xbf16>
    %277 = arith.truncf %274 : vector<8x196xf32> to vector<8x196xbf16>
    %cst_145 = arith.constant dense<0.000000e+00> : vector<8x196xf32>
    %278 = tpu.matmul %276, %277, %cst_145 {dimension_numbers = #tpu.dot_dimension_numbers<[1], [0], [0], [1], [0, 0, 1, 1], [], []>} : vector<8x8xbf16>, vector<8x196xbf16>, vector<8x196xf32> -> vector<8x196xf32>
    %279 = arith.addf %271, %278 : vector<8x196xf32>
    %280 = vector.extract_strided_slice %245 {offsets = [0, 32], sizes = [8, 196], strides = [1, 1]} : vector<8x260xf32> to vector<8x196xf32>
    %c4_146 = arith.constant 4 : index
    %c0_147 = arith.constant 0 : index
    %c0_148 = arith.constant 0 : index
    %281 = vector.load %arg8[%c4_146, %c0_147, %c0_148] : memref<9x8x8xbf16, #tpu.memory_space<vmem>>, vector<1x8x8xbf16>
    %282 = vector.shape_cast %281 : vector<1x8x8xbf16> to vector<8x8xbf16>
    %283 = arith.truncf %280 : vector<8x196xf32> to vector<8x196xbf16>
    %cst_149 = arith.constant dense<0.000000e+00> : vector<8x196xf32>
    %284 = tpu.matmul %282, %283, %cst_149 {dimension_numbers = #tpu.dot_dimension_numbers<[1], [0], [0], [1], [0, 0, 1, 1], [], []>} : vector<8x8xbf16>, vector<8x196xbf16>, vector<8x196xf32> -> vector<8x196xf32>
    %285 = arith.addf %279, %284 : vector<8x196xf32>
    %286 = vector.extract_strided_slice %245 {offsets = [0, 33], sizes = [8, 196], strides = [1, 1]} : vector<8x260xf32> to vector<8x196xf32>
    %287 = vector.broadcast %248 : vector<1x196xf32> to vector<8x196xf32>
    %288 = arith.mulf %286, %287 : vector<8x196xf32>
    %c5_150 = arith.constant 5 : index
    %c0_151 = arith.constant 0 : index
    %c0_152 = arith.constant 0 : index
    %289 = vector.load %arg8[%c5_150, %c0_151, %c0_152] : memref<9x8x8xbf16, #tpu.memory_space<vmem>>, vector<1x8x8xbf16>
    %290 = vector.shape_cast %289 : vector<1x8x8xbf16> to vector<8x8xbf16>
    %291 = arith.truncf %288 : vector<8x196xf32> to vector<8x196xbf16>
    %cst_153 = arith.constant dense<0.000000e+00> : vector<8x196xf32>
    %292 = tpu.matmul %290, %291, %cst_153 {dimension_numbers = #tpu.dot_dimension_numbers<[1], [0], [0], [1], [0, 0, 1, 1], [], []>} : vector<8x8xbf16>, vector<8x196xbf16>, vector<8x196xf32> -> vector<8x196xf32>
    %293 = arith.addf %285, %292 : vector<8x196xf32>
    %294 = vector.extract_strided_slice %245 {offsets = [0, 45], sizes = [8, 196], strides = [1, 1]} : vector<8x260xf32> to vector<8x196xf32>
    %295 = vector.broadcast %247 : vector<1x196xf32> to vector<8x196xf32>
    %296 = arith.mulf %294, %295 : vector<8x196xf32>
    %c6_154 = arith.constant 6 : index
    %c0_155 = arith.constant 0 : index
    %c0_156 = arith.constant 0 : index
    %297 = vector.load %arg8[%c6_154, %c0_155, %c0_156] : memref<9x8x8xbf16, #tpu.memory_space<vmem>>, vector<1x8x8xbf16>
    %298 = vector.shape_cast %297 : vector<1x8x8xbf16> to vector<8x8xbf16>
    %299 = arith.truncf %296 : vector<8x196xf32> to vector<8x196xbf16>
    %cst_157 = arith.constant dense<0.000000e+00> : vector<8x196xf32>
    %300 = tpu.matmul %298, %299, %cst_157 {dimension_numbers = #tpu.dot_dimension_numbers<[1], [0], [0], [1], [0, 0, 1, 1], [], []>} : vector<8x8xbf16>, vector<8x196xbf16>, vector<8x196xf32> -> vector<8x196xf32>
    %301 = arith.addf %293, %300 : vector<8x196xf32>
    %302 = vector.extract_strided_slice %245 {offsets = [0, 46], sizes = [8, 196], strides = [1, 1]} : vector<8x260xf32> to vector<8x196xf32>
    %c7_158 = arith.constant 7 : index
    %c0_159 = arith.constant 0 : index
    %c0_160 = arith.constant 0 : index
    %303 = vector.load %arg8[%c7_158, %c0_159, %c0_160] : memref<9x8x8xbf16, #tpu.memory_space<vmem>>, vector<1x8x8xbf16>
    %304 = vector.shape_cast %303 : vector<1x8x8xbf16> to vector<8x8xbf16>
    %305 = arith.truncf %302 : vector<8x196xf32> to vector<8x196xbf16>
    %cst_161 = arith.constant dense<0.000000e+00> : vector<8x196xf32>
    %306 = tpu.matmul %304, %305, %cst_161 {dimension_numbers = #tpu.dot_dimension_numbers<[1], [0], [0], [1], [0, 0, 1, 1], [], []>} : vector<8x8xbf16>, vector<8x196xbf16>, vector<8x196xf32> -> vector<8x196xf32>
    %307 = arith.addf %301, %306 : vector<8x196xf32>
    %308 = vector.extract_strided_slice %245 {offsets = [0, 47], sizes = [8, 196], strides = [1, 1]} : vector<8x260xf32> to vector<8x196xf32>
    %309 = vector.broadcast %248 : vector<1x196xf32> to vector<8x196xf32>
    %310 = arith.mulf %308, %309 : vector<8x196xf32>
    %c8_162 = arith.constant 8 : index
    %c0_163 = arith.constant 0 : index
    %c0_164 = arith.constant 0 : index
    %311 = vector.load %arg8[%c8_162, %c0_163, %c0_164] : memref<9x8x8xbf16, #tpu.memory_space<vmem>>, vector<1x8x8xbf16>
    %312 = vector.shape_cast %311 : vector<1x8x8xbf16> to vector<8x8xbf16>
    %313 = arith.truncf %310 : vector<8x196xf32> to vector<8x196xbf16>
    %cst_165 = arith.constant dense<0.000000e+00> : vector<8x196xf32>
    %314 = tpu.matmul %312, %313, %cst_165 {dimension_numbers = #tpu.dot_dimension_numbers<[1], [0], [0], [1], [0, 0, 1, 1], [], []>} : vector<8x8xbf16>, vector<8x196xbf16>, vector<8x196xf32> -> vector<8x196xf32>
    %315 = arith.addf %307, %314 : vector<8x196xf32>
    %c0_166 = arith.constant 0 : index
    %c0_167 = arith.constant 0 : index
    %316 = vector.load %arg9[%c0_166, %c0_167] : memref<8x1xf32, #tpu.memory_space<vmem>>, vector<8x1xf32>
    %317 = vector.broadcast %316 : vector<8x1xf32> to vector<8x196xf32>
    %318 = arith.addf %315, %317 : vector<8x196xf32>
    %cst_168 = arith.constant 0.000000e+00 : f32
    %319 = vector.broadcast %cst_168 : f32 to vector<8x196xf32>
    %320 = arith.maximumf %318, %319 : vector<8x196xf32>
    %cst_169 = arith.constant 0.000000e+00 : f32
    %321 = vector.broadcast %cst_169 : f32 to vector<8x32xf32>
    %322 = tpu.concatenate %321, %320, %321 in 1 : vector<8x32xf32>, vector<8x196xf32>, vector<8x32xf32> -> vector<8x260xf32>
    %323 = vector.extract_strided_slice %322 {offsets = [0, 33], sizes = [8, 196], strides = [1, 1]} : vector<8x260xf32> to vector<8x196xf32>
    %324 = arith.maximumf %320, %323 : vector<8x196xf32>
    %325 = vector.extract_strided_slice %322 {offsets = [0, 46], sizes = [8, 196], strides = [1, 1]} : vector<8x260xf32> to vector<8x196xf32>
    %326 = arith.maximumf %324, %325 : vector<8x196xf32>
    %327 = vector.extract_strided_slice %322 {offsets = [0, 47], sizes = [8, 196], strides = [1, 1]} : vector<8x260xf32> to vector<8x196xf32>
    %328 = arith.maximumf %326, %327 : vector<8x196xf32>
    %329 = arith.truncf %328 : vector<8x196xf32> to vector<8x196xbf16>
    %c0_170 = arith.constant 0 : index
    %c0_171 = arith.constant 0 : index
    %330 = vector.load %arg15[%c0_170, %c0_171] : memref<196x49xbf16, #tpu.memory_space<vmem>>, vector<196x49xbf16>
    %cst_172 = arith.constant dense<0.000000e+00> : vector<8x49xf32>
    %331 = tpu.matmul %329, %330, %cst_172 {dimension_numbers = #tpu.dot_dimension_numbers<[1], [0], [0], [1], [0, 0, 1, 1], [], []>} : vector<8x196xbf16>, vector<196x49xbf16>, vector<8x49xf32> -> vector<8x49xf32>
    %c0_173 = arith.constant 0 : index
    %c0_174 = arith.constant 0 : index
    %332 = vector.load %arg11[%c0_173, %c0_174] : memref<1x10xf32, #tpu.memory_space<vmem>>, vector<1x10xf32>
    %333 = vector.extract_strided_slice %331 {offsets = [0, 0], sizes = [1, 49], strides = [1, 1]} : vector<8x49xf32> to vector<1x49xf32>
    %334 = arith.truncf %333 : vector<1x49xf32> to vector<1x49xbf16>
    %c0_175 = arith.constant 0 : index
    %c0_176 = arith.constant 0 : index
    %c0_177 = arith.constant 0 : index
    %335 = vector.load %arg10[%c0_175, %c0_176, %c0_177] : memref<8x49x10xbf16, #tpu.memory_space<vmem>>, vector<1x49x10xbf16>
    %336 = vector.shape_cast %335 : vector<1x49x10xbf16> to vector<49x10xbf16>
    %cst_178 = arith.constant dense<0.000000e+00> : vector<1x10xf32>
    %337 = tpu.matmul %334, %336, %cst_178 {dimension_numbers = #tpu.dot_dimension_numbers<[1], [0], [0], [1], [0, 0, 1, 1], [], []>} : vector<1x49xbf16>, vector<49x10xbf16>, vector<1x10xf32> -> vector<1x10xf32>
    %338 = arith.addf %332, %337 : vector<1x10xf32>
    %339 = vector.extract_strided_slice %331 {offsets = [1, 0], sizes = [1, 49], strides = [1, 1]} : vector<8x49xf32> to vector<1x49xf32>
    %340 = arith.truncf %339 : vector<1x49xf32> to vector<1x49xbf16>
    %c1_179 = arith.constant 1 : index
    %c0_180 = arith.constant 0 : index
    %c0_181 = arith.constant 0 : index
    %341 = vector.load %arg10[%c1_179, %c0_180, %c0_181] : memref<8x49x10xbf16, #tpu.memory_space<vmem>>, vector<1x49x10xbf16>
    %342 = vector.shape_cast %341 : vector<1x49x10xbf16> to vector<49x10xbf16>
    %cst_182 = arith.constant dense<0.000000e+00> : vector<1x10xf32>
    %343 = tpu.matmul %340, %342, %cst_182 {dimension_numbers = #tpu.dot_dimension_numbers<[1], [0], [0], [1], [0, 0, 1, 1], [], []>} : vector<1x49xbf16>, vector<49x10xbf16>, vector<1x10xf32> -> vector<1x10xf32>
    %344 = arith.addf %338, %343 : vector<1x10xf32>
    %345 = vector.extract_strided_slice %331 {offsets = [2, 0], sizes = [1, 49], strides = [1, 1]} : vector<8x49xf32> to vector<1x49xf32>
    %346 = arith.truncf %345 : vector<1x49xf32> to vector<1x49xbf16>
    %c2_183 = arith.constant 2 : index
    %c0_184 = arith.constant 0 : index
    %c0_185 = arith.constant 0 : index
    %347 = vector.load %arg10[%c2_183, %c0_184, %c0_185] : memref<8x49x10xbf16, #tpu.memory_space<vmem>>, vector<1x49x10xbf16>
    %348 = vector.shape_cast %347 : vector<1x49x10xbf16> to vector<49x10xbf16>
    %cst_186 = arith.constant dense<0.000000e+00> : vector<1x10xf32>
    %349 = tpu.matmul %346, %348, %cst_186 {dimension_numbers = #tpu.dot_dimension_numbers<[1], [0], [0], [1], [0, 0, 1, 1], [], []>} : vector<1x49xbf16>, vector<49x10xbf16>, vector<1x10xf32> -> vector<1x10xf32>
    %350 = arith.addf %344, %349 : vector<1x10xf32>
    %351 = vector.extract_strided_slice %331 {offsets = [3, 0], sizes = [1, 49], strides = [1, 1]} : vector<8x49xf32> to vector<1x49xf32>
    %352 = arith.truncf %351 : vector<1x49xf32> to vector<1x49xbf16>
    %c3_187 = arith.constant 3 : index
    %c0_188 = arith.constant 0 : index
    %c0_189 = arith.constant 0 : index
    %353 = vector.load %arg10[%c3_187, %c0_188, %c0_189] : memref<8x49x10xbf16, #tpu.memory_space<vmem>>, vector<1x49x10xbf16>
    %354 = vector.shape_cast %353 : vector<1x49x10xbf16> to vector<49x10xbf16>
    %cst_190 = arith.constant dense<0.000000e+00> : vector<1x10xf32>
    %355 = tpu.matmul %352, %354, %cst_190 {dimension_numbers = #tpu.dot_dimension_numbers<[1], [0], [0], [1], [0, 0, 1, 1], [], []>} : vector<1x49xbf16>, vector<49x10xbf16>, vector<1x10xf32> -> vector<1x10xf32>
    %356 = arith.addf %350, %355 : vector<1x10xf32>
    %357 = vector.extract_strided_slice %331 {offsets = [4, 0], sizes = [1, 49], strides = [1, 1]} : vector<8x49xf32> to vector<1x49xf32>
    %358 = arith.truncf %357 : vector<1x49xf32> to vector<1x49xbf16>
    %c4_191 = arith.constant 4 : index
    %c0_192 = arith.constant 0 : index
    %c0_193 = arith.constant 0 : index
    %359 = vector.load %arg10[%c4_191, %c0_192, %c0_193] : memref<8x49x10xbf16, #tpu.memory_space<vmem>>, vector<1x49x10xbf16>
    %360 = vector.shape_cast %359 : vector<1x49x10xbf16> to vector<49x10xbf16>
    %cst_194 = arith.constant dense<0.000000e+00> : vector<1x10xf32>
    %361 = tpu.matmul %358, %360, %cst_194 {dimension_numbers = #tpu.dot_dimension_numbers<[1], [0], [0], [1], [0, 0, 1, 1], [], []>} : vector<1x49xbf16>, vector<49x10xbf16>, vector<1x10xf32> -> vector<1x10xf32>
    %362 = arith.addf %356, %361 : vector<1x10xf32>
    %363 = vector.extract_strided_slice %331 {offsets = [5, 0], sizes = [1, 49], strides = [1, 1]} : vector<8x49xf32> to vector<1x49xf32>
    %364 = arith.truncf %363 : vector<1x49xf32> to vector<1x49xbf16>
    %c5_195 = arith.constant 5 : index
    %c0_196 = arith.constant 0 : index
    %c0_197 = arith.constant 0 : index
    %365 = vector.load %arg10[%c5_195, %c0_196, %c0_197] : memref<8x49x10xbf16, #tpu.memory_space<vmem>>, vector<1x49x10xbf16>
    %366 = vector.shape_cast %365 : vector<1x49x10xbf16> to vector<49x10xbf16>
    %cst_198 = arith.constant dense<0.000000e+00> : vector<1x10xf32>
    %367 = tpu.matmul %364, %366, %cst_198 {dimension_numbers = #tpu.dot_dimension_numbers<[1], [0], [0], [1], [0, 0, 1, 1], [], []>} : vector<1x49xbf16>, vector<49x10xbf16>, vector<1x10xf32> -> vector<1x10xf32>
    %368 = arith.addf %362, %367 : vector<1x10xf32>
    %369 = vector.extract_strided_slice %331 {offsets = [6, 0], sizes = [1, 49], strides = [1, 1]} : vector<8x49xf32> to vector<1x49xf32>
    %370 = arith.truncf %369 : vector<1x49xf32> to vector<1x49xbf16>
    %c6_199 = arith.constant 6 : index
    %c0_200 = arith.constant 0 : index
    %c0_201 = arith.constant 0 : index
    %371 = vector.load %arg10[%c6_199, %c0_200, %c0_201] : memref<8x49x10xbf16, #tpu.memory_space<vmem>>, vector<1x49x10xbf16>
    %372 = vector.shape_cast %371 : vector<1x49x10xbf16> to vector<49x10xbf16>
    %cst_202 = arith.constant dense<0.000000e+00> : vector<1x10xf32>
    %373 = tpu.matmul %370, %372, %cst_202 {dimension_numbers = #tpu.dot_dimension_numbers<[1], [0], [0], [1], [0, 0, 1, 1], [], []>} : vector<1x49xbf16>, vector<49x10xbf16>, vector<1x10xf32> -> vector<1x10xf32>
    %374 = arith.addf %368, %373 : vector<1x10xf32>
    %375 = vector.extract_strided_slice %331 {offsets = [7, 0], sizes = [1, 49], strides = [1, 1]} : vector<8x49xf32> to vector<1x49xf32>
    %376 = arith.truncf %375 : vector<1x49xf32> to vector<1x49xbf16>
    %c7_203 = arith.constant 7 : index
    %c0_204 = arith.constant 0 : index
    %c0_205 = arith.constant 0 : index
    %377 = vector.load %arg10[%c7_203, %c0_204, %c0_205] : memref<8x49x10xbf16, #tpu.memory_space<vmem>>, vector<1x49x10xbf16>
    %378 = vector.shape_cast %377 : vector<1x49x10xbf16> to vector<49x10xbf16>
    %cst_206 = arith.constant dense<0.000000e+00> : vector<1x10xf32>
    %379 = tpu.matmul %376, %378, %cst_206 {dimension_numbers = #tpu.dot_dimension_numbers<[1], [0], [0], [1], [0, 0, 1, 1], [], []>} : vector<1x49xbf16>, vector<49x10xbf16>, vector<1x10xf32> -> vector<1x10xf32>
    %380 = arith.addf %374, %379 : vector<1x10xf32>
    %c0_207 = arith.constant 0 : index
    %c0_208 = arith.constant 0 : index
    %c0_209 = arith.constant 0 : index
    %381 = vector.load %arg16[%c0_207, %c0_208, %c0_209] : memref<1x1x10xf32, #tpu.memory_space<vmem>>, vector<1x1x10xf32>
    %382 = vector.shape_cast %381 : vector<1x1x10xf32> to vector<1x10xf32>
    %383 = vector.shape_cast %380 : vector<1x10xf32> to vector<1x1x10xf32>
    tpu.vector_store %arg16[%c0_207, %c0_208, %c0_209], %383 {strides = array<i32>} : memref<1x1x10xf32, #tpu.memory_space<vmem>>, vector<1x1x10xf32>,
    return
  }
  func.func @transform_0(%arg0: i32) -> (i32, i32, i32) {
    %c0_i32 = arith.constant 0 : i32
    %c0_i32_0 = arith.constant 0 : i32
    %c0_i32_1 = arith.constant 0 : i32
    return %arg0, %c0_i32, %c0_i32_0 : i32, i32, i32
  }
  func.func @transform_1(%arg0: i32) -> (i32, i32, i32) {
    %c0_i32 = arith.constant 0 : i32
    %c0_i32_0 = arith.constant 0 : i32
    %c0_i32_1 = arith.constant 0 : i32
    %c0_i32_2 = arith.constant 0 : i32
    return %c0_i32, %c0_i32_0, %c0_i32_1 : i32, i32, i32
  }
  func.func @transform_2(%arg0: i32) -> (i32, i32) {
    %c0_i32 = arith.constant 0 : i32
    %c0_i32_0 = arith.constant 0 : i32
    %c0_i32_1 = arith.constant 0 : i32
    return %c0_i32, %c0_i32_0 : i32, i32
  }
  func.func @transform_3(%arg0: i32) -> (i32, i32, i32) {
    %c0_i32 = arith.constant 0 : i32
    %c0_i32_0 = arith.constant 0 : i32
    %c0_i32_1 = arith.constant 0 : i32
    %c0_i32_2 = arith.constant 0 : i32
    return %c0_i32, %c0_i32_0, %c0_i32_1 : i32, i32, i32
  }
  func.func @transform_4(%arg0: i32) -> (i32, i32) {
    %c0_i32 = arith.constant 0 : i32
    %c0_i32_0 = arith.constant 0 : i32
    %c0_i32_1 = arith.constant 0 : i32
    return %c0_i32, %c0_i32_0 : i32, i32
  }
  func.func @transform_5(%arg0: i32) -> (i32, i32, i32) {
    %c0_i32 = arith.constant 0 : i32
    %c0_i32_0 = arith.constant 0 : i32
    %c0_i32_1 = arith.constant 0 : i32
    %c0_i32_2 = arith.constant 0 : i32
    return %c0_i32, %c0_i32_0, %c0_i32_1 : i32, i32, i32
  }
  func.func @transform_6(%arg0: i32) -> (i32, i32) {
    %c0_i32 = arith.constant 0 : i32
    %c0_i32_0 = arith.constant 0 : i32
    %c0_i32_1 = arith.constant 0 : i32
    return %c0_i32, %c0_i32_0 : i32, i32
  }
  func.func @transform_7(%arg0: i32) -> (i32, i32, i32) {
    %c0_i32 = arith.constant 0 : i32
    %c0_i32_0 = arith.constant 0 : i32
    %c0_i32_1 = arith.constant 0 : i32
    %c0_i32_2 = arith.constant 0 : i32
    return %c0_i32, %c0_i32_0, %c0_i32_1 : i32, i32, i32
  }
  func.func @transform_8(%arg0: i32) -> (i32, i32) {
    %c0_i32 = arith.constant 0 : i32
    %c0_i32_0 = arith.constant 0 : i32
    %c0_i32_1 = arith.constant 0 : i32
    return %c0_i32, %c0_i32_0 : i32, i32
  }
  func.func @transform_9(%arg0: i32) -> (i32, i32, i32) {
    %c0_i32 = arith.constant 0 : i32
    %c0_i32_0 = arith.constant 0 : i32
    %c0_i32_1 = arith.constant 0 : i32
    %c0_i32_2 = arith.constant 0 : i32
    return %c0_i32, %c0_i32_0, %c0_i32_1 : i32, i32, i32
  }
  func.func @transform_10(%arg0: i32) -> (i32, i32) {
    %c0_i32 = arith.constant 0 : i32
    %c0_i32_0 = arith.constant 0 : i32
    %c0_i32_1 = arith.constant 0 : i32
    return %c0_i32, %c0_i32_0 : i32, i32
  }
  func.func @transform_11(%arg0: i32) -> (i32, i32) {
    %c0_i32 = arith.constant 0 : i32
    %c0_i32_0 = arith.constant 0 : i32
    %c0_i32_1 = arith.constant 0 : i32
    return %c0_i32, %c0_i32_0 : i32, i32
  }
  func.func @transform_12(%arg0: i32) -> (i32, i32) {
    %c0_i32 = arith.constant 0 : i32
    %c0_i32_0 = arith.constant 0 : i32
    %c0_i32_1 = arith.constant 0 : i32
    return %c0_i32, %c0_i32_0 : i32, i32
  }
  func.func @transform_13(%arg0: i32) -> (i32, i32) {
    %c0_i32 = arith.constant 0 : i32
    %c0_i32_0 = arith.constant 0 : i32
    %c0_i32_1 = arith.constant 0 : i32
    return %c0_i32, %c0_i32_0 : i32, i32
  }
  func.func @transform_14(%arg0: i32) -> (i32, i32) {
    %c0_i32 = arith.constant 0 : i32
    %c0_i32_0 = arith.constant 0 : i32
    %c0_i32_1 = arith.constant 0 : i32
    return %c0_i32, %c0_i32_0 : i32, i32
  }
  func.func @transform_15(%arg0: i32) -> (i32, i32, i32) {
    %c0_i32 = arith.constant 0 : i32
    %c0_i32_0 = arith.constant 0 : i32
    %c0_i32_1 = arith.constant 0 : i32
    return %arg0, %c0_i32, %c0_i32_0 : i32, i32, i32
  }
}

</mosaic_0001>

<llo_original>
// kernel: classification_forward.1
$region0: #{classification_forward.1}
  #allocation0 [shape = 'u32[]', space=smem, size = 0x4, offset = 0x4, fixed_abs, tag = 'smem constant byte address 0x4 - core index']
  #allocation1 [shape = 'u32[144,128]{1,0:T(1,128)}', space=vmem, size = 0x12000, scoped, tag = 'internal scratch']
  %s0 = inlined_call_operand.vmem [shape: f32[2,4,784], index: 0, kind: input, shape index: {}]
  %s1 = inlined_call_operand.vmem [shape: bf16[9,8,4], index: 1, kind: input, shape index: {}]
  %s2 = inlined_call_operand.vmem [shape: f32[8,1], index: 2, kind: input, shape index: {}]
  %s3 = inlined_call_operand.vmem [shape: bf16[9,8,8], index: 3, kind: input, shape index: {}]
  %s4 = inlined_call_operand.vmem [shape: f32[8,1], index: 4, kind: input, shape index: {}]
  %s5 = inlined_call_operand.vmem [shape: bf16[9,8,8], index: 5, kind: input, shape index: {}]
  %s6 = inlined_call_operand.vmem [shape: f32[8,1], index: 6, kind: input, shape index: {}]
  %s7 = inlined_call_operand.vmem [shape: bf16[9,8,8], index: 7, kind: input, shape index: {}]
  %s8 = inlined_call_operand.vmem [shape: f32[8,1], index: 8, kind: input, shape index: {}]
  %s9 = inlined_call_operand.vmem [shape: bf16[8,49,10], index: 9, kind: input, shape index: {}]
  %s10 = inlined_call_operand.vmem [shape: f32[1,10], index: 10, kind: input, shape index: {}]
  %s11 = inlined_call_operand.vmem [shape: f32[2,784], index: 11, kind: input, shape index: {}]
  %s12 = inlined_call_operand.vmem [shape: f32[2,196], index: 12, kind: input, shape index: {}]
  %s13 = inlined_call_operand.vmem [shape: bf16[784,196], index: 13, kind: input, shape index: {}]
  %s14 = inlined_call_operand.vmem [shape: bf16[196,49], index: 14, kind: input, shape index: {}]
  %s15 = inlined_call_operand.hbm [shape: f32[2,1,10], index: 15, kind: output, shape index: {}]
  %s16 = sld [smem:[#allocation0]]
  $region93: #{classification_forward.1} parent=0
    _
  %s18 = ssub.s32 1, %s16
  %s19 = scalar_select 0, %s18, %s16
  $region1: #{classification_forward.1} parent=0
    #allocation2 [shape = 'u8[1024]{0}', space=vmem, size = 0x400, scoped, tag = 'output window, operand 0']
    #allocation3 [shape = 's32[2]{0}', space=sflag, size = 0x8, scoped, tag = 'scoped memory for classification_forward.1']
    %20 = vsyncpa [#allocation3], 0
    %s21 = scalar_lea.sflag [#allocation3], 1
    %22 = vsyncpa %s21, 0
    loop: start=0, step=1, limit=4
    $region2: #{classification_forward.1} parent=1 // loop_pre_header
      _
    $region3: #{classification_forward.1} parent=1 // loop_header
      %s24 = sphi 0, %s28
      %p25 = scmp.ge.s32.totalorder %s24, 4
      %s34 = sphi 0, %s36
      %s37 = sphi 0, %s34
      %s38 = sphi 0, %s37
      %s54 = sphi 0, %s38
      %s58 = sphi 0, %s58
      %s60 = sphi 0, %s58
      %s61 = sphi 0, %s60
      %s75 = sphi 0, %s61
      %s79 = sphi 0, %s79
      %s81 = sphi 0, %s79
      %s82 = sphi 0, %s81
      %s96 = sphi 0, %s82
      %s100 = sphi 0, %s100
      %s102 = sphi 0, %s100
      %s103 = sphi 0, %s102
      %s117 = sphi 0, %s103
      %s121 = sphi 0, %s121
      %s123 = sphi 0, %s121
      %s124 = sphi 0, %s123
      %s138 = sphi 0, %s124
      %s142 = sphi 0, %s142
      %s144 = sphi 0, %s142
      %s145 = sphi 0, %s144
      %s159 = sphi 0, %s145
      %s163 = sphi 0, %s163
      %s165 = sphi 0, %s163
      %s166 = sphi 0, %s165
      %s180 = sphi 0, %s166
      %s184 = sphi 0, %s184
      %s186 = sphi 0, %s184
      %s187 = sphi 0, %s186
      %s201 = sphi 0, %s187
      %s205 = sphi 0, %s205
      %s207 = sphi 0, %s205
      %s208 = sphi 0, %s207
      %s222 = sphi 0, %s208
      %s226 = sphi 0, %s226
      %s228 = sphi 0, %s226
      %s229 = sphi 0, %s228
      %s243 = sphi 0, %s229
      %s247 = sphi 0, %s247
      %s249 = sphi 0, %s247
      %s250 = sphi 0, %s249
      %s264 = sphi 0, %s250
      %s268 = sphi 0, %s268
      %s270 = sphi 0, %s268
      %s271 = sphi 0, %s270
      %s285 = sphi 0, %s271
      %s289 = sphi 0, %s289
      %s291 = sphi 0, %s289
      %s292 = sphi 0, %s291
      %s306 = sphi 0, %s292
      %s310 = sphi 0, %s310
      %s312 = sphi 0, %s310
      %s313 = sphi 0, %s312
      %s327 = sphi 0, %s313
      %s331 = sphi 0, %s331
      %s333 = sphi 0, %s331
      %s334 = sphi 0, %s333
      %s348 = sphi 0, %s334
      %s354 = sphi 0, %s356
      %s357 = sphi 0, %s354
      %s358 = sphi 0, %s357
      %s374 = sphi 0, %s358
    $region4: #{classification_forward.1} parent=1 // loop_header_branch
      %27 = sbr.rel (%p25) target = $region8
    $region5: #{classification_forward.1} parent=1 // loop_body
      %s29 = ssub.s32 %s24, 1
      %s30 = ssub.s32 %s24, 2
      %s31 = sadd.s32 %s24, 1
      %s32 = ssub.s32 %s24, %s31
      %p33 = scmp.eq.s32.totalorder %s32, 0
      %s35 = sadd.s32 %s34, 1
      %s36 = scalar_select %p33, %s34, %s35
      %p39 = pneg %p33
      %p40 = scmp.eq.s32.totalorder %s24, 1
      %p41 = por %p39, %p40
      %p42 = scmp.ne.s32.totalorder %s34, %s37
      %p43 = scmp.eq.s32.totalorder %s24, 0
      %p44 = por %p42, %p43
      %p45 = scmp.ne.s32.totalorder %s34, %s37
      %p46 = scmp.eq.s32.totalorder %s29, 1
      %p47 = por %p45, %p46
      %p48 = scmp.ne.s32.totalorder %s37, %s38
      %p49 = scmp.eq.s32.totalorder %s29, 0
      %p50 = por %p48, %p49
      %p51 = scmp.ne.s32.totalorder %s37, %s38
      %p52 = scmp.eq.s32.totalorder %s30, 1
      %p53 = por %p51, %p52
      %p55 = scmp.ne.s32.totalorder %s38, %s54
      %p56 = scmp.eq.s32.totalorder %s30, 0
      %p57 = por %p55, %p56
      %s59 = sadd.s32 %s58, 1
      %p62 = scmp.eq.s32.totalorder %s24, 1
      %p63 = scmp.ne.s32.totalorder %s58, %s60
      %p64 = scmp.eq.s32.totalorder %s24, 0
      %p65 = por %p63, %p64
      %p66 = scmp.ne.s32.totalorder %s58, %s60
      %p67 = scmp.eq.s32.totalorder %s29, 1
      %p68 = por %p66, %p67
      %p69 = scmp.ne.s32.totalorder %s60, %s61
      %p70 = scmp.eq.s32.totalorder %s29, 0
      %p71 = por %p69, %p70
      %p72 = scmp.ne.s32.totalorder %s60, %s61
      %p73 = scmp.eq.s32.totalorder %s30, 1
      %p74 = por %p72, %p73
      %p76 = scmp.ne.s32.totalorder %s61, %s75
      %p77 = scmp.eq.s32.totalorder %s30, 0
      %p78 = por %p76, %p77
      %s80 = sadd.s32 %s79, 1
      %p83 = scmp.eq.s32.totalorder %s24, 1
      %p84 = scmp.ne.s32.totalorder %s79, %s81
      %p85 = scmp.eq.s32.totalorder %s24, 0
      %p86 = por %p84, %p85
      %p87 = scmp.ne.s32.totalorder %s79, %s81
      %p88 = scmp.eq.s32.totalorder %s29, 1
      %p89 = por %p87, %p88
      %p90 = scmp.ne.s32.totalorder %s81, %s82
      %p91 = scmp.eq.s32.totalorder %s29, 0
      %p92 = por %p90, %p91
      %p93 = scmp.ne.s32.totalorder %s81, %s82
      %p94 = scmp.eq.s32.totalorder %s30, 1
      %p95 = por %p93, %p94
      %p97 = scmp.ne.s32.totalorder %s82, %s96
      %p98 = scmp.eq.s32.totalorder %s30, 0
      %p99 = por %p97, %p98
      %s101 = sadd.s32 %s100, 1
      %p104 = scmp.eq.s32.totalorder %s24, 1
      %p105 = scmp.ne.s32.totalorder %s100, %s102
      %p106 = scmp.eq.s32.totalorder %s24, 0
      %p107 = por %p105, %p106
      %p108 = scmp.ne.s32.totalorder %s100, %s102
      %p109 = scmp.eq.s32.totalorder %s29, 1
      %p110 = por %p108, %p109
      %p111 = scmp.ne.s32.totalorder %s102, %s103
      %p112 = scmp.eq.s32.totalorder %s29, 0
      %p113 = por %p111, %p112
      %p114 = scmp.ne.s32.totalorder %s102, %s103
      %p115 = scmp.eq.s32.totalorder %s30, 1
      %p116 = por %p114, %p115
      %p118 = scmp.ne.s32.totalorder %s103, %s117
      %p119 = scmp.eq.s32.totalorder %s30, 0
      %p120 = por %p118, %p119
      %s122 = sadd.s32 %s121, 1
      %p125 = scmp.eq.s32.totalorder %s24, 1
      %p126 = scmp.ne.s32.totalorder %s121, %s123
      %p127 = scmp.eq.s32.totalorder %s24, 0
      %p128 = por %p126, %p127
      %p129 = scmp.ne.s32.totalorder %s121, %s123
      %p130 = scmp.eq.s32.totalorder %s29, 1
      %p131 = por %p129, %p130
      %p132 = scmp.ne.s32.totalorder %s123, %s124
      %p133 = scmp.eq.s32.totalorder %s29, 0
      %p134 = por %p132, %p133
      %p135 = scmp.ne.s32.totalorder %s123, %s124
      %p136 = scmp.eq.s32.totalorder %s30, 1
      %p137 = por %p135, %p136
      %p139 = scmp.ne.s32.totalorder %s124, %s138
      %p140 = scmp.eq.s32.totalorder %s30, 0
      %p141 = por %p139, %p140
      %s143 = sadd.s32 %s142, 1
      %p146 = scmp.eq.s32.totalorder %s24, 1
      %p147 = scmp.ne.s32.totalorder %s142, %s144
      %p148 = scmp.eq.s32.totalorder %s24, 0
      %p149 = por %p147, %p148
      %p150 = scmp.ne.s32.totalorder %s142, %s144
      %p151 = scmp.eq.s32.totalorder %s29, 1
      %p152 = por %p150, %p151
      %p153 = scmp.ne.s32.totalorder %s144, %s145
      %p154 = scmp.eq.s32.totalorder %s29, 0
      %p155 = por %p153, %p154
      %p156 = scmp.ne.s32.totalorder %s144, %s145
      %p157 = scmp.eq.s32.totalorder %s30, 1
      %p158 = por %p156, %p157
      %p160 = scmp.ne.s32.totalorder %s145, %s159
      %p161 = scmp.eq.s32.totalorder %s30, 0
      %p162 = por %p160, %p161
      %s164 = sadd.s32 %s163, 1
      %p167 = scmp.eq.s32.totalorder %s24, 1
      %p168 = scmp.ne.s32.totalorder %s163, %s165
      %p169 = scmp.eq.s32.totalorder %s24, 0
      %p170 = por %p168, %p169
      %p171 = scmp.ne.s32.totalorder %s163, %s165
      %p172 = scmp.eq.s32.totalorder %s29, 1
      %p173 = por %p171, %p172
      %p174 = scmp.ne.s32.totalorder %s165, %s166
      %p175 = scmp.eq.s32.totalorder %s29, 0
      %p176 = por %p174, %p175
      %p177 = scmp.ne.s32.totalorder %s165, %s166
      %p178 = scmp.eq.s32.totalorder %s30, 1
      %p179 = por %p177, %p178
      %p181 = scmp.ne.s32.totalorder %s166, %s180
      %p182 = scmp.eq.s32.totalorder %s30, 0
      %p183 = por %p181, %p182
      %s185 = sadd.s32 %s184, 1
      %p188 = scmp.eq.s32.totalorder %s24, 1
      %p189 = scmp.ne.s32.totalorder %s184, %s186
      %p190 = scmp.eq.s32.totalorder %s24, 0
      %p191 = por %p189, %p190
      %p192 = scmp.ne.s32.totalorder %s184, %s186
      %p193 = scmp.eq.s32.totalorder %s29, 1
      %p194 = por %p192, %p193
      %p195 = scmp.ne.s32.totalorder %s186, %s187
      %p196 = scmp.eq.s32.totalorder %s29, 0
      %p197 = por %p195, %p196
      %p198 = scmp.ne.s32.totalorder %s186, %s187
      %p199 = scmp.eq.s32.totalorder %s30, 1
      %p200 = por %p198, %p199
      %p202 = scmp.ne.s32.totalorder %s187, %s201
      %p203 = scmp.eq.s32.totalorder %s30, 0
      %p204 = por %p202, %p203
      %s206 = sadd.s32 %s205, 1
      %p209 = scmp.eq.s32.totalorder %s24, 1
      %p210 = scmp.ne.s32.totalorder %s205, %s207
      %p211 = scmp.eq.s32.totalorder %s24, 0
      %p212 = por %p210, %p211
      %p213 = scmp.ne.s32.totalorder %s205, %s207
      %p214 = scmp.eq.s32.totalorder %s29, 1
      %p215 = por %p213, %p214
      %p216 = scmp.ne.s32.totalorder %s207, %s208
      %p217 = scmp.eq.s32.totalorder %s29, 0
      %p218 = por %p216, %p217
      %p219 = scmp.ne.s32.totalorder %s207, %s208
      %p220 = scmp.eq.s32.totalorder %s30, 1
      %p221 = por %p219, %p220
      %p223 = scmp.ne.s32.totalorder %s208, %s222
      %p224 = scmp.eq.s32.totalorder %s30, 0
      %p225 = por %p223, %p224
      %s227 = sadd.s32 %s226, 1
      %p230 = scmp.eq.s32.totalorder %s24, 1
      %p231 = scmp.ne.s32.totalorder %s226, %s228
      %p232 = scmp.eq.s32.totalorder %s24, 0
      %p233 = por %p231, %p232
      %p234 = scmp.ne.s32.totalorder %s226, %s228
      %p235 = scmp.eq.s32.totalorder %s29, 1
      %p236 = por %p234, %p235
      %p237 = scmp.ne.s32.totalorder %s228, %s229
      %p238 = scmp.eq.s32.totalorder %s29, 0
      %p239 = por %p237, %p238
      %p240 = scmp.ne.s32.totalorder %s228, %s229
      %p241 = scmp.eq.s32.totalorder %s30, 1
      %p242 = por %p240, %p241
      %p244 = scmp.ne.s32.totalorder %s229, %s243
      %p245 = scmp.eq.s32.totalorder %s30, 0
      %p246 = por %p244, %p245
      %s248 = sadd.s32 %s247, 1
      %p251 = scmp.eq.s32.totalorder %s24, 1
      %p252 = scmp.ne.s32.totalorder %s247, %s249
      %p253 = scmp.eq.s32.totalorder %s24, 0
      %p254 = por %p252, %p253
      %p255 = scmp.ne.s32.totalorder %s247, %s249
      %p256 = scmp.eq.s32.totalorder %s29, 1
      %p257 = por %p255, %p256
      %p258 = scmp.ne.s32.totalorder %s249, %s250
      %p259 = scmp.eq.s32.totalorder %s29, 0
      %p260 = por %p258, %p259
      %p261 = scmp.ne.s32.totalorder %s249, %s250
      %p262 = scmp.eq.s32.totalorder %s30, 1
      %p263 = por %p261, %p262
      %p265 = scmp.ne.s32.totalorder %s250, %s264
      %p266 = scmp.eq.s32.totalorder %s30, 0
      %p267 = por %p265, %p266
      %s269 = sadd.s32 %s268, 1
      %p272 = scmp.eq.s32.totalorder %s24, 1
      %p273 = scmp.ne.s32.totalorder %s268, %s270
      %p274 = scmp.eq.s32.totalorder %s24, 0
      %p275 = por %p273, %p274
      %p276 = scmp.ne.s32.totalorder %s268, %s270
      %p277 = scmp.eq.s32.totalorder %s29, 1
      %p278 = por %p276, %p277
      %p279 = scmp.ne.s32.totalorder %s270, %s271
      %p280 = scmp.eq.s32.totalorder %s29, 0
      %p281 = por %p279, %p280
      %p282 = scmp.ne.s32.totalorder %s270, %s271
      %p283 = scmp.eq.s32.totalorder %s30, 1
      %p284 = por %p282, %p283
      %p286 = scmp.ne.s32.totalorder %s271, %s285
      %p287 = scmp.eq.s32.totalorder %s30, 0
      %p288 = por %p286, %p287
      %s290 = sadd.s32 %s289, 1
      %p293 = scmp.eq.s32.totalorder %s24, 1
      %p294 = scmp.ne.s32.totalorder %s289, %s291
      %p295 = scmp.eq.s32.totalorder %s24, 0
      %p296 = por %p294, %p295
      %p297 = scmp.ne.s32.totalorder %s289, %s291
      %p298 = scmp.eq.s32.totalorder %s29, 1
      %p299 = por %p297, %p298
      %p300 = scmp.ne.s32.totalorder %s291, %s292
      %p301 = scmp.eq.s32.totalorder %s29, 0
      %p302 = por %p300, %p301
      %p303 = scmp.ne.s32.totalorder %s291, %s292
      %p304 = scmp.eq.s32.totalorder %s30, 1
      %p305 = por %p303, %p304
      %p307 = scmp.ne.s32.totalorder %s292, %s306
      %p308 = scmp.eq.s32.totalorder %s30, 0
      %p309 = por %p307, %p308
      %s311 = sadd.s32 %s310, 1
      %p314 = scmp.eq.s32.totalorder %s24, 1
      %p315 = scmp.ne.s32.totalorder %s310, %s312
      %p316 = scmp.eq.s32.totalorder %s24, 0
      %p317 = por %p315, %p316
      %p318 = scmp.ne.s32.totalorder %s310, %s312
      %p319 = scmp.eq.s32.totalorder %s29, 1
      %p320 = por %p318, %p319
      %p321 = scmp.ne.s32.totalorder %s312, %s313
      %p322 = scmp.eq.s32.totalorder %s29, 0
      %p323 = por %p321, %p322
      %p324 = scmp.ne.s32.totalorder %s312, %s313
      %p325 = scmp.eq.s32.totalorder %s30, 1
      %p326 = por %p324, %p325
      %p328 = scmp.ne.s32.totalorder %s313, %s327
      %p329 = scmp.eq.s32.totalorder %s30, 0
      %p330 = por %p328, %p329
      %s332 = sadd.s32 %s331, 1
      %p335 = scmp.eq.s32.totalorder %s24, 1
      %p336 = scmp.ne.s32.totalorder %s331, %s333
      %p337 = scmp.eq.s32.totalorder %s24, 0
      %p338 = por %p336, %p337
      %p339 = scmp.ne.s32.totalorder %s331, %s333
      %p340 = scmp.eq.s32.totalorder %s29, 1
      %p341 = por %p339, %p340
      %p342 = scmp.ne.s32.totalorder %s333, %s334
      %p343 = scmp.eq.s32.totalorder %s29, 0
      %p344 = por %p342, %p343
      %p345 = scmp.ne.s32.totalorder %s333, %s334
      %p346 = scmp.eq.s32.totalorder %s30, 1
      %p347 = por %p345, %p346
      %p349 = scmp.ne.s32.totalorder %s334, %s348
      %p350 = scmp.eq.s32.totalorder %s30, 0
      %p351 = por %p349, %p350
      %s352 = ssub.s32 %s24, %s31
      %p353 = scmp.eq.s32.totalorder %s352, 0
      %s355 = sadd.s32 %s354, 1
      %s356 = scalar_select %p353, %s354, %s355
      %p359 = pneg %p353
      %p360 = scmp.eq.s32.totalorder %s24, 1
      %p361 = por %p359, %p360
      %p362 = scmp.ne.s32.totalorder %s354, %s357
      %p363 = scmp.eq.s32.totalorder %s24, 0
      %p364 = por %p362, %p363
      %p365 = scmp.ne.s32.totalorder %s354, %s357
      %p366 = scmp.eq.s32.totalorder %s29, 1
      %p367 = por %p365, %p366
      %p368 = scmp.ne.s32.totalorder %s357, %s358
      %p369 = scmp.eq.s32.totalorder %s29, 0
      %p370 = por %p368, %p369
      %p371 = scmp.ne.s32.totalorder %s357, %s358
      %p372 = scmp.eq.s32.totalorder %s30, 1
      %p373 = por %p371, %p372
      %p375 = scmp.ne.s32.totalorder %s358, %s374
      %p376 = scmp.eq.s32.totalorder %s30, 0
      %p377 = por %p375, %p376
      %p378 = scmp.le.s32.totalorder 1, %s24
      %p379 = scmp.lt.s32.totalorder %s24, 3
      %p380 = pnand %p378, %p379
      %p381 = pneg %p380
      // Predicated region
      $region9: #{classification_forward.1} parent=5 // pred_check
        _
      $region10: #{classification_forward.1} parent=5 // pred_check_branch
        %383 = sbr.rel (%p380) target = $region12
      $region11: #{classification_forward.1} parent=5 // pred_region
        %s384 = ssub.s32 %s24, 1
        // Predicated region
        $region13: #{classification_forward.1} parent=11 // pred_check
          %p385 = pneg %p71
        $region14: #{classification_forward.1} parent=11 // pred_check_branch
          %387 = sbr.rel (%p385) target = $region16
        $region15: #{classification_forward.1} parent=11 // pred_region
          _
        $region16: #{classification_forward.1} parent=11 // pred_fallthru
          _
        // Predicated region
        $region17: #{classification_forward.1} parent=11 // pred_check
          %p388 = pneg %p92
        $region18: #{classification_forward.1} parent=11 // pred_check_branch
          %390 = sbr.rel (%p388) target = $region20
        $region19: #{classification_forward.1} parent=11 // pred_region
          _
        $region20: #{classification_forward.1} parent=11 // pred_fallthru
          _
        // Predicated region
        $region21: #{classification_forward.1} parent=11 // pred_check
          %p391 = pneg %p113
        $region22: #{classification_forward.1} parent=11 // pred_check_branch
          %393 = sbr.rel (%p391) target = $region24
        $region23: #{classification_forward.1} parent=11 // pred_region
          _
        $region24: #{classification_forward.1} parent=11 // pred_fallthru
          _
        // Predicated region
        $region25: #{classification_forward.1} parent=11 // pred_check
          %p394 = pneg %p134
        $region26: #{classification_forward.1} parent=11 // pred_check_branch
          %396 = sbr.rel (%p394) target = $region28
        $region27: #{classification_forward.1} parent=11 // pred_region
          _
        $region28: #{classification_forward.1} parent=11 // pred_fallthru
          _
        // Predicated region
        $region29: #{classification_forward.1} parent=11 // pred_check
          %p397 = pneg %p155
        $region30: #{classification_forward.1} parent=11 // pred_check_branch
          %399 = sbr.rel (%p397) target = $region32
        $region31: #{classification_forward.1} parent=11 // pred_region
          _
        $region32: #{classification_forward.1} parent=11 // pred_fallthru
          _
        // Predicated region
        $region33: #{classification_forward.1} parent=11 // pred_check
          %p400 = pneg %p176
        $region34: #{classification_forward.1} parent=11 // pred_check_branch
          %402 = sbr.rel (%p400) target = $region36
        $region35: #{classification_forward.1} parent=11 // pred_region
          _
        $region36: #{classification_forward.1} parent=11 // pred_fallthru
          _
        // Predicated region
        $region37: #{classification_forward.1} parent=11 // pred_check
          %p403 = pneg %p197
        $region38: #{classification_forward.1} parent=11 // pred_check_branch
          %405 = sbr.rel (%p403) target = $region40
        $region39: #{classification_forward.1} parent=11 // pred_region
          _
        $region40: #{classification_forward.1} parent=11 // pred_fallthru
          _
        // Predicated region
        $region41: #{classification_forward.1} parent=11 // pred_check
          %p406 = pneg %p218
        $region42: #{classification_forward.1} parent=11 // pred_check_branch
          %408 = sbr.rel (%p406) target = $region44
        $region43: #{classification_forward.1} parent=11 // pred_region
          _
        $region44: #{classification_forward.1} parent=11 // pred_fallthru
          _
        // Predicated region
        $region45: #{classification_forward.1} parent=11 // pred_check
          %p409 = pneg %p239
        $region46: #{classification_forward.1} parent=11 // pred_check_branch
          %411 = sbr.rel (%p409) target = $region48
        $region47: #{classification_forward.1} parent=11 // pred_region
          _
        $region48: #{classification_forward.1} parent=11 // pred_fallthru
          _
        // Predicated region
        $region49: #{classification_forward.1} parent=11 // pred_check
          %p412 = pneg %p260
        $region50: #{classification_forward.1} parent=11 // pred_check_branch
          %414 = sbr.rel (%p412) target = $region52
        $region51: #{classification_forward.1} parent=11 // pred_region
          _
        $region52: #{classification_forward.1} parent=11 // pred_fallthru
          _
        // Predicated region
        $region53: #{classification_forward.1} parent=11 // pred_check
          %p415 = pneg %p281
        $region54: #{classification_forward.1} parent=11 // pred_check_branch
          %417 = sbr.rel (%p415) target = $region56
        $region55: #{classification_forward.1} parent=11 // pred_region
          _
        $region56: #{classification_forward.1} parent=11 // pred_fallthru
          _
        // Predicated region
        $region57: #{classification_forward.1} parent=11 // pred_check
          %p418 = pneg %p302
        $region58: #{classification_forward.1} parent=11 // pred_check_branch
          %420 = sbr.rel (%p418) target = $region60
        $region59: #{classification_forward.1} parent=11 // pred_region
          _
        $region60: #{classification_forward.1} parent=11 // pred_fallthru
          _
        // Predicated region
        $region61: #{classification_forward.1} parent=11 // pred_check
          %p421 = pneg %p323
        $region62: #{classification_forward.1} parent=11 // pred_check_branch
          %423 = sbr.rel (%p421) target = $region64
        $region63: #{classification_forward.1} parent=11 // pred_region
          _
        $region64: #{classification_forward.1} parent=11 // pred_fallthru
          _
        // Predicated region
        $region65: #{classification_forward.1} parent=11 // pred_check
          %p424 = pneg %p344
        $region66: #{classification_forward.1} parent=11 // pred_check_branch
          %426 = sbr.rel (%p424) target = $region68
        $region67: #{classification_forward.1} parent=11 // pred_region
          _
        $region68: #{classification_forward.1} parent=11 // pred_fallthru
          _
      $region12: #{classification_forward.1} parent=5 // pred_fallthru
        _
      %p427 = scmp.lt.s32.totalorder %s24, 2
      // Predicated region
      $region69: #{classification_forward.1} parent=5 // pred_check
        %p428 = pneg %p427
      $region70: #{classification_forward.1} parent=5 // pred_check_branch
        %430 = sbr.rel (%p428) target = $region72
      $region71: #{classification_forward.1} parent=5 // pred_region
        // Predicated region
        $region73: #{classification_forward.1} parent=71 // pred_check
          %p431 = pneg %p44
        $region74: #{classification_forward.1} parent=71 // pred_check_branch
          %433 = sbr.rel (%p431) target = $region76
        $region75: #{classification_forward.1} parent=71 // pred_region
          %p434 = scmp.lt.s32.totalorder %s24, 1
          %s435 = scalar_select %p434, %s24, 1
          %s436 = smul.addr %s435, 7
          %s437 = smul.addr %s436, 4
          %s438 = scalar_lea.vmem %s0, %s437
        $region76: #{classification_forward.1} parent=71 // pred_fallthru
          _
      $region72: #{classification_forward.1} parent=5 // pred_fallthru
        _
      %p439 = scmp.le.s32.totalorder 1, %s24
      %p440 = scmp.lt.s32.totalorder %s24, 3
      %p441 = pnand %p439, %p440
      %p442 = pneg %p441
      // Predicated region
      $region77: #{classification_forward.1} parent=5 // pred_check
        _
      $region78: #{classification_forward.1} parent=5 // pred_check_branch
        %444 = sbr.rel (%p441) target = $region80
      $region79: #{classification_forward.1} parent=5 // pred_region
        %s445 = ssub.s32 %s24, 1
        %p446 = scmp.lt.s32.totalorder %s29, 1
        %s447 = scalar_select %p446, %s29, 1
        %s448 = smul.addr %s447, 7
        %s449 = smul.addr %s448, 4
        %s450 = scalar_lea.vmem %s0, %s449
        %p451 = pneg %p50
        %p452 = pneg %p47
        %p453 = pneg %p71
        %p454 = pneg %p68
        %p455 = pneg %p92
        %p456 = pneg %p89
        %p457 = pneg %p113
        %p458 = pneg %p110
        %p459 = pneg %p134
        %p460 = pneg %p131
        %p461 = pneg %p155
        %p462 = pneg %p152
        %p463 = pneg %p176
        %p464 = pneg %p173
        %p465 = pneg %p197
        %p466 = pneg %p194
        %p467 = pneg %p218
        %p468 = pneg %p215
        %p469 = pneg %p239
        %p470 = pneg %p236
        %p471 = pneg %p260
        %p472 = pneg %p257
        %p473 = pneg %p281
        %p474 = pneg %p278
        %p475 = pneg %p302
        %p476 = pneg %p299
        %p477 = pneg %p323
        %p478 = pneg %p320
        %p479 = pneg %p344
        %p480 = pneg %p341
        %p481 = pneg %p370
        %p482 = pneg %p367
        %s483 = sand.u32 %s357, 1
        %s484 = scalar_lea.sflag [#allocation3], %s483
        %s485 = sand.u32 %s357, 1
        %s486 = scalar_lea.vmem [#allocation2], %s485
        %p487 = scmp.lt.s32.totalorder %s29, 1
        %s488 = scalar_select %p487, %s29, 1
        %s489 = smul.addr %s488, 7
        %s490 = smul.addr %s489, 4
        %s491 = scalar_lea.vmem %s0, %s490
        %v493 = vld [vmem:[%s491] sm:$0xff]
        %v494 = vld [vmem:[%s491 + $0x8] sm:$0xff]
        %v495 = vld [vmem:[%s491 + $0x10] sm:$0xff]
        %v496 = vld [vmem:[%s491 + $0x18] sm:$0xf]
        %v501 = vcombine.high %v493, %v493
        %v502 = vcombine.high %v494, %v494
        %v503 = vcombine.high %v495, %v495
        %504 = vrot.lane.b32.xlu0 %v493, 32
        %v505 = vpop.permute.xlu0 %504
        %506 = vrot.lane.b32.xlu0 %v501, 32
        %v507 = vpop.permute.xlu0 %506
        %508 = vrot.lane.b32.xlu0 %v494, 32
        %v509 = vpop.permute.xlu0 %508
        %510 = vrot.lane.b32.xlu0 %v502, 32
        %v511 = vpop.permute.xlu0 %510
        %512 = vrot.lane.b32.xlu0 %v495, 32
        %v513 = vpop.permute.xlu0 %512
        %514 = vrot.lane.b32.xlu0 %v503, 32
        %v515 = vpop.permute.xlu0 %514
        %516 = vrot.lane.b32.xlu0 %v496, 32
        %v517 = vpop.permute.xlu0 %516
        %vm518 = vcmask 261120
        %v519 = vsel %vm518, %v505, %v507
        %v520 = vsel %vm518, %v507, %v509
        %v521 = vsel %vm518, %v509, %v511
        %v522 = vsel %vm518, %v511, %v513
        %v523 = vsel %vm518, %v513, %v515
        %v524 = vsel %vm518, %v515, %v517
        %v532 = vsel %vm518, 0.0, %v505
        %vm533 = vcmask 392192
        %v534 = vsel %vm533, %v524, 0.0
        %v535 = vld [vmem:[%s11] sm:$0xff]
        %v536 = vld [vmem:[%s11 + $0x8] sm:$0x3f]
        %v539 = vlaneseq
        %v540 = vshrl.u32 %v539, 7
        %v541 = vsub.s32 0, %v540
        %v542 = vrot.slane %v535, %v541
        %v543 = vlaneseq
        %v544 = vshrl.u32 %v543, 7
        %v545 = vsub.s32 2, %v544
        %v546 = vrot.slane %v535, %v545
        %v547 = vlaneseq
        %v548 = vshrl.u32 %v547, 7
        %v549 = vsub.s32 4, %v548
        %v550 = vrot.slane %v535, %v549
        %v551 = vlaneseq
        %v552 = vshrl.u32 %v551, 7
        %v553 = vsub.s32 6, %v552
        %v554 = vrot.slane %v535, %v553
        %v555 = vlaneseq
        %v556 = vshrl.u32 %v555, 7
        %v557 = vsub.s32 0, %v556
        %v558 = vrot.slane %v536, %v557
        %v559 = vlaneseq
        %v560 = vshrl.u32 %v559, 7
        %v561 = vsub.s32 2, %v560
        %v562 = vrot.slane %v536, %v561
        %v563 = vlaneseq
        %v564 = vshrl.u32 %v563, 7
        %v565 = vsub.s32 4, %v564
        %v566 = vrot.slane %v536, %v565
        %v574 = vlaneseq
        %v575 = vshrl.u32 %v574, 7
        %v576 = vsub.s32 0, %v575
        %v577 = vrot.slane %v542, %v576
        %v578 = vlaneseq
        %v579 = vshrl.u32 %v578, 7
        %v580 = vsub.s32 0, %v579
        %v581 = vrot.slane %v546, %v580
        %v582 = vlaneseq
        %v583 = vshrl.u32 %v582, 7
        %v584 = vsub.s32 0, %v583
        %v585 = vrot.slane %v550, %v584
        %v586 = vlaneseq
        %v587 = vshrl.u32 %v586, 7
        %v588 = vsub.s32 0, %v587
        %v589 = vrot.slane %v554, %v588
        %v590 = vlaneseq
        %v591 = vshrl.u32 %v590, 7
        %v592 = vsub.s32 0, %v591
        %v593 = vrot.slane %v558, %v592
        %v594 = vlaneseq
        %v595 = vshrl.u32 %v594, 7
        %v596 = vsub.s32 0, %v595
        %v597 = vrot.slane %v562, %v596
        %v598 = vlaneseq
        %v599 = vshrl.u32 %v598, 7
        %v600 = vsub.s32 0, %v599
        %v601 = vrot.slane %v566, %v600
        %609 = vrot.lane.b32.xlu0 %v577, 3
        %v610 = vpop.permute.xlu0 %609
        %611 = vrot.lane.b32.xlu0 %v581, 3
        %v612 = vpop.permute.xlu0 %611
        %613 = vrot.lane.b32.xlu0 %v585, 3
        %v614 = vpop.permute.xlu0 %613
        %615 = vrot.lane.b32.xlu0 %v589, 3
        %v616 = vpop.permute.xlu0 %615
        %617 = vrot.lane.b32.xlu0 %v593, 3
        %v618 = vpop.permute.xlu0 %617
        %619 = vrot.lane.b32.xlu0 %v597, 3
        %v620 = vpop.permute.xlu0 %619
        %621 = vrot.lane.b32.xlu0 %v601, 3
        %v622 = vpop.permute.xlu0 %621
        %vm623 = vcmask 23552
        %v624 = vsel %vm623, %v610, %v612
        %v625 = vsel %vm623, %v612, %v614
        %v626 = vsel %vm623, %v614, %v616
        %v627 = vsel %vm623, %v616, %v618
        %v628 = vsel %vm623, %v618, %v620
        %v629 = vsel %vm623, %v620, %v622
        %v637 = vmul.f32 %v532, %v610
        %v638 = vmul.f32 %v519, %v624
        %v639 = vmul.f32 %v520, %v625
        %v640 = vmul.f32 %v521, %v626
        %v641 = vmul.f32 %v522, %v627
        %v642 = vmul.f32 %v523, %v628
        %v643 = vmul.f32 %v534, %v629
        %v644 = vld [vmem:[%s1] sm:$0xf]
        %v645 = vpack.c.bf16 %v637, %v637
        %v646 = vpack.c.bf16 %v638, %v638
        %v647 = vpack.c.bf16 %v639, %v639
        %v648 = vpack.c.bf16 %v640, %v640
        %v649 = vpack.c.bf16 %v641, %v641
        %v650 = vpack.c.bf16 %v642, %v642
        %v651 = vpack.c.bf16 %v643, %v643
        %s652 = scalar_lea.vmem %s1, 4
        %v653 = vld [vmem:[%s652] sm:$0xf]
        %v654 = vpack.c.bf16 %v532, %v532
        %v655 = vpack.c.bf16 %v519, %v519
        %v656 = vpack.c.bf16 %v520, %v520
        %v657 = vpack.c.bf16 %v521, %v521
        %v658 = vpack.c.bf16 %v522, %v522
        %v659 = vpack.c.bf16 %v523, %v523
        %v660 = vpack.c.bf16 %v534, %v534
        %668 = vrot.lane.b32.xlu0 %v654, 124
        %v669 = vpop.permute.xlu0 %668
        %670 = vrot.lane.b32.xlu0 %v655, 124
        %v671 = vpop.permute.xlu0 %670
        %672 = vrot.lane.b32.xlu0 %v656, 124
        %v673 = vpop.permute.xlu0 %672
        %674 = vrot.lane.b32.xlu0 %v657, 124
        %v675 = vpop.permute.xlu0 %674
        %676 = vrot.lane.b32.xlu0 %v658, 124
        %v677 = vpop.permute.xlu0 %676
        %678 = vrot.lane.b32.xlu0 %v659, 124
        %v679 = vpop.permute.xlu0 %678
        %680 = vrot.lane.b32.xlu0 %v660, 124
        %v681 = vpop.permute.xlu0 %680
        %vm682 = vcmask 1014784
        %v683 = vsel %vm682, %v669, %v671
        %v684 = vsel %vm682, %v671, %v673
        %v685 = vsel %vm682, %v673, %v675
        %v686 = vsel %vm682, %v675, %v677
        %v687 = vsel %vm682, %v677, %v679
        %v688 = vsel %vm682, %v679, %v681
        %vm689 = vcmask 31744
        %v691 = vsel %vm689, %v653, 0
        %vm693 = vcmask 1041408
        %v695 = vsel %vm693, %v683, 0
        %v698 = vsel %vm693, %v684, 0
        %v701 = vsel %vm693, %v685, 0
        %v704 = vsel %vm693, %v686, 0
        %v707 = vsel %vm693, %v687, 0
        %v710 = vsel %vm693, %v688, 0
        %v713 = vsel %vm693, %v681, 0
        %715 = vmatprep.subr.bf16.mxu0 0
        %716 = vmatpush1.bf16.msra.mxu0 0
        %717 = vmatprep.subr.bf16.mxu0 0
        %718 = vmatpush1.bf16.msra.mxu0 0
        %719 = vmatprep.subr.bf16.mxu0 0
        %720 = vmatpush1.bf16.msra.mxu0 0
        %721 = vmatprep.subr.bf16.mxu0 0
        %722 = vmatpush1.bf16.msra.mxu0 0
        %723 = vmatprep.subr.bf16.mxu0 0
        %724 = vmatpush1.bf16.msra.mxu0 0
        %725 = vmatprep.subr.bf16.mxu0 0
        %726 = vmatpush1.bf16.msra.mxu0 0
        %727 = vmatprep.subr.bf16.mxu0 0
        %728 = vmatpush1.bf16.msra.mxu0 0
        %729 = vmatprep.subr.bf16.mxu0 %v698
        %730 = vmatpush1.bf16.msra.mxu0 %v695
        %731 = vmatprep.subr.bf16.mxu0 0
        %732 = vmatpush2.bf16.msra.mxu0 0
        %733 = vmatprep.subr.bf16.mxu0 0
        %734 = vmatpush2.bf16.msra.mxu0 0
        %735 = vmatprep.subr.bf16.mxu0 0
        %736 = vmatpush2.bf16.msra.mxu0 0
        %737 = vmatprep.subr.bf16.mxu0 0
        %738 = vmatpush2.bf16.msra.mxu0 0
        %739 = vmatprep.subr.bf16.mxu0 0
        %740 = vmatpush2.bf16.msra.mxu0 0
        %741 = vmatprep.subr.bf16.mxu0 0
        %742 = vmatpush2.bf16.msra.mxu0 0
        %743 = vmatprep.subr.bf16.mxu0 0
        %744 = vmatpush2.bf16.msra.mxu0 0
        %745 = vmatprep.subr.bf16.mxu0 0
        %746 = vmatpush2.bf16.msra.mxu0 0
        %747 = vmatprep.mubr.bf16.mxu0 0
        %748 = vmatmul.mubr.bf16.gmra.mxu0 %v691
        %v749 = vpop.f32.mrf.mxu0
        %v750 = vadd.f32 0.0, %v749
        %v751 = vpop.f32.mrf.mxu0
        %v752 = vadd.f32 0.0, %v751
        %v753 = vpop.f32.mrf.mxu0
        %v754 = vpop.f32.mrf.mxu0
        %755 = vdwg.mxu0
        %756 = vmatprep.subr.bf16.mxu0 0
        %757 = vmatpush1.bf16.msra.mxu0 0
        %758 = vmatprep.subr.bf16.mxu0 0
        %759 = vmatpush1.bf16.msra.mxu0 0
        %760 = vmatprep.subr.bf16.mxu0 0
        %761 = vmatpush1.bf16.msra.mxu0 0
        %762 = vmatprep.subr.bf16.mxu0 0
        %763 = vmatpush1.bf16.msra.mxu0 0
        %764 = vmatprep.subr.bf16.mxu0 0
        %765 = vmatpush1.bf16.msra.mxu0 0
        %766 = vmatprep.subr.bf16.mxu0 0
        %767 = vmatpush1.bf16.msra.mxu0 0
        %768 = vmatprep.subr.bf16.mxu0 0
        %769 = vmatpush1.bf16.msra.mxu0 0
        %770 = vmatprep.subr.bf16.mxu0 %v704
        %771 = vmatpush1.bf16.msra.mxu0 %v701
        %772 = vmatprep.subr.bf16.mxu0 0
        %773 = vmatpush2.bf16.msra.mxu0 0
        %774 = vmatprep.subr.bf16.mxu0 0
        %775 = vmatpush2.bf16.msra.mxu0 0
        %776 = vmatprep.subr.bf16.mxu0 0
        %777 = vmatpush2.bf16.msra.mxu0 0
        %778 = vmatprep.subr.bf16.mxu0 0
        %779 = vmatpush2.bf16.msra.mxu0 0
        %780 = vmatprep.subr.bf16.mxu0 0
        %781 = vmatpush2.bf16.msra.mxu0 0
        %782 = vmatprep.subr.bf16.mxu0 0
        %783 = vmatpush2.bf16.msra.mxu0 0
        %784 = vmatprep.subr.bf16.mxu0 0
        %785 = vmatpush2.bf16.msra.mxu0 0
        %786 = vmatprep.subr.bf16.mxu0 0
        %787 = vmatpush2.bf16.msra.mxu0 0
        %788 = vmatprep.mubr.bf16.mxu0 0
        %789 = vmatmul.mubr.bf16.gmra.mxu0 %v691
        %v790 = vpop.f32.mrf.mxu0
        %v791 = vadd.f32 0.0, %v790
        %v792 = vpop.f32.mrf.mxu0
        %v793 = vadd.f32 0.0, %v792
        %v794 = vpop.f32.mrf.mxu0
        %v795 = vpop.f32.mrf.mxu0
        %796 = vdwg.mxu0
        %797 = vmatprep.subr.bf16.mxu0 0
        %798 = vmatpush1.bf16.msra.mxu0 0
        %799 = vmatprep.subr.bf16.mxu0 0
        %800 = vmatpush1.bf16.msra.mxu0 0
        %801 = vmatprep.subr.bf16.mxu0 0
        %802 = vmatpush1.bf16.msra.mxu0 0
        %803 = vmatprep.subr.bf16.mxu0 0
        %804 = vmatpush1.bf16.msra.mxu0 0
        %805 = vmatprep.subr.bf16.mxu0 0
        %806 = vmatpush1.bf16.msra.mxu0 0
        %807 = vmatprep.subr.bf16.mxu0 0
        %808 = vmatpush1.bf16.msra.mxu0 0
        %809 = vmatprep.subr.bf16.mxu0 0
        %810 = vmatpush1.bf16.msra.mxu0 0
        %811 = vmatprep.subr.bf16.mxu0 %v710
        %812 = vmatpush1.bf16.msra.mxu0 %v707
        %813 = vmatprep.subr.bf16.mxu0 0
        %814 = vmatpush2.bf16.msra.mxu0 0
        %815 = vmatprep.subr.bf16.mxu0 0
        %816 = vmatpush2.bf16.msra.mxu0 0
        %817 = vmatprep.subr.bf16.mxu0 0
        %818 = vmatpush2.bf16.msra.mxu0 0
        %819 = vmatprep.subr.bf16.mxu0 0
        %820 = vmatpush2.bf16.msra.mxu0 0
        %821 = vmatprep.subr.bf16.mxu0 0
        %822 = vmatpush2.bf16.msra.mxu0 0
        %823 = vmatprep.subr.bf16.mxu0 0
        %824 = vmatpush2.bf16.msra.mxu0 0
        %825 = vmatprep.subr.bf16.mxu0 0
        %826 = vmatpush2.bf16.msra.mxu0 0
        %827 = vmatprep.subr.bf16.mxu0 0
        %828 = vmatpush2.bf16.msra.mxu0 0
        %829 = vmatprep.mubr.bf16.mxu0 0
        %830 = vmatmul.mubr.bf16.gmra.mxu0 %v691
        %v831 = vpop.f32.mrf.mxu0
        %v832 = vadd.f32 0.0, %v831
        %v833 = vpop.f32.mrf.mxu0
        %v834 = vadd.f32 0.0, %v833
        %v835 = vpop.f32.mrf.mxu0
        %v836 = vpop.f32.mrf.mxu0
        %837 = vdwg.mxu0
        %838 = vmatprep.subr.bf16.mxu0 0
        %839 = vmatpush1.bf16.msra.mxu0 0
        %840 = vmatprep.subr.bf16.mxu0 0
        %841 = vmatpush1.bf16.msra.mxu0 0
        %842 = vmatprep.subr.bf16.mxu0 0
        %843 = vmatpush1.bf16.msra.mxu0 0
        %844 = vmatprep.subr.bf16.mxu0 0
        %845 = vmatpush1.bf16.msra.mxu0 0
        %846 = vmatprep.subr.bf16.mxu0 0
        %847 = vmatpush1.bf16.msra.mxu0 0
        %848 = vmatprep.subr.bf16.mxu0 0
        %849 = vmatpush1.bf16.msra.mxu0 0
        %850 = vmatprep.subr.bf16.mxu0 0
        %851 = vmatpush1.bf16.msra.mxu0 0
        %852 = vmatprep.subr.bf16.mxu0 0
        %853 = vmatpush1.bf16.msra.mxu0 %v713
        %854 = vmatprep.subr.bf16.mxu0 0
        %855 = vmatpush2.bf16.msra.mxu0 0
        %856 = vmatprep.subr.bf16.mxu0 0
        %857 = vmatpush2.bf16.msra.mxu0 0
        %858 = vmatprep.subr.bf16.mxu0 0
        %859 = vmatpush2.bf16.msra.mxu0 0
        %860 = vmatprep.subr.bf16.mxu0 0
        %861 = vmatpush2.bf16.msra.mxu0 0
        %862 = vmatprep.subr.bf16.mxu0 0
        %863 = vmatpush2.bf16.msra.mxu0 0
        %864 = vmatprep.subr.bf16.mxu0 0
        %865 = vmatpush2.bf16.msra.mxu0 0
        %866 = vmatprep.subr.bf16.mxu0 0
        %867 = vmatpush2.bf16.msra.mxu0 0
        %868 = vmatprep.subr.bf16.mxu0 0
        %869 = vmatpush2.bf16.msra.mxu0 0
        %870 = vmatprep.mubr.bf16.mxu0 0
        %871 = vmatmul.mubr.bf16.gmra.mxu0 %v691
        %v872 = vpop.f32.mrf.mxu0
        %v873 = vadd.f32 0.0, %v872
        %v874 = vpop.f32.mrf.mxu0
        %v875 = vpop.f32.mrf.mxu0
        %v876 = vpop.f32.mrf.mxu0
        %877 = vdwg.mxu0
        %885 = vrot.lane.b32.xlu0 %v645, 125
        %v886 = vpop.permute.xlu0 %885
        %887 = vrot.lane.b32.xlu0 %v646, 125
        %v888 = vpop.permute.xlu0 %887
        %889 = vrot.lane.b32.xlu0 %v647, 125
        %v890 = vpop.permute.xlu0 %889
        %891 = vrot.lane.b32.xlu0 %v648, 125
        %v892 = vpop.permute.xlu0 %891
        %893 = vrot.lane.b32.xlu0 %v649, 125
        %v894 = vpop.permute.xlu0 %893
        %895 = vrot.lane.b32.xlu0 %v650, 125
        %v896 = vpop.permute.xlu0 %895
        %897 = vrot.lane.b32.xlu0 %v651, 125
        %v898 = vpop.permute.xlu0 %897
        %vm899 = vcmask 1022976
        %v900 = vsel %vm899, %v886, %v888
        %v901 = vsel %vm899, %v888, %v890
        %v902 = vsel %vm899, %v890, %v892
        %v903 = vsel %vm899, %v892, %v894
        %v904 = vsel %vm899, %v894, %v896
        %v905 = vsel %vm899, %v896, %v898
        %v907 = vsel %vm689, %v644, 0
        %v910 = vsel %vm693, %v900, 0
        %v913 = vsel %vm693, %v901, 0
        %v916 = vsel %vm693, %v902, 0
        %v919 = vsel %vm693, %v903, 0
        %v922 = vsel %vm693, %v904, 0
        %v925 = vsel %vm693, %v905, 0
        %v928 = vsel %vm693, %v898, 0
        %930 = vmatprep.subr.bf16.mxu0 0
        %931 = vmatpush1.bf16.msra.mxu0 0
        %932 = vmatprep.subr.bf16.mxu0 0
        %933 = vmatpush1.bf16.msra.mxu0 0
        %934 = vmatprep.subr.bf16.mxu0 0
        %935 = vmatpush1.bf16.msra.mxu0 0
        %936 = vmatprep.subr.bf16.mxu0 0
        %937 = vmatpush1.bf16.msra.mxu0 0
        %938 = vmatprep.subr.bf16.mxu0 0
        %939 = vmatpush1.bf16.msra.mxu0 0
        %940 = vmatprep.subr.bf16.mxu0 0
        %941 = vmatpush1.bf16.msra.mxu0 0
        %942 = vmatprep.subr.bf16.mxu0 0
        %943 = vmatpush1.bf16.msra.mxu0 0
        %944 = vmatprep.subr.bf16.mxu0 %v913
        %945 = vmatpush1.bf16.msra.mxu0 %v910
        %946 = vmatprep.subr.bf16.mxu0 0
        %947 = vmatpush2.bf16.msra.mxu0 0
        %948 = vmatprep.subr.bf16.mxu0 0
        %949 = vmatpush2.bf16.msra.mxu0 0
        %950 = vmatprep.subr.bf16.mxu0 0
        %951 = vmatpush2.bf16.msra.mxu0 0
        %952 = vmatprep.subr.bf16.mxu0 0
        %953 = vmatpush2.bf16.msra.mxu0 0
        %954 = vmatprep.subr.bf16.mxu0 0
        %955 = vmatpush2.bf16.msra.mxu0 0
        %956 = vmatprep.subr.bf16.mxu0 0
        %957 = vmatpush2.bf16.msra.mxu0 0
        %958 = vmatprep.subr.bf16.mxu0 0
        %959 = vmatpush2.bf16.msra.mxu0 0
        %960 = vmatprep.subr.bf16.mxu0 0
        %961 = vmatpush2.bf16.msra.mxu0 0
        %962 = vmatprep.mubr.bf16.mxu0 0
        %963 = vmatmul.mubr.bf16.gmra.mxu0 %v907
        %v964 = vpop.f32.mrf.mxu0
        %v965 = vadd.f32 %v750, %v964
        %v966 = vpop.f32.mrf.mxu0
        %v967 = vadd.f32 %v752, %v966
        %v968 = vpop.f32.mrf.mxu0
        %v969 = vpop.f32.mrf.mxu0
        %970 = vdwg.mxu0
        %971 = vmatprep.subr.bf16.mxu0 0
        %972 = vmatpush1.bf16.msra.mxu0 0
        %973 = vmatprep.subr.bf16.mxu0 0
        %974 = vmatpush1.bf16.msra.mxu0 0
        %975 = vmatprep.subr.bf16.mxu0 0
        %976 = vmatpush1.bf16.msra.mxu0 0
        %977 = vmatprep.subr.bf16.mxu0 0
        %978 = vmatpush1.bf16.msra.mxu0 0
        %979 = vmatprep.subr.bf16.mxu0 0
        %980 = vmatpush1.bf16.msra.mxu0 0
        %981 = vmatprep.subr.bf16.mxu0 0
        %982 = vmatpush1.bf16.msra.mxu0 0
        %983 = vmatprep.subr.bf16.mxu0 0
        %984 = vmatpush1.bf16.msra.mxu0 0
        %985 = vmatprep.subr.bf16.mxu0 %v919
        %986 = vmatpush1.bf16.msra.mxu0 %v916
        %987 = vmatprep.subr.bf16.mxu0 0
        %988 = vmatpush2.bf16.msra.mxu0 0
        %989 = vmatprep.subr.bf16.mxu0 0
        %990 = vmatpush2.bf16.msra.mxu0 0
        %991 = vmatprep.subr.bf16.mxu0 0
        %992 = vmatpush2.bf16.msra.mxu0 0
        %993 = vmatprep.subr.bf16.mxu0 0
        %994 = vmatpush2.bf16.msra.mxu0 0
        %995 = vmatprep.subr.bf16.mxu0 0
        %996 = vmatpush2.bf16.msra.mxu0 0
        %997 = vmatprep.subr.bf16.mxu0 0
        %998 = vmatpush2.bf16.msra.mxu0 0
        %999 = vmatprep.subr.bf16.mxu0 0
        %1000 = vmatpush2.bf16.msra.mxu0 0
        %1001 = vmatprep.subr.bf16.mxu0 0
        %1002 = vmatpush2.bf16.msra.mxu0 0
        %1003 = vmatprep.mubr.bf16.mxu0 0
        %1004 = vmatmul.mubr.bf16.gmra.mxu0 %v907
        %v1005 = vpop.f32.mrf.mxu0
        %v1006 = vadd.f32 %v791, %v1005
        %v1007 = vpop.f32.mrf.mxu0
        %v1008 = vadd.f32 %v793, %v1007
        %v1009 = vpop.f32.mrf.mxu0
        %v1010 = vpop.f32.mrf.mxu0
        %1011 = vdwg.mxu0
        %1012 = vmatprep.subr.bf16.mxu0 0
        %1013 = vmatpush1.bf16.msra.mxu0 0
        %1014 = vmatprep.subr.bf16.mxu0 0
        %1015 = vmatpush1.bf16.msra.mxu0 0
        %1016 = vmatprep.subr.bf16.mxu0 0
        %1017 = vmatpush1.bf16.msra.mxu0 0
        %1018 = vmatprep.subr.bf16.mxu0 0
        %1019 = vmatpush1.bf16.msra.mxu0 0
        %1020 = vmatprep.subr.bf16.mxu0 0
        %1021 = vmatpush1.bf16.msra.mxu0 0
        %1022 = vmatprep.subr.bf16.mxu0 0
        %1023 = vmatpush1.bf16.msra.mxu0 0
        %1024 = vmatprep.subr.bf16.mxu0 0
        %1025 = vmatpush1.bf16.msra.mxu0 0
        %1026 = vmatprep.subr.bf16.mxu0 %v925
        %1027 = vmatpush1.bf16.msra.mxu0 %v922
        %1028 = vmatprep.subr.bf16.mxu0 0
        %1029 = vmatpush2.bf16.msra.mxu0 0
        %1030 = vmatprep.subr.bf16.mxu0 0
        %1031 = vmatpush2.bf16.msra.mxu0 0
        %1032 = vmatprep.subr.bf16.mxu0 0
        %1033 = vmatpush2.bf16.msra.mxu0 0
        %1034 = vmatprep.subr.bf16.mxu0 0
        %1035 = vmatpush2.bf16.msra.mxu0 0
        %1036 = vmatprep.subr.bf16.mxu0 0
        %1037 = vmatpush2.bf16.msra.mxu0 0
        %1038 = vmatprep.subr.bf16.mxu0 0
        %1039 = vmatpush2.bf16.msra.mxu0 0
        %1040 = vmatprep.subr.bf16.mxu0 0
        %1041 = vmatpush2.bf16.msra.mxu0 0
        %1042 = vmatprep.subr.bf16.mxu0 0
        %1043 = vmatpush2.bf16.msra.mxu0 0
        %1044 = vmatprep.mubr.bf16.mxu0 0
        %1045 = vmatmul.mubr.bf16.gmra.mxu0 %v907
        %v1046 = vpop.f32.mrf.mxu0
        %v1047 = vadd.f32 %v832, %v1046
        %v1048 = vpop.f32.mrf.mxu0
        %v1049 = vadd.f32 %v834, %v1048
        %v1050 = vpop.f32.mrf.mxu0
        %v1051 = vpop.f32.mrf.mxu0
        %1052 = vdwg.mxu0
        %1053 = vmatprep.subr.bf16.mxu0 0
        %1054 = vmatpush1.bf16.msra.mxu0 0
        %1055 = vmatprep.subr.bf16.mxu0 0
        %1056 = vmatpush1.bf16.msra.mxu0 0
        %1057 = vmatprep.subr.bf16.mxu0 0
        %1058 = vmatpush1.bf16.msra.mxu0 0
        %1059 = vmatprep.subr.bf16.mxu0 0
        %1060 = vmatpush1.bf16.msra.mxu0 0
        %1061 = vmatprep.subr.bf16.mxu0 0
        %1062 = vmatpush1.bf16.msra.mxu0 0
        %1063 = vmatprep.subr.bf16.mxu0 0
        %1064 = vmatpush1.bf16.msra.mxu0 0
        %1065 = vmatprep.subr.bf16.mxu0 0
        %1066 = vmatpush1.bf16.msra.mxu0 0
        %1067 = vmatprep.subr.bf16.mxu0 0
        %1068 = vmatpush1.bf16.msra.mxu0 %v928
        %1069 = vmatprep.subr.bf16.mxu0 0
        %1070 = vmatpush2.bf16.msra.mxu0 0
        %1071 = vmatprep.subr.bf16.mxu0 0
        %1072 = vmatpush2.bf16.msra.mxu0 0
        %1073 = vmatprep.subr.bf16.mxu0 0
        %1074 = vmatpush2.bf16.msra.mxu0 0
        %1075 = vmatprep.subr.bf16.mxu0 0
        %1076 = vmatpush2.bf16.msra.mxu0 0
        %1077 = vmatprep.subr.bf16.mxu0 0
        %1078 = vmatpush2.bf16.msra.mxu0 0
        %1079 = vmatprep.subr.bf16.mxu0 0
        %1080 = vmatpush2.bf16.msra.mxu0 0
        %1081 = vmatprep.subr.bf16.mxu0 0
        %1082 = vmatpush2.bf16.msra.mxu0 0
        %1083 = vmatprep.subr.bf16.mxu0 0
        %1084 = vmatpush2.bf16.msra.mxu0 0
        %1085 = vmatprep.mubr.bf16.mxu0 0
        %1086 = vmatmul.mubr.bf16.gmra.mxu0 %v907
        %v1087 = vpop.f32.mrf.mxu0
        %v1088 = vadd.f32 %v873, %v1087
        %v1089 = vpop.f32.mrf.mxu0
        %v1090 = vpop.f32.mrf.mxu0
        %v1091 = vpop.f32.mrf.mxu0
        %1092 = vdwg.mxu0
        %v1093 = vlaneseq
        %v1094 = vshrl.u32 %v1093, 7
        %v1095 = vsub.s32 1, %v1094
        %v1096 = vrot.slane %v535, %v1095
        %v1097 = vlaneseq
        %v1098 = vshrl.u32 %v1097, 7
        %v1099 = vsub.s32 3, %v1098
        %v1100 = vrot.slane %v535, %v1099
        %v1101 = vlaneseq
        %v1102 = vshrl.u32 %v1101, 7
        %v1103 = vsub.s32 5, %v1102
        %v1104 = vrot.slane %v535, %v1103
        %v1105 = vlaneseq
        %v1106 = vshrl.u32 %v1105, 7
        %v1107 = vsub.s32 7, %v1106
        %v1108 = vrot.slane %v535, %v1107
        %v1109 = vlaneseq
        %v1110 = vshrl.u32 %v1109, 7
        %v1111 = vsub.s32 1, %v1110
        %v1112 = vrot.slane %v536, %v1111
        %v1113 = vlaneseq
        %v1114 = vshrl.u32 %v1113, 7
        %v1115 = vsub.s32 3, %v1114
        %v1116 = vrot.slane %v536, %v1115
        %v1117 = vlaneseq
        %v1118 = vshrl.u32 %v1117, 7
        %v1119 = vsub.s32 5, %v1118
        %v1120 = vrot.slane %v536, %v1119
        %v1128 = vlaneseq
        %v1129 = vshrl.u32 %v1128, 7
        %v1130 = vsub.s32 1, %v1129
        %v1131 = vrot.slane %v1096, %v1130
        %v1132 = vlaneseq
        %v1133 = vshrl.u32 %v1132, 7
        %v1134 = vsub.s32 1, %v1133
        %v1135 = vrot.slane %v1100, %v1134
        %v1136 = vlaneseq
        %v1137 = vshrl.u32 %v1136, 7
        %v1138 = vsub.s32 1, %v1137
        %v1139 = vrot.slane %v1104, %v1138
        %v1140 = vlaneseq
        %v1141 = vshrl.u32 %v1140, 7
        %v1142 = vsub.s32 1, %v1141
        %v1143 = vrot.slane %v1108, %v1142
        %v1144 = vlaneseq
        %v1145 = vshrl.u32 %v1144, 7
        %v1146 = vsub.s32 1, %v1145
        %v1147 = vrot.slane %v1112, %v1146
        %v1148 = vlaneseq
        %v1149 = vshrl.u32 %v1148, 7
        %v1150 = vsub.s32 1, %v1149
        %v1151 = vrot.slane %v1116, %v1150
        %v1152 = vlaneseq
        %v1153 = vshrl.u32 %v1152, 7
        %v1154 = vsub.s32 1, %v1153
        %v1155 = vrot.slane %v1120, %v1154
        %1163 = vrot.lane.b32.xlu0 %v1131, 5
        %v1164 = vpop.permute.xlu0 %1163
        %1165 = vrot.lane.b32.xlu0 %v1135, 5
        %v1166 = vpop.permute.xlu0 %1165
        %1167 = vrot.lane.b32.xlu0 %v1139, 5
        %v1168 = vpop.permute.xlu0 %1167
        %1169 = vrot.lane.b32.xlu0 %v1143, 5
        %v1170 = vpop.permute.xlu0 %1169
        %1171 = vrot.lane.b32.xlu0 %v1147, 5
        %v1172 = vpop.permute.xlu0 %1171
        %1173 = vrot.lane.b32.xlu0 %v1151, 5
        %v1174 = vpop.permute.xlu0 %1173
        %1175 = vrot.lane.b32.xlu0 %v1155, 5
        %v1176 = vpop.permute.xlu0 %1175
        %vm1177 = vcmask 39936
        %v1178 = vsel %vm1177, %v1164, %v1166
        %v1179 = vsel %vm1177, %v1166, %v1168
        %v1180 = vsel %vm1177, %v1168, %v1170
        %v1181 = vsel %vm1177, %v1170, %v1172
        %v1182 = vsel %vm1177, %v1172, %v1174
        %v1183 = vsel %vm1177, %v1174, %v1176
        %v1191 = vmul.f32 %v532, %v1164
        %v1192 = vmul.f32 %v519, %v1178
        %v1193 = vmul.f32 %v520, %v1179
        %v1194 = vmul.f32 %v521, %v1180
        %v1195 = vmul.f32 %v522, %v1181
        %v1196 = vmul.f32 %v523, %v1182
        %v1197 = vmul.f32 %v534, %v1183
        %s1198 = scalar_lea.vmem %s1, 8
        %v1199 = vld [vmem:[%s1198] sm:$0xf]
        %v1200 = vpack.c.bf16 %v1191, %v1191
        %v1201 = vpack.c.bf16 %v1192, %v1192
        %v1202 = vpack.c.bf16 %v1193, %v1193
        %v1203 = vpack.c.bf16 %v1194, %v1194
        %v1204 = vpack.c.bf16 %v1195, %v1195
        %v1205 = vpack.c.bf16 %v1196, %v1196
        %v1206 = vpack.c.bf16 %v1197, %v1197
        %1214 = vrot.lane.b32.xlu0 %v1200, 123
        %v1215 = vpop.permute.xlu0 %1214
        %1216 = vrot.lane.b32.xlu0 %v1201, 123
        %v1217 = vpop.permute.xlu0 %1216
        %1218 = vrot.lane.b32.xlu0 %v1202, 123
        %v1219 = vpop.permute.xlu0 %1218
        %1220 = vrot.lane.b32.xlu0 %v1203, 123
        %v1221 = vpop.permute.xlu0 %1220
        %1222 = vrot.lane.b32.xlu0 %v1204, 123
        %v1223 = vpop.permute.xlu0 %1222
        %1224 = vrot.lane.b32.xlu0 %v1205, 123
        %v1225 = vpop.permute.xlu0 %1224
        %1226 = vrot.lane.b32.xlu0 %v1206, 123
        %v1227 = vpop.permute.xlu0 %1226
        %vm1228 = vcmask 1006592
        %v1229 = vsel %vm1228, %v1215, %v1217
        %v1230 = vsel %vm1228, %v1217, %v1219
        %v1231 = vsel %vm1228, %v1219, %v1221
        %v1232 = vsel %vm1228, %v1221, %v1223
        %v1233 = vsel %vm1228, %v1223, %v1225
        %v1234 = vsel %vm1228, %v1225, %v1227
        %v1236 = vsel %vm689, %v1199, 0
        %v1239 = vsel %vm693, %v1229, 0
        %v1242 = vsel %vm693, %v1230, 0
        %v1245 = vsel %vm693, %v1231, 0
        %v1248 = vsel %vm693, %v1232, 0
        %v1251 = vsel %vm693, %v1233, 0
        %v1254 = vsel %vm693, %v1234, 0
        %v1257 = vsel %vm693, %v1227, 0
        %1259 = vmatprep.subr.bf16.mxu0 0
        %1260 = vmatpush1.bf16.msra.mxu0 0
        %1261 = vmatprep.subr.bf16.mxu0 0
        %1262 = vmatpush1.bf16.msra.mxu0 0
        %1263 = vmatprep.subr.bf16.mxu0 0
        %1264 = vmatpush1.bf16.msra.mxu0 0
        %1265 = vmatprep.subr.bf16.mxu0 0
        %1266 = vmatpush1.bf16.msra.mxu0 0
        %1267 = vmatprep.subr.bf16.mxu0 0
        %1268 = vmatpush1.bf16.msra.mxu0 0
        %1269 = vmatprep.subr.bf16.mxu0 0
        %1270 = vmatpush1.bf16.msra.mxu0 0
        %1271 = vmatprep.subr.bf16.mxu0 0
        %1272 = vmatpush1.bf16.msra.mxu0 0
        %1273 = vmatprep.subr.bf16.mxu0 %v1242
        %1274 = vmatpush1.bf16.msra.mxu0 %v1239
        %1275 = vmatprep.subr.bf16.mxu0 0
        %1276 = vmatpush2.bf16.msra.mxu0 0
        %1277 = vmatprep.subr.bf16.mxu0 0
        %1278 = vmatpush2.bf16.msra.mxu0 0
        %1279 = vmatprep.subr.bf16.mxu0 0
        %1280 = vmatpush2.bf16.msra.mxu0 0
        %1281 = vmatprep.subr.bf16.mxu0 0
        %1282 = vmatpush2.bf16.msra.mxu0 0
        %1283 = vmatprep.subr.bf16.mxu0 0
        %1284 = vmatpush2.bf16.msra.mxu0 0
        %1285 = vmatprep.subr.bf16.mxu0 0
        %1286 = vmatpush2.bf16.msra.mxu0 0
        %1287 = vmatprep.subr.bf16.mxu0 0
        %1288 = vmatpush2.bf16.msra.mxu0 0
        %1289 = vmatprep.subr.bf16.mxu0 0
        %1290 = vmatpush2.bf16.msra.mxu0 0
        %1291 = vmatprep.mubr.bf16.mxu0 0
        %1292 = vmatmul.mubr.bf16.gmra.mxu0 %v1236
        %v1293 = vpop.f32.mrf.mxu0
        %v1294 = vadd.f32 0.0, %v1293
        %v1295 = vpop.f32.mrf.mxu0
        %v1296 = vadd.f32 0.0, %v1295
        %v1297 = vpop.f32.mrf.mxu0
        %v1298 = vpop.f32.mrf.mxu0
        %1299 = vdwg.mxu0
        %1300 = vmatprep.subr.bf16.mxu0 0
        %1301 = vmatpush1.bf16.msra.mxu0 0
        %1302 = vmatprep.subr.bf16.mxu0 0
        %1303 = vmatpush1.bf16.msra.mxu0 0
        %1304 = vmatprep.subr.bf16.mxu0 0
        %1305 = vmatpush1.bf16.msra.mxu0 0
        %1306 = vmatprep.subr.bf16.mxu0 0
        %1307 = vmatpush1.bf16.msra.mxu0 0
        %1308 = vmatprep.subr.bf16.mxu0 0
        %1309 = vmatpush1.bf16.msra.mxu0 0
        %1310 = vmatprep.subr.bf16.mxu0 0
        %1311 = vmatpush1.bf16.msra.mxu0 0
        %1312 = vmatprep.subr.bf16.mxu0 0
        %1313 = vmatpush1.bf16.msra.mxu0 0
        %1314 = vmatprep.subr.bf16.mxu0 %v1248
        %1315 = vmatpush1.bf16.msra.mxu0 %v1245
        %1316 = vmatprep.subr.bf16.mxu0 0
        %1317 = vmatpush2.bf16.msra.mxu0 0
        %1318 = vmatprep.subr.bf16.mxu0 0
        %1319 = vmatpush2.bf16.msra.mxu0 0
        %1320 = vmatprep.subr.bf16.mxu0 0
        %1321 = vmatpush2.bf16.msra.mxu0 0
        %1322 = vmatprep.subr.bf16.mxu0 0
        %1323 = vmatpush2.bf16.msra.mxu0 0
        %1324 = vmatprep.subr.bf16.mxu0 0
        %1325 = vmatpush2.bf16.msra.mxu0 0
        %1326 = vmatprep.subr.bf16.mxu0 0
        %1327 = vmatpush2.bf16.msra.mxu0 0
        %1328 = vmatprep.subr.bf16.mxu0 0
        %1329 = vmatpush2.bf16.msra.mxu0 0
        %1330 = vmatprep.subr.bf16.mxu0 0
        %1331 = vmatpush2.bf16.msra.mxu0 0
        %1332 = vmatprep.mubr.bf16.mxu0 0
        %1333 = vmatmul.mubr.bf16.gmra.mxu0 %v1236
        %v1334 = vpop.f32.mrf.mxu0
        %v1335 = vadd.f32 0.0, %v1334
        %v1336 = vpop.f32.mrf.mxu0
        %v1337 = vadd.f32 0.0, %v1336
        %v1338 = vpop.f32.mrf.mxu0
        %v1339 = vpop.f32.mrf.mxu0
        %1340 = vdwg.mxu0
        %1341 = vmatprep.subr.bf16.mxu0 0
        %1342 = vmatpush1.bf16.msra.mxu0 0
        %1343 = vmatprep.subr.bf16.mxu0 0
        %1344 = vmatpush1.bf16.msra.mxu0 0
        %1345 = vmatprep.subr.bf16.mxu0 0
        %1346 = vmatpush1.bf16.msra.mxu0 0
        %1347 = vmatprep.subr.bf16.mxu0 0
        %1348 = vmatpush1.bf16.msra.mxu0 0
        %1349 = vmatprep.subr.bf16.mxu0 0
        %1350 = vmatpush1.bf16.msra.mxu0 0
        %1351 = vmatprep.subr.bf16.mxu0 0
        %1352 = vmatpush1.bf16.msra.mxu0 0
        %1353 = vmatprep.subr.bf16.mxu0 0
        %1354 = vmatpush1.bf16.msra.mxu0 0
        %1355 = vmatprep.subr.bf16.mxu0 %v1254
        %1356 = vmatpush1.bf16.msra.mxu0 %v1251
        %1357 = vmatprep.subr.bf16.mxu0 0
        %1358 = vmatpush2.bf16.msra.mxu0 0
        %1359 = vmatprep.subr.bf16.mxu0 0
        %1360 = vmatpush2.bf16.msra.mxu0 0
        %1361 = vmatprep.subr.bf16.mxu0 0
        %1362 = vmatpush2.bf16.msra.mxu0 0
        %1363 = vmatprep.subr.bf16.mxu0 0
        %1364 = vmatpush2.bf16.msra.mxu0 0
        %1365 = vmatprep.subr.bf16.mxu0 0
        %1366 = vmatpush2.bf16.msra.mxu0 0
        %1367 = vmatprep.subr.bf16.mxu0 0
        %1368 = vmatpush2.bf16.msra.mxu0 0
        %1369 = vmatprep.subr.bf16.mxu0 0
        %1370 = vmatpush2.bf16.msra.mxu0 0
        %1371 = vmatprep.subr.bf16.mxu0 0
        %1372 = vmatpush2.bf16.msra.mxu0 0
        %1373 = vmatprep.mubr.bf16.mxu0 0
        %1374 = vmatmul.mubr.bf16.gmra.mxu0 %v1236
        %v1375 = vpop.f32.mrf.mxu0
        %v1376 = vadd.f32 0.0, %v1375
        %v1377 = vpop.f32.mrf.mxu0
        %v1378 = vadd.f32 0.0, %v1377
        %v1379 = vpop.f32.mrf.mxu0
        %v1380 = vpop.f32.mrf.mxu0
        %1381 = vdwg.mxu0
        %1382 = vmatprep.subr.bf16.mxu0 0
        %1383 = vmatpush1.bf16.msra.mxu0 0
        %1384 = vmatprep.subr.bf16.mxu0 0
        %1385 = vmatpush1.bf16.msra.mxu0 0
        %1386 = vmatprep.subr.bf16.mxu0 0
        %1387 = vmatpush1.bf16.msra.mxu0 0
        %1388 = vmatprep.subr.bf16.mxu0 0
        %1389 = vmatpush1.bf16.msra.mxu0 0
        %1390 = vmatprep.subr.bf16.mxu0 0
        %1391 = vmatpush1.bf16.msra.mxu0 0
        %1392 = vmatprep.subr.bf16.mxu0 0
        %1393 = vmatpush1.bf16.msra.mxu0 0
        %1394 = vmatprep.subr.bf16.mxu0 0
        %1395 = vmatpush1.bf16.msra.mxu0 0
        %1396 = vmatprep.subr.bf16.mxu0 0
        %1397 = vmatpush1.bf16.msra.mxu0 %v1257
        %1398 = vmatprep.subr.bf16.mxu0 0
        %1399 = vmatpush2.bf16.msra.mxu0 0
        %1400 = vmatprep.subr.bf16.mxu0 0
        %1401 = vmatpush2.bf16.msra.mxu0 0
        %1402 = vmatprep.subr.bf16.mxu0 0
        %1403 = vmatpush2.bf16.msra.mxu0 0
        %1404 = vmatprep.subr.bf16.mxu0 0
        %1405 = vmatpush2.bf16.msra.mxu0 0
        %1406 = vmatprep.subr.bf16.mxu0 0
        %1407 = vmatpush2.bf16.msra.mxu0 0
        %1408 = vmatprep.subr.bf16.mxu0 0
        %1409 = vmatpush2.bf16.msra.mxu0 0
        %1410 = vmatprep.subr.bf16.mxu0 0
        %1411 = vmatpush2.bf16.msra.mxu0 0
        %1412 = vmatprep.subr.bf16.mxu0 0
        %1413 = vmatpush2.bf16.msra.mxu0 0
        %1414 = vmatprep.mubr.bf16.mxu0 0
        %1415 = vmatmul.mubr.bf16.gmra.mxu0 %v1236
        %v1416 = vpop.f32.mrf.mxu0
        %v1417 = vadd.f32 0.0, %v1416
        %v1418 = vpop.f32.mrf.mxu0
        %v1419 = vpop.f32.mrf.mxu0
        %v1420 = vpop.f32.mrf.mxu0
        %1421 = vdwg.mxu0
        %v1422 = vadd.f32 %v965, %v1294
        %v1423 = vadd.f32 %v967, %v1296
        %v1424 = vadd.f32 %v1006, %v1335
        %v1425 = vadd.f32 %v1008, %v1337
        %v1426 = vadd.f32 %v1047, %v1376
        %v1427 = vadd.f32 %v1049, %v1378
        %v1428 = vadd.f32 %v1088, %v1417
        %1429 = vrot.lane.b32.xlu0 %v577, 31
        %v1430 = vpop.permute.xlu0 %1429
        %1431 = vrot.lane.b32.xlu0 %v581, 31
        %v1432 = vpop.permute.xlu0 %1431
        %1433 = vrot.lane.b32.xlu0 %v585, 31
        %v1434 = vpop.permute.xlu0 %1433
        %1435 = vrot.lane.b32.xlu0 %v589, 31
        %v1436 = vpop.permute.xlu0 %1435
        %1437 = vrot.lane.b32.xlu0 %v593, 31
        %v1438 = vpop.permute.xlu0 %1437
        %1439 = vrot.lane.b32.xlu0 %v597, 31
        %v1440 = vpop.permute.xlu0 %1439
        %1441 = vrot.lane.b32.xlu0 %v601, 31
        %v1442 = vpop.permute.xlu0 %1441
        %vm1443 = vcmask 252928
        %v1444 = vsel %vm1443, %v1430, %v1432
        %v1445 = vsel %vm1443, %v1432, %v1434
        %v1446 = vsel %vm1443, %v1434, %v1436
        %v1447 = vsel %vm1443, %v1436, %v1438
        %v1448 = vsel %vm1443, %v1438, %v1440
        %v1449 = vsel %vm1443, %v1440, %v1442
        %v1457 = vmul.f32 %v532, %v1430
        %v1458 = vmul.f32 %v519, %v1444
        %v1459 = vmul.f32 %v520, %v1445
        %v1460 = vmul.f32 %v521, %v1446
        %v1461 = vmul.f32 %v522, %v1447
        %v1462 = vmul.f32 %v523, %v1448
        %v1463 = vmul.f32 %v534, %v1449
        %s1464 = scalar_lea.vmem %s1, 12
        %v1465 = vld [vmem:[%s1464] sm:$0xf]
        %v1466 = vpack.c.bf16 %v1457, %v1457
        %v1467 = vpack.c.bf16 %v1458, %v1458
        %v1468 = vpack.c.bf16 %v1459, %v1459
        %v1469 = vpack.c.bf16 %v1460, %v1460
        %v1470 = vpack.c.bf16 %v1461, %v1461
        %v1471 = vpack.c.bf16 %v1462, %v1462
        %v1472 = vpack.c.bf16 %v1463, %v1463
        %1480 = vrot.lane.b32.xlu0 %v1466, 97
        %v1481 = vpop.permute.xlu0 %1480
        %1482 = vrot.lane.b32.xlu0 %v1467, 97
        %v1483 = vpop.permute.xlu0 %1482
        %1484 = vrot.lane.b32.xlu0 %v1468, 97
        %v1485 = vpop.permute.xlu0 %1484
        %1486 = vrot.lane.b32.xlu0 %v1469, 97
        %v1487 = vpop.permute.xlu0 %1486
        %1488 = vrot.lane.b32.xlu0 %v1470, 97
        %v1489 = vpop.permute.xlu0 %1488
        %1490 = vrot.lane.b32.xlu0 %v1471, 97
        %v1491 = vpop.permute.xlu0 %1490
        %1492 = vrot.lane.b32.xlu0 %v1472, 97
        %v1493 = vpop.permute.xlu0 %1492
        %vm1494 = vcmask 793600
        %v1495 = vsel %vm1494, %v1481, %v1483
        %v1496 = vsel %vm1494, %v1483, %v1485
        %v1497 = vsel %vm1494, %v1485, %v1487
        %v1498 = vsel %vm1494, %v1487, %v1489
        %v1499 = vsel %vm1494, %v1489, %v1491
        %v1500 = vsel %vm1494, %v1491, %v1493
        %v1502 = vsel %vm689, %v1465, 0
        %v1505 = vsel %vm693, %v1495, 0
        %v1508 = vsel %vm693, %v1496, 0
        %v1511 = vsel %vm693, %v1497, 0
        %v1514 = vsel %vm693, %v1498, 0
        %v1517 = vsel %vm693, %v1499, 0
        %v1520 = vsel %vm693, %v1500, 0
        %v1523 = vsel %vm693, %v1493, 0
        %1525 = vmatprep.subr.bf16.mxu0 0
        %1526 = vmatpush1.bf16.msra.mxu0 0
        %1527 = vmatprep.subr.bf16.mxu0 0
        %1528 = vmatpush1.bf16.msra.mxu0 0
        %1529 = vmatprep.subr.bf16.mxu0 0
        %1530 = vmatpush1.bf16.msra.mxu0 0
        %1531 = vmatprep.subr.bf16.mxu0 0
        %1532 = vmatpush1.bf16.msra.mxu0 0
        %1533 = vmatprep.subr.bf16.mxu0 0
        %1534 = vmatpush1.bf16.msra.mxu0 0
        %1535 = vmatprep.subr.bf16.mxu0 0
        %1536 = vmatpush1.bf16.msra.mxu0 0
        %1537 = vmatprep.subr.bf16.mxu0 0
        %1538 = vmatpush1.bf16.msra.mxu0 0
        %1539 = vmatprep.subr.bf16.mxu0 %v1508
        %1540 = vmatpush1.bf16.msra.mxu0 %v1505
        %1541 = vmatprep.subr.bf16.mxu0 0
        %1542 = vmatpush2.bf16.msra.mxu0 0
        %1543 = vmatprep.subr.bf16.mxu0 0
        %1544 = vmatpush2.bf16.msra.mxu0 0
        %1545 = vmatprep.subr.bf16.mxu0 0
        %1546 = vmatpush2.bf16.msra.mxu0 0
        %1547 = vmatprep.subr.bf16.mxu0 0
        %1548 = vmatpush2.bf16.msra.mxu0 0
        %1549 = vmatprep.subr.bf16.mxu0 0
        %1550 = vmatpush2.bf16.msra.mxu0 0
        %1551 = vmatprep.subr.bf16.mxu0 0
        %1552 = vmatpush2.bf16.msra.mxu0 0
        %1553 = vmatprep.subr.bf16.mxu0 0
        %1554 = vmatpush2.bf16.msra.mxu0 0
        %1555 = vmatprep.subr.bf16.mxu0 0
        %1556 = vmatpush2.bf16.msra.mxu0 0
        %1557 = vmatprep.mubr.bf16.mxu0 0
        %1558 = vmatmul.mubr.bf16.gmra.mxu0 %v1502
        %v1559 = vpop.f32.mrf.mxu0
        %v1560 = vadd.f32 0.0, %v1559
        %v1561 = vpop.f32.mrf.mxu0
        %v1562 = vadd.f32 0.0, %v1561
        %v1563 = vpop.f32.mrf.mxu0
        %v1564 = vpop.f32.mrf.mxu0
        %1565 = vdwg.mxu0
        %1566 = vmatprep.subr.bf16.mxu0 0
        %1567 = vmatpush1.bf16.msra.mxu0 0
        %1568 = vmatprep.subr.bf16.mxu0 0
        %1569 = vmatpush1.bf16.msra.mxu0 0
        %1570 = vmatprep.subr.bf16.mxu0 0
        %1571 = vmatpush1.bf16.msra.mxu0 0
        %1572 = vmatprep.subr.bf16.mxu0 0
        %1573 = vmatpush1.bf16.msra.mxu0 0
        %1574 = vmatprep.subr.bf16.mxu0 0
        %1575 = vmatpush1.bf16.msra.mxu0 0
        %1576 = vmatprep.subr.bf16.mxu0 0
        %1577 = vmatpush1.bf16.msra.mxu0 0
        %1578 = vmatprep.subr.bf16.mxu0 0
        %1579 = vmatpush1.bf16.msra.mxu0 0
        %1580 = vmatprep.subr.bf16.mxu0 %v1514
        %1581 = vmatpush1.bf16.msra.mxu0 %v1511
        %1582 = vmatprep.subr.bf16.mxu0 0
        %1583 = vmatpush2.bf16.msra.mxu0 0
        %1584 = vmatprep.subr.bf16.mxu0 0
        %1585 = vmatpush2.bf16.msra.mxu0 0
        %1586 = vmatprep.subr.bf16.mxu0 0
        %1587 = vmatpush2.bf16.msra.mxu0 0
        %1588 = vmatprep.subr.bf16.mxu0 0
        %1589 = vmatpush2.bf16.msra.mxu0 0
        %1590 = vmatprep.subr.bf16.mxu0 0
        %1591 = vmatpush2.bf16.msra.mxu0 0
        %1592 = vmatprep.subr.bf16.mxu0 0
        %1593 = vmatpush2.bf16.msra.mxu0 0
        %1594 = vmatprep.subr.bf16.mxu0 0
        %1595 = vmatpush2.bf16.msra.mxu0 0
        %1596 = vmatprep.subr.bf16.mxu0 0
        %1597 = vmatpush2.bf16.msra.mxu0 0
        %1598 = vmatprep.mubr.bf16.mxu0 0
        %1599 = vmatmul.mubr.bf16.gmra.mxu0 %v1502
        %v1600 = vpop.f32.mrf.mxu0
        %v1601 = vadd.f32 0.0, %v1600
        %v1602 = vpop.f32.mrf.mxu0
        %v1603 = vadd.f32 0.0, %v1602
        %v1604 = vpop.f32.mrf.mxu0
        %v1605 = vpop.f32.mrf.mxu0
        %1606 = vdwg.mxu0
        %1607 = vmatprep.subr.bf16.mxu0 0
        %1608 = vmatpush1.bf16.msra.mxu0 0
        %1609 = vmatprep.subr.bf16.mxu0 0
        %1610 = vmatpush1.bf16.msra.mxu0 0
        %1611 = vmatprep.subr.bf16.mxu0 0
        %1612 = vmatpush1.bf16.msra.mxu0 0
        %1613 = vmatprep.subr.bf16.mxu0 0
        %1614 = vmatpush1.bf16.msra.mxu0 0
        %1615 = vmatprep.subr.bf16.mxu0 0
        %1616 = vmatpush1.bf16.msra.mxu0 0
        %1617 = vmatprep.subr.bf16.mxu0 0
        %1618 = vmatpush1.bf16.msra.mxu0 0
        %1619 = vmatprep.subr.bf16.mxu0 0
        %1620 = vmatpush1.bf16.msra.mxu0 0
        %1621 = vmatprep.subr.bf16.mxu0 %v1520
        %1622 = vmatpush1.bf16.msra.mxu0 %v1517
        %1623 = vmatprep.subr.bf16.mxu0 0
        %1624 = vmatpush2.bf16.msra.mxu0 0
        %1625 = vmatprep.subr.bf16.mxu0 0
        %1626 = vmatpush2.bf16.msra.mxu0 0
        %1627 = vmatprep.subr.bf16.mxu0 0
        %1628 = vmatpush2.bf16.msra.mxu0 0
        %1629 = vmatprep.subr.bf16.mxu0 0
        %1630 = vmatpush2.bf16.msra.mxu0 0
        %1631 = vmatprep.subr.bf16.mxu0 0
        %1632 = vmatpush2.bf16.msra.mxu0 0
        %1633 = vmatprep.subr.bf16.mxu0 0
        %1634 = vmatpush2.bf16.msra.mxu0 0
        %1635 = vmatprep.subr.bf16.mxu0 0
        %1636 = vmatpush2.bf16.msra.mxu0 0
        %1637 = vmatprep.subr.bf16.mxu0 0
        %1638 = vmatpush2.bf16.msra.mxu0 0
        %1639 = vmatprep.mubr.bf16.mxu0 0
        %1640 = vmatmul.mubr.bf16.gmra.mxu0 %v1502
        %v1641 = vpop.f32.mrf.mxu0
        %v1642 = vadd.f32 0.0, %v1641
        %v1643 = vpop.f32.mrf.mxu0
        %v1644 = vadd.f32 0.0, %v1643
        %v1645 = vpop.f32.mrf.mxu0
        %v1646 = vpop.f32.mrf.mxu0
        %1647 = vdwg.mxu0
        %1648 = vmatprep.subr.bf16.mxu0 0
        %1649 = vmatpush1.bf16.msra.mxu0 0
        %1650 = vmatprep.subr.bf16.mxu0 0
        %1651 = vmatpush1.bf16.msra.mxu0 0
        %1652 = vmatprep.subr.bf16.mxu0 0
        %1653 = vmatpush1.bf16.msra.mxu0 0
        %1654 = vmatprep.subr.bf16.mxu0 0
        %1655 = vmatpush1.bf16.msra.mxu0 0
        %1656 = vmatprep.subr.bf16.mxu0 0
        %1657 = vmatpush1.bf16.msra.mxu0 0
        %1658 = vmatprep.subr.bf16.mxu0 0
        %1659 = vmatpush1.bf16.msra.mxu0 0
        %1660 = vmatprep.subr.bf16.mxu0 0
        %1661 = vmatpush1.bf16.msra.mxu0 0
        %1662 = vmatprep.subr.bf16.mxu0 0
        %1663 = vmatpush1.bf16.msra.mxu0 %v1523
        %1664 = vmatprep.subr.bf16.mxu0 0
        %1665 = vmatpush2.bf16.msra.mxu0 0
        %1666 = vmatprep.subr.bf16.mxu0 0
        %1667 = vmatpush2.bf16.msra.mxu0 0
        %1668 = vmatprep.subr.bf16.mxu0 0
        %1669 = vmatpush2.bf16.msra.mxu0 0
        %1670 = vmatprep.subr.bf16.mxu0 0
        %1671 = vmatpush2.bf16.msra.mxu0 0
        %1672 = vmatprep.subr.bf16.mxu0 0
        %1673 = vmatpush2.bf16.msra.mxu0 0
        %1674 = vmatprep.subr.bf16.mxu0 0
        %1675 = vmatpush2.bf16.msra.mxu0 0
        %1676 = vmatprep.subr.bf16.mxu0 0
        %1677 = vmatpush2.bf16.msra.mxu0 0
        %1678 = vmatprep.subr.bf16.mxu0 0
        %1679 = vmatpush2.bf16.msra.mxu0 0
        %1680 = vmatprep.mubr.bf16.mxu0 0
        %1681 = vmatmul.mubr.bf16.gmra.mxu0 %v1502
        %v1682 = vpop.f32.mrf.mxu0
        %v1683 = vadd.f32 0.0, %v1682
        %v1684 = vpop.f32.mrf.mxu0
        %v1685 = vpop.f32.mrf.mxu0
        %v1686 = vpop.f32.mrf.mxu0
        %1687 = vdwg.mxu0
        %v1688 = vadd.f32 %v1422, %v1560
        %v1689 = vadd.f32 %v1423, %v1562
        %v1690 = vadd.f32 %v1424, %v1601
        %v1691 = vadd.f32 %v1425, %v1603
        %v1692 = vadd.f32 %v1426, %v1642
        %v1693 = vadd.f32 %v1427, %v1644
        %v1694 = vadd.f32 %v1428, %v1683
        %s1695 = scalar_lea.vmem %s1, 16
        %v1696 = vld [vmem:[%s1695] sm:$0xf]
        %1697 = vrot.lane.b32.xlu0 %v654, 96
        %v1698 = vpop.permute.xlu0 %1697
        %1699 = vrot.lane.b32.xlu0 %v655, 96
        %v1700 = vpop.permute.xlu0 %1699
        %1701 = vrot.lane.b32.xlu0 %v656, 96
        %v1702 = vpop.permute.xlu0 %1701
        %1703 = vrot.lane.b32.xlu0 %v657, 96
        %v1704 = vpop.permute.xlu0 %1703
        %1705 = vrot.lane.b32.xlu0 %v658, 96
        %v1706 = vpop.permute.xlu0 %1705
        %1707 = vrot.lane.b32.xlu0 %v659, 96
        %v1708 = vpop.permute.xlu0 %1707
        %1709 = vrot.lane.b32.xlu0 %v660, 96
        %v1710 = vpop.permute.xlu0 %1709
        %vm1711 = vcmask 785408
        %v1712 = vsel %vm1711, %v1698, %v1700
        %v1713 = vsel %vm1711, %v1700, %v1702
        %v1714 = vsel %vm1711, %v1702, %v1704
        %v1715 = vsel %vm1711, %v1704, %v1706
        %v1716 = vsel %vm1711, %v1706, %v1708
        %v1717 = vsel %vm1711, %v1708, %v1710
        %v1719 = vsel %vm689, %v1696, 0
        %v1722 = vsel %vm693, %v1712, 0
        %v1725 = vsel %vm693, %v1713, 0
        %v1728 = vsel %vm693, %v1714, 0
        %v1731 = vsel %vm693, %v1715, 0
        %v1734 = vsel %vm693, %v1716, 0
        %v1737 = vsel %vm693, %v1717, 0
        %v1740 = vsel %vm693, %v1710, 0
        %1742 = vmatprep.subr.bf16.mxu0 0
        %1743 = vmatpush1.bf16.msra.mxu0 0
        %1744 = vmatprep.subr.bf16.mxu0 0
        %1745 = vmatpush1.bf16.msra.mxu0 0
        %1746 = vmatprep.subr.bf16.mxu0 0
        %1747 = vmatpush1.bf16.msra.mxu0 0
        %1748 = vmatprep.subr.bf16.mxu0 0
        %1749 = vmatpush1.bf16.msra.mxu0 0
        %1750 = vmatprep.subr.bf16.mxu0 0
        %1751 = vmatpush1.bf16.msra.mxu0 0
        %1752 = vmatprep.subr.bf16.mxu0 0
        %1753 = vmatpush1.bf16.msra.mxu0 0
        %1754 = vmatprep.subr.bf16.mxu0 0
        %1755 = vmatpush1.bf16.msra.mxu0 0
        %1756 = vmatprep.subr.bf16.mxu0 %v1725
        %1757 = vmatpush1.bf16.msra.mxu0 %v1722
        %1758 = vmatprep.subr.bf16.mxu0 0
        %1759 = vmatpush2.bf16.msra.mxu0 0
        %1760 = vmatprep.subr.bf16.mxu0 0
        %1761 = vmatpush2.bf16.msra.mxu0 0
        %1762 = vmatprep.subr.bf16.mxu0 0
        %1763 = vmatpush2.bf16.msra.mxu0 0
        %1764 = vmatprep.subr.bf16.mxu0 0
        %1765 = vmatpush2.bf16.msra.mxu0 0
        %1766 = vmatprep.subr.bf16.mxu0 0
        %1767 = vmatpush2.bf16.msra.mxu0 0
        %1768 = vmatprep.subr.bf16.mxu0 0
        %1769 = vmatpush2.bf16.msra.mxu0 0
        %1770 = vmatprep.subr.bf16.mxu0 0
        %1771 = vmatpush2.bf16.msra.mxu0 0
        %1772 = vmatprep.subr.bf16.mxu0 0
        %1773 = vmatpush2.bf16.msra.mxu0 0
        %1774 = vmatprep.mubr.bf16.mxu0 0
        %1775 = vmatmul.mubr.bf16.gmra.mxu0 %v1719
        %v1776 = vpop.f32.mrf.mxu0
        %v1777 = vadd.f32 0.0, %v1776
        %v1778 = vpop.f32.mrf.mxu0
        %v1779 = vadd.f32 0.0, %v1778
        %v1780 = vpop.f32.mrf.mxu0
        %v1781 = vpop.f32.mrf.mxu0
        %1782 = vdwg.mxu0
        %1783 = vmatprep.subr.bf16.mxu0 0
        %1784 = vmatpush1.bf16.msra.mxu0 0
        %1785 = vmatprep.subr.bf16.mxu0 0
        %1786 = vmatpush1.bf16.msra.mxu0 0
        %1787 = vmatprep.subr.bf16.mxu0 0
        %1788 = vmatpush1.bf16.msra.mxu0 0
        %1789 = vmatprep.subr.bf16.mxu0 0
        %1790 = vmatpush1.bf16.msra.mxu0 0
        %1791 = vmatprep.subr.bf16.mxu0 0
        %1792 = vmatpush1.bf16.msra.mxu0 0
        %1793 = vmatprep.subr.bf16.mxu0 0
        %1794 = vmatpush1.bf16.msra.mxu0 0
        %1795 = vmatprep.subr.bf16.mxu0 0
        %1796 = vmatpush1.bf16.msra.mxu0 0
        %1797 = vmatprep.subr.bf16.mxu0 %v1731
        %1798 = vmatpush1.bf16.msra.mxu0 %v1728
        %1799 = vmatprep.subr.bf16.mxu0 0
        %1800 = vmatpush2.bf16.msra.mxu0 0
        %1801 = vmatprep.subr.bf16.mxu0 0
        %1802 = vmatpush2.bf16.msra.mxu0 0
        %1803 = vmatprep.subr.bf16.mxu0 0
        %1804 = vmatpush2.bf16.msra.mxu0 0
        %1805 = vmatprep.subr.bf16.mxu0 0
        %1806 = vmatpush2.bf16.msra.mxu0 0
        %1807 = vmatprep.subr.bf16.mxu0 0
        %1808 = vmatpush2.bf16.msra.mxu0 0
        %1809 = vmatprep.subr.bf16.mxu0 0
        %1810 = vmatpush2.bf16.msra.mxu0 0
        %1811 = vmatprep.subr.bf16.mxu0 0
        %1812 = vmatpush2.bf16.msra.mxu0 0
        %1813 = vmatprep.subr.bf16.mxu0 0
        %1814 = vmatpush2.bf16.msra.mxu0 0
        %1815 = vmatprep.mubr.bf16.mxu0 0
        %1816 = vmatmul.mubr.bf16.gmra.mxu0 %v1719
        %v1817 = vpop.f32.mrf.mxu0
        %v1818 = vadd.f32 0.0, %v1817
        %v1819 = vpop.f32.mrf.mxu0
        %v1820 = vadd.f32 0.0, %v1819
        %v1821 = vpop.f32.mrf.mxu0
        %v1822 = vpop.f32.mrf.mxu0
        %1823 = vdwg.mxu0
        %1824 = vmatprep.subr.bf16.mxu0 0
        %1825 = vmatpush1.bf16.msra.mxu0 0
        %1826 = vmatprep.subr.bf16.mxu0 0
        %1827 = vmatpush1.bf16.msra.mxu0 0
        %1828 = vmatprep.subr.bf16.mxu0 0
        %1829 = vmatpush1.bf16.msra.mxu0 0
        %1830 = vmatprep.subr.bf16.mxu0 0
        %1831 = vmatpush1.bf16.msra.mxu0 0
        %1832 = vmatprep.subr.bf16.mxu0 0
        %1833 = vmatpush1.bf16.msra.mxu0 0
        %1834 = vmatprep.subr.bf16.mxu0 0
        %1835 = vmatpush1.bf16.msra.mxu0 0
        %1836 = vmatprep.subr.bf16.mxu0 0
        %1837 = vmatpush1.bf16.msra.mxu0 0
        %1838 = vmatprep.subr.bf16.mxu0 %v1737
        %1839 = vmatpush1.bf16.msra.mxu0 %v1734
        %1840 = vmatprep.subr.bf16.mxu0 0
        %1841 = vmatpush2.bf16.msra.mxu0 0
        %1842 = vmatprep.subr.bf16.mxu0 0
        %1843 = vmatpush2.bf16.msra.mxu0 0
        %1844 = vmatprep.subr.bf16.mxu0 0
        %1845 = vmatpush2.bf16.msra.mxu0 0
        %1846 = vmatprep.subr.bf16.mxu0 0
        %1847 = vmatpush2.bf16.msra.mxu0 0
        %1848 = vmatprep.subr.bf16.mxu0 0
        %1849 = vmatpush2.bf16.msra.mxu0 0
        %1850 = vmatprep.subr.bf16.mxu0 0
        %1851 = vmatpush2.bf16.msra.mxu0 0
        %1852 = vmatprep.subr.bf16.mxu0 0
        %1853 = vmatpush2.bf16.msra.mxu0 0
        %1854 = vmatprep.subr.bf16.mxu0 0
        %1855 = vmatpush2.bf16.msra.mxu0 0
        %1856 = vmatprep.mubr.bf16.mxu0 0
        %1857 = vmatmul.mubr.bf16.gmra.mxu0 %v1719
        %v1858 = vpop.f32.mrf.mxu0
        %v1859 = vadd.f32 0.0, %v1858
        %v1860 = vpop.f32.mrf.mxu0
        %v1861 = vadd.f32 0.0, %v1860
        %v1862 = vpop.f32.mrf.mxu0
        %v1863 = vpop.f32.mrf.mxu0
        %1864 = vdwg.mxu0
        %1865 = vmatprep.subr.bf16.mxu0 0
        %1866 = vmatpush1.bf16.msra.mxu0 0
        %1867 = vmatprep.subr.bf16.mxu0 0
        %1868 = vmatpush1.bf16.msra.mxu0 0
        %1869 = vmatprep.subr.bf16.mxu0 0
        %1870 = vmatpush1.bf16.msra.mxu0 0
        %1871 = vmatprep.subr.bf16.mxu0 0
        %1872 = vmatpush1.bf16.msra.mxu0 0
        %1873 = vmatprep.subr.bf16.mxu0 0
        %1874 = vmatpush1.bf16.msra.mxu0 0
        %1875 = vmatprep.subr.bf16.mxu0 0
        %1876 = vmatpush1.bf16.msra.mxu0 0
        %1877 = vmatprep.subr.bf16.mxu0 0
        %1878 = vmatpush1.bf16.msra.mxu0 0
        %1879 = vmatprep.subr.bf16.mxu0 0
        %1880 = vmatpush1.bf16.msra.mxu0 %v1740
        %1881 = vmatprep.subr.bf16.mxu0 0
        %1882 = vmatpush2.bf16.msra.mxu0 0
        %1883 = vmatprep.subr.bf16.mxu0 0
        %1884 = vmatpush2.bf16.msra.mxu0 0
        %1885 = vmatprep.subr.bf16.mxu0 0
        %1886 = vmatpush2.bf16.msra.mxu0 0
        %1887 = vmatprep.subr.bf16.mxu0 0
        %1888 = vmatpush2.bf16.msra.mxu0 0
        %1889 = vmatprep.subr.bf16.mxu0 0
        %1890 = vmatpush2.bf16.msra.mxu0 0
        %1891 = vmatprep.subr.bf16.mxu0 0
        %1892 = vmatpush2.bf16.msra.mxu0 0
        %1893 = vmatprep.subr.bf16.mxu0 0
        %1894 = vmatpush2.bf16.msra.mxu0 0
        %1895 = vmatprep.subr.bf16.mxu0 0
        %1896 = vmatpush2.bf16.msra.mxu0 0
        %1897 = vmatprep.mubr.bf16.mxu0 0
        %1898 = vmatmul.mubr.bf16.gmra.mxu0 %v1719
        %v1899 = vpop.f32.mrf.mxu0
        %v1900 = vadd.f32 0.0, %v1899
        %v1901 = vpop.f32.mrf.mxu0
        %v1902 = vpop.f32.mrf.mxu0
        %v1903 = vpop.f32.mrf.mxu0
        %1904 = vdwg.mxu0
        %v1905 = vadd.f32 %v1688, %v1777
        %v1906 = vadd.f32 %v1689, %v1779
        %v1907 = vadd.f32 %v1690, %v1818
        %v1908 = vadd.f32 %v1691, %v1820
        %v1909 = vadd.f32 %v1692, %v1859
        %v1910 = vadd.f32 %v1693, %v1861
        %v1911 = vadd.f32 %v1694, %v1900
        %1912 = vrot.lane.b32.xlu0 %v1131, 33
        %v1913 = vpop.permute.xlu0 %1912
        %1914 = vrot.lane.b32.xlu0 %v1135, 33
        %v1915 = vpop.permute.xlu0 %1914
        %1916 = vrot.lane.b32.xlu0 %v1139, 33
        %v1917 = vpop.permute.xlu0 %1916
        %1918 = vrot.lane.b32.xlu0 %v1143, 33
        %v1919 = vpop.permute.xlu0 %1918
        %1920 = vrot.lane.b32.xlu0 %v1147, 33
        %v1921 = vpop.permute.xlu0 %1920
        %1922 = vrot.lane.b32.xlu0 %v1151, 33
        %v1923 = vpop.permute.xlu0 %1922
        %1924 = vrot.lane.b32.xlu0 %v1155, 33
        %v1925 = vpop.permute.xlu0 %1924
        %vm1926 = vcmask 269312
        %v1927 = vsel %vm1926, %v1913, %v1915
        %v1928 = vsel %vm1926, %v1915, %v1917
        %v1929 = vsel %vm1926, %v1917, %v1919
        %v1930 = vsel %vm1926, %v1919, %v1921
        %v1931 = vsel %vm1926, %v1921, %v1923
        %v1932 = vsel %vm1926, %v1923, %v1925
        %v1940 = vmul.f32 %v532, %v1913
        %v1941 = vmul.f32 %v519, %v1927
        %v1942 = vmul.f32 %v520, %v1928
        %v1943 = vmul.f32 %v521, %v1929
        %v1944 = vmul.f32 %v522, %v1930
        %v1945 = vmul.f32 %v523, %v1931
        %v1946 = vmul.f32 %v534, %v1932
        %s1947 = scalar_lea.vmem %s1, 20
        %v1948 = vld [vmem:[%s1947] sm:$0xf]
        %v1949 = vpack.c.bf16 %v1940, %v1940
        %v1950 = vpack.c.bf16 %v1941, %v1941
        %v1951 = vpack.c.bf16 %v1942, %v1942
        %v1952 = vpack.c.bf16 %v1943, %v1943
        %v1953 = vpack.c.bf16 %v1944, %v1944
        %v1954 = vpack.c.bf16 %v1945, %v1945
        %v1955 = vpack.c.bf16 %v1946, %v1946
        %1963 = vrot.lane.b32.xlu0 %v1949, 95
        %v1964 = vpop.permute.xlu0 %1963
        %1965 = vrot.lane.b32.xlu0 %v1950, 95
        %v1966 = vpop.permute.xlu0 %1965
        %1967 = vrot.lane.b32.xlu0 %v1951, 95
        %v1968 = vpop.permute.xlu0 %1967
        %1969 = vrot.lane.b32.xlu0 %v1952, 95
        %v1970 = vpop.permute.xlu0 %1969
        %1971 = vrot.lane.b32.xlu0 %v1953, 95
        %v1972 = vpop.permute.xlu0 %1971
        %1973 = vrot.lane.b32.xlu0 %v1954, 95
        %v1974 = vpop.permute.xlu0 %1973
        %1975 = vrot.lane.b32.xlu0 %v1955, 95
        %v1976 = vpop.permute.xlu0 %1975
        %vm1977 = vcmask 777216
        %v1978 = vsel %vm1977, %v1964, %v1966
        %v1979 = vsel %vm1977, %v1966, %v1968
        %v1980 = vsel %vm1977, %v1968, %v1970
        %v1981 = vsel %vm1977, %v1970, %v1972
        %v1982 = vsel %vm1977, %v1972, %v1974
        %v1983 = vsel %vm1977, %v1974, %v1976
        %v1985 = vsel %vm689, %v1948, 0
        %v1988 = vsel %vm693, %v1978, 0
        %v1991 = vsel %vm693, %v1979, 0
        %v1994 = vsel %vm693, %v1980, 0
        %v1997 = vsel %vm693, %v1981, 0
        %v2000 = vsel %vm693, %v1982, 0
        %v2003 = vsel %vm693, %v1983, 0
        %v2006 = vsel %vm693, %v1976, 0
        %2008 = vmatprep.subr.bf16.mxu0 0
        %2009 = vmatpush1.bf16.msra.mxu0 0
        %2010 = vmatprep.subr.bf16.mxu0 0
        %2011 = vmatpush1.bf16.msra.mxu0 0
        %2012 = vmatprep.subr.bf16.mxu0 0
        %2013 = vmatpush1.bf16.msra.mxu0 0
        %2014 = vmatprep.subr.bf16.mxu0 0
        %2015 = vmatpush1.bf16.msra.mxu0 0
        %2016 = vmatprep.subr.bf16.mxu0 0
        %2017 = vmatpush1.bf16.msra.mxu0 0
        %2018 = vmatprep.subr.bf16.mxu0 0
        %2019 = vmatpush1.bf16.msra.mxu0 0
        %2020 = vmatprep.subr.bf16.mxu0 0
        %2021 = vmatpush1.bf16.msra.mxu0 0
        %2022 = vmatprep.subr.bf16.mxu0 %v1991
        %2023 = vmatpush1.bf16.msra.mxu0 %v1988
        %2024 = vmatprep.subr.bf16.mxu0 0
        %2025 = vmatpush2.bf16.msra.mxu0 0
        %2026 = vmatprep.subr.bf16.mxu0 0
        %2027 = vmatpush2.bf16.msra.mxu0 0
        %2028 = vmatprep.subr.bf16.mxu0 0
        %2029 = vmatpush2.bf16.msra.mxu0 0
        %2030 = vmatprep.subr.bf16.mxu0 0
        %2031 = vmatpush2.bf16.msra.mxu0 0
        %2032 = vmatprep.subr.bf16.mxu0 0
        %2033 = vmatpush2.bf16.msra.mxu0 0
        %2034 = vmatprep.subr.bf16.mxu0 0
        %2035 = vmatpush2.bf16.msra.mxu0 0
        %2036 = vmatprep.subr.bf16.mxu0 0
        %2037 = vmatpush2.bf16.msra.mxu0 0
        %2038 = vmatprep.subr.bf16.mxu0 0
        %2039 = vmatpush2.bf16.msra.mxu0 0
        %2040 = vmatprep.mubr.bf16.mxu0 0
        %2041 = vmatmul.mubr.bf16.gmra.mxu0 %v1985
        %v2042 = vpop.f32.mrf.mxu0
        %v2043 = vadd.f32 0.0, %v2042
        %v2044 = vpop.f32.mrf.mxu0
        %v2045 = vadd.f32 0.0, %v2044
        %v2046 = vpop.f32.mrf.mxu0
        %v2047 = vpop.f32.mrf.mxu0
        %2048 = vdwg.mxu0
        %2049 = vmatprep.subr.bf16.mxu0 0
        %2050 = vmatpush1.bf16.msra.mxu0 0
        %2051 = vmatprep.subr.bf16.mxu0 0
        %2052 = vmatpush1.bf16.msra.mxu0 0
        %2053 = vmatprep.subr.bf16.mxu0 0
        %2054 = vmatpush1.bf16.msra.mxu0 0
        %2055 = vmatprep.subr.bf16.mxu0 0
        %2056 = vmatpush1.bf16.msra.mxu0 0
        %2057 = vmatprep.subr.bf16.mxu0 0
        %2058 = vmatpush1.bf16.msra.mxu0 0
        %2059 = vmatprep.subr.bf16.mxu0 0
        %2060 = vmatpush1.bf16.msra.mxu0 0
        %2061 = vmatprep.subr.bf16.mxu0 0
        %2062 = vmatpush1.bf16.msra.mxu0 0
        %2063 = vmatprep.subr.bf16.mxu0 %v1997
        %2064 = vmatpush1.bf16.msra.mxu0 %v1994
        %2065 = vmatprep.subr.bf16.mxu0 0
        %2066 = vmatpush2.bf16.msra.mxu0 0
        %2067 = vmatprep.subr.bf16.mxu0 0
        %2068 = vmatpush2.bf16.msra.mxu0 0
        %2069 = vmatprep.subr.bf16.mxu0 0
        %2070 = vmatpush2.bf16.msra.mxu0 0
        %2071 = vmatprep.subr.bf16.mxu0 0
        %2072 = vmatpush2.bf16.msra.mxu0 0
        %2073 = vmatprep.subr.bf16.mxu0 0
        %2074 = vmatpush2.bf16.msra.mxu0 0
        %2075 = vmatprep.subr.bf16.mxu0 0
        %2076 = vmatpush2.bf16.msra.mxu0 0
        %2077 = vmatprep.subr.bf16.mxu0 0
        %2078 = vmatpush2.bf16.msra.mxu0 0
        %2079 = vmatprep.subr.bf16.mxu0 0
        %2080 = vmatpush2.bf16.msra.mxu0 0
        %2081 = vmatprep.mubr.bf16.mxu0 0
        %2082 = vmatmul.mubr.bf16.gmra.mxu0 %v1985
        %v2083 = vpop.f32.mrf.mxu0
        %v2084 = vadd.f32 0.0, %v2083
        %v2085 = vpop.f32.mrf.mxu0
        %v2086 = vadd.f32 0.0, %v2085
        %v2087 = vpop.f32.mrf.mxu0
        %v2088 = vpop.f32.mrf.mxu0
        %2089 = vdwg.mxu0
        %2090 = vmatprep.subr.bf16.mxu0 0
        %2091 = vmatpush1.bf16.msra.mxu0 0
        %2092 = vmatprep.subr.bf16.mxu0 0
        %2093 = vmatpush1.bf16.msra.mxu0 0
        %2094 = vmatprep.subr.bf16.mxu0 0
        %2095 = vmatpush1.bf16.msra.mxu0 0
        %2096 = vmatprep.subr.bf16.mxu0 0
        %2097 = vmatpush1.bf16.msra.mxu0 0
        %2098 = vmatprep.subr.bf16.mxu0 0
        %2099 = vmatpush1.bf16.msra.mxu0 0
        %2100 = vmatprep.subr.bf16.mxu0 0
        %2101 = vmatpush1.bf16.msra.mxu0 0
        %2102 = vmatprep.subr.bf16.mxu0 0
        %2103 = vmatpush1.bf16.msra.mxu0 0
        %2104 = vmatprep.subr.bf16.mxu0 %v2003
        %2105 = vmatpush1.bf16.msra.mxu0 %v2000
        %2106 = vmatprep.subr.bf16.mxu0 0
        %2107 = vmatpush2.bf16.msra.mxu0 0
        %2108 = vmatprep.subr.bf16.mxu0 0
        %2109 = vmatpush2.bf16.msra.mxu0 0
        %2110 = vmatprep.subr.bf16.mxu0 0
        %2111 = vmatpush2.bf16.msra.mxu0 0
        %2112 = vmatprep.subr.bf16.mxu0 0
        %2113 = vmatpush2.bf16.msra.mxu0 0
        %2114 = vmatprep.subr.bf16.mxu0 0
        %2115 = vmatpush2.bf16.msra.mxu0 0
        %2116 = vmatprep.subr.bf16.mxu0 0
        %2117 = vmatpush2.bf16.msra.mxu0 0
        %2118 = vmatprep.subr.bf16.mxu0 0
        %2119 = vmatpush2.bf16.msra.mxu0 0
        %2120 = vmatprep.subr.bf16.mxu0 0
        %2121 = vmatpush2.bf16.msra.mxu0 0
        %2122 = vmatprep.mubr.bf16.mxu0 0
        %2123 = vmatmul.mubr.bf16.gmra.mxu0 %v1985
        %v2124 = vpop.f32.mrf.mxu0
        %v2125 = vadd.f32 0.0, %v2124
        %v2126 = vpop.f32.mrf.mxu0
        %v2127 = vadd.f32 0.0, %v2126
        %v2128 = vpop.f32.mrf.mxu0
        %v2129 = vpop.f32.mrf.mxu0
        %2130 = vdwg.mxu0
        %2131 = vmatprep.subr.bf16.mxu0 0
        %2132 = vmatpush1.bf16.msra.mxu0 0
        %2133 = vmatprep.subr.bf16.mxu0 0
        %2134 = vmatpush1.bf16.msra.mxu0 0
        %2135 = vmatprep.subr.bf16.mxu0 0
        %2136 = vmatpush1.bf16.msra.mxu0 0
        %2137 = vmatprep.subr.bf16.mxu0 0
        %2138 = vmatpush1.bf16.msra.mxu0 0
        %2139 = vmatprep.subr.bf16.mxu0 0
        %2140 = vmatpush1.bf16.msra.mxu0 0
        %2141 = vmatprep.subr.bf16.mxu0 0
        %2142 = vmatpush1.bf16.msra.mxu0 0
        %2143 = vmatprep.subr.bf16.mxu0 0
        %2144 = vmatpush1.bf16.msra.mxu0 0
        %2145 = vmatprep.subr.bf16.mxu0 0
        %2146 = vmatpush1.bf16.msra.mxu0 %v2006
        %2147 = vmatprep.subr.bf16.mxu0 0
        %2148 = vmatpush2.bf16.msra.mxu0 0
        %2149 = vmatprep.subr.bf16.mxu0 0
        %2150 = vmatpush2.bf16.msra.mxu0 0
        %2151 = vmatprep.subr.bf16.mxu0 0
        %2152 = vmatpush2.bf16.msra.mxu0 0
        %2153 = vmatprep.subr.bf16.mxu0 0
        %2154 = vmatpush2.bf16.msra.mxu0 0
        %2155 = vmatprep.subr.bf16.mxu0 0
        %2156 = vmatpush2.bf16.msra.mxu0 0
        %2157 = vmatprep.subr.bf16.mxu0 0
        %2158 = vmatpush2.bf16.msra.mxu0 0
        %2159 = vmatprep.subr.bf16.mxu0 0
        %2160 = vmatpush2.bf16.msra.mxu0 0
        %2161 = vmatprep.subr.bf16.mxu0 0
        %2162 = vmatpush2.bf16.msra.mxu0 0
        %2163 = vmatprep.mubr.bf16.mxu0 0
        %2164 = vmatmul.mubr.bf16.gmra.mxu0 %v1985
        %v2165 = vpop.f32.mrf.mxu0
        %v2166 = vadd.f32 0.0, %v2165
        %v2167 = vpop.f32.mrf.mxu0
        %v2168 = vpop.f32.mrf.mxu0
        %v2169 = vpop.f32.mrf.mxu0
        %2170 = vdwg.mxu0
        %v2171 = vadd.f32 %v1905, %v2043
        %v2172 = vadd.f32 %v1906, %v2045
        %v2173 = vadd.f32 %v1907, %v2084
        %v2174 = vadd.f32 %v1908, %v2086
        %v2175 = vadd.f32 %v1909, %v2125
        %v2176 = vadd.f32 %v1910, %v2127
        %v2177 = vadd.f32 %v1911, %v2166
        %2178 = vrot.lane.b32.xlu0 %v577, 59
        %v2179 = vpop.permute.xlu0 %2178
        %2180 = vrot.lane.b32.xlu0 %v581, 59
        %v2181 = vpop.permute.xlu0 %2180
        %2182 = vrot.lane.b32.xlu0 %v585, 59
        %v2183 = vpop.permute.xlu0 %2182
        %2184 = vrot.lane.b32.xlu0 %v589, 59
        %v2185 = vpop.permute.xlu0 %2184
        %2186 = vrot.lane.b32.xlu0 %v593, 59
        %v2187 = vpop.permute.xlu0 %2186
        %2188 = vrot.lane.b32.xlu0 %v597, 59
        %v2189 = vpop.permute.xlu0 %2188
        %2190 = vrot.lane.b32.xlu0 %v601, 59
        %v2191 = vpop.permute.xlu0 %2190
        %vm2192 = vcmask 482304
        %v2193 = vsel %vm2192, %v2179, %v2181
        %v2194 = vsel %vm2192, %v2181, %v2183
        %v2195 = vsel %vm2192, %v2183, %v2185
        %v2196 = vsel %vm2192, %v2185, %v2187
        %v2197 = vsel %vm2192, %v2187, %v2189
        %v2198 = vsel %vm2192, %v2189, %v2191
        %v2206 = vmul.f32 %v532, %v2179
        %v2207 = vmul.f32 %v519, %v2193
        %v2208 = vmul.f32 %v520, %v2194
        %v2209 = vmul.f32 %v521, %v2195
        %v2210 = vmul.f32 %v522, %v2196
        %v2211 = vmul.f32 %v523, %v2197
        %v2212 = vmul.f32 %v534, %v2198
        %s2213 = scalar_lea.vmem %s1, 24
        %v2214 = vld [vmem:[%s2213] sm:$0xf]
        %v2215 = vpack.c.bf16 %v2206, %v2206
        %v2216 = vpack.c.bf16 %v2207, %v2207
        %v2217 = vpack.c.bf16 %v2208, %v2208
        %v2218 = vpack.c.bf16 %v2209, %v2209
        %v2219 = vpack.c.bf16 %v2210, %v2210
        %v2220 = vpack.c.bf16 %v2211, %v2211
        %v2221 = vpack.c.bf16 %v2212, %v2212
        %2229 = vrot.lane.b32.xlu0 %v2215, 69
        %v2230 = vpop.permute.xlu0 %2229
        %2231 = vrot.lane.b32.xlu0 %v2216, 69
        %v2232 = vpop.permute.xlu0 %2231
        %2233 = vrot.lane.b32.xlu0 %v2217, 69
        %v2234 = vpop.permute.xlu0 %2233
        %2235 = vrot.lane.b32.xlu0 %v2218, 69
        %v2236 = vpop.permute.xlu0 %2235
        %2237 = vrot.lane.b32.xlu0 %v2219, 69
        %v2238 = vpop.permute.xlu0 %2237
        %2239 = vrot.lane.b32.xlu0 %v2220, 69
        %v2240 = vpop.permute.xlu0 %2239
        %2241 = vrot.lane.b32.xlu0 %v2221, 69
        %v2242 = vpop.permute.xlu0 %2241
        %vm2243 = vcmask 564224
        %v2244 = vsel %vm2243, %v2230, %v2232
        %v2245 = vsel %vm2243, %v2232, %v2234
        %v2246 = vsel %vm2243, %v2234, %v2236
        %v2247 = vsel %vm2243, %v2236, %v2238
        %v2248 = vsel %vm2243, %v2238, %v2240
        %v2249 = vsel %vm2243, %v2240, %v2242
        %v2251 = vsel %vm689, %v2214, 0
        %v2254 = vsel %vm693, %v2244, 0
        %v2257 = vsel %vm693, %v2245, 0
        %v2260 = vsel %vm693, %v2246, 0
        %v2263 = vsel %vm693, %v2247, 0
        %v2266 = vsel %vm693, %v2248, 0
        %v2269 = vsel %vm693, %v2249, 0
        %v2272 = vsel %vm693, %v2242, 0
        %2274 = vmatprep.subr.bf16.mxu0 0
        %2275 = vmatpush1.bf16.msra.mxu0 0
        %2276 = vmatprep.subr.bf16.mxu0 0
        %2277 = vmatpush1.bf16.msra.mxu0 0
        %2278 = vmatprep.subr.bf16.mxu0 0
        %2279 = vmatpush1.bf16.msra.mxu0 0
        %2280 = vmatprep.subr.bf16.mxu0 0
        %2281 = vmatpush1.bf16.msra.mxu0 0
        %2282 = vmatprep.subr.bf16.mxu0 0
        %2283 = vmatpush1.bf16.msra.mxu0 0
        %2284 = vmatprep.subr.bf16.mxu0 0
        %2285 = vmatpush1.bf16.msra.mxu0 0
        %2286 = vmatprep.subr.bf16.mxu0 0
        %2287 = vmatpush1.bf16.msra.mxu0 0
        %2288 = vmatprep.subr.bf16.mxu0 %v2257
        %2289 = vmatpush1.bf16.msra.mxu0 %v2254
        %2290 = vmatprep.subr.bf16.mxu0 0
        %2291 = vmatpush2.bf16.msra.mxu0 0
        %2292 = vmatprep.subr.bf16.mxu0 0
        %2293 = vmatpush2.bf16.msra.mxu0 0
        %2294 = vmatprep.subr.bf16.mxu0 0
        %2295 = vmatpush2.bf16.msra.mxu0 0
        %2296 = vmatprep.subr.bf16.mxu0 0
        %2297 = vmatpush2.bf16.msra.mxu0 0
        %2298 = vmatprep.subr.bf16.mxu0 0
        %2299 = vmatpush2.bf16.msra.mxu0 0
        %2300 = vmatprep.subr.bf16.mxu0 0
        %2301 = vmatpush2.bf16.msra.mxu0 0
        %2302 = vmatprep.subr.bf16.mxu0 0
        %2303 = vmatpush2.bf16.msra.mxu0 0
        %2304 = vmatprep.subr.bf16.mxu0 0
        %2305 = vmatpush2.bf16.msra.mxu0 0
        %2306 = vmatprep.mubr.bf16.mxu0 0
        %2307 = vmatmul.mubr.bf16.gmra.mxu0 %v2251
        %v2308 = vpop.f32.mrf.mxu0
        %v2309 = vadd.f32 0.0, %v2308
        %v2310 = vpop.f32.mrf.mxu0
        %v2311 = vadd.f32 0.0, %v2310
        %v2312 = vpop.f32.mrf.mxu0
        %v2313 = vpop.f32.mrf.mxu0
        %2314 = vdwg.mxu0
        %2315 = vmatprep.subr.bf16.mxu0 0
        %2316 = vmatpush1.bf16.msra.mxu0 0
        %2317 = vmatprep.subr.bf16.mxu0 0
        %2318 = vmatpush1.bf16.msra.mxu0 0
        %2319 = vmatprep.subr.bf16.mxu0 0
        %2320 = vmatpush1.bf16.msra.mxu0 0
        %2321 = vmatprep.subr.bf16.mxu0 0
        %2322 = vmatpush1.bf16.msra.mxu0 0
        %2323 = vmatprep.subr.bf16.mxu0 0
        %2324 = vmatpush1.bf16.msra.mxu0 0
        %2325 = vmatprep.subr.bf16.mxu0 0
        %2326 = vmatpush1.bf16.msra.mxu0 0
        %2327 = vmatprep.subr.bf16.mxu0 0
        %2328 = vmatpush1.bf16.msra.mxu0 0
        %2329 = vmatprep.subr.bf16.mxu0 %v2263
        %2330 = vmatpush1.bf16.msra.mxu0 %v2260
        %2331 = vmatprep.subr.bf16.mxu0 0
        %2332 = vmatpush2.bf16.msra.mxu0 0
        %2333 = vmatprep.subr.bf16.mxu0 0
        %2334 = vmatpush2.bf16.msra.mxu0 0
        %2335 = vmatprep.subr.bf16.mxu0 0
        %2336 = vmatpush2.bf16.msra.mxu0 0
        %2337 = vmatprep.subr.bf16.mxu0 0
        %2338 = vmatpush2.bf16.msra.mxu0 0
        %2339 = vmatprep.subr.bf16.mxu0 0
        %2340 = vmatpush2.bf16.msra.mxu0 0
        %2341 = vmatprep.subr.bf16.mxu0 0
        %2342 = vmatpush2.bf16.msra.mxu0 0
        %2343 = vmatprep.subr.bf16.mxu0 0
        %2344 = vmatpush2.bf16.msra.mxu0 0
        %2345 = vmatprep.subr.bf16.mxu0 0
        %2346 = vmatpush2.bf16.msra.mxu0 0
        %2347 = vmatprep.mubr.bf16.mxu0 0
        %2348 = vmatmul.mubr.bf16.gmra.mxu0 %v2251
        %v2349 = vpop.f32.mrf.mxu0
        %v2350 = vadd.f32 0.0, %v2349
        %v2351 = vpop.f32.mrf.mxu0
        %v2352 = vadd.f32 0.0, %v2351
        %v2353 = vpop.f32.mrf.mxu0
        %v2354 = vpop.f32.mrf.mxu0
        %2355 = vdwg.mxu0
        %2356 = vmatprep.subr.bf16.mxu0 0
        %2357 = vmatpush1.bf16.msra.mxu0 0
        %2358 = vmatprep.subr.bf16.mxu0 0
        %2359 = vmatpush1.bf16.msra.mxu0 0
        %2360 = vmatprep.subr.bf16.mxu0 0
        %2361 = vmatpush1.bf16.msra.mxu0 0
        %2362 = vmatprep.subr.bf16.mxu0 0
        %2363 = vmatpush1.bf16.msra.mxu0 0
        %2364 = vmatprep.subr.bf16.mxu0 0
        %2365 = vmatpush1.bf16.msra.mxu0 0
        %2366 = vmatprep.subr.bf16.mxu0 0
        %2367 = vmatpush1.bf16.msra.mxu0 0
        %2368 = vmatprep.subr.bf16.mxu0 0
        %2369 = vmatpush1.bf16.msra.mxu0 0
        %2370 = vmatprep.subr.bf16.mxu0 %v2269
        %2371 = vmatpush1.bf16.msra.mxu0 %v2266
        %2372 = vmatprep.subr.bf16.mxu0 0
        %2373 = vmatpush2.bf16.msra.mxu0 0
        %2374 = vmatprep.subr.bf16.mxu0 0
        %2375 = vmatpush2.bf16.msra.mxu0 0
        %2376 = vmatprep.subr.bf16.mxu0 0
        %2377 = vmatpush2.bf16.msra.mxu0 0
        %2378 = vmatprep.subr.bf16.mxu0 0
        %2379 = vmatpush2.bf16.msra.mxu0 0
        %2380 = vmatprep.subr.bf16.mxu0 0
        %2381 = vmatpush2.bf16.msra.mxu0 0
        %2382 = vmatprep.subr.bf16.mxu0 0
        %2383 = vmatpush2.bf16.msra.mxu0 0
        %2384 = vmatprep.subr.bf16.mxu0 0
        %2385 = vmatpush2.bf16.msra.mxu0 0
        %2386 = vmatprep.subr.bf16.mxu0 0
        %2387 = vmatpush2.bf16.msra.mxu0 0
        %2388 = vmatprep.mubr.bf16.mxu0 0
        %2389 = vmatmul.mubr.bf16.gmra.mxu0 %v2251
        %v2390 = vpop.f32.mrf.mxu0
        %v2391 = vadd.f32 0.0, %v2390
        %v2392 = vpop.f32.mrf.mxu0
        %v2393 = vadd.f32 0.0, %v2392
        %v2394 = vpop.f32.mrf.mxu0
        %v2395 = vpop.f32.mrf.mxu0
        %2396 = vdwg.mxu0
        %2397 = vmatprep.subr.bf16.mxu0 0
        %2398 = vmatpush1.bf16.msra.mxu0 0
        %2399 = vmatprep.subr.bf16.mxu0 0
        %2400 = vmatpush1.bf16.msra.mxu0 0
        %2401 = vmatprep.subr.bf16.mxu0 0
        %2402 = vmatpush1.bf16.msra.mxu0 0
        %2403 = vmatprep.subr.bf16.mxu0 0
        %2404 = vmatpush1.bf16.msra.mxu0 0
        %2405 = vmatprep.subr.bf16.mxu0 0
        %2406 = vmatpush1.bf16.msra.mxu0 0
        %2407 = vmatprep.subr.bf16.mxu0 0
        %2408 = vmatpush1.bf16.msra.mxu0 0
        %2409 = vmatprep.subr.bf16.mxu0 0
        %2410 = vmatpush1.bf16.msra.mxu0 0
        %2411 = vmatprep.subr.bf16.mxu0 0
        %2412 = vmatpush1.bf16.msra.mxu0 %v2272
        %2413 = vmatprep.subr.bf16.mxu0 0
        %2414 = vmatpush2.bf16.msra.mxu0 0
        %2415 = vmatprep.subr.bf16.mxu0 0
        %2416 = vmatpush2.bf16.msra.mxu0 0
        %2417 = vmatprep.subr.bf16.mxu0 0
        %2418 = vmatpush2.bf16.msra.mxu0 0
        %2419 = vmatprep.subr.bf16.mxu0 0
        %2420 = vmatpush2.bf16.msra.mxu0 0
        %2421 = vmatprep.subr.bf16.mxu0 0
        %2422 = vmatpush2.bf16.msra.mxu0 0
        %2423 = vmatprep.subr.bf16.mxu0 0
        %2424 = vmatpush2.bf16.msra.mxu0 0
        %2425 = vmatprep.subr.bf16.mxu0 0
        %2426 = vmatpush2.bf16.msra.mxu0 0
        %2427 = vmatprep.subr.bf16.mxu0 0
        %2428 = vmatpush2.bf16.msra.mxu0 0
        %2429 = vmatprep.mubr.bf16.mxu0 0
        %2430 = vmatmul.mubr.bf16.gmra.mxu0 %v2251
        %v2431 = vpop.f32.mrf.mxu0
        %v2432 = vadd.f32 0.0, %v2431
        %v2433 = vpop.f32.mrf.mxu0
        %v2434 = vpop.f32.mrf.mxu0
        %v2435 = vpop.f32.mrf.mxu0
        %2436 = vdwg.mxu0
        %v2437 = vadd.f32 %v2171, %v2309
        %v2438 = vadd.f32 %v2172, %v2311
        %v2439 = vadd.f32 %v2173, %v2350
        %v2440 = vadd.f32 %v2174, %v2352
        %v2441 = vadd.f32 %v2175, %v2391
        %v2442 = vadd.f32 %v2176, %v2393
        %v2443 = vadd.f32 %v2177, %v2432
        %s2444 = scalar_lea.vmem %s1, 28
        %v2445 = vld [vmem:[%s2444] sm:$0xf]
        %2446 = vrot.lane.b32.xlu0 %v654, 68
        %v2447 = vpop.permute.xlu0 %2446
        %2448 = vrot.lane.b32.xlu0 %v655, 68
        %v2449 = vpop.permute.xlu0 %2448
        %2450 = vrot.lane.b32.xlu0 %v656, 68
        %v2451 = vpop.permute.xlu0 %2450
        %2452 = vrot.lane.b32.xlu0 %v657, 68
        %v2453 = vpop.permute.xlu0 %2452
        %2454 = vrot.lane.b32.xlu0 %v658, 68
        %v2455 = vpop.permute.xlu0 %2454
        %2456 = vrot.lane.b32.xlu0 %v659, 68
        %v2457 = vpop.permute.xlu0 %2456
        %2458 = vrot.lane.b32.xlu0 %v660, 68
        %v2459 = vpop.permute.xlu0 %2458
        %vm2460 = vcmask 556032
        %v2461 = vsel %vm2460, %v2447, %v2449
        %v2462 = vsel %vm2460, %v2449, %v2451
        %v2463 = vsel %vm2460, %v2451, %v2453
        %v2464 = vsel %vm2460, %v2453, %v2455
        %v2465 = vsel %vm2460, %v2455, %v2457
        %v2466 = vsel %vm2460, %v2457, %v2459
        %v2468 = vsel %vm689, %v2445, 0
        %v2471 = vsel %vm693, %v2461, 0
        %v2474 = vsel %vm693, %v2462, 0
        %v2477 = vsel %vm693, %v2463, 0
        %v2480 = vsel %vm693, %v2464, 0
        %v2483 = vsel %vm693, %v2465, 0
        %v2486 = vsel %vm693, %v2466, 0
        %v2489 = vsel %vm693, %v2459, 0
        %2491 = vmatprep.subr.bf16.mxu0 0
        %2492 = vmatpush1.bf16.msra.mxu0 0
        %2493 = vmatprep.subr.bf16.mxu0 0
        %2494 = vmatpush1.bf16.msra.mxu0 0
        %2495 = vmatprep.subr.bf16.mxu0 0
        %2496 = vmatpush1.bf16.msra.mxu0 0
        %2497 = vmatprep.subr.bf16.mxu0 0
        %2498 = vmatpush1.bf16.msra.mxu0 0
        %2499 = vmatprep.subr.bf16.mxu0 0
        %2500 = vmatpush1.bf16.msra.mxu0 0
        %2501 = vmatprep.subr.bf16.mxu0 0
        %2502 = vmatpush1.bf16.msra.mxu0 0
        %2503 = vmatprep.subr.bf16.mxu0 0
        %2504 = vmatpush1.bf16.msra.mxu0 0
        %2505 = vmatprep.subr.bf16.mxu0 %v2474
        %2506 = vmatpush1.bf16.msra.mxu0 %v2471
        %2507 = vmatprep.subr.bf16.mxu0 0
        %2508 = vmatpush2.bf16.msra.mxu0 0
        %2509 = vmatprep.subr.bf16.mxu0 0
        %2510 = vmatpush2.bf16.msra.mxu0 0
        %2511 = vmatprep.subr.bf16.mxu0 0
        %2512 = vmatpush2.bf16.msra.mxu0 0
        %2513 = vmatprep.subr.bf16.mxu0 0
        %2514 = vmatpush2.bf16.msra.mxu0 0
        %2515 = vmatprep.subr.bf16.mxu0 0
        %2516 = vmatpush2.bf16.msra.mxu0 0
        %2517 = vmatprep.subr.bf16.mxu0 0
        %2518 = vmatpush2.bf16.msra.mxu0 0
        %2519 = vmatprep.subr.bf16.mxu0 0
        %2520 = vmatpush2.bf16.msra.mxu0 0
        %2521 = vmatprep.subr.bf16.mxu0 0
        %2522 = vmatpush2.bf16.msra.mxu0 0
        %2523 = vmatprep.mubr.bf16.mxu0 0
        %2524 = vmatmul.mubr.bf16.gmra.mxu0 %v2468
        %v2525 = vpop.f32.mrf.mxu0
        %v2526 = vadd.f32 0.0, %v2525
        %v2527 = vpop.f32.mrf.mxu0
        %v2528 = vadd.f32 0.0, %v2527
        %v2529 = vpop.f32.mrf.mxu0
        %v2530 = vpop.f32.mrf.mxu0
        %2531 = vdwg.mxu0
        %2532 = vmatprep.subr.bf16.mxu0 0
        %2533 = vmatpush1.bf16.msra.mxu0 0
        %2534 = vmatprep.subr.bf16.mxu0 0
        %2535 = vmatpush1.bf16.msra.mxu0 0
        %2536 = vmatprep.subr.bf16.mxu0 0
        %2537 = vmatpush1.bf16.msra.mxu0 0
        %2538 = vmatprep.subr.bf16.mxu0 0
        %2539 = vmatpush1.bf16.msra.mxu0 0
        %2540 = vmatprep.subr.bf16.mxu0 0
        %2541 = vmatpush1.bf16.msra.mxu0 0
        %2542 = vmatprep.subr.bf16.mxu0 0
        %2543 = vmatpush1.bf16.msra.mxu0 0
        %2544 = vmatprep.subr.bf16.mxu0 0
        %2545 = vmatpush1.bf16.msra.mxu0 0
        %2546 = vmatprep.subr.bf16.mxu0 %v2480
        %2547 = vmatpush1.bf16.msra.mxu0 %v2477
        %2548 = vmatprep.subr.bf16.mxu0 0
        %2549 = vmatpush2.bf16.msra.mxu0 0
        %2550 = vmatprep.subr.bf16.mxu0 0
        %2551 = vmatpush2.bf16.msra.mxu0 0
        %2552 = vmatprep.subr.bf16.mxu0 0
        %2553 = vmatpush2.bf16.msra.mxu0 0
        %2554 = vmatprep.subr.bf16.mxu0 0
        %2555 = vmatpush2.bf16.msra.mxu0 0
        %2556 = vmatprep.subr.bf16.mxu0 0
        %2557 = vmatpush2.bf16.msra.mxu0 0
        %2558 = vmatprep.subr.bf16.mxu0 0
        %2559 = vmatpush2.bf16.msra.mxu0 0
        %2560 = vmatprep.subr.bf16.mxu0 0
        %2561 = vmatpush2.bf16.msra.mxu0 0
        %2562 = vmatprep.subr.bf16.mxu0 0
        %2563 = vmatpush2.bf16.msra.mxu0 0
        %2564 = vmatprep.mubr.bf16.mxu0 0
        %2565 = vmatmul.mubr.bf16.gmra.mxu0 %v2468
        %v2566 = vpop.f32.mrf.mxu0
        %v2567 = vadd.f32 0.0, %v2566
        %v2568 = vpop.f32.mrf.mxu0
        %v2569 = vadd.f32 0.0, %v2568
        %v2570 = vpop.f32.mrf.mxu0
        %v2571 = vpop.f32.mrf.mxu0
        %2572 = vdwg.mxu0
        %2573 = vmatprep.subr.bf16.mxu0 0
        %2574 = vmatpush1.bf16.msra.mxu0 0
        %2575 = vmatprep.subr.bf16.mxu0 0
        %2576 = vmatpush1.bf16.msra.mxu0 0
        %2577 = vmatprep.subr.bf16.mxu0 0
        %2578 = vmatpush1.bf16.msra.mxu0 0
        %2579 = vmatprep.subr.bf16.mxu0 0
        %2580 = vmatpush1.bf16.msra.mxu0 0
        %2581 = vmatprep.subr.bf16.mxu0 0
        %2582 = vmatpush1.bf16.msra.mxu0 0
        %2583 = vmatprep.subr.bf16.mxu0 0
        %2584 = vmatpush1.bf16.msra.mxu0 0
        %2585 = vmatprep.subr.bf16.mxu0 0
        %2586 = vmatpush1.bf16.msra.mxu0 0
        %2587 = vmatprep.subr.bf16.mxu0 %v2486
        %2588 = vmatpush1.bf16.msra.mxu0 %v2483
        %2589 = vmatprep.subr.bf16.mxu0 0
        %2590 = vmatpush2.bf16.msra.mxu0 0
        %2591 = vmatprep.subr.bf16.mxu0 0
        %2592 = vmatpush2.bf16.msra.mxu0 0
        %2593 = vmatprep.subr.bf16.mxu0 0
        %2594 = vmatpush2.bf16.msra.mxu0 0
        %2595 = vmatprep.subr.bf16.mxu0 0
        %2596 = vmatpush2.bf16.msra.mxu0 0
        %2597 = vmatprep.subr.bf16.mxu0 0
        %2598 = vmatpush2.bf16.msra.mxu0 0
        %2599 = vmatprep.subr.bf16.mxu0 0
        %2600 = vmatpush2.bf16.msra.mxu0 0
        %2601 = vmatprep.subr.bf16.mxu0 0
        %2602 = vmatpush2.bf16.msra.mxu0 0
        %2603 = vmatprep.subr.bf16.mxu0 0
        %2604 = vmatpush2.bf16.msra.mxu0 0
        %2605 = vmatprep.mubr.bf16.mxu0 0
        %2606 = vmatmul.mubr.bf16.gmra.mxu0 %v2468
        %v2607 = vpop.f32.mrf.mxu0
        %v2608 = vadd.f32 0.0, %v2607
        %v2609 = vpop.f32.mrf.mxu0
        %v2610 = vadd.f32 0.0, %v2609
        %v2611 = vpop.f32.mrf.mxu0
        %v2612 = vpop.f32.mrf.mxu0
        %2613 = vdwg.mxu0
        %2614 = vmatprep.subr.bf16.mxu0 0
        %2615 = vmatpush1.bf16.msra.mxu0 0
        %2616 = vmatprep.subr.bf16.mxu0 0
        %2617 = vmatpush1.bf16.msra.mxu0 0
        %2618 = vmatprep.subr.bf16.mxu0 0
        %2619 = vmatpush1.bf16.msra.mxu0 0
        %2620 = vmatprep.subr.bf16.mxu0 0
        %2621 = vmatpush1.bf16.msra.mxu0 0
        %2622 = vmatprep.subr.bf16.mxu0 0
        %2623 = vmatpush1.bf16.msra.mxu0 0
        %2624 = vmatprep.subr.bf16.mxu0 0
        %2625 = vmatpush1.bf16.msra.mxu0 0
        %2626 = vmatprep.subr.bf16.mxu0 0
        %2627 = vmatpush1.bf16.msra.mxu0 0
        %2628 = vmatprep.subr.bf16.mxu0 0
        %2629 = vmatpush1.bf16.msra.mxu0 %v2489
        %2630 = vmatprep.subr.bf16.mxu0 0
        %2631 = vmatpush2.bf16.msra.mxu0 0
        %2632 = vmatprep.subr.bf16.mxu0 0
        %2633 = vmatpush2.bf16.msra.mxu0 0
        %2634 = vmatprep.subr.bf16.mxu0 0
        %2635 = vmatpush2.bf16.msra.mxu0 0
        %2636 = vmatprep.subr.bf16.mxu0 0
        %2637 = vmatpush2.bf16.msra.mxu0 0
        %2638 = vmatprep.subr.bf16.mxu0 0
        %2639 = vmatpush2.bf16.msra.mxu0 0
        %2640 = vmatprep.subr.bf16.mxu0 0
        %2641 = vmatpush2.bf16.msra.mxu0 0
        %2642 = vmatprep.subr.bf16.mxu0 0
        %2643 = vmatpush2.bf16.msra.mxu0 0
        %2644 = vmatprep.subr.bf16.mxu0 0
        %2645 = vmatpush2.bf16.msra.mxu0 0
        %2646 = vmatprep.mubr.bf16.mxu0 0
        %2647 = vmatmul.mubr.bf16.gmra.mxu0 %v2468
        %v2648 = vpop.f32.mrf.mxu0
        %v2649 = vadd.f32 0.0, %v2648
        %v2650 = vpop.f32.mrf.mxu0
        %v2651 = vpop.f32.mrf.mxu0
        %v2652 = vpop.f32.mrf.mxu0
        %2653 = vdwg.mxu0
        %v2654 = vadd.f32 %v2437, %v2526
        %v2655 = vadd.f32 %v2438, %v2528
        %v2656 = vadd.f32 %v2439, %v2567
        %v2657 = vadd.f32 %v2440, %v2569
        %v2658 = vadd.f32 %v2441, %v2608
        %v2659 = vadd.f32 %v2442, %v2610
        %v2660 = vadd.f32 %v2443, %v2649
        %2661 = vrot.lane.b32.xlu0 %v1131, 61
        %v2662 = vpop.permute.xlu0 %2661
        %2663 = vrot.lane.b32.xlu0 %v1135, 61
        %v2664 = vpop.permute.xlu0 %2663
        %2665 = vrot.lane.b32.xlu0 %v1139, 61
        %v2666 = vpop.permute.xlu0 %2665
        %2667 = vrot.lane.b32.xlu0 %v1143, 61
        %v2668 = vpop.permute.xlu0 %2667
        %2669 = vrot.lane.b32.xlu0 %v1147, 61
        %v2670 = vpop.permute.xlu0 %2669
        %2671 = vrot.lane.b32.xlu0 %v1151, 61
        %v2672 = vpop.permute.xlu0 %2671
        %2673 = vrot.lane.b32.xlu0 %v1155, 61
        %v2674 = vpop.permute.xlu0 %2673
        %vm2675 = vcmask 498688
        %v2676 = vsel %vm2675, %v2662, %v2664
        %v2677 = vsel %vm2675, %v2664, %v2666
        %v2678 = vsel %vm2675, %v2666, %v2668
        %v2679 = vsel %vm2675, %v2668, %v2670
        %v2680 = vsel %vm2675, %v2670, %v2672
        %v2681 = vsel %vm2675, %v2672, %v2674
        %v2689 = vmul.f32 %v532, %v2662
        %v2690 = vmul.f32 %v519, %v2676
        %v2691 = vmul.f32 %v520, %v2677
        %v2692 = vmul.f32 %v521, %v2678
        %v2693 = vmul.f32 %v522, %v2679
        %v2694 = vmul.f32 %v523, %v2680
        %v2695 = vmul.f32 %v534, %v2681
        %s2696 = scalar_lea.vmem %s1, 32
        %v2697 = vld [vmem:[%s2696] sm:$0xf]
        %v2698 = vpack.c.bf16 %v2689, %v2689
        %v2699 = vpack.c.bf16 %v2690, %v2690
        %v2700 = vpack.c.bf16 %v2691, %v2691
        %v2701 = vpack.c.bf16 %v2692, %v2692
        %v2702 = vpack.c.bf16 %v2693, %v2693
        %v2703 = vpack.c.bf16 %v2694, %v2694
        %v2704 = vpack.c.bf16 %v2695, %v2695
        %2712 = vrot.lane.b32.xlu0 %v2698, 67
        %v2713 = vpop.permute.xlu0 %2712
        %2714 = vrot.lane.b32.xlu0 %v2699, 67
        %v2715 = vpop.permute.xlu0 %2714
        %2716 = vrot.lane.b32.xlu0 %v2700, 67
        %v2717 = vpop.permute.xlu0 %2716
        %2718 = vrot.lane.b32.xlu0 %v2701, 67
        %v2719 = vpop.permute.xlu0 %2718
        %2720 = vrot.lane.b32.xlu0 %v2702, 67
        %v2721 = vpop.permute.xlu0 %2720
        %2722 = vrot.lane.b32.xlu0 %v2703, 67
        %v2723 = vpop.permute.xlu0 %2722
        %2724 = vrot.lane.b32.xlu0 %v2704, 67
        %v2725 = vpop.permute.xlu0 %2724
        %vm2726 = vcmask 547840
        %v2727 = vsel %vm2726, %v2713, %v2715
        %v2728 = vsel %vm2726, %v2715, %v2717
        %v2729 = vsel %vm2726, %v2717, %v2719
        %v2730 = vsel %vm2726, %v2719, %v2721
        %v2731 = vsel %vm2726, %v2721, %v2723
        %v2732 = vsel %vm2726, %v2723, %v2725
        %v2734 = vsel %vm689, %v2697, 0
        %v2737 = vsel %vm693, %v2727, 0
        %v2740 = vsel %vm693, %v2728, 0
        %v2743 = vsel %vm693, %v2729, 0
        %v2746 = vsel %vm693, %v2730, 0
        %v2749 = vsel %vm693, %v2731, 0
        %v2752 = vsel %vm693, %v2732, 0
        %v2755 = vsel %vm693, %v2725, 0
        %2757 = vmatprep.subr.bf16.mxu0 0
        %2758 = vmatpush1.bf16.msra.mxu0 0
        %2759 = vmatprep.subr.bf16.mxu0 0
        %2760 = vmatpush1.bf16.msra.mxu0 0
        %2761 = vmatprep.subr.bf16.mxu0 0
        %2762 = vmatpush1.bf16.msra.mxu0 0
        %2763 = vmatprep.subr.bf16.mxu0 0
        %2764 = vmatpush1.bf16.msra.mxu0 0
        %2765 = vmatprep.subr.bf16.mxu0 0
        %2766 = vmatpush1.bf16.msra.mxu0 0
        %2767 = vmatprep.subr.bf16.mxu0 0
        %2768 = vmatpush1.bf16.msra.mxu0 0
        %2769 = vmatprep.subr.bf16.mxu0 0
        %2770 = vmatpush1.bf16.msra.mxu0 0
        %2771 = vmatprep.subr.bf16.mxu0 %v2740
        %2772 = vmatpush1.bf16.msra.mxu0 %v2737
        %2773 = vmatprep.subr.bf16.mxu0 0
        %2774 = vmatpush2.bf16.msra.mxu0 0
        %2775 = vmatprep.subr.bf16.mxu0 0
        %2776 = vmatpush2.bf16.msra.mxu0 0
        %2777 = vmatprep.subr.bf16.mxu0 0
        %2778 = vmatpush2.bf16.msra.mxu0 0
        %2779 = vmatprep.subr.bf16.mxu0 0
        %2780 = vmatpush2.bf16.msra.mxu0 0
        %2781 = vmatprep.subr.bf16.mxu0 0
        %2782 = vmatpush2.bf16.msra.mxu0 0
        %2783 = vmatprep.subr.bf16.mxu0 0
        %2784 = vmatpush2.bf16.msra.mxu0 0
        %2785 = vmatprep.subr.bf16.mxu0 0
        %2786 = vmatpush2.bf16.msra.mxu0 0
        %2787 = vmatprep.subr.bf16.mxu0 0
        %2788 = vmatpush2.bf16.msra.mxu0 0
        %2789 = vmatprep.mubr.bf16.mxu0 0
        %2790 = vmatmul.mubr.bf16.gmra.mxu0 %v2734
        %v2791 = vpop.f32.mrf.mxu0
        %v2792 = vadd.f32 0.0, %v2791
        %v2793 = vpop.f32.mrf.mxu0
        %v2794 = vadd.f32 0.0, %v2793
        %v2795 = vpop.f32.mrf.mxu0
        %v2796 = vpop.f32.mrf.mxu0
        %2797 = vdwg.mxu0
        %2798 = vmatprep.subr.bf16.mxu0 0
        %2799 = vmatpush1.bf16.msra.mxu0 0
        %2800 = vmatprep.subr.bf16.mxu0 0
        %2801 = vmatpush1.bf16.msra.mxu0 0
        %2802 = vmatprep.subr.bf16.mxu0 0
        %2803 = vmatpush1.bf16.msra.mxu0 0
        %2804 = vmatprep.subr.bf16.mxu0 0
        %2805 = vmatpush1.bf16.msra.mxu0 0
        %2806 = vmatprep.subr.bf16.mxu0 0
        %2807 = vmatpush1.bf16.msra.mxu0 0
        %2808 = vmatprep.subr.bf16.mxu0 0
        %2809 = vmatpush1.bf16.msra.mxu0 0
        %2810 = vmatprep.subr.bf16.mxu0 0
        %2811 = vmatpush1.bf16.msra.mxu0 0
        %2812 = vmatprep.subr.bf16.mxu0 %v2746
        %2813 = vmatpush1.bf16.msra.mxu0 %v2743
        %2814 = vmatprep.subr.bf16.mxu0 0
        %2815 = vmatpush2.bf16.msra.mxu0 0
        %2816 = vmatprep.subr.bf16.mxu0 0
        %2817 = vmatpush2.bf16.msra.mxu0 0
        %2818 = vmatprep.subr.bf16.mxu0 0
        %2819 = vmatpush2.bf16.msra.mxu0 0
        %2820 = vmatprep.subr.bf16.mxu0 0
        %2821 = vmatpush2.bf16.msra.mxu0 0
        %2822 = vmatprep.subr.bf16.mxu0 0
        %2823 = vmatpush2.bf16.msra.mxu0 0
        %2824 = vmatprep.subr.bf16.mxu0 0
        %2825 = vmatpush2.bf16.msra.mxu0 0
        %2826 = vmatprep.subr.bf16.mxu0 0
        %2827 = vmatpush2.bf16.msra.mxu0 0
        %2828 = vmatprep.subr.bf16.mxu0 0
        %2829 = vmatpush2.bf16.msra.mxu0 0
        %2830 = vmatprep.mubr.bf16.mxu0 0
        %2831 = vmatmul.mubr.bf16.gmra.mxu0 %v2734
        %v2832 = vpop.f32.mrf.mxu0
        %v2833 = vadd.f32 0.0, %v2832
        %v2834 = vpop.f32.mrf.mxu0
        %v2835 = vadd.f32 0.0, %v2834
        %v2836 = vpop.f32.mrf.mxu0
        %v2837 = vpop.f32.mrf.mxu0
        %2838 = vdwg.mxu0
        %2839 = vmatprep.subr.bf16.mxu0 0
        %2840 = vmatpush1.bf16.msra.mxu0 0
        %2841 = vmatprep.subr.bf16.mxu0 0
        %2842 = vmatpush1.bf16.msra.mxu0 0
        %2843 = vmatprep.subr.bf16.mxu0 0
        %2844 = vmatpush1.bf16.msra.mxu0 0
        %2845 = vmatprep.subr.bf16.mxu0 0
        %2846 = vmatpush1.bf16.msra.mxu0 0
        %2847 = vmatprep.subr.bf16.mxu0 0
        %2848 = vmatpush1.bf16.msra.mxu0 0
        %2849 = vmatprep.subr.bf16.mxu0 0
        %2850 = vmatpush1.bf16.msra.mxu0 0
        %2851 = vmatprep.subr.bf16.mxu0 0
        %2852 = vmatpush1.bf16.msra.mxu0 0
        %2853 = vmatprep.subr.bf16.mxu0 %v2752
        %2854 = vmatpush1.bf16.msra.mxu0 %v2749
        %2855 = vmatprep.subr.bf16.mxu0 0
        %2856 = vmatpush2.bf16.msra.mxu0 0
        %2857 = vmatprep.subr.bf16.mxu0 0
        %2858 = vmatpush2.bf16.msra.mxu0 0
        %2859 = vmatprep.subr.bf16.mxu0 0
        %2860 = vmatpush2.bf16.msra.mxu0 0
        %2861 = vmatprep.subr.bf16.mxu0 0
        %2862 = vmatpush2.bf16.msra.mxu0 0
        %2863 = vmatprep.subr.bf16.mxu0 0
        %2864 = vmatpush2.bf16.msra.mxu0 0
        %2865 = vmatprep.subr.bf16.mxu0 0
        %2866 = vmatpush2.bf16.msra.mxu0 0
        %2867 = vmatprep.subr.bf16.mxu0 0
        %2868 = vmatpush2.bf16.msra.mxu0 0
        %2869 = vmatprep.subr.bf16.mxu0 0
        %2870 = vmatpush2.bf16.msra.mxu0 0
        %2871 = vmatprep.mubr.bf16.mxu0 0
        %2872 = vmatmul.mubr.bf16.gmra.mxu0 %v2734
        %v2873 = vpop.f32.mrf.mxu0
        %v2874 = vadd.f32 0.0, %v2873
        %v2875 = vpop.f32.mrf.mxu0
        %v2876 = vadd.f32 0.0, %v2875
        %v2877 = vpop.f32.mrf.mxu0
        %v2878 = vpop.f32.mrf.mxu0
        %2879 = vdwg.mxu0
        %2880 = vmatprep.subr.bf16.mxu0 0
        %2881 = vmatpush1.bf16.msra.mxu0 0
        %2882 = vmatprep.subr.bf16.mxu0 0
        %2883 = vmatpush1.bf16.msra.mxu0 0
        %2884 = vmatprep.subr.bf16.mxu0 0
        %2885 = vmatpush1.bf16.msra.mxu0 0
        %2886 = vmatprep.subr.bf16.mxu0 0
        %2887 = vmatpush1.bf16.msra.mxu0 0
        %2888 = vmatprep.subr.bf16.mxu0 0
        %2889 = vmatpush1.bf16.msra.mxu0 0
        %2890 = vmatprep.subr.bf16.mxu0 0
        %2891 = vmatpush1.bf16.msra.mxu0 0
        %2892 = vmatprep.subr.bf16.mxu0 0
        %2893 = vmatpush1.bf16.msra.mxu0 0
        %2894 = vmatprep.subr.bf16.mxu0 0
        %2895 = vmatpush1.bf16.msra.mxu0 %v2755
        %2896 = vmatprep.subr.bf16.mxu0 0
        %2897 = vmatpush2.bf16.msra.mxu0 0
        %2898 = vmatprep.subr.bf16.mxu0 0
        %2899 = vmatpush2.bf16.msra.mxu0 0
        %2900 = vmatprep.subr.bf16.mxu0 0
        %2901 = vmatpush2.bf16.msra.mxu0 0
        %2902 = vmatprep.subr.bf16.mxu0 0
        %2903 = vmatpush2.bf16.msra.mxu0 0
        %2904 = vmatprep.subr.bf16.mxu0 0
        %2905 = vmatpush2.bf16.msra.mxu0 0
        %2906 = vmatprep.subr.bf16.mxu0 0
        %2907 = vmatpush2.bf16.msra.mxu0 0
        %2908 = vmatprep.subr.bf16.mxu0 0
        %2909 = vmatpush2.bf16.msra.mxu0 0
        %2910 = vmatprep.subr.bf16.mxu0 0
        %2911 = vmatpush2.bf16.msra.mxu0 0
        %2912 = vmatprep.mubr.bf16.mxu0 0
        %2913 = vmatmul.mubr.bf16.gmra.mxu0 %v2734
        %v2914 = vpop.f32.mrf.mxu0
        %v2915 = vadd.f32 0.0, %v2914
        %v2916 = vpop.f32.mrf.mxu0
        %v2917 = vpop.f32.mrf.mxu0
        %v2918 = vpop.f32.mrf.mxu0
        %2919 = vdwg.mxu0
        %v2920 = vadd.f32 %v2654, %v2792
        %v2921 = vadd.f32 %v2655, %v2794
        %v2922 = vadd.f32 %v2656, %v2833
        %v2923 = vadd.f32 %v2657, %v2835
        %v2924 = vadd.f32 %v2658, %v2874
        %v2925 = vadd.f32 %v2659, %v2876
        %v2926 = vadd.f32 %v2660, %v2915
        %v2927 = vld [vmem:[%s2] sm:$0xff]
        %2929 = vset.pattern.permute.xlu0 0
        %2930 = vperm.xlu0 %2929, %v2927
        %v2931 = vpop.permute.xlu0 %2930
        %v2933 = vadd.f32 %v2920, %v2931
        %v2934 = vadd.f32 %v2921, %v2931
        %v2935 = vadd.f32 %v2922, %v2931
        %v2936 = vadd.f32 %v2923, %v2931
        %v2937 = vadd.f32 %v2924, %v2931
        %v2938 = vadd.f32 %v2925, %v2931
        %v2939 = vadd.f32 %v2926, %v2931
        %v2940 = vmax.f32 %v2933, 0.0
        %v2941 = vmax.f32 %v2934, 0.0
        %v2942 = vmax.f32 %v2935, 0.0
        %v2943 = vmax.f32 %v2936, 0.0
        %v2944 = vmax.f32 %v2937, 0.0
        %v2945 = vmax.f32 %v2938, 0.0
        %v2946 = vmax.f32 %v2939, 0.0
        %2954 = vrot.lane.b32.xlu0 %v2940, 32
        %v2955 = vpop.permute.xlu0 %2954
        %2956 = vrot.lane.b32.xlu0 %v2941, 32
        %v2957 = vpop.permute.xlu0 %2956
        %2958 = vrot.lane.b32.xlu0 %v2942, 32
        %v2959 = vpop.permute.xlu0 %2958
        %2960 = vrot.lane.b32.xlu0 %v2943, 32
        %v2961 = vpop.permute.xlu0 %2960
        %2962 = vrot.lane.b32.xlu0 %v2944, 32
        %v2963 = vpop.permute.xlu0 %2962
        %2964 = vrot.lane.b32.xlu0 %v2945, 32
        %v2965 = vpop.permute.xlu0 %2964
        %2966 = vrot.lane.b32.xlu0 %v2946, 32
        %v2967 = vpop.permute.xlu0 %2966
        %v2968 = vsel %vm518, %v2955, %v2957
        %v2969 = vsel %vm518, %v2957, %v2959
        %v2970 = vsel %vm518, %v2959, %v2961
        %v2971 = vsel %vm518, %v2961, %v2963
        %v2972 = vsel %vm518, %v2963, %v2965
        %v2973 = vsel %vm518, %v2965, %v2967
        %v2981 = vsel %vm518, 0.0, %v2955
        %v2982 = vsel %vm533, %v2973, 0.0
        %v2983 = vmul.f32 %v2981, %v610
        %v2984 = vmul.f32 %v2968, %v624
        %v2985 = vmul.f32 %v2969, %v625
        %v2986 = vmul.f32 %v2970, %v626
        %v2987 = vmul.f32 %v2971, %v627
        %v2988 = vmul.f32 %v2972, %v628
        %v2989 = vmul.f32 %v2982, %v629
        %v2990 = vld [vmem:[%s3] sm:$0xf]
        %v2991 = vpack.c.bf16 %v2983, %v2983
        %v2992 = vpack.c.bf16 %v2984, %v2984
        %v2993 = vpack.c.bf16 %v2985, %v2985
        %v2994 = vpack.c.bf16 %v2986, %v2986
        %v2995 = vpack.c.bf16 %v2987, %v2987
        %v2996 = vpack.c.bf16 %v2988, %v2988
        %v2997 = vpack.c.bf16 %v2989, %v2989
        %s2998 = scalar_lea.vmem %s3, 4
        %v2999 = vld [vmem:[%s2998] sm:$0xf]
        %v3000 = vpack.c.bf16 %v2981, %v2981
        %v3001 = vpack.c.bf16 %v2968, %v2968
        %v3002 = vpack.c.bf16 %v2969, %v2969
        %v3003 = vpack.c.bf16 %v2970, %v2970
        %v3004 = vpack.c.bf16 %v2971, %v2971
        %v3005 = vpack.c.bf16 %v2972, %v2972
        %v3006 = vpack.c.bf16 %v2982, %v2982
        %3014 = vrot.lane.b32.xlu0 %v3000, 124
        %v3015 = vpop.permute.xlu0 %3014
        %3016 = vrot.lane.b32.xlu0 %v3001, 124
        %v3017 = vpop.permute.xlu0 %3016
        %3018 = vrot.lane.b32.xlu0 %v3002, 124
        %v3019 = vpop.permute.xlu0 %3018
        %3020 = vrot.lane.b32.xlu0 %v3003, 124
        %v3021 = vpop.permute.xlu0 %3020
        %3022 = vrot.lane.b32.xlu0 %v3004, 124
        %v3023 = vpop.permute.xlu0 %3022
        %3024 = vrot.lane.b32.xlu0 %v3005, 124
        %v3025 = vpop.permute.xlu0 %3024
        %3026 = vrot.lane.b32.xlu0 %v3006, 124
        %v3027 = vpop.permute.xlu0 %3026
        %v3028 = vsel %vm682, %v3015, %v3017
        %v3029 = vsel %vm682, %v3017, %v3019
        %v3030 = vsel %vm682, %v3019, %v3021
        %v3031 = vsel %vm682, %v3021, %v3023
        %v3032 = vsel %vm682, %v3023, %v3025
        %v3033 = vsel %vm682, %v3025, %v3027
        %vm3034 = vcmask 64512
        %v3036 = vsel %vm3034, %v2999, 0
        %vm3038 = vcmask 1043456
        %v3040 = vsel %vm3038, %v3028, 0
        %v3043 = vsel %vm3038, %v3029, 0
        %v3046 = vsel %vm3038, %v3030, 0
        %v3049 = vsel %vm3038, %v3031, 0
        %v3052 = vsel %vm3038, %v3032, 0
        %v3055 = vsel %vm3038, %v3033, 0
        %v3058 = vsel %vm3038, %v3027, 0
        %3060 = vmatprep.subr.bf16.mxu0 0
        %3061 = vmatpush1.bf16.msra.mxu0 0
        %3062 = vmatprep.subr.bf16.mxu0 0
        %3063 = vmatpush1.bf16.msra.mxu0 0
        %3064 = vmatprep.subr.bf16.mxu0 0
        %3065 = vmatpush1.bf16.msra.mxu0 0
        %3066 = vmatprep.subr.bf16.mxu0 0
        %3067 = vmatpush1.bf16.msra.mxu0 0
        %3068 = vmatprep.subr.bf16.mxu0 0
        %3069 = vmatpush1.bf16.msra.mxu0 0
        %3070 = vmatprep.subr.bf16.mxu0 0
        %3071 = vmatpush1.bf16.msra.mxu0 0
        %3072 = vmatprep.subr.bf16.mxu0 0
        %3073 = vmatpush1.bf16.msra.mxu0 0
        %3074 = vmatprep.subr.bf16.mxu0 %v3043
        %3075 = vmatpush1.bf16.msra.mxu0 %v3040
        %3076 = vmatprep.subr.bf16.mxu0 0
        %3077 = vmatpush2.bf16.msra.mxu0 0
        %3078 = vmatprep.subr.bf16.mxu0 0
        %3079 = vmatpush2.bf16.msra.mxu0 0
        %3080 = vmatprep.subr.bf16.mxu0 0
        %3081 = vmatpush2.bf16.msra.mxu0 0
        %3082 = vmatprep.subr.bf16.mxu0 0
        %3083 = vmatpush2.bf16.msra.mxu0 0
        %3084 = vmatprep.subr.bf16.mxu0 0
        %3085 = vmatpush2.bf16.msra.mxu0 0
        %3086 = vmatprep.subr.bf16.mxu0 0
        %3087 = vmatpush2.bf16.msra.mxu0 0
        %3088 = vmatprep.subr.bf16.mxu0 0
        %3089 = vmatpush2.bf16.msra.mxu0 0
        %3090 = vmatprep.subr.bf16.mxu0 0
        %3091 = vmatpush2.bf16.msra.mxu0 0
        %3092 = vmatprep.mubr.bf16.mxu0 0
        %3093 = vmatmul.mubr.bf16.gmra.mxu0 %v3036
        %v3094 = vpop.f32.mrf.mxu0
        %v3095 = vadd.f32 0.0, %v3094
        %v3096 = vpop.f32.mrf.mxu0
        %v3097 = vadd.f32 0.0, %v3096
        %v3098 = vpop.f32.mrf.mxu0
        %v3099 = vpop.f32.mrf.mxu0
        %3100 = vdwg.mxu0
        %3101 = vmatprep.subr.bf16.mxu0 0
        %3102 = vmatpush1.bf16.msra.mxu0 0
        %3103 = vmatprep.subr.bf16.mxu0 0
        %3104 = vmatpush1.bf16.msra.mxu0 0
        %3105 = vmatprep.subr.bf16.mxu0 0
        %3106 = vmatpush1.bf16.msra.mxu0 0
        %3107 = vmatprep.subr.bf16.mxu0 0
        %3108 = vmatpush1.bf16.msra.mxu0 0
        %3109 = vmatprep.subr.bf16.mxu0 0
        %3110 = vmatpush1.bf16.msra.mxu0 0
        %3111 = vmatprep.subr.bf16.mxu0 0
        %3112 = vmatpush1.bf16.msra.mxu0 0
        %3113 = vmatprep.subr.bf16.mxu0 0
        %3114 = vmatpush1.bf16.msra.mxu0 0
        %3115 = vmatprep.subr.bf16.mxu0 %v3049
        %3116 = vmatpush1.bf16.msra.mxu0 %v3046
        %3117 = vmatprep.subr.bf16.mxu0 0
        %3118 = vmatpush2.bf16.msra.mxu0 0
        %3119 = vmatprep.subr.bf16.mxu0 0
        %3120 = vmatpush2.bf16.msra.mxu0 0
        %3121 = vmatprep.subr.bf16.mxu0 0
        %3122 = vmatpush2.bf16.msra.mxu0 0
        %3123 = vmatprep.subr.bf16.mxu0 0
        %3124 = vmatpush2.bf16.msra.mxu0 0
        %3125 = vmatprep.subr.bf16.mxu0 0
        %3126 = vmatpush2.bf16.msra.mxu0 0
        %3127 = vmatprep.subr.bf16.mxu0 0
        %3128 = vmatpush2.bf16.msra.mxu0 0
        %3129 = vmatprep.subr.bf16.mxu0 0
        %3130 = vmatpush2.bf16.msra.mxu0 0
        %3131 = vmatprep.subr.bf16.mxu0 0
        %3132 = vmatpush2.bf16.msra.mxu0 0
        %3133 = vmatprep.mubr.bf16.mxu0 0
        %3134 = vmatmul.mubr.bf16.gmra.mxu0 %v3036
        %v3135 = vpop.f32.mrf.mxu0
        %v3136 = vadd.f32 0.0, %v3135
        %v3137 = vpop.f32.mrf.mxu0
        %v3138 = vadd.f32 0.0, %v3137
        %v3139 = vpop.f32.mrf.mxu0
        %v3140 = vpop.f32.mrf.mxu0
        %3141 = vdwg.mxu0
        %3142 = vmatprep.subr.bf16.mxu0 0
        %3143 = vmatpush1.bf16.msra.mxu0 0
        %3144 = vmatprep.subr.bf16.mxu0 0
        %3145 = vmatpush1.bf16.msra.mxu0 0
        %3146 = vmatprep.subr.bf16.mxu0 0
        %3147 = vmatpush1.bf16.msra.mxu0 0
        %3148 = vmatprep.subr.bf16.mxu0 0
        %3149 = vmatpush1.bf16.msra.mxu0 0
        %3150 = vmatprep.subr.bf16.mxu0 0
        %3151 = vmatpush1.bf16.msra.mxu0 0
        %3152 = vmatprep.subr.bf16.mxu0 0
        %3153 = vmatpush1.bf16.msra.mxu0 0
        %3154 = vmatprep.subr.bf16.mxu0 0
        %3155 = vmatpush1.bf16.msra.mxu0 0
        %3156 = vmatprep.subr.bf16.mxu0 %v3055
        %3157 = vmatpush1.bf16.msra.mxu0 %v3052
        %3158 = vmatprep.subr.bf16.mxu0 0
        %3159 = vmatpush2.bf16.msra.mxu0 0
        %3160 = vmatprep.subr.bf16.mxu0 0
        %3161 = vmatpush2.bf16.msra.mxu0 0
        %3162 = vmatprep.subr.bf16.mxu0 0
        %3163 = vmatpush2.bf16.msra.mxu0 0
        %3164 = vmatprep.subr.bf16.mxu0 0
        %3165 = vmatpush2.bf16.msra.mxu0 0
        %3166 = vmatprep.subr.bf16.mxu0 0
        %3167 = vmatpush2.bf16.msra.mxu0 0
        %3168 = vmatprep.subr.bf16.mxu0 0
        %3169 = vmatpush2.bf16.msra.mxu0 0
        %3170 = vmatprep.subr.bf16.mxu0 0
        %3171 = vmatpush2.bf16.msra.mxu0 0
        %3172 = vmatprep.subr.bf16.mxu0 0
        %3173 = vmatpush2.bf16.msra.mxu0 0
        %3174 = vmatprep.mubr.bf16.mxu0 0
        %3175 = vmatmul.mubr.bf16.gmra.mxu0 %v3036
        %v3176 = vpop.f32.mrf.mxu0
        %v3177 = vadd.f32 0.0, %v3176
        %v3178 = vpop.f32.mrf.mxu0
        %v3179 = vadd.f32 0.0, %v3178
        %v3180 = vpop.f32.mrf.mxu0
        %v3181 = vpop.f32.mrf.mxu0
        %3182 = vdwg.mxu0
        %3183 = vmatprep.subr.bf16.mxu0 0
        %3184 = vmatpush1.bf16.msra.mxu0 0
        %3185 = vmatprep.subr.bf16.mxu0 0
        %3186 = vmatpush1.bf16.msra.mxu0 0
        %3187 = vmatprep.subr.bf16.mxu0 0
        %3188 = vmatpush1.bf16.msra.mxu0 0
        %3189 = vmatprep.subr.bf16.mxu0 0
        %3190 = vmatpush1.bf16.msra.mxu0 0
        %3191 = vmatprep.subr.bf16.mxu0 0
        %3192 = vmatpush1.bf16.msra.mxu0 0
        %3193 = vmatprep.subr.bf16.mxu0 0
        %3194 = vmatpush1.bf16.msra.mxu0 0
        %3195 = vmatprep.subr.bf16.mxu0 0
        %3196 = vmatpush1.bf16.msra.mxu0 0
        %3197 = vmatprep.subr.bf16.mxu0 0
        %3198 = vmatpush1.bf16.msra.mxu0 %v3058
        %3199 = vmatprep.subr.bf16.mxu0 0
        %3200 = vmatpush2.bf16.msra.mxu0 0
        %3201 = vmatprep.subr.bf16.mxu0 0
        %3202 = vmatpush2.bf16.msra.mxu0 0
        %3203 = vmatprep.subr.bf16.mxu0 0
        %3204 = vmatpush2.bf16.msra.mxu0 0
        %3205 = vmatprep.subr.bf16.mxu0 0
        %3206 = vmatpush2.bf16.msra.mxu0 0
        %3207 = vmatprep.subr.bf16.mxu0 0
        %3208 = vmatpush2.bf16.msra.mxu0 0
        %3209 = vmatprep.subr.bf16.mxu0 0
        %3210 = vmatpush2.bf16.msra.mxu0 0
        %3211 = vmatprep.subr.bf16.mxu0 0
        %3212 = vmatpush2.bf16.msra.mxu0 0
        %3213 = vmatprep.subr.bf16.mxu0 0
        %3214 = vmatpush2.bf16.msra.mxu0 0
        %3215 = vmatprep.mubr.bf16.mxu0 0
        %3216 = vmatmul.mubr.bf16.gmra.mxu0 %v3036
        %v3217 = vpop.f32.mrf.mxu0
        %v3218 = vadd.f32 0.0, %v3217
        %v3219 = vpop.f32.mrf.mxu0
        %v3220 = vpop.f32.mrf.mxu0
        %v3221 = vpop.f32.mrf.mxu0
        %3222 = vdwg.mxu0
        %3230 = vrot.lane.b32.xlu0 %v2991, 125
        %v3231 = vpop.permute.xlu0 %3230
        %3232 = vrot.lane.b32.xlu0 %v2992, 125
        %v3233 = vpop.permute.xlu0 %3232
        %3234 = vrot.lane.b32.xlu0 %v2993, 125
        %v3235 = vpop.permute.xlu0 %3234
        %3236 = vrot.lane.b32.xlu0 %v2994, 125
        %v3237 = vpop.permute.xlu0 %3236
        %3238 = vrot.lane.b32.xlu0 %v2995, 125
        %v3239 = vpop.permute.xlu0 %3238
        %3240 = vrot.lane.b32.xlu0 %v2996, 125
        %v3241 = vpop.permute.xlu0 %3240
        %3242 = vrot.lane.b32.xlu0 %v2997, 125
        %v3243 = vpop.permute.xlu0 %3242
        %v3244 = vsel %vm899, %v3231, %v3233
        %v3245 = vsel %vm899, %v3233, %v3235
        %v3246 = vsel %vm899, %v3235, %v3237
        %v3247 = vsel %vm899, %v3237, %v3239
        %v3248 = vsel %vm899, %v3239, %v3241
        %v3249 = vsel %vm899, %v3241, %v3243
        %v3251 = vsel %vm3034, %v2990, 0
        %v3254 = vsel %vm3038, %v3244, 0
        %v3257 = vsel %vm3038, %v3245, 0
        %v3260 = vsel %vm3038, %v3246, 0
        %v3263 = vsel %vm3038, %v3247, 0
        %v3266 = vsel %vm3038, %v3248, 0
        %v3269 = vsel %vm3038, %v3249, 0
        %v3272 = vsel %vm3038, %v3243, 0
        %3274 = vmatprep.subr.bf16.mxu0 0
        %3275 = vmatpush1.bf16.msra.mxu0 0
        %3276 = vmatprep.subr.bf16.mxu0 0
        %3277 = vmatpush1.bf16.msra.mxu0 0
        %3278 = vmatprep.subr.bf16.mxu0 0
        %3279 = vmatpush1.bf16.msra.mxu0 0
        %3280 = vmatprep.subr.bf16.mxu0 0
        %3281 = vmatpush1.bf16.msra.mxu0 0
        %3282 = vmatprep.subr.bf16.mxu0 0
        %3283 = vmatpush1.bf16.msra.mxu0 0
        %3284 = vmatprep.subr.bf16.mxu0 0
        %3285 = vmatpush1.bf16.msra.mxu0 0
        %3286 = vmatprep.subr.bf16.mxu0 0
        %3287 = vmatpush1.bf16.msra.mxu0 0
        %3288 = vmatprep.subr.bf16.mxu0 %v3257
        %3289 = vmatpush1.bf16.msra.mxu0 %v3254
        %3290 = vmatprep.subr.bf16.mxu0 0
        %3291 = vmatpush2.bf16.msra.mxu0 0
        %3292 = vmatprep.subr.bf16.mxu0 0
        %3293 = vmatpush2.bf16.msra.mxu0 0
        %3294 = vmatprep.subr.bf16.mxu0 0
        %3295 = vmatpush2.bf16.msra.mxu0 0
        %3296 = vmatprep.subr.bf16.mxu0 0
        %3297 = vmatpush2.bf16.msra.mxu0 0
        %3298 = vmatprep.subr.bf16.mxu0 0
        %3299 = vmatpush2.bf16.msra.mxu0 0
        %3300 = vmatprep.subr.bf16.mxu0 0
        %3301 = vmatpush2.bf16.msra.mxu0 0
        %3302 = vmatprep.subr.bf16.mxu0 0
        %3303 = vmatpush2.bf16.msra.mxu0 0
        %3304 = vmatprep.subr.bf16.mxu0 0
        %3305 = vmatpush2.bf16.msra.mxu0 0
        %3306 = vmatprep.mubr.bf16.mxu0 0
        %3307 = vmatmul.mubr.bf16.gmra.mxu0 %v3251
        %v3308 = vpop.f32.mrf.mxu0
        %v3309 = vadd.f32 %v3095, %v3308
        %v3310 = vpop.f32.mrf.mxu0
        %v3311 = vadd.f32 %v3097, %v3310
        %v3312 = vpop.f32.mrf.mxu0
        %v3313 = vpop.f32.mrf.mxu0
        %3314 = vdwg.mxu0
        %3315 = vmatprep.subr.bf16.mxu0 0
        %3316 = vmatpush1.bf16.msra.mxu0 0
        %3317 = vmatprep.subr.bf16.mxu0 0
        %3318 = vmatpush1.bf16.msra.mxu0 0
        %3319 = vmatprep.subr.bf16.mxu0 0
        %3320 = vmatpush1.bf16.msra.mxu0 0
        %3321 = vmatprep.subr.bf16.mxu0 0
        %3322 = vmatpush1.bf16.msra.mxu0 0
        %3323 = vmatprep.subr.bf16.mxu0 0
        %3324 = vmatpush1.bf16.msra.mxu0 0
        %3325 = vmatprep.subr.bf16.mxu0 0
        %3326 = vmatpush1.bf16.msra.mxu0 0
        %3327 = vmatprep.subr.bf16.mxu0 0
        %3328 = vmatpush1.bf16.msra.mxu0 0
        %3329 = vmatprep.subr.bf16.mxu0 %v3263
        %3330 = vmatpush1.bf16.msra.mxu0 %v3260
        %3331 = vmatprep.subr.bf16.mxu0 0
        %3332 = vmatpush2.bf16.msra.mxu0 0
        %3333 = vmatprep.subr.bf16.mxu0 0
        %3334 = vmatpush2.bf16.msra.mxu0 0
        %3335 = vmatprep.subr.bf16.mxu0 0
        %3336 = vmatpush2.bf16.msra.mxu0 0
        %3337 = vmatprep.subr.bf16.mxu0 0
        %3338 = vmatpush2.bf16.msra.mxu0 0
        %3339 = vmatprep.subr.bf16.mxu0 0
        %3340 = vmatpush2.bf16.msra.mxu0 0
        %3341 = vmatprep.subr.bf16.mxu0 0
        %3342 = vmatpush2.bf16.msra.mxu0 0
        %3343 = vmatprep.subr.bf16.mxu0 0
        %3344 = vmatpush2.bf16.msra.mxu0 0
        %3345 = vmatprep.subr.bf16.mxu0 0
        %3346 = vmatpush2.bf16.msra.mxu0 0
        %3347 = vmatprep.mubr.bf16.mxu0 0
        %3348 = vmatmul.mubr.bf16.gmra.mxu0 %v3251
        %v3349 = vpop.f32.mrf.mxu0
        %v3350 = vadd.f32 %v3136, %v3349
        %v3351 = vpop.f32.mrf.mxu0
        %v3352 = vadd.f32 %v3138, %v3351
        %v3353 = vpop.f32.mrf.mxu0
        %v3354 = vpop.f32.mrf.mxu0
        %3355 = vdwg.mxu0
        %3356 = vmatprep.subr.bf16.mxu0 0
        %3357 = vmatpush1.bf16.msra.mxu0 0
        %3358 = vmatprep.subr.bf16.mxu0 0
        %3359 = vmatpush1.bf16.msra.mxu0 0
        %3360 = vmatprep.subr.bf16.mxu0 0
        %3361 = vmatpush1.bf16.msra.mxu0 0
        %3362 = vmatprep.subr.bf16.mxu0 0
        %3363 = vmatpush1.bf16.msra.mxu0 0
        %3364 = vmatprep.subr.bf16.mxu0 0
        %3365 = vmatpush1.bf16.msra.mxu0 0
        %3366 = vmatprep.subr.bf16.mxu0 0
        %3367 = vmatpush1.bf16.msra.mxu0 0
        %3368 = vmatprep.subr.bf16.mxu0 0
        %3369 = vmatpush1.bf16.msra.mxu0 0
        %3370 = vmatprep.subr.bf16.mxu0 %v3269
        %3371 = vmatpush1.bf16.msra.mxu0 %v3266
        %3372 = vmatprep.subr.bf16.mxu0 0
        %3373 = vmatpush2.bf16.msra.mxu0 0
        %3374 = vmatprep.subr.bf16.mxu0 0
        %3375 = vmatpush2.bf16.msra.mxu0 0
        %3376 = vmatprep.subr.bf16.mxu0 0
        %3377 = vmatpush2.bf16.msra.mxu0 0
        %3378 = vmatprep.subr.bf16.mxu0 0
        %3379 = vmatpush2.bf16.msra.mxu0 0
        %3380 = vmatprep.subr.bf16.mxu0 0
        %3381 = vmatpush2.bf16.msra.mxu0 0
        %3382 = vmatprep.subr.bf16.mxu0 0
        %3383 = vmatpush2.bf16.msra.mxu0 0
        %3384 = vmatprep.subr.bf16.mxu0 0
        %3385 = vmatpush2.bf16.msra.mxu0 0
        %3386 = vmatprep.subr.bf16.mxu0 0
        %3387 = vmatpush2.bf16.msra.mxu0 0
        %3388 = vmatprep.mubr.bf16.mxu0 0
        %3389 = vmatmul.mubr.bf16.gmra.mxu0 %v3251
        %v3390 = vpop.f32.mrf.mxu0
        %v3391 = vadd.f32 %v3177, %v3390
        %v3392 = vpop.f32.mrf.mxu0
        %v3393 = vadd.f32 %v3179, %v3392
        %v3394 = vpop.f32.mrf.mxu0
        %v3395 = vpop.f32.mrf.mxu0
        %3396 = vdwg.mxu0
        %3397 = vmatprep.subr.bf16.mxu0 0
        %3398 = vmatpush1.bf16.msra.mxu0 0
        %3399 = vmatprep.subr.bf16.mxu0 0
        %3400 = vmatpush1.bf16.msra.mxu0 0
        %3401 = vmatprep.subr.bf16.mxu0 0
        %3402 = vmatpush1.bf16.msra.mxu0 0
        %3403 = vmatprep.subr.bf16.mxu0 0
        %3404 = vmatpush1.bf16.msra.mxu0 0
        %3405 = vmatprep.subr.bf16.mxu0 0
        %3406 = vmatpush1.bf16.msra.mxu0 0
        %3407 = vmatprep.subr.bf16.mxu0 0
        %3408 = vmatpush1.bf16.msra.mxu0 0
        %3409 = vmatprep.subr.bf16.mxu0 0
        %3410 = vmatpush1.bf16.msra.mxu0 0
        %3411 = vmatprep.subr.bf16.mxu0 0
        %3412 = vmatpush1.bf16.msra.mxu0 %v3272
        %3413 = vmatprep.subr.bf16.mxu0 0
        %3414 = vmatpush2.bf16.msra.mxu0 0
        %3415 = vmatprep.subr.bf16.mxu0 0
        %3416 = vmatpush2.bf16.msra.mxu0 0
        %3417 = vmatprep.subr.bf16.mxu0 0
        %3418 = vmatpush2.bf16.msra.mxu0 0
        %3419 = vmatprep.subr.bf16.mxu0 0
        %3420 = vmatpush2.bf16.msra.mxu0 0
        %3421 = vmatprep.subr.bf16.mxu0 0
        %3422 = vmatpush2.bf16.msra.mxu0 0
        %3423 = vmatprep.subr.bf16.mxu0 0
        %3424 = vmatpush2.bf16.msra.mxu0 0
        %3425 = vmatprep.subr.bf16.mxu0 0
        %3426 = vmatpush2.bf16.msra.mxu0 0
        %3427 = vmatprep.subr.bf16.mxu0 0
        %3428 = vmatpush2.bf16.msra.mxu0 0
        %3429 = vmatprep.mubr.bf16.mxu0 0
        %3430 = vmatmul.mubr.bf16.gmra.mxu0 %v3251
        %v3431 = vpop.f32.mrf.mxu0
        %v3432 = vadd.f32 %v3218, %v3431
        %v3433 = vpop.f32.mrf.mxu0
        %v3434 = vpop.f32.mrf.mxu0
        %v3435 = vpop.f32.mrf.mxu0
        %3436 = vdwg.mxu0
        %v3437 = vmul.f32 %v2981, %v1164
        %v3438 = vmul.f32 %v2968, %v1178
        %v3439 = vmul.f32 %v2969, %v1179
        %v3440 = vmul.f32 %v2970, %v1180
        %v3441 = vmul.f32 %v2971, %v1181
        %v3442 = vmul.f32 %v2972, %v1182
        %v3443 = vmul.f32 %v2982, %v1183
        %s3444 = scalar_lea.vmem %s3, 8
        %v3445 = vld [vmem:[%s3444] sm:$0xf]
        %v3446 = vpack.c.bf16 %v3437, %v3437
        %v3447 = vpack.c.bf16 %v3438, %v3438
        %v3448 = vpack.c.bf16 %v3439, %v3439
        %v3449 = vpack.c.bf16 %v3440, %v3440
        %v3450 = vpack.c.bf16 %v3441, %v3441
        %v3451 = vpack.c.bf16 %v3442, %v3442
        %v3452 = vpack.c.bf16 %v3443, %v3443
        %3460 = vrot.lane.b32.xlu0 %v3446, 123
        %v3461 = vpop.permute.xlu0 %3460
        %3462 = vrot.lane.b32.xlu0 %v3447, 123
        %v3463 = vpop.permute.xlu0 %3462
        %3464 = vrot.lane.b32.xlu0 %v3448, 123
        %v3465 = vpop.permute.xlu0 %3464
        %3466 = vrot.lane.b32.xlu0 %v3449, 123
        %v3467 = vpop.permute.xlu0 %3466
        %3468 = vrot.lane.b32.xlu0 %v3450, 123
        %v3469 = vpop.permute.xlu0 %3468
        %3470 = vrot.lane.b32.xlu0 %v3451, 123
        %v3471 = vpop.permute.xlu0 %3470
        %3472 = vrot.lane.b32.xlu0 %v3452, 123
        %v3473 = vpop.permute.xlu0 %3472
        %v3474 = vsel %vm1228, %v3461, %v3463
        %v3475 = vsel %vm1228, %v3463, %v3465
        %v3476 = vsel %vm1228, %v3465, %v3467
        %v3477 = vsel %vm1228, %v3467, %v3469
        %v3478 = vsel %vm1228, %v3469, %v3471
        %v3479 = vsel %vm1228, %v3471, %v3473
        %v3481 = vsel %vm3034, %v3445, 0
        %v3484 = vsel %vm3038, %v3474, 0
        %v3487 = vsel %vm3038, %v3475, 0
        %v3490 = vsel %vm3038, %v3476, 0
        %v3493 = vsel %vm3038, %v3477, 0
        %v3496 = vsel %vm3038, %v3478, 0
        %v3499 = vsel %vm3038, %v3479, 0
        %v3502 = vsel %vm3038, %v3473, 0
        %3504 = vmatprep.subr.bf16.mxu0 0
        %3505 = vmatpush1.bf16.msra.mxu0 0
        %3506 = vmatprep.subr.bf16.mxu0 0
        %3507 = vmatpush1.bf16.msra.mxu0 0
        %3508 = vmatprep.subr.bf16.mxu0 0
        %3509 = vmatpush1.bf16.msra.mxu0 0
        %3510 = vmatprep.subr.bf16.mxu0 0
        %3511 = vmatpush1.bf16.msra.mxu0 0
        %3512 = vmatprep.subr.bf16.mxu0 0
        %3513 = vmatpush1.bf16.msra.mxu0 0
        %3514 = vmatprep.subr.bf16.mxu0 0
        %3515 = vmatpush1.bf16.msra.mxu0 0
        %3516 = vmatprep.subr.bf16.mxu0 0
        %3517 = vmatpush1.bf16.msra.mxu0 0
        %3518 = vmatprep.subr.bf16.mxu0 %v3487
        %3519 = vmatpush1.bf16.msra.mxu0 %v3484
        %3520 = vmatprep.subr.bf16.mxu0 0
        %3521 = vmatpush2.bf16.msra.mxu0 0
        %3522 = vmatprep.subr.bf16.mxu0 0
        %3523 = vmatpush2.bf16.msra.mxu0 0
        %3524 = vmatprep.subr.bf16.mxu0 0
        %3525 = vmatpush2.bf16.msra.mxu0 0
        %3526 = vmatprep.subr.bf16.mxu0 0
        %3527 = vmatpush2.bf16.msra.mxu0 0
        %3528 = vmatprep.subr.bf16.mxu0 0
        %3529 = vmatpush2.bf16.msra.mxu0 0
        %3530 = vmatprep.subr.bf16.mxu0 0
        %3531 = vmatpush2.bf16.msra.mxu0 0
        %3532 = vmatprep.subr.bf16.mxu0 0
        %3533 = vmatpush2.bf16.msra.mxu0 0
        %3534 = vmatprep.subr.bf16.mxu0 0
        %3535 = vmatpush2.bf16.msra.mxu0 0
        %3536 = vmatprep.mubr.bf16.mxu0 0
        %3537 = vmatmul.mubr.bf16.gmra.mxu0 %v3481
        %v3538 = vpop.f32.mrf.mxu0
        %v3539 = vadd.f32 0.0, %v3538
        %v3540 = vpop.f32.mrf.mxu0
        %v3541 = vadd.f32 0.0, %v3540
        %v3542 = vpop.f32.mrf.mxu0
        %v3543 = vpop.f32.mrf.mxu0
        %3544 = vdwg.mxu0
        %3545 = vmatprep.subr.bf16.mxu0 0
        %3546 = vmatpush1.bf16.msra.mxu0 0
        %3547 = vmatprep.subr.bf16.mxu0 0
        %3548 = vmatpush1.bf16.msra.mxu0 0
        %3549 = vmatprep.subr.bf16.mxu0 0
        %3550 = vmatpush1.bf16.msra.mxu0 0
        %3551 = vmatprep.subr.bf16.mxu0 0
        %3552 = vmatpush1.bf16.msra.mxu0 0
        %3553 = vmatprep.subr.bf16.mxu0 0
        %3554 = vmatpush1.bf16.msra.mxu0 0
        %3555 = vmatprep.subr.bf16.mxu0 0
        %3556 = vmatpush1.bf16.msra.mxu0 0
        %3557 = vmatprep.subr.bf16.mxu0 0
        %3558 = vmatpush1.bf16.msra.mxu0 0
        %3559 = vmatprep.subr.bf16.mxu0 %v3493
        %3560 = vmatpush1.bf16.msra.mxu0 %v3490
        %3561 = vmatprep.subr.bf16.mxu0 0
        %3562 = vmatpush2.bf16.msra.mxu0 0
        %3563 = vmatprep.subr.bf16.mxu0 0
        %3564 = vmatpush2.bf16.msra.mxu0 0
        %3565 = vmatprep.subr.bf16.mxu0 0
        %3566 = vmatpush2.bf16.msra.mxu0 0
        %3567 = vmatprep.subr.bf16.mxu0 0
        %3568 = vmatpush2.bf16.msra.mxu0 0
        %3569 = vmatprep.subr.bf16.mxu0 0
        %3570 = vmatpush2.bf16.msra.mxu0 0
        %3571 = vmatprep.subr.bf16.mxu0 0
        %3572 = vmatpush2.bf16.msra.mxu0 0
        %3573 = vmatprep.subr.bf16.mxu0 0
        %3574 = vmatpush2.bf16.msra.mxu0 0
        %3575 = vmatprep.subr.bf16.mxu0 0
        %3576 = vmatpush2.bf16.msra.mxu0 0
        %3577 = vmatprep.mubr.bf16.mxu0 0
        %3578 = vmatmul.mubr.bf16.gmra.mxu0 %v3481
        %v3579 = vpop.f32.mrf.mxu0
        %v3580 = vadd.f32 0.0, %v3579
        %v3581 = vpop.f32.mrf.mxu0
        %v3582 = vadd.f32 0.0, %v3581
        %v3583 = vpop.f32.mrf.mxu0
        %v3584 = vpop.f32.mrf.mxu0
        %3585 = vdwg.mxu0
        %3586 = vmatprep.subr.bf16.mxu0 0
        %3587 = vmatpush1.bf16.msra.mxu0 0
        %3588 = vmatprep.subr.bf16.mxu0 0
        %3589 = vmatpush1.bf16.msra.mxu0 0
        %3590 = vmatprep.subr.bf16.mxu0 0
        %3591 = vmatpush1.bf16.msra.mxu0 0
        %3592 = vmatprep.subr.bf16.mxu0 0
        %3593 = vmatpush1.bf16.msra.mxu0 0
        %3594 = vmatprep.subr.bf16.mxu0 0
        %3595 = vmatpush1.bf16.msra.mxu0 0
        %3596 = vmatprep.subr.bf16.mxu0 0
        %3597 = vmatpush1.bf16.msra.mxu0 0
        %3598 = vmatprep.subr.bf16.mxu0 0
        %3599 = vmatpush1.bf16.msra.mxu0 0
        %3600 = vmatprep.subr.bf16.mxu0 %v3499
        %3601 = vmatpush1.bf16.msra.mxu0 %v3496
        %3602 = vmatprep.subr.bf16.mxu0 0
        %3603 = vmatpush2.bf16.msra.mxu0 0
        %3604 = vmatprep.subr.bf16.mxu0 0
        %3605 = vmatpush2.bf16.msra.mxu0 0
        %3606 = vmatprep.subr.bf16.mxu0 0
        %3607 = vmatpush2.bf16.msra.mxu0 0
        %3608 = vmatprep.subr.bf16.mxu0 0
        %3609 = vmatpush2.bf16.msra.mxu0 0
        %3610 = vmatprep.subr.bf16.mxu0 0
        %3611 = vmatpush2.bf16.msra.mxu0 0
        %3612 = vmatprep.subr.bf16.mxu0 0
        %3613 = vmatpush2.bf16.msra.mxu0 0
        %3614 = vmatprep.subr.bf16.mxu0 0
        %3615 = vmatpush2.bf16.msra.mxu0 0
        %3616 = vmatprep.subr.bf16.mxu0 0
        %3617 = vmatpush2.bf16.msra.mxu0 0
        %3618 = vmatprep.mubr.bf16.mxu0 0
        %3619 = vmatmul.mubr.bf16.gmra.mxu0 %v3481
        %v3620 = vpop.f32.mrf.mxu0
        %v3621 = vadd.f32 0.0, %v3620
        %v3622 = vpop.f32.mrf.mxu0
        %v3623 = vadd.f32 0.0, %v3622
        %v3624 = vpop.f32.mrf.mxu0
        %v3625 = vpop.f32.mrf.mxu0
        %3626 = vdwg.mxu0
        %3627 = vmatprep.subr.bf16.mxu0 0
        %3628 = vmatpush1.bf16.msra.mxu0 0
        %3629 = vmatprep.subr.bf16.mxu0 0
        %3630 = vmatpush1.bf16.msra.mxu0 0
        %3631 = vmatprep.subr.bf16.mxu0 0
        %3632 = vmatpush1.bf16.msra.mxu0 0
        %3633 = vmatprep.subr.bf16.mxu0 0
        %3634 = vmatpush1.bf16.msra.mxu0 0
        %3635 = vmatprep.subr.bf16.mxu0 0
        %3636 = vmatpush1.bf16.msra.mxu0 0
        %3637 = vmatprep.subr.bf16.mxu0 0
        %3638 = vmatpush1.bf16.msra.mxu0 0
        %3639 = vmatprep.subr.bf16.mxu0 0
        %3640 = vmatpush1.bf16.msra.mxu0 0
        %3641 = vmatprep.subr.bf16.mxu0 0
        %3642 = vmatpush1.bf16.msra.mxu0 %v3502
        %3643 = vmatprep.subr.bf16.mxu0 0
        %3644 = vmatpush2.bf16.msra.mxu0 0
        %3645 = vmatprep.subr.bf16.mxu0 0
        %3646 = vmatpush2.bf16.msra.mxu0 0
        %3647 = vmatprep.subr.bf16.mxu0 0
        %3648 = vmatpush2.bf16.msra.mxu0 0
        %3649 = vmatprep.subr.bf16.mxu0 0
        %3650 = vmatpush2.bf16.msra.mxu0 0
        %3651 = vmatprep.subr.bf16.mxu0 0
        %3652 = vmatpush2.bf16.msra.mxu0 0
        %3653 = vmatprep.subr.bf16.mxu0 0
        %3654 = vmatpush2.bf16.msra.mxu0 0
        %3655 = vmatprep.subr.bf16.mxu0 0
        %3656 = vmatpush2.bf16.msra.mxu0 0
        %3657 = vmatprep.subr.bf16.mxu0 0
        %3658 = vmatpush2.bf16.msra.mxu0 0
        %3659 = vmatprep.mubr.bf16.mxu0 0
        %3660 = vmatmul.mubr.bf16.gmra.mxu0 %v3481
        %v3661 = vpop.f32.mrf.mxu0
        %v3662 = vadd.f32 0.0, %v3661
        %v3663 = vpop.f32.mrf.mxu0
        %v3664 = vpop.f32.mrf.mxu0
        %v3665 = vpop.f32.mrf.mxu0
        %3666 = vdwg.mxu0
        %v3667 = vadd.f32 %v3309, %v3539
        %v3668 = vadd.f32 %v3311, %v3541
        %v3669 = vadd.f32 %v3350, %v3580
        %v3670 = vadd.f32 %v3352, %v3582
        %v3671 = vadd.f32 %v3391, %v3621
        %v3672 = vadd.f32 %v3393, %v3623
        %v3673 = vadd.f32 %v3432, %v3662
        %v3674 = vmul.f32 %v2981, %v1430
        %v3675 = vmul.f32 %v2968, %v1444
        %v3676 = vmul.f32 %v2969, %v1445
        %v3677 = vmul.f32 %v2970, %v1446
        %v3678 = vmul.f32 %v2971, %v1447
        %v3679 = vmul.f32 %v2972, %v1448
        %v3680 = vmul.f32 %v2982, %v1449
        %s3681 = scalar_lea.vmem %s3, 12
        %v3682 = vld [vmem:[%s3681] sm:$0xf]
        %v3683 = vpack.c.bf16 %v3674, %v3674
        %v3684 = vpack.c.bf16 %v3675, %v3675
        %v3685 = vpack.c.bf16 %v3676, %v3676
        %v3686 = vpack.c.bf16 %v3677, %v3677
        %v3687 = vpack.c.bf16 %v3678, %v3678
        %v3688 = vpack.c.bf16 %v3679, %v3679
        %v3689 = vpack.c.bf16 %v3680, %v3680
        %3697 = vrot.lane.b32.xlu0 %v3683, 97
        %v3698 = vpop.permute.xlu0 %3697
        %3699 = vrot.lane.b32.xlu0 %v3684, 97
        %v3700 = vpop.permute.xlu0 %3699
        %3701 = vrot.lane.b32.xlu0 %v3685, 97
        %v3702 = vpop.permute.xlu0 %3701
        %3703 = vrot.lane.b32.xlu0 %v3686, 97
        %v3704 = vpop.permute.xlu0 %3703
        %3705 = vrot.lane.b32.xlu0 %v3687, 97
        %v3706 = vpop.permute.xlu0 %3705
        %3707 = vrot.lane.b32.xlu0 %v3688, 97
        %v3708 = vpop.permute.xlu0 %3707
        %3709 = vrot.lane.b32.xlu0 %v3689, 97
        %v3710 = vpop.permute.xlu0 %3709
        %v3711 = vsel %vm1494, %v3698, %v3700
        %v3712 = vsel %vm1494, %v3700, %v3702
        %v3713 = vsel %vm1494, %v3702, %v3704
        %v3714 = vsel %vm1494, %v3704, %v3706
        %v3715 = vsel %vm1494, %v3706, %v3708
        %v3716 = vsel %vm1494, %v3708, %v3710
        %v3718 = vsel %vm3034, %v3682, 0
        %v3721 = vsel %vm3038, %v3711, 0
        %v3724 = vsel %vm3038, %v3712, 0
        %v3727 = vsel %vm3038, %v3713, 0
        %v3730 = vsel %vm3038, %v3714, 0
        %v3733 = vsel %vm3038, %v3715, 0
        %v3736 = vsel %vm3038, %v3716, 0
        %v3739 = vsel %vm3038, %v3710, 0
        %3741 = vmatprep.subr.bf16.mxu0 0
        %3742 = vmatpush1.bf16.msra.mxu0 0
        %3743 = vmatprep.subr.bf16.mxu0 0
        %3744 = vmatpush1.bf16.msra.mxu0 0
        %3745 = vmatprep.subr.bf16.mxu0 0
        %3746 = vmatpush1.bf16.msra.mxu0 0
        %3747 = vmatprep.subr.bf16.mxu0 0
        %3748 = vmatpush1.bf16.msra.mxu0 0
        %3749 = vmatprep.subr.bf16.mxu0 0
        %3750 = vmatpush1.bf16.msra.mxu0 0
        %3751 = vmatprep.subr.bf16.mxu0 0
        %3752 = vmatpush1.bf16.msra.mxu0 0
        %3753 = vmatprep.subr.bf16.mxu0 0
        %3754 = vmatpush1.bf16.msra.mxu0 0
        %3755 = vmatprep.subr.bf16.mxu0 %v3724
        %3756 = vmatpush1.bf16.msra.mxu0 %v3721
        %3757 = vmatprep.subr.bf16.mxu0 0
        %3758 = vmatpush2.bf16.msra.mxu0 0
        %3759 = vmatprep.subr.bf16.mxu0 0
        %3760 = vmatpush2.bf16.msra.mxu0 0
        %3761 = vmatprep.subr.bf16.mxu0 0
        %3762 = vmatpush2.bf16.msra.mxu0 0
        %3763 = vmatprep.subr.bf16.mxu0 0
        %3764 = vmatpush2.bf16.msra.mxu0 0
        %3765 = vmatprep.subr.bf16.mxu0 0
        %3766 = vmatpush2.bf16.msra.mxu0 0
        %3767 = vmatprep.subr.bf16.mxu0 0
        %3768 = vmatpush2.bf16.msra.mxu0 0
        %3769 = vmatprep.subr.bf16.mxu0 0
        %3770 = vmatpush2.bf16.msra.mxu0 0
        %3771 = vmatprep.subr.bf16.mxu0 0
        %3772 = vmatpush2.bf16.msra.mxu0 0
        %3773 = vmatprep.mubr.bf16.mxu0 0
        %3774 = vmatmul.mubr.bf16.gmra.mxu0 %v3718
        %v3775 = vpop.f32.mrf.mxu0
        %v3776 = vadd.f32 0.0, %v3775
        %v3777 = vpop.f32.mrf.mxu0
        %v3778 = vadd.f32 0.0, %v3777
        %v3779 = vpop.f32.mrf.mxu0
        %v3780 = vpop.f32.mrf.mxu0
        %3781 = vdwg.mxu0
        %3782 = vmatprep.subr.bf16.mxu0 0
        %3783 = vmatpush1.bf16.msra.mxu0 0
        %3784 = vmatprep.subr.bf16.mxu0 0
        %3785 = vmatpush1.bf16.msra.mxu0 0
        %3786 = vmatprep.subr.bf16.mxu0 0
        %3787 = vmatpush1.bf16.msra.mxu0 0
        %3788 = vmatprep.subr.bf16.mxu0 0
        %3789 = vmatpush1.bf16.msra.mxu0 0
        %3790 = vmatprep.subr.bf16.mxu0 0
        %3791 = vmatpush1.bf16.msra.mxu0 0
        %3792 = vmatprep.subr.bf16.mxu0 0
        %3793 = vmatpush1.bf16.msra.mxu0 0
        %3794 = vmatprep.subr.bf16.mxu0 0
        %3795 = vmatpush1.bf16.msra.mxu0 0
        %3796 = vmatprep.subr.bf16.mxu0 %v3730
        %3797 = vmatpush1.bf16.msra.mxu0 %v3727
        %3798 = vmatprep.subr.bf16.mxu0 0
        %3799 = vmatpush2.bf16.msra.mxu0 0
        %3800 = vmatprep.subr.bf16.mxu0 0
        %3801 = vmatpush2.bf16.msra.mxu0 0
        %3802 = vmatprep.subr.bf16.mxu0 0
        %3803 = vmatpush2.bf16.msra.mxu0 0
        %3804 = vmatprep.subr.bf16.mxu0 0
        %3805 = vmatpush2.bf16.msra.mxu0 0
        %3806 = vmatprep.subr.bf16.mxu0 0
        %3807 = vmatpush2.bf16.msra.mxu0 0
        %3808 = vmatprep.subr.bf16.mxu0 0
        %3809 = vmatpush2.bf16.msra.mxu0 0
        %3810 = vmatprep.subr.bf16.mxu0 0
        %3811 = vmatpush2.bf16.msra.mxu0 0
        %3812 = vmatprep.subr.bf16.mxu0 0
        %3813 = vmatpush2.bf16.msra.mxu0 0
        %3814 = vmatprep.mubr.bf16.mxu0 0
        %3815 = vmatmul.mubr.bf16.gmra.mxu0 %v3718
        %v3816 = vpop.f32.mrf.mxu0
        %v3817 = vadd.f32 0.0, %v3816
        %v3818 = vpop.f32.mrf.mxu0
        %v3819 = vadd.f32 0.0, %v3818
        %v3820 = vpop.f32.mrf.mxu0
        %v3821 = vpop.f32.mrf.mxu0
        %3822 = vdwg.mxu0
        %3823 = vmatprep.subr.bf16.mxu0 0
        %3824 = vmatpush1.bf16.msra.mxu0 0
        %3825 = vmatprep.subr.bf16.mxu0 0
        %3826 = vmatpush1.bf16.msra.mxu0 0
        %3827 = vmatprep.subr.bf16.mxu0 0
        %3828 = vmatpush1.bf16.msra.mxu0 0
        %3829 = vmatprep.subr.bf16.mxu0 0
        %3830 = vmatpush1.bf16.msra.mxu0 0
        %3831 = vmatprep.subr.bf16.mxu0 0
        %3832 = vmatpush1.bf16.msra.mxu0 0
        %3833 = vmatprep.subr.bf16.mxu0 0
        %3834 = vmatpush1.bf16.msra.mxu0 0
        %3835 = vmatprep.subr.bf16.mxu0 0
        %3836 = vmatpush1.bf16.msra.mxu0 0
        %3837 = vmatprep.subr.bf16.mxu0 %v3736
        %3838 = vmatpush1.bf16.msra.mxu0 %v3733
        %3839 = vmatprep.subr.bf16.mxu0 0
        %3840 = vmatpush2.bf16.msra.mxu0 0
        %3841 = vmatprep.subr.bf16.mxu0 0
        %3842 = vmatpush2.bf16.msra.mxu0 0
        %3843 = vmatprep.subr.bf16.mxu0 0
        %3844 = vmatpush2.bf16.msra.mxu0 0
        %3845 = vmatprep.subr.bf16.mxu0 0
        %3846 = vmatpush2.bf16.msra.mxu0 0
        %3847 = vmatprep.subr.bf16.mxu0 0
        %3848 = vmatpush2.bf16.msra.mxu0 0
        %3849 = vmatprep.subr.bf16.mxu0 0
        %3850 = vmatpush2.bf16.msra.mxu0 0
        %3851 = vmatprep.subr.bf16.mxu0 0
        %3852 = vmatpush2.bf16.msra.mxu0 0
        %3853 = vmatprep.subr.bf16.mxu0 0
        %3854 = vmatpush2.bf16.msra.mxu0 0
        %3855 = vmatprep.mubr.bf16.mxu0 0
        %3856 = vmatmul.mubr.bf16.gmra.mxu0 %v3718
        %v3857 = vpop.f32.mrf.mxu0
        %v3858 = vadd.f32 0.0, %v3857
        %v3859 = vpop.f32.mrf.mxu0
        %v3860 = vadd.f32 0.0, %v3859
        %v3861 = vpop.f32.mrf.mxu0
        %v3862 = vpop.f32.mrf.mxu0
        %3863 = vdwg.mxu0
        %3864 = vmatprep.subr.bf16.mxu0 0
        %3865 = vmatpush1.bf16.msra.mxu0 0
        %3866 = vmatprep.subr.bf16.mxu0 0
        %3867 = vmatpush1.bf16.msra.mxu0 0
        %3868 = vmatprep.subr.bf16.mxu0 0
        %3869 = vmatpush1.bf16.msra.mxu0 0
        %3870 = vmatprep.subr.bf16.mxu0 0
        %3871 = vmatpush1.bf16.msra.mxu0 0
        %3872 = vmatprep.subr.bf16.mxu0 0
        %3873 = vmatpush1.bf16.msra.mxu0 0
        %3874 = vmatprep.subr.bf16.mxu0 0
        %3875 = vmatpush1.bf16.msra.mxu0 0
        %3876 = vmatprep.subr.bf16.mxu0 0
        %3877 = vmatpush1.bf16.msra.mxu0 0
        %3878 = vmatprep.subr.bf16.mxu0 0
        %3879 = vmatpush1.bf16.msra.mxu0 %v3739
        %3880 = vmatprep.subr.bf16.mxu0 0
        %3881 = vmatpush2.bf16.msra.mxu0 0
        %3882 = vmatprep.subr.bf16.mxu0 0
        %3883 = vmatpush2.bf16.msra.mxu0 0
        %3884 = vmatprep.subr.bf16.mxu0 0
        %3885 = vmatpush2.bf16.msra.mxu0 0
        %3886 = vmatprep.subr.bf16.mxu0 0
        %3887 = vmatpush2.bf16.msra.mxu0 0
        %3888 = vmatprep.subr.bf16.mxu0 0
        %3889 = vmatpush2.bf16.msra.mxu0 0
        %3890 = vmatprep.subr.bf16.mxu0 0
        %3891 = vmatpush2.bf16.msra.mxu0 0
        %3892 = vmatprep.subr.bf16.mxu0 0
        %3893 = vmatpush2.bf16.msra.mxu0 0
        %3894 = vmatprep.subr.bf16.mxu0 0
        %3895 = vmatpush2.bf16.msra.mxu0 0
        %3896 = vmatprep.mubr.bf16.mxu0 0
        %3897 = vmatmul.mubr.bf16.gmra.mxu0 %v3718
        %v3898 = vpop.f32.mrf.mxu0
        %v3899 = vadd.f32 0.0, %v3898
        %v3900 = vpop.f32.mrf.mxu0
        %v3901 = vpop.f32.mrf.mxu0
        %v3902 = vpop.f32.mrf.mxu0
        %3903 = vdwg.mxu0
        %v3904 = vadd.f32 %v3667, %v3776
        %v3905 = vadd.f32 %v3668, %v3778
        %v3906 = vadd.f32 %v3669, %v3817
        %v3907 = vadd.f32 %v3670, %v3819
        %v3908 = vadd.f32 %v3671, %v3858
        %v3909 = vadd.f32 %v3672, %v3860
        %v3910 = vadd.f32 %v3673, %v3899
        %s3911 = scalar_lea.vmem %s3, 16
        %v3912 = vld [vmem:[%s3911] sm:$0xf]
        %3913 = vrot.lane.b32.xlu0 %v3000, 96
        %v3914 = vpop.permute.xlu0 %3913
        %3915 = vrot.lane.b32.xlu0 %v3001, 96
        %v3916 = vpop.permute.xlu0 %3915
        %3917 = vrot.lane.b32.xlu0 %v3002, 96
        %v3918 = vpop.permute.xlu0 %3917
        %3919 = vrot.lane.b32.xlu0 %v3003, 96
        %v3920 = vpop.permute.xlu0 %3919
        %3921 = vrot.lane.b32.xlu0 %v3004, 96
        %v3922 = vpop.permute.xlu0 %3921
        %3923 = vrot.lane.b32.xlu0 %v3005, 96
        %v3924 = vpop.permute.xlu0 %3923
        %3925 = vrot.lane.b32.xlu0 %v3006, 96
        %v3926 = vpop.permute.xlu0 %3925
        %v3927 = vsel %vm1711, %v3914, %v3916
        %v3928 = vsel %vm1711, %v3916, %v3918
        %v3929 = vsel %vm1711, %v3918, %v3920
        %v3930 = vsel %vm1711, %v3920, %v3922
        %v3931 = vsel %vm1711, %v3922, %v3924
        %v3932 = vsel %vm1711, %v3924, %v3926
        %v3934 = vsel %vm3034, %v3912, 0
        %v3937 = vsel %vm3038, %v3927, 0
        %v3940 = vsel %vm3038, %v3928, 0
        %v3943 = vsel %vm3038, %v3929, 0
        %v3946 = vsel %vm3038, %v3930, 0
        %v3949 = vsel %vm3038, %v3931, 0
        %v3952 = vsel %vm3038, %v3932, 0
        %v3955 = vsel %vm3038, %v3926, 0
        %3957 = vmatprep.subr.bf16.mxu0 0
        %3958 = vmatpush1.bf16.msra.mxu0 0
        %3959 = vmatprep.subr.bf16.mxu0 0
        %3960 = vmatpush1.bf16.msra.mxu0 0
        %3961 = vmatprep.subr.bf16.mxu0 0
        %3962 = vmatpush1.bf16.msra.mxu0 0
        %3963 = vmatprep.subr.bf16.mxu0 0
        %3964 = vmatpush1.bf16.msra.mxu0 0
        %3965 = vmatprep.subr.bf16.mxu0 0
        %3966 = vmatpush1.bf16.msra.mxu0 0
        %3967 = vmatprep.subr.bf16.mxu0 0
        %3968 = vmatpush1.bf16.msra.mxu0 0
        %3969 = vmatprep.subr.bf16.mxu0 0
        %3970 = vmatpush1.bf16.msra.mxu0 0
        %3971 = vmatprep.subr.bf16.mxu0 %v3940
        %3972 = vmatpush1.bf16.msra.mxu0 %v3937
        %3973 = vmatprep.subr.bf16.mxu0 0
        %3974 = vmatpush2.bf16.msra.mxu0 0
        %3975 = vmatprep.subr.bf16.mxu0 0
        %3976 = vmatpush2.bf16.msra.mxu0 0
        %3977 = vmatprep.subr.bf16.mxu0 0
        %3978 = vmatpush2.bf16.msra.mxu0 0
        %3979 = vmatprep.subr.bf16.mxu0 0
        %3980 = vmatpush2.bf16.msra.mxu0 0
        %3981 = vmatprep.subr.bf16.mxu0 0
        %3982 = vmatpush2.bf16.msra.mxu0 0
        %3983 = vmatprep.subr.bf16.mxu0 0
        %3984 = vmatpush2.bf16.msra.mxu0 0
        %3985 = vmatprep.subr.bf16.mxu0 0
        %3986 = vmatpush2.bf16.msra.mxu0 0
        %3987 = vmatprep.subr.bf16.mxu0 0
        %3988 = vmatpush2.bf16.msra.mxu0 0
        %3989 = vmatprep.mubr.bf16.mxu0 0
        %3990 = vmatmul.mubr.bf16.gmra.mxu0 %v3934
        %v3991 = vpop.f32.mrf.mxu0
        %v3992 = vadd.f32 0.0, %v3991
        %v3993 = vpop.f32.mrf.mxu0
        %v3994 = vadd.f32 0.0, %v3993
        %v3995 = vpop.f32.mrf.mxu0
        %v3996 = vpop.f32.mrf.mxu0
        %3997 = vdwg.mxu0
        %3998 = vmatprep.subr.bf16.mxu0 0
        %3999 = vmatpush1.bf16.msra.mxu0 0
        %4000 = vmatprep.subr.bf16.mxu0 0
        %4001 = vmatpush1.bf16.msra.mxu0 0
        %4002 = vmatprep.subr.bf16.mxu0 0
        %4003 = vmatpush1.bf16.msra.mxu0 0
        %4004 = vmatprep.subr.bf16.mxu0 0
        %4005 = vmatpush1.bf16.msra.mxu0 0
        %4006 = vmatprep.subr.bf16.mxu0 0
        %4007 = vmatpush1.bf16.msra.mxu0 0
        %4008 = vmatprep.subr.bf16.mxu0 0
        %4009 = vmatpush1.bf16.msra.mxu0 0
        %4010 = vmatprep.subr.bf16.mxu0 0
        %4011 = vmatpush1.bf16.msra.mxu0 0
        %4012 = vmatprep.subr.bf16.mxu0 %v3946
        %4013 = vmatpush1.bf16.msra.mxu0 %v3943
        %4014 = vmatprep.subr.bf16.mxu0 0
        %4015 = vmatpush2.bf16.msra.mxu0 0
        %4016 = vmatprep.subr.bf16.mxu0 0
        %4017 = vmatpush2.bf16.msra.mxu0 0
        %4018 = vmatprep.subr.bf16.mxu0 0
        %4019 = vmatpush2.bf16.msra.mxu0 0
        %4020 = vmatprep.subr.bf16.mxu0 0
        %4021 = vmatpush2.bf16.msra.mxu0 0
        %4022 = vmatprep.subr.bf16.mxu0 0
        %4023 = vmatpush2.bf16.msra.mxu0 0
        %4024 = vmatprep.subr.bf16.mxu0 0
        %4025 = vmatpush2.bf16.msra.mxu0 0
        %4026 = vmatprep.subr.bf16.mxu0 0
        %4027 = vmatpush2.bf16.msra.mxu0 0
        %4028 = vmatprep.subr.bf16.mxu0 0
        %4029 = vmatpush2.bf16.msra.mxu0 0
        %4030 = vmatprep.mubr.bf16.mxu0 0
        %4031 = vmatmul.mubr.bf16.gmra.mxu0 %v3934
        %v4032 = vpop.f32.mrf.mxu0
        %v4033 = vadd.f32 0.0, %v4032
        %v4034 = vpop.f32.mrf.mxu0
        %v4035 = vadd.f32 0.0, %v4034
        %v4036 = vpop.f32.mrf.mxu0
        %v4037 = vpop.f32.mrf.mxu0
        %4038 = vdwg.mxu0
        %4039 = vmatprep.subr.bf16.mxu0 0
        %4040 = vmatpush1.bf16.msra.mxu0 0
        %4041 = vmatprep.subr.bf16.mxu0 0
        %4042 = vmatpush1.bf16.msra.mxu0 0
        %4043 = vmatprep.subr.bf16.mxu0 0
        %4044 = vmatpush1.bf16.msra.mxu0 0
        %4045 = vmatprep.subr.bf16.mxu0 0
        %4046 = vmatpush1.bf16.msra.mxu0 0
        %4047 = vmatprep.subr.bf16.mxu0 0
        %4048 = vmatpush1.bf16.msra.mxu0 0
        %4049 = vmatprep.subr.bf16.mxu0 0
        %4050 = vmatpush1.bf16.msra.mxu0 0
        %4051 = vmatprep.subr.bf16.mxu0 0
        %4052 = vmatpush1.bf16.msra.mxu0 0
        %4053 = vmatprep.subr.bf16.mxu0 %v3952
        %4054 = vmatpush1.bf16.msra.mxu0 %v3949
        %4055 = vmatprep.subr.bf16.mxu0 0
        %4056 = vmatpush2.bf16.msra.mxu0 0
        %4057 = vmatprep.subr.bf16.mxu0 0
        %4058 = vmatpush2.bf16.msra.mxu0 0
        %4059 = vmatprep.subr.bf16.mxu0 0
        %4060 = vmatpush2.bf16.msra.mxu0 0
        %4061 = vmatprep.subr.bf16.mxu0 0
        %4062 = vmatpush2.bf16.msra.mxu0 0
        %4063 = vmatprep.subr.bf16.mxu0 0
        %4064 = vmatpush2.bf16.msra.mxu0 0
        %4065 = vmatprep.subr.bf16.mxu0 0
        %4066 = vmatpush2.bf16.msra.mxu0 0
        %4067 = vmatprep.subr.bf16.mxu0 0
        %4068 = vmatpush2.bf16.msra.mxu0 0
        %4069 = vmatprep.subr.bf16.mxu0 0
        %4070 = vmatpush2.bf16.msra.mxu0 0
        %4071 = vmatprep.mubr.bf16.mxu0 0
        %4072 = vmatmul.mubr.bf16.gmra.mxu0 %v3934
        %v4073 = vpop.f32.mrf.mxu0
        %v4074 = vadd.f32 0.0, %v4073
        %v4075 = vpop.f32.mrf.mxu0
        %v4076 = vadd.f32 0.0, %v4075
        %v4077 = vpop.f32.mrf.mxu0
        %v4078 = vpop.f32.mrf.mxu0
        %4079 = vdwg.mxu0
        %4080 = vmatprep.subr.bf16.mxu0 0
        %4081 = vmatpush1.bf16.msra.mxu0 0
        %4082 = vmatprep.subr.bf16.mxu0 0
        %4083 = vmatpush1.bf16.msra.mxu0 0
        %4084 = vmatprep.subr.bf16.mxu0 0
        %4085 = vmatpush1.bf16.msra.mxu0 0
        %4086 = vmatprep.subr.bf16.mxu0 0
        %4087 = vmatpush1.bf16.msra.mxu0 0
        %4088 = vmatprep.subr.bf16.mxu0 0
        %4089 = vmatpush1.bf16.msra.mxu0 0
        %4090 = vmatprep.subr.bf16.mxu0 0
        %4091 = vmatpush1.bf16.msra.mxu0 0
        %4092 = vmatprep.subr.bf16.mxu0 0
        %4093 = vmatpush1.bf16.msra.mxu0 0
        %4094 = vmatprep.subr.bf16.mxu0 0
        %4095 = vmatpush1.bf16.msra.mxu0 %v3955
        %4096 = vmatprep.subr.bf16.mxu0 0
        %4097 = vmatpush2.bf16.msra.mxu0 0
        %4098 = vmatprep.subr.bf16.mxu0 0
        %4099 = vmatpush2.bf16.msra.mxu0 0
        %4100 = vmatprep.subr.bf16.mxu0 0
        %4101 = vmatpush2.bf16.msra.mxu0 0
        %4102 = vmatprep.subr.bf16.mxu0 0
        %4103 = vmatpush2.bf16.msra.mxu0 0
        %4104 = vmatprep.subr.bf16.mxu0 0
        %4105 = vmatpush2.bf16.msra.mxu0 0
        %4106 = vmatprep.subr.bf16.mxu0 0
        %4107 = vmatpush2.bf16.msra.mxu0 0
        %4108 = vmatprep.subr.bf16.mxu0 0
        %4109 = vmatpush2.bf16.msra.mxu0 0
        %4110 = vmatprep.subr.bf16.mxu0 0
        %4111 = vmatpush2.bf16.msra.mxu0 0
        %4112 = vmatprep.mubr.bf16.mxu0 0
        %4113 = vmatmul.mubr.bf16.gmra.mxu0 %v3934
        %v4114 = vpop.f32.mrf.mxu0
        %v4115 = vadd.f32 0.0, %v4114
        %v4116 = vpop.f32.mrf.mxu0
        %v4117 = vpop.f32.mrf.mxu0
        %v4118 = vpop.f32.mrf.mxu0
        %4119 = vdwg.mxu0
        %v4120 = vadd.f32 %v3904, %v3992
        %v4121 = vadd.f32 %v3905, %v3994
        %v4122 = vadd.f32 %v3906, %v4033
        %v4123 = vadd.f32 %v3907, %v4035
        %v4124 = vadd.f32 %v3908, %v4074
        %v4125 = vadd.f32 %v3909, %v4076
        %v4126 = vadd.f32 %v3910, %v4115
        %v4127 = vmul.f32 %v2981, %v1913
        %v4128 = vmul.f32 %v2968, %v1927
        %v4129 = vmul.f32 %v2969, %v1928
        %v4130 = vmul.f32 %v2970, %v1929
        %v4131 = vmul.f32 %v2971, %v1930
        %v4132 = vmul.f32 %v2972, %v1931
        %v4133 = vmul.f32 %v2982, %v1932
        %s4134 = scalar_lea.vmem %s3, 20
        %v4135 = vld [vmem:[%s4134] sm:$0xf]
        %v4136 = vpack.c.bf16 %v4127, %v4127
        %v4137 = vpack.c.bf16 %v4128, %v4128
        %v4138 = vpack.c.bf16 %v4129, %v4129
        %v4139 = vpack.c.bf16 %v4130, %v4130
        %v4140 = vpack.c.bf16 %v4131, %v4131
        %v4141 = vpack.c.bf16 %v4132, %v4132
        %v4142 = vpack.c.bf16 %v4133, %v4133
        %4150 = vrot.lane.b32.xlu0 %v4136, 95
        %v4151 = vpop.permute.xlu0 %4150
        %4152 = vrot.lane.b32.xlu0 %v4137, 95
        %v4153 = vpop.permute.xlu0 %4152
        %4154 = vrot.lane.b32.xlu0 %v4138, 95
        %v4155 = vpop.permute.xlu0 %4154
        %4156 = vrot.lane.b32.xlu0 %v4139, 95
        %v4157 = vpop.permute.xlu0 %4156
        %4158 = vrot.lane.b32.xlu0 %v4140, 95
        %v4159 = vpop.permute.xlu0 %4158
        %4160 = vrot.lane.b32.xlu0 %v4141, 95
        %v4161 = vpop.permute.xlu0 %4160
        %4162 = vrot.lane.b32.xlu0 %v4142, 95
        %v4163 = vpop.permute.xlu0 %4162
        %v4164 = vsel %vm1977, %v4151, %v4153
        %v4165 = vsel %vm1977, %v4153, %v4155
        %v4166 = vsel %vm1977, %v4155, %v4157
        %v4167 = vsel %vm1977, %v4157, %v4159
        %v4168 = vsel %vm1977, %v4159, %v4161
        %v4169 = vsel %vm1977, %v4161, %v4163
        %v4171 = vsel %vm3034, %v4135, 0
        %v4174 = vsel %vm3038, %v4164, 0
        %v4177 = vsel %vm3038, %v4165, 0
        %v4180 = vsel %vm3038, %v4166, 0
        %v4183 = vsel %vm3038, %v4167, 0
        %v4186 = vsel %vm3038, %v4168, 0
        %v4189 = vsel %vm3038, %v4169, 0
        %v4192 = vsel %vm3038, %v4163, 0
        %4194 = vmatprep.subr.bf16.mxu0 0
        %4195 = vmatpush1.bf16.msra.mxu0 0
        %4196 = vmatprep.subr.bf16.mxu0 0
        %4197 = vmatpush1.bf16.msra.mxu0 0
        %4198 = vmatprep.subr.bf16.mxu0 0
        %4199 = vmatpush1.bf16.msra.mxu0 0
        %4200 = vmatprep.subr.bf16.mxu0 0
        %4201 = vmatpush1.bf16.msra.mxu0 0
        %4202 = vmatprep.subr.bf16.mxu0 0
        %4203 = vmatpush1.bf16.msra.mxu0 0
        %4204 = vmatprep.subr.bf16.mxu0 0
        %4205 = vmatpush1.bf16.msra.mxu0 0
        %4206 = vmatprep.subr.bf16.mxu0 0
        %4207 = vmatpush1.bf16.msra.mxu0 0
        %4208 = vmatprep.subr.bf16.mxu0 %v4177
        %4209 = vmatpush1.bf16.msra.mxu0 %v4174
        %4210 = vmatprep.subr.bf16.mxu0 0
        %4211 = vmatpush2.bf16.msra.mxu0 0
        %4212 = vmatprep.subr.bf16.mxu0 0
        %4213 = vmatpush2.bf16.msra.mxu0 0
        %4214 = vmatprep.subr.bf16.mxu0 0
        %4215 = vmatpush2.bf16.msra.mxu0 0
        %4216 = vmatprep.subr.bf16.mxu0 0
        %4217 = vmatpush2.bf16.msra.mxu0 0
        %4218 = vmatprep.subr.bf16.mxu0 0
        %4219 = vmatpush2.bf16.msra.mxu0 0
        %4220 = vmatprep.subr.bf16.mxu0 0
        %4221 = vmatpush2.bf16.msra.mxu0 0
        %4222 = vmatprep.subr.bf16.mxu0 0
        %4223 = vmatpush2.bf16.msra.mxu0 0
        %4224 = vmatprep.subr.bf16.mxu0 0
        %4225 = vmatpush2.bf16.msra.mxu0 0
        %4226 = vmatprep.mubr.bf16.mxu0 0
        %4227 = vmatmul.mubr.bf16.gmra.mxu0 %v4171
        %v4228 = vpop.f32.mrf.mxu0
        %v4229 = vadd.f32 0.0, %v4228
        %v4230 = vpop.f32.mrf.mxu0
        %v4231 = vadd.f32 0.0, %v4230
        %v4232 = vpop.f32.mrf.mxu0
        %v4233 = vpop.f32.mrf.mxu0
        %4234 = vdwg.mxu0
        %4235 = vmatprep.subr.bf16.mxu0 0
        %4236 = vmatpush1.bf16.msra.mxu0 0
        %4237 = vmatprep.subr.bf16.mxu0 0
        %4238 = vmatpush1.bf16.msra.mxu0 0
        %4239 = vmatprep.subr.bf16.mxu0 0
        %4240 = vmatpush1.bf16.msra.mxu0 0
        %4241 = vmatprep.subr.bf16.mxu0 0
        %4242 = vmatpush1.bf16.msra.mxu0 0
        %4243 = vmatprep.subr.bf16.mxu0 0
        %4244 = vmatpush1.bf16.msra.mxu0 0
        %4245 = vmatprep.subr.bf16.mxu0 0
        %4246 = vmatpush1.bf16.msra.mxu0 0
        %4247 = vmatprep.subr.bf16.mxu0 0
        %4248 = vmatpush1.bf16.msra.mxu0 0
        %4249 = vmatprep.subr.bf16.mxu0 %v4183
        %4250 = vmatpush1.bf16.msra.mxu0 %v4180
        %4251 = vmatprep.subr.bf16.mxu0 0
        %4252 = vmatpush2.bf16.msra.mxu0 0
        %4253 = vmatprep.subr.bf16.mxu0 0
        %4254 = vmatpush2.bf16.msra.mxu0 0
        %4255 = vmatprep.subr.bf16.mxu0 0
        %4256 = vmatpush2.bf16.msra.mxu0 0
        %4257 = vmatprep.subr.bf16.mxu0 0
        %4258 = vmatpush2.bf16.msra.mxu0 0
        %4259 = vmatprep.subr.bf16.mxu0 0
        %4260 = vmatpush2.bf16.msra.mxu0 0
        %4261 = vmatprep.subr.bf16.mxu0 0
        %4262 = vmatpush2.bf16.msra.mxu0 0
        %4263 = vmatprep.subr.bf16.mxu0 0
        %4264 = vmatpush2.bf16.msra.mxu0 0
        %4265 = vmatprep.subr.bf16.mxu0 0
        %4266 = vmatpush2.bf16.msra.mxu0 0
        %4267 = vmatprep.mubr.bf16.mxu0 0
        %4268 = vmatmul.mubr.bf16.gmra.mxu0 %v4171
        %v4269 = vpop.f32.mrf.mxu0
        %v4270 = vadd.f32 0.0, %v4269
        %v4271 = vpop.f32.mrf.mxu0
        %v4272 = vadd.f32 0.0, %v4271
        %v4273 = vpop.f32.mrf.mxu0
        %v4274 = vpop.f32.mrf.mxu0
        %4275 = vdwg.mxu0
        %4276 = vmatprep.subr.bf16.mxu0 0
        %4277 = vmatpush1.bf16.msra.mxu0 0
        %4278 = vmatprep.subr.bf16.mxu0 0
        %4279 = vmatpush1.bf16.msra.mxu0 0
        %4280 = vmatprep.subr.bf16.mxu0 0
        %4281 = vmatpush1.bf16.msra.mxu0 0
        %4282 = vmatprep.subr.bf16.mxu0 0
        %4283 = vmatpush1.bf16.msra.mxu0 0
        %4284 = vmatprep.subr.bf16.mxu0 0
        %4285 = vmatpush1.bf16.msra.mxu0 0
        %4286 = vmatprep.subr.bf16.mxu0 0
        %4287 = vmatpush1.bf16.msra.mxu0 0
        %4288 = vmatprep.subr.bf16.mxu0 0
        %4289 = vmatpush1.bf16.msra.mxu0 0
        %4290 = vmatprep.subr.bf16.mxu0 %v4189
        %4291 = vmatpush1.bf16.msra.mxu0 %v4186
        %4292 = vmatprep.subr.bf16.mxu0 0
        %4293 = vmatpush2.bf16.msra.mxu0 0
        %4294 = vmatprep.subr.bf16.mxu0 0
        %4295 = vmatpush2.bf16.msra.mxu0 0
        %4296 = vmatprep.subr.bf16.mxu0 0
        %4297 = vmatpush2.bf16.msra.mxu0 0
        %4298 = vmatprep.subr.bf16.mxu0 0
        %4299 = vmatpush2.bf16.msra.mxu0 0
        %4300 = vmatprep.subr.bf16.mxu0 0
        %4301 = vmatpush2.bf16.msra.mxu0 0
        %4302 = vmatprep.subr.bf16.mxu0 0
        %4303 = vmatpush2.bf16.msra.mxu0 0
        %4304 = vmatprep.subr.bf16.mxu0 0
        %4305 = vmatpush2.bf16.msra.mxu0 0
        %4306 = vmatprep.subr.bf16.mxu0 0
        %4307 = vmatpush2.bf16.msra.mxu0 0
        %4308 = vmatprep.mubr.bf16.mxu0 0
        %4309 = vmatmul.mubr.bf16.gmra.mxu0 %v4171
        %v4310 = vpop.f32.mrf.mxu0
        %v4311 = vadd.f32 0.0, %v4310
        %v4312 = vpop.f32.mrf.mxu0
        %v4313 = vadd.f32 0.0, %v4312
        %v4314 = vpop.f32.mrf.mxu0
        %v4315 = vpop.f32.mrf.mxu0
        %4316 = vdwg.mxu0
        %4317 = vmatprep.subr.bf16.mxu0 0
        %4318 = vmatpush1.bf16.msra.mxu0 0
        %4319 = vmatprep.subr.bf16.mxu0 0
        %4320 = vmatpush1.bf16.msra.mxu0 0
        %4321 = vmatprep.subr.bf16.mxu0 0
        %4322 = vmatpush1.bf16.msra.mxu0 0
        %4323 = vmatprep.subr.bf16.mxu0 0
        %4324 = vmatpush1.bf16.msra.mxu0 0
        %4325 = vmatprep.subr.bf16.mxu0 0
        %4326 = vmatpush1.bf16.msra.mxu0 0
        %4327 = vmatprep.subr.bf16.mxu0 0
        %4328 = vmatpush1.bf16.msra.mxu0 0
        %4329 = vmatprep.subr.bf16.mxu0 0
        %4330 = vmatpush1.bf16.msra.mxu0 0
        %4331 = vmatprep.subr.bf16.mxu0 0
        %4332 = vmatpush1.bf16.msra.mxu0 %v4192
        %4333 = vmatprep.subr.bf16.mxu0 0
        %4334 = vmatpush2.bf16.msra.mxu0 0
        %4335 = vmatprep.subr.bf16.mxu0 0
        %4336 = vmatpush2.bf16.msra.mxu0 0
        %4337 = vmatprep.subr.bf16.mxu0 0
        %4338 = vmatpush2.bf16.msra.mxu0 0
        %4339 = vmatprep.subr.bf16.mxu0 0
        %4340 = vmatpush2.bf16.msra.mxu0 0
        %4341 = vmatprep.subr.bf16.mxu0 0
        %4342 = vmatpush2.bf16.msra.mxu0 0
        %4343 = vmatprep.subr.bf16.mxu0 0
        %4344 = vmatpush2.bf16.msra.mxu0 0
        %4345 = vmatprep.subr.bf16.mxu0 0
        %4346 = vmatpush2.bf16.msra.mxu0 0
        %4347 = vmatprep.subr.bf16.mxu0 0
        %4348 = vmatpush2.bf16.msra.mxu0 0
        %4349 = vmatprep.mubr.bf16.mxu0 0
        %4350 = vmatmul.mubr.bf16.gmra.mxu0 %v4171
        %v4351 = vpop.f32.mrf.mxu0
        %v4352 = vadd.f32 0.0, %v4351
        %v4353 = vpop.f32.mrf.mxu0
        %v4354 = vpop.f32.mrf.mxu0
        %v4355 = vpop.f32.mrf.mxu0
        %4356 = vdwg.mxu0
        %v4357 = vadd.f32 %v4120, %v4229
        %v4358 = vadd.f32 %v4121, %v4231
        %v4359 = vadd.f32 %v4122, %v4270
        %v4360 = vadd.f32 %v4123, %v4272
        %v4361 = vadd.f32 %v4124, %v4311
        %v4362 = vadd.f32 %v4125, %v4313
        %v4363 = vadd.f32 %v4126, %v4352
        %v4364 = vmul.f32 %v2981, %v2179
        %v4365 = vmul.f32 %v2968, %v2193
        %v4366 = vmul.f32 %v2969, %v2194
        %v4367 = vmul.f32 %v2970, %v2195
        %v4368 = vmul.f32 %v2971, %v2196
        %v4369 = vmul.f32 %v2972, %v2197
        %v4370 = vmul.f32 %v2982, %v2198
        %s4371 = scalar_lea.vmem %s3, 24
        %v4372 = vld [vmem:[%s4371] sm:$0xf]
        %v4373 = vpack.c.bf16 %v4364, %v4364
        %v4374 = vpack.c.bf16 %v4365, %v4365
        %v4375 = vpack.c.bf16 %v4366, %v4366
        %v4376 = vpack.c.bf16 %v4367, %v4367
        %v4377 = vpack.c.bf16 %v4368, %v4368
        %v4378 = vpack.c.bf16 %v4369, %v4369
        %v4379 = vpack.c.bf16 %v4370, %v4370
        %4387 = vrot.lane.b32.xlu0 %v4373, 69
        %v4388 = vpop.permute.xlu0 %4387
        %4389 = vrot.lane.b32.xlu0 %v4374, 69
        %v4390 = vpop.permute.xlu0 %4389
        %4391 = vrot.lane.b32.xlu0 %v4375, 69
        %v4392 = vpop.permute.xlu0 %4391
        %4393 = vrot.lane.b32.xlu0 %v4376, 69
        %v4394 = vpop.permute.xlu0 %4393
        %4395 = vrot.lane.b32.xlu0 %v4377, 69
        %v4396 = vpop.permute.xlu0 %4395
        %4397 = vrot.lane.b32.xlu0 %v4378, 69
        %v4398 = vpop.permute.xlu0 %4397
        %4399 = vrot.lane.b32.xlu0 %v4379, 69
        %v4400 = vpop.permute.xlu0 %4399
        %v4401 = vsel %vm2243, %v4388, %v4390
        %v4402 = vsel %vm2243, %v4390, %v4392
        %v4403 = vsel %vm2243, %v4392, %v4394
        %v4404 = vsel %vm2243, %v4394, %v4396
        %v4405 = vsel %vm2243, %v4396, %v4398
        %v4406 = vsel %vm2243, %v4398, %v4400
        %v4408 = vsel %vm3034, %v4372, 0
        %v4411 = vsel %vm3038, %v4401, 0
        %v4414 = vsel %vm3038, %v4402, 0
        %v4417 = vsel %vm3038, %v4403, 0
        %v4420 = vsel %vm3038, %v4404, 0
        %v4423 = vsel %vm3038, %v4405, 0
        %v4426 = vsel %vm3038, %v4406, 0
        %v4429 = vsel %vm3038, %v4400, 0
        %4431 = vmatprep.subr.bf16.mxu0 0
        %4432 = vmatpush1.bf16.msra.mxu0 0
        %4433 = vmatprep.subr.bf16.mxu0 0
        %4434 = vmatpush1.bf16.msra.mxu0 0
        %4435 = vmatprep.subr.bf16.mxu0 0
        %4436 = vmatpush1.bf16.msra.mxu0 0
        %4437 = vmatprep.subr.bf16.mxu0 0
        %4438 = vmatpush1.bf16.msra.mxu0 0
        %4439 = vmatprep.subr.bf16.mxu0 0
        %4440 = vmatpush1.bf16.msra.mxu0 0
        %4441 = vmatprep.subr.bf16.mxu0 0
        %4442 = vmatpush1.bf16.msra.mxu0 0
        %4443 = vmatprep.subr.bf16.mxu0 0
        %4444 = vmatpush1.bf16.msra.mxu0 0
        %4445 = vmatprep.subr.bf16.mxu0 %v4414
        %4446 = vmatpush1.bf16.msra.mxu0 %v4411
        %4447 = vmatprep.subr.bf16.mxu0 0
        %4448 = vmatpush2.bf16.msra.mxu0 0
        %4449 = vmatprep.subr.bf16.mxu0 0
        %4450 = vmatpush2.bf16.msra.mxu0 0
        %4451 = vmatprep.subr.bf16.mxu0 0
        %4452 = vmatpush2.bf16.msra.mxu0 0
        %4453 = vmatprep.subr.bf16.mxu0 0
        %4454 = vmatpush2.bf16.msra.mxu0 0
        %4455 = vmatprep.subr.bf16.mxu0 0
        %4456 = vmatpush2.bf16.msra.mxu0 0
        %4457 = vmatprep.subr.bf16.mxu0 0
        %4458 = vmatpush2.bf16.msra.mxu0 0
        %4459 = vmatprep.subr.bf16.mxu0 0
        %4460 = vmatpush2.bf16.msra.mxu0 0
        %4461 = vmatprep.subr.bf16.mxu0 0
        %4462 = vmatpush2.bf16.msra.mxu0 0
        %4463 = vmatprep.mubr.bf16.mxu0 0
        %4464 = vmatmul.mubr.bf16.gmra.mxu0 %v4408
        %v4465 = vpop.f32.mrf.mxu0
        %v4466 = vadd.f32 0.0, %v4465
        %v4467 = vpop.f32.mrf.mxu0
        %v4468 = vadd.f32 0.0, %v4467
        %v4469 = vpop.f32.mrf.mxu0
        %v4470 = vpop.f32.mrf.mxu0
        %4471 = vdwg.mxu0
        %4472 = vmatprep.subr.bf16.mxu0 0
        %4473 = vmatpush1.bf16.msra.mxu0 0
        %4474 = vmatprep.subr.bf16.mxu0 0
        %4475 = vmatpush1.bf16.msra.mxu0 0
        %4476 = vmatprep.subr.bf16.mxu0 0
        %4477 = vmatpush1.bf16.msra.mxu0 0
        %4478 = vmatprep.subr.bf16.mxu0 0
        %4479 = vmatpush1.bf16.msra.mxu0 0
        %4480 = vmatprep.subr.bf16.mxu0 0
        %4481 = vmatpush1.bf16.msra.mxu0 0
        %4482 = vmatprep.subr.bf16.mxu0 0
        %4483 = vmatpush1.bf16.msra.mxu0 0
        %4484 = vmatprep.subr.bf16.mxu0 0
        %4485 = vmatpush1.bf16.msra.mxu0 0
        %4486 = vmatprep.subr.bf16.mxu0 %v4420
        %4487 = vmatpush1.bf16.msra.mxu0 %v4417
        %4488 = vmatprep.subr.bf16.mxu0 0
        %4489 = vmatpush2.bf16.msra.mxu0 0
        %4490 = vmatprep.subr.bf16.mxu0 0
        %4491 = vmatpush2.bf16.msra.mxu0 0
        %4492 = vmatprep.subr.bf16.mxu0 0
        %4493 = vmatpush2.bf16.msra.mxu0 0
        %4494 = vmatprep.subr.bf16.mxu0 0
        %4495 = vmatpush2.bf16.msra.mxu0 0
        %4496 = vmatprep.subr.bf16.mxu0 0
        %4497 = vmatpush2.bf16.msra.mxu0 0
        %4498 = vmatprep.subr.bf16.mxu0 0
        %4499 = vmatpush2.bf16.msra.mxu0 0
        %4500 = vmatprep.subr.bf16.mxu0 0
        %4501 = vmatpush2.bf16.msra.mxu0 0
        %4502 = vmatprep.subr.bf16.mxu0 0
        %4503 = vmatpush2.bf16.msra.mxu0 0
        %4504 = vmatprep.mubr.bf16.mxu0 0
        %4505 = vmatmul.mubr.bf16.gmra.mxu0 %v4408
        %v4506 = vpop.f32.mrf.mxu0
        %v4507 = vadd.f32 0.0, %v4506
        %v4508 = vpop.f32.mrf.mxu0
        %v4509 = vadd.f32 0.0, %v4508
        %v4510 = vpop.f32.mrf.mxu0
        %v4511 = vpop.f32.mrf.mxu0
        %4512 = vdwg.mxu0
        %4513 = vmatprep.subr.bf16.mxu0 0
        %4514 = vmatpush1.bf16.msra.mxu0 0
        %4515 = vmatprep.subr.bf16.mxu0 0
        %4516 = vmatpush1.bf16.msra.mxu0 0
        %4517 = vmatprep.subr.bf16.mxu0 0
        %4518 = vmatpush1.bf16.msra.mxu0 0
        %4519 = vmatprep.subr.bf16.mxu0 0
        %4520 = vmatpush1.bf16.msra.mxu0 0
        %4521 = vmatprep.subr.bf16.mxu0 0
        %4522 = vmatpush1.bf16.msra.mxu0 0
        %4523 = vmatprep.subr.bf16.mxu0 0
        %4524 = vmatpush1.bf16.msra.mxu0 0
        %4525 = vmatprep.subr.bf16.mxu0 0
        %4526 = vmatpush1.bf16.msra.mxu0 0
        %4527 = vmatprep.subr.bf16.mxu0 %v4426
        %4528 = vmatpush1.bf16.msra.mxu0 %v4423
        %4529 = vmatprep.subr.bf16.mxu0 0
        %4530 = vmatpush2.bf16.msra.mxu0 0
        %4531 = vmatprep.subr.bf16.mxu0 0
        %4532 = vmatpush2.bf16.msra.mxu0 0
        %4533 = vmatprep.subr.bf16.mxu0 0
        %4534 = vmatpush2.bf16.msra.mxu0 0
        %4535 = vmatprep.subr.bf16.mxu0 0
        %4536 = vmatpush2.bf16.msra.mxu0 0
        %4537 = vmatprep.subr.bf16.mxu0 0
        %4538 = vmatpush2.bf16.msra.mxu0 0
        %4539 = vmatprep.subr.bf16.mxu0 0
        %4540 = vmatpush2.bf16.msra.mxu0 0
        %4541 = vmatprep.subr.bf16.mxu0 0
        %4542 = vmatpush2.bf16.msra.mxu0 0
        %4543 = vmatprep.subr.bf16.mxu0 0
        %4544 = vmatpush2.bf16.msra.mxu0 0
        %4545 = vmatprep.mubr.bf16.mxu0 0
        %4546 = vmatmul.mubr.bf16.gmra.mxu0 %v4408
        %v4547 = vpop.f32.mrf.mxu0
        %v4548 = vadd.f32 0.0, %v4547
        %v4549 = vpop.f32.mrf.mxu0
        %v4550 = vadd.f32 0.0, %v4549
        %v4551 = vpop.f32.mrf.mxu0
        %v4552 = vpop.f32.mrf.mxu0
        %4553 = vdwg.mxu0
        %4554 = vmatprep.subr.bf16.mxu0 0
        %4555 = vmatpush1.bf16.msra.mxu0 0
        %4556 = vmatprep.subr.bf16.mxu0 0
        %4557 = vmatpush1.bf16.msra.mxu0 0
        %4558 = vmatprep.subr.bf16.mxu0 0
        %4559 = vmatpush1.bf16.msra.mxu0 0
        %4560 = vmatprep.subr.bf16.mxu0 0
        %4561 = vmatpush1.bf16.msra.mxu0 0
        %4562 = vmatprep.subr.bf16.mxu0 0
        %4563 = vmatpush1.bf16.msra.mxu0 0
        %4564 = vmatprep.subr.bf16.mxu0 0
        %4565 = vmatpush1.bf16.msra.mxu0 0
        %4566 = vmatprep.subr.bf16.mxu0 0
        %4567 = vmatpush1.bf16.msra.mxu0 0
        %4568 = vmatprep.subr.bf16.mxu0 0
        %4569 = vmatpush1.bf16.msra.mxu0 %v4429
        %4570 = vmatprep.subr.bf16.mxu0 0
        %4571 = vmatpush2.bf16.msra.mxu0 0
        %4572 = vmatprep.subr.bf16.mxu0 0
        %4573 = vmatpush2.bf16.msra.mxu0 0
        %4574 = vmatprep.subr.bf16.mxu0 0
        %4575 = vmatpush2.bf16.msra.mxu0 0
        %4576 = vmatprep.subr.bf16.mxu0 0
        %4577 = vmatpush2.bf16.msra.mxu0 0
        %4578 = vmatprep.subr.bf16.mxu0 0
        %4579 = vmatpush2.bf16.msra.mxu0 0
        %4580 = vmatprep.subr.bf16.mxu0 0
        %4581 = vmatpush2.bf16.msra.mxu0 0
        %4582 = vmatprep.subr.bf16.mxu0 0
        %4583 = vmatpush2.bf16.msra.mxu0 0
        %4584 = vmatprep.subr.bf16.mxu0 0
        %4585 = vmatpush2.bf16.msra.mxu0 0
        %4586 = vmatprep.mubr.bf16.mxu0 0
        %4587 = vmatmul.mubr.bf16.gmra.mxu0 %v4408
        %v4588 = vpop.f32.mrf.mxu0
        %v4589 = vadd.f32 0.0, %v4588
        %v4590 = vpop.f32.mrf.mxu0
        %v4591 = vpop.f32.mrf.mxu0
        %v4592 = vpop.f32.mrf.mxu0
        %4593 = vdwg.mxu0
        %v4594 = vadd.f32 %v4357, %v4466
        %v4595 = vadd.f32 %v4358, %v4468
        %v4596 = vadd.f32 %v4359, %v4507
        %v4597 = vadd.f32 %v4360, %v4509
        %v4598 = vadd.f32 %v4361, %v4548
        %v4599 = vadd.f32 %v4362, %v4550
        %v4600 = vadd.f32 %v4363, %v4589
        %s4601 = scalar_lea.vmem %s3, 28
        %v4602 = vld [vmem:[%s4601] sm:$0xf]
        %4603 = vrot.lane.b32.xlu0 %v3000, 68
        %v4604 = vpop.permute.xlu0 %4603
        %4605 = vrot.lane.b32.xlu0 %v3001, 68
        %v4606 = vpop.permute.xlu0 %4605
        %4607 = vrot.lane.b32.xlu0 %v3002, 68
        %v4608 = vpop.permute.xlu0 %4607
        %4609 = vrot.lane.b32.xlu0 %v3003, 68
        %v4610 = vpop.permute.xlu0 %4609
        %4611 = vrot.lane.b32.xlu0 %v3004, 68
        %v4612 = vpop.permute.xlu0 %4611
        %4613 = vrot.lane.b32.xlu0 %v3005, 68
        %v4614 = vpop.permute.xlu0 %4613
        %4615 = vrot.lane.b32.xlu0 %v3006, 68
        %v4616 = vpop.permute.xlu0 %4615
        %v4617 = vsel %vm2460, %v4604, %v4606
        %v4618 = vsel %vm2460, %v4606, %v4608
        %v4619 = vsel %vm2460, %v4608, %v4610
        %v4620 = vsel %vm2460, %v4610, %v4612
        %v4621 = vsel %vm2460, %v4612, %v4614
        %v4622 = vsel %vm2460, %v4614, %v4616
        %v4624 = vsel %vm3034, %v4602, 0
        %v4627 = vsel %vm3038, %v4617, 0
        %v4630 = vsel %vm3038, %v4618, 0
        %v4633 = vsel %vm3038, %v4619, 0
        %v4636 = vsel %vm3038, %v4620, 0
        %v4639 = vsel %vm3038, %v4621, 0
        %v4642 = vsel %vm3038, %v4622, 0
        %v4645 = vsel %vm3038, %v4616, 0
        %4647 = vmatprep.subr.bf16.mxu0 0
        %4648 = vmatpush1.bf16.msra.mxu0 0
        %4649 = vmatprep.subr.bf16.mxu0 0
        %4650 = vmatpush1.bf16.msra.mxu0 0
        %4651 = vmatprep.subr.bf16.mxu0 0
        %4652 = vmatpush1.bf16.msra.mxu0 0
        %4653 = vmatprep.subr.bf16.mxu0 0
        %4654 = vmatpush1.bf16.msra.mxu0 0
        %4655 = vmatprep.subr.bf16.mxu0 0
        %4656 = vmatpush1.bf16.msra.mxu0 0
        %4657 = vmatprep.subr.bf16.mxu0 0
        %4658 = vmatpush1.bf16.msra.mxu0 0
        %4659 = vmatprep.subr.bf16.mxu0 0
        %4660 = vmatpush1.bf16.msra.mxu0 0
        %4661 = vmatprep.subr.bf16.mxu0 %v4630
        %4662 = vmatpush1.bf16.msra.mxu0 %v4627
        %4663 = vmatprep.subr.bf16.mxu0 0
        %4664 = vmatpush2.bf16.msra.mxu0 0
        %4665 = vmatprep.subr.bf16.mxu0 0
        %4666 = vmatpush2.bf16.msra.mxu0 0
        %4667 = vmatprep.subr.bf16.mxu0 0
        %4668 = vmatpush2.bf16.msra.mxu0 0
        %4669 = vmatprep.subr.bf16.mxu0 0
        %4670 = vmatpush2.bf16.msra.mxu0 0
        %4671 = vmatprep.subr.bf16.mxu0 0
        %4672 = vmatpush2.bf16.msra.mxu0 0
        %4673 = vmatprep.subr.bf16.mxu0 0
        %4674 = vmatpush2.bf16.msra.mxu0 0
        %4675 = vmatprep.subr.bf16.mxu0 0
        %4676 = vmatpush2.bf16.msra.mxu0 0
        %4677 = vmatprep.subr.bf16.mxu0 0
        %4678 = vmatpush2.bf16.msra.mxu0 0
        %4679 = vmatprep.mubr.bf16.mxu0 0
        %4680 = vmatmul.mubr.bf16.gmra.mxu0 %v4624
        %v4681 = vpop.f32.mrf.mxu0
        %v4682 = vadd.f32 0.0, %v4681
        %v4683 = vpop.f32.mrf.mxu0
        %v4684 = vadd.f32 0.0, %v4683
        %v4685 = vpop.f32.mrf.mxu0
        %v4686 = vpop.f32.mrf.mxu0
        %4687 = vdwg.mxu0
        %4688 = vmatprep.subr.bf16.mxu0 0
        %4689 = vmatpush1.bf16.msra.mxu0 0
        %4690 = vmatprep.subr.bf16.mxu0 0
        %4691 = vmatpush1.bf16.msra.mxu0 0
        %4692 = vmatprep.subr.bf16.mxu0 0
        %4693 = vmatpush1.bf16.msra.mxu0 0
        %4694 = vmatprep.subr.bf16.mxu0 0
        %4695 = vmatpush1.bf16.msra.mxu0 0
        %4696 = vmatprep.subr.bf16.mxu0 0
        %4697 = vmatpush1.bf16.msra.mxu0 0
        %4698 = vmatprep.subr.bf16.mxu0 0
        %4699 = vmatpush1.bf16.msra.mxu0 0
        %4700 = vmatprep.subr.bf16.mxu0 0
        %4701 = vmatpush1.bf16.msra.mxu0 0
        %4702 = vmatprep.subr.bf16.mxu0 %v4636
        %4703 = vmatpush1.bf16.msra.mxu0 %v4633
        %4704 = vmatprep.subr.bf16.mxu0 0
        %4705 = vmatpush2.bf16.msra.mxu0 0
        %4706 = vmatprep.subr.bf16.mxu0 0
        %4707 = vmatpush2.bf16.msra.mxu0 0
        %4708 = vmatprep.subr.bf16.mxu0 0
        %4709 = vmatpush2.bf16.msra.mxu0 0
        %4710 = vmatprep.subr.bf16.mxu0 0
        %4711 = vmatpush2.bf16.msra.mxu0 0
        %4712 = vmatprep.subr.bf16.mxu0 0
        %4713 = vmatpush2.bf16.msra.mxu0 0
        %4714 = vmatprep.subr.bf16.mxu0 0
        %4715 = vmatpush2.bf16.msra.mxu0 0
        %4716 = vmatprep.subr.bf16.mxu0 0
        %4717 = vmatpush2.bf16.msra.mxu0 0
        %4718 = vmatprep.subr.bf16.mxu0 0
        %4719 = vmatpush2.bf16.msra.mxu0 0
        %4720 = vmatprep.mubr.bf16.mxu0 0
        %4721 = vmatmul.mubr.bf16.gmra.mxu0 %v4624
        %v4722 = vpop.f32.mrf.mxu0
        %v4723 = vadd.f32 0.0, %v4722
        %v4724 = vpop.f32.mrf.mxu0
        %v4725 = vadd.f32 0.0, %v4724
        %v4726 = vpop.f32.mrf.mxu0
        %v4727 = vpop.f32.mrf.mxu0
        %4728 = vdwg.mxu0
        %4729 = vmatprep.subr.bf16.mxu0 0
        %4730 = vmatpush1.bf16.msra.mxu0 0
        %4731 = vmatprep.subr.bf16.mxu0 0
        %4732 = vmatpush1.bf16.msra.mxu0 0
        %4733 = vmatprep.subr.bf16.mxu0 0
        %4734 = vmatpush1.bf16.msra.mxu0 0
        %4735 = vmatprep.subr.bf16.mxu0 0
        %4736 = vmatpush1.bf16.msra.mxu0 0
        %4737 = vmatprep.subr.bf16.mxu0 0
        %4738 = vmatpush1.bf16.msra.mxu0 0
        %4739 = vmatprep.subr.bf16.mxu0 0
        %4740 = vmatpush1.bf16.msra.mxu0 0
        %4741 = vmatprep.subr.bf16.mxu0 0
        %4742 = vmatpush1.bf16.msra.mxu0 0
        %4743 = vmatprep.subr.bf16.mxu0 %v4642
        %4744 = vmatpush1.bf16.msra.mxu0 %v4639
        %4745 = vmatprep.subr.bf16.mxu0 0
        %4746 = vmatpush2.bf16.msra.mxu0 0
        %4747 = vmatprep.subr.bf16.mxu0 0
        %4748 = vmatpush2.bf16.msra.mxu0 0
        %4749 = vmatprep.subr.bf16.mxu0 0
        %4750 = vmatpush2.bf16.msra.mxu0 0
        %4751 = vmatprep.subr.bf16.mxu0 0
        %4752 = vmatpush2.bf16.msra.mxu0 0
        %4753 = vmatprep.subr.bf16.mxu0 0
        %4754 = vmatpush2.bf16.msra.mxu0 0
        %4755 = vmatprep.subr.bf16.mxu0 0
        %4756 = vmatpush2.bf16.msra.mxu0 0
        %4757 = vmatprep.subr.bf16.mxu0 0
        %4758 = vmatpush2.bf16.msra.mxu0 0
        %4759 = vmatprep.subr.bf16.mxu0 0
        %4760 = vmatpush2.bf16.msra.mxu0 0
        %4761 = vmatprep.mubr.bf16.mxu0 0
        %4762 = vmatmul.mubr.bf16.gmra.mxu0 %v4624
        %v4763 = vpop.f32.mrf.mxu0
        %v4764 = vadd.f32 0.0, %v4763
        %v4765 = vpop.f32.mrf.mxu0
        %v4766 = vadd.f32 0.0, %v4765
        %v4767 = vpop.f32.mrf.mxu0
        %v4768 = vpop.f32.mrf.mxu0
        %4769 = vdwg.mxu0
        %4770 = vmatprep.subr.bf16.mxu0 0
        %4771 = vmatpush1.bf16.msra.mxu0 0
        %4772 = vmatprep.subr.bf16.mxu0 0
        %4773 = vmatpush1.bf16.msra.mxu0 0
        %4774 = vmatprep.subr.bf16.mxu0 0
        %4775 = vmatpush1.bf16.msra.mxu0 0
        %4776 = vmatprep.subr.bf16.mxu0 0
        %4777 = vmatpush1.bf16.msra.mxu0 0
        %4778 = vmatprep.subr.bf16.mxu0 0
        %4779 = vmatpush1.bf16.msra.mxu0 0
        %4780 = vmatprep.subr.bf16.mxu0 0
        %4781 = vmatpush1.bf16.msra.mxu0 0
        %4782 = vmatprep.subr.bf16.mxu0 0
        %4783 = vmatpush1.bf16.msra.mxu0 0
        %4784 = vmatprep.subr.bf16.mxu0 0
        %4785 = vmatpush1.bf16.msra.mxu0 %v4645
        %4786 = vmatprep.subr.bf16.mxu0 0
        %4787 = vmatpush2.bf16.msra.mxu0 0
        %4788 = vmatprep.subr.bf16.mxu0 0
        %4789 = vmatpush2.bf16.msra.mxu0 0
        %4790 = vmatprep.subr.bf16.mxu0 0
        %4791 = vmatpush2.bf16.msra.mxu0 0
        %4792 = vmatprep.subr.bf16.mxu0 0
        %4793 = vmatpush2.bf16.msra.mxu0 0
        %4794 = vmatprep.subr.bf16.mxu0 0
        %4795 = vmatpush2.bf16.msra.mxu0 0
        %4796 = vmatprep.subr.bf16.mxu0 0
        %4797 = vmatpush2.bf16.msra.mxu0 0
        %4798 = vmatprep.subr.bf16.mxu0 0
        %4799 = vmatpush2.bf16.msra.mxu0 0
        %4800 = vmatprep.subr.bf16.mxu0 0
        %4801 = vmatpush2.bf16.msra.mxu0 0
        %4802 = vmatprep.mubr.bf16.mxu0 0
        %4803 = vmatmul.mubr.bf16.gmra.mxu0 %v4624
        %v4804 = vpop.f32.mrf.mxu0
        %v4805 = vadd.f32 0.0, %v4804
        %v4806 = vpop.f32.mrf.mxu0
        %v4807 = vpop.f32.mrf.mxu0
        %v4808 = vpop.f32.mrf.mxu0
        %4809 = vdwg.mxu0
        %v4810 = vadd.f32 %v4594, %v4682
        %v4811 = vadd.f32 %v4595, %v4684
        %v4812 = vadd.f32 %v4596, %v4723
        %v4813 = vadd.f32 %v4597, %v4725
        %v4814 = vadd.f32 %v4598, %v4764
        %v4815 = vadd.f32 %v4599, %v4766
        %v4816 = vadd.f32 %v4600, %v4805
        %v4817 = vmul.f32 %v2981, %v2662
        %v4818 = vmul.f32 %v2968, %v2676
        %v4819 = vmul.f32 %v2969, %v2677
        %v4820 = vmul.f32 %v2970, %v2678
        %v4821 = vmul.f32 %v2971, %v2679
        %v4822 = vmul.f32 %v2972, %v2680
        %v4823 = vmul.f32 %v2982, %v2681
        %s4824 = scalar_lea.vmem %s3, 32
        %v4825 = vld [vmem:[%s4824] sm:$0xf]
        %v4826 = vpack.c.bf16 %v4817, %v4817
        %v4827 = vpack.c.bf16 %v4818, %v4818
        %v4828 = vpack.c.bf16 %v4819, %v4819
        %v4829 = vpack.c.bf16 %v4820, %v4820
        %v4830 = vpack.c.bf16 %v4821, %v4821
        %v4831 = vpack.c.bf16 %v4822, %v4822
        %v4832 = vpack.c.bf16 %v4823, %v4823
        %4840 = vrot.lane.b32.xlu0 %v4826, 67
        %v4841 = vpop.permute.xlu0 %4840
        %4842 = vrot.lane.b32.xlu0 %v4827, 67
        %v4843 = vpop.permute.xlu0 %4842
        %4844 = vrot.lane.b32.xlu0 %v4828, 67
        %v4845 = vpop.permute.xlu0 %4844
        %4846 = vrot.lane.b32.xlu0 %v4829, 67
        %v4847 = vpop.permute.xlu0 %4846
        %4848 = vrot.lane.b32.xlu0 %v4830, 67
        %v4849 = vpop.permute.xlu0 %4848
        %4850 = vrot.lane.b32.xlu0 %v4831, 67
        %v4851 = vpop.permute.xlu0 %4850
        %4852 = vrot.lane.b32.xlu0 %v4832, 67
        %v4853 = vpop.permute.xlu0 %4852
        %v4854 = vsel %vm2726, %v4841, %v4843
        %v4855 = vsel %vm2726, %v4843, %v4845
        %v4856 = vsel %vm2726, %v4845, %v4847
        %v4857 = vsel %vm2726, %v4847, %v4849
        %v4858 = vsel %vm2726, %v4849, %v4851
        %v4859 = vsel %vm2726, %v4851, %v4853
        %v4861 = vsel %vm3034, %v4825, 0
        %v4864 = vsel %vm3038, %v4854, 0
        %v4867 = vsel %vm3038, %v4855, 0
        %v4870 = vsel %vm3038, %v4856, 0
        %v4873 = vsel %vm3038, %v4857, 0
        %v4876 = vsel %vm3038, %v4858, 0
        %v4879 = vsel %vm3038, %v4859, 0
        %v4882 = vsel %vm3038, %v4853, 0
        %4884 = vmatprep.subr.bf16.mxu0 0
        %4885 = vmatpush1.bf16.msra.mxu0 0
        %4886 = vmatprep.subr.bf16.mxu0 0
        %4887 = vmatpush1.bf16.msra.mxu0 0
        %4888 = vmatprep.subr.bf16.mxu0 0
        %4889 = vmatpush1.bf16.msra.mxu0 0
        %4890 = vmatprep.subr.bf16.mxu0 0
        %4891 = vmatpush1.bf16.msra.mxu0 0
        %4892 = vmatprep.subr.bf16.mxu0 0
        %4893 = vmatpush1.bf16.msra.mxu0 0
        %4894 = vmatprep.subr.bf16.mxu0 0
        %4895 = vmatpush1.bf16.msra.mxu0 0
        %4896 = vmatprep.subr.bf16.mxu0 0
        %4897 = vmatpush1.bf16.msra.mxu0 0
        %4898 = vmatprep.subr.bf16.mxu0 %v4867
        %4899 = vmatpush1.bf16.msra.mxu0 %v4864
        %4900 = vmatprep.subr.bf16.mxu0 0
        %4901 = vmatpush2.bf16.msra.mxu0 0
        %4902 = vmatprep.subr.bf16.mxu0 0
        %4903 = vmatpush2.bf16.msra.mxu0 0
        %4904 = vmatprep.subr.bf16.mxu0 0
        %4905 = vmatpush2.bf16.msra.mxu0 0
        %4906 = vmatprep.subr.bf16.mxu0 0
        %4907 = vmatpush2.bf16.msra.mxu0 0
        %4908 = vmatprep.subr.bf16.mxu0 0
        %4909 = vmatpush2.bf16.msra.mxu0 0
        %4910 = vmatprep.subr.bf16.mxu0 0
        %4911 = vmatpush2.bf16.msra.mxu0 0
        %4912 = vmatprep.subr.bf16.mxu0 0
        %4913 = vmatpush2.bf16.msra.mxu0 0
        %4914 = vmatprep.subr.bf16.mxu0 0
        %4915 = vmatpush2.bf16.msra.mxu0 0
        %4916 = vmatprep.mubr.bf16.mxu0 0
        %4917 = vmatmul.mubr.bf16.gmra.mxu0 %v4861
        %v4918 = vpop.f32.mrf.mxu0
        %v4919 = vadd.f32 0.0, %v4918
        %v4920 = vpop.f32.mrf.mxu0
        %v4921 = vadd.f32 0.0, %v4920
        %v4922 = vpop.f32.mrf.mxu0
        %v4923 = vpop.f32.mrf.mxu0
        %4924 = vdwg.mxu0
        %4925 = vmatprep.subr.bf16.mxu0 0
        %4926 = vmatpush1.bf16.msra.mxu0 0
        %4927 = vmatprep.subr.bf16.mxu0 0
        %4928 = vmatpush1.bf16.msra.mxu0 0
        %4929 = vmatprep.subr.bf16.mxu0 0
        %4930 = vmatpush1.bf16.msra.mxu0 0
        %4931 = vmatprep.subr.bf16.mxu0 0
        %4932 = vmatpush1.bf16.msra.mxu0 0
        %4933 = vmatprep.subr.bf16.mxu0 0
        %4934 = vmatpush1.bf16.msra.mxu0 0
        %4935 = vmatprep.subr.bf16.mxu0 0
        %4936 = vmatpush1.bf16.msra.mxu0 0
        %4937 = vmatprep.subr.bf16.mxu0 0
        %4938 = vmatpush1.bf16.msra.mxu0 0
        %4939 = vmatprep.subr.bf16.mxu0 %v4873
        %4940 = vmatpush1.bf16.msra.mxu0 %v4870
        %4941 = vmatprep.subr.bf16.mxu0 0
        %4942 = vmatpush2.bf16.msra.mxu0 0
        %4943 = vmatprep.subr.bf16.mxu0 0
        %4944 = vmatpush2.bf16.msra.mxu0 0
        %4945 = vmatprep.subr.bf16.mxu0 0
        %4946 = vmatpush2.bf16.msra.mxu0 0
        %4947 = vmatprep.subr.bf16.mxu0 0
        %4948 = vmatpush2.bf16.msra.mxu0 0
        %4949 = vmatprep.subr.bf16.mxu0 0
        %4950 = vmatpush2.bf16.msra.mxu0 0
        %4951 = vmatprep.subr.bf16.mxu0 0
        %4952 = vmatpush2.bf16.msra.mxu0 0
        %4953 = vmatprep.subr.bf16.mxu0 0
        %4954 = vmatpush2.bf16.msra.mxu0 0
        %4955 = vmatprep.subr.bf16.mxu0 0
        %4956 = vmatpush2.bf16.msra.mxu0 0
        %4957 = vmatprep.mubr.bf16.mxu0 0
        %4958 = vmatmul.mubr.bf16.gmra.mxu0 %v4861
        %v4959 = vpop.f32.mrf.mxu0
        %v4960 = vadd.f32 0.0, %v4959
        %v4961 = vpop.f32.mrf.mxu0
        %v4962 = vadd.f32 0.0, %v4961
        %v4963 = vpop.f32.mrf.mxu0
        %v4964 = vpop.f32.mrf.mxu0
        %4965 = vdwg.mxu0
        %4966 = vmatprep.subr.bf16.mxu0 0
        %4967 = vmatpush1.bf16.msra.mxu0 0
        %4968 = vmatprep.subr.bf16.mxu0 0
        %4969 = vmatpush1.bf16.msra.mxu0 0
        %4970 = vmatprep.subr.bf16.mxu0 0
        %4971 = vmatpush1.bf16.msra.mxu0 0
        %4972 = vmatprep.subr.bf16.mxu0 0
        %4973 = vmatpush1.bf16.msra.mxu0 0
        %4974 = vmatprep.subr.bf16.mxu0 0
        %4975 = vmatpush1.bf16.msra.mxu0 0
        %4976 = vmatprep.subr.bf16.mxu0 0
        %4977 = vmatpush1.bf16.msra.mxu0 0
        %4978 = vmatprep.subr.bf16.mxu0 0
        %4979 = vmatpush1.bf16.msra.mxu0 0
        %4980 = vmatprep.subr.bf16.mxu0 %v4879
        %4981 = vmatpush1.bf16.msra.mxu0 %v4876
        %4982 = vmatprep.subr.bf16.mxu0 0
        %4983 = vmatpush2.bf16.msra.mxu0 0
        %4984 = vmatprep.subr.bf16.mxu0 0
        %4985 = vmatpush2.bf16.msra.mxu0 0
        %4986 = vmatprep.subr.bf16.mxu0 0
        %4987 = vmatpush2.bf16.msra.mxu0 0
        %4988 = vmatprep.subr.bf16.mxu0 0
        %4989 = vmatpush2.bf16.msra.mxu0 0
        %4990 = vmatprep.subr.bf16.mxu0 0
        %4991 = vmatpush2.bf16.msra.mxu0 0
        %4992 = vmatprep.subr.bf16.mxu0 0
        %4993 = vmatpush2.bf16.msra.mxu0 0
        %4994 = vmatprep.subr.bf16.mxu0 0
        %4995 = vmatpush2.bf16.msra.mxu0 0
        %4996 = vmatprep.subr.bf16.mxu0 0
        %4997 = vmatpush2.bf16.msra.mxu0 0
        %4998 = vmatprep.mubr.bf16.mxu0 0
        %4999 = vmatmul.mubr.bf16.gmra.mxu0 %v4861
        %v5000 = vpop.f32.mrf.mxu0
        %v5001 = vadd.f32 0.0, %v5000
        %v5002 = vpop.f32.mrf.mxu0
        %v5003 = vadd.f32 0.0, %v5002
        %v5004 = vpop.f32.mrf.mxu0
        %v5005 = vpop.f32.mrf.mxu0
        %5006 = vdwg.mxu0
        %5007 = vmatprep.subr.bf16.mxu0 0
        %5008 = vmatpush1.bf16.msra.mxu0 0
        %5009 = vmatprep.subr.bf16.mxu0 0
        %5010 = vmatpush1.bf16.msra.mxu0 0
        %5011 = vmatprep.subr.bf16.mxu0 0
        %5012 = vmatpush1.bf16.msra.mxu0 0
        %5013 = vmatprep.subr.bf16.mxu0 0
        %5014 = vmatpush1.bf16.msra.mxu0 0
        %5015 = vmatprep.subr.bf16.mxu0 0
        %5016 = vmatpush1.bf16.msra.mxu0 0
        %5017 = vmatprep.subr.bf16.mxu0 0
        %5018 = vmatpush1.bf16.msra.mxu0 0
        %5019 = vmatprep.subr.bf16.mxu0 0
        %5020 = vmatpush1.bf16.msra.mxu0 0
        %5021 = vmatprep.subr.bf16.mxu0 0
        %5022 = vmatpush1.bf16.msra.mxu0 %v4882
        %5023 = vmatprep.subr.bf16.mxu0 0
        %5024 = vmatpush2.bf16.msra.mxu0 0
        %5025 = vmatprep.subr.bf16.mxu0 0
        %5026 = vmatpush2.bf16.msra.mxu0 0
        %5027 = vmatprep.subr.bf16.mxu0 0
        %5028 = vmatpush2.bf16.msra.mxu0 0
        %5029 = vmatprep.subr.bf16.mxu0 0
        %5030 = vmatpush2.bf16.msra.mxu0 0
        %5031 = vmatprep.subr.bf16.mxu0 0
        %5032 = vmatpush2.bf16.msra.mxu0 0
        %5033 = vmatprep.subr.bf16.mxu0 0
        %5034 = vmatpush2.bf16.msra.mxu0 0
        %5035 = vmatprep.subr.bf16.mxu0 0
        %5036 = vmatpush2.bf16.msra.mxu0 0
        %5037 = vmatprep.subr.bf16.mxu0 0
        %5038 = vmatpush2.bf16.msra.mxu0 0
        %5039 = vmatprep.mubr.bf16.mxu0 0
        %5040 = vmatmul.mubr.bf16.gmra.mxu0 %v4861
        %v5041 = vpop.f32.mrf.mxu0
        %v5042 = vadd.f32 0.0, %v5041
        %v5043 = vpop.f32.mrf.mxu0
        %v5044 = vpop.f32.mrf.mxu0
        %v5045 = vpop.f32.mrf.mxu0
        %5046 = vdwg.mxu0
        %v5047 = vadd.f32 %v4810, %v4919
        %v5048 = vadd.f32 %v4811, %v4921
        %v5049 = vadd.f32 %v4812, %v4960
        %v5050 = vadd.f32 %v4813, %v4962
        %v5051 = vadd.f32 %v4814, %v5001
        %v5052 = vadd.f32 %v4815, %v5003
        %v5053 = vadd.f32 %v4816, %v5042
        %v5054 = vld [vmem:[%s4] sm:$0xff]
        %5056 = vset.pattern.permute.xlu0 0
        %5057 = vperm.xlu0 %5056, %v5054
        %v5058 = vpop.permute.xlu0 %5057
        %v5060 = vadd.f32 %v5047, %v5058
        %v5061 = vadd.f32 %v5048, %v5058
        %v5062 = vadd.f32 %v5049, %v5058
        %v5063 = vadd.f32 %v5050, %v5058
        %v5064 = vadd.f32 %v5051, %v5058
        %v5065 = vadd.f32 %v5052, %v5058
        %v5066 = vadd.f32 %v5053, %v5058
        %v5067 = vmax.f32 %v5060, 0.0
        %v5068 = vmax.f32 %v5061, 0.0
        %v5069 = vmax.f32 %v5062, 0.0
        %v5070 = vmax.f32 %v5063, 0.0
        %v5071 = vmax.f32 %v5064, 0.0
        %v5072 = vmax.f32 %v5065, 0.0
        %v5073 = vmax.f32 %v5066, 0.0
        %5081 = vrot.lane.b32.xlu0 %v5067, 32
        %v5082 = vpop.permute.xlu0 %5081
        %5083 = vrot.lane.b32.xlu0 %v5068, 32
        %v5084 = vpop.permute.xlu0 %5083
        %5085 = vrot.lane.b32.xlu0 %v5069, 32
        %v5086 = vpop.permute.xlu0 %5085
        %5087 = vrot.lane.b32.xlu0 %v5070, 32
        %v5088 = vpop.permute.xlu0 %5087
        %5089 = vrot.lane.b32.xlu0 %v5071, 32
        %v5090 = vpop.permute.xlu0 %5089
        %5091 = vrot.lane.b32.xlu0 %v5072, 32
        %v5092 = vpop.permute.xlu0 %5091
        %5093 = vrot.lane.b32.xlu0 %v5073, 32
        %v5094 = vpop.permute.xlu0 %5093
        %v5095 = vsel %vm518, %v5082, %v5084
        %v5096 = vsel %vm518, %v5084, %v5086
        %v5097 = vsel %vm518, %v5086, %v5088
        %v5098 = vsel %vm518, %v5088, %v5090
        %v5099 = vsel %vm518, %v5090, %v5092
        %v5100 = vsel %vm518, %v5092, %v5094
        %v5103 = vsel %vm518, 0.0, %v5082
        %v5104 = vsel %vm533, %v5100, 0.0
        %5107 = vrot.lane.b32.xlu0 %v5103, 95
        %v5108 = vpop.permute.xlu0 %5107
        %5109 = vrot.lane.b32.xlu0 %v5095, 95
        %v5110 = vpop.permute.xlu0 %5109
        %5111 = vrot.lane.b32.xlu0 %v5096, 95
        %v5112 = vpop.permute.xlu0 %5111
        %5113 = vrot.lane.b32.xlu0 %v5097, 95
        %v5114 = vpop.permute.xlu0 %5113
        %5115 = vrot.lane.b32.xlu0 %v5098, 95
        %v5116 = vpop.permute.xlu0 %5115
        %5117 = vrot.lane.b32.xlu0 %v5099, 95
        %v5118 = vpop.permute.xlu0 %5117
        %5119 = vrot.lane.b32.xlu0 %v5104, 95
        %v5120 = vpop.permute.xlu0 %5119
        %vm5121 = vcmask 777216
        %v5122 = vsel %vm5121, %v5108, %v5110
        %v5123 = vsel %vm5121, %v5110, %v5112
        %v5124 = vsel %vm5121, %v5112, %v5114
        %v5125 = vsel %vm5121, %v5114, %v5116
        %v5126 = vsel %vm5121, %v5116, %v5118
        %v5127 = vsel %vm5121, %v5118, %v5120
        %v5135 = vmax.f32 %v5067, %v5122
        %v5136 = vmax.f32 %v5068, %v5123
        %v5137 = vmax.f32 %v5069, %v5124
        %v5138 = vmax.f32 %v5070, %v5125
        %v5139 = vmax.f32 %v5071, %v5126
        %v5140 = vmax.f32 %v5072, %v5127
        %v5141 = vmax.f32 %v5073, %v5120
        %5142 = vrot.lane.b32.xlu0 %v5103, 68
        %v5143 = vpop.permute.xlu0 %5142
        %5144 = vrot.lane.b32.xlu0 %v5095, 68
        %v5145 = vpop.permute.xlu0 %5144
        %5146 = vrot.lane.b32.xlu0 %v5096, 68
        %v5147 = vpop.permute.xlu0 %5146
        %5148 = vrot.lane.b32.xlu0 %v5097, 68
        %v5149 = vpop.permute.xlu0 %5148
        %5150 = vrot.lane.b32.xlu0 %v5098, 68
        %v5151 = vpop.permute.xlu0 %5150
        %5152 = vrot.lane.b32.xlu0 %v5099, 68
        %v5153 = vpop.permute.xlu0 %5152
        %5154 = vrot.lane.b32.xlu0 %v5104, 68
        %v5155 = vpop.permute.xlu0 %5154
        %vm5156 = vcmask 556032
        %v5157 = vsel %vm5156, %v5143, %v5145
        %v5158 = vsel %vm5156, %v5145, %v5147
        %v5159 = vsel %vm5156, %v5147, %v5149
        %v5160 = vsel %vm5156, %v5149, %v5151
        %v5161 = vsel %vm5156, %v5151, %v5153
        %v5162 = vsel %vm5156, %v5153, %v5155
        %v5170 = vmax.f32 %v5135, %v5157
        %v5171 = vmax.f32 %v5136, %v5158
        %v5172 = vmax.f32 %v5137, %v5159
        %v5173 = vmax.f32 %v5138, %v5160
        %v5174 = vmax.f32 %v5139, %v5161
        %v5175 = vmax.f32 %v5140, %v5162
        %v5176 = vmax.f32 %v5141, %v5155
        %5177 = vrot.lane.b32.xlu0 %v5103, 67
        %v5178 = vpop.permute.xlu0 %5177
        %5179 = vrot.lane.b32.xlu0 %v5095, 67
        %v5180 = vpop.permute.xlu0 %5179
        %5181 = vrot.lane.b32.xlu0 %v5096, 67
        %v5182 = vpop.permute.xlu0 %5181
        %5183 = vrot.lane.b32.xlu0 %v5097, 67
        %v5184 = vpop.permute.xlu0 %5183
        %5185 = vrot.lane.b32.xlu0 %v5098, 67
        %v5186 = vpop.permute.xlu0 %5185
        %5187 = vrot.lane.b32.xlu0 %v5099, 67
        %v5188 = vpop.permute.xlu0 %5187
        %5189 = vrot.lane.b32.xlu0 %v5104, 67
        %v5190 = vpop.permute.xlu0 %5189
        %vm5191 = vcmask 547840
        %v5192 = vsel %vm5191, %v5178, %v5180
        %v5193 = vsel %vm5191, %v5180, %v5182
        %v5194 = vsel %vm5191, %v5182, %v5184
        %v5195 = vsel %vm5191, %v5184, %v5186
        %v5196 = vsel %vm5191, %v5186, %v5188
        %v5197 = vsel %vm5191, %v5188, %v5190
        %v5205 = vmax.f32 %v5170, %v5192
        %v5206 = vmax.f32 %v5171, %v5193
        %v5207 = vmax.f32 %v5172, %v5194
        %v5208 = vmax.f32 %v5173, %v5195
        %v5209 = vmax.f32 %v5174, %v5196
        %v5210 = vmax.f32 %v5175, %v5197
        %v5211 = vmax.f32 %v5176, %v5190
        %v5212 = vpack.c.bf16 %v5205, %v5205
        %v5213 = vpack.c.bf16 %v5206, %v5206
        %v5214 = vpack.c.bf16 %v5207, %v5207
        %v5215 = vpack.c.bf16 %v5208, %v5208
        %v5216 = vpack.c.bf16 %v5209, %v5209
        %v5217 = vpack.c.bf16 %v5210, %v5210
        %v5218 = vpack.c.bf16 %v5211, %v5211
        %v5219 = vld [vmem:[%s13] sm:$0xff]
        %v5220 = vld [vmem:[%s13 + $0x8] sm:$0xff]
        %v5221 = vld [vmem:[%s13 + $0x10] sm:$0xff]
        %v5222 = vld [vmem:[%s13 + $0x18] sm:$0xff]
        %v5223 = vld [vmem:[%s13 + $0x20] sm:$0xff]
        %v5224 = vld [vmem:[%s13 + $0x28] sm:$0xff]
        %v5225 = vld [vmem:[%s13 + $0x30] sm:$0xff]
        %v5226 = vld [vmem:[%s13 + $0x38] sm:$0xff]
        %v5227 = vld [vmem:[%s13 + $0x40] sm:$0xff]
        %v5228 = vld [vmem:[%s13 + $0x48] sm:$0xff]
        %v5229 = vld [vmem:[%s13 + $0x50] sm:$0xff]
        %v5230 = vld [vmem:[%s13 + $0x58] sm:$0xff]
        %v5231 = vld [vmem:[%s13 + $0x60] sm:$0xff]
        %v5232 = vld [vmem:[%s13 + $0x68] sm:$0xff]
        %v5233 = vld [vmem:[%s13 + $0x70] sm:$0xff]
        %v5234 = vld [vmem:[%s13 + $0x78] sm:$0xff]
        %v5235 = vld [vmem:[%s13 + $0x80] sm:$0xff]
        %v5236 = vld [vmem:[%s13 + $0x88] sm:$0xff]
        %v5237 = vld [vmem:[%s13 + $0x90] sm:$0xff]
        %v5238 = vld [vmem:[%s13 + $0x98] sm:$0xff]
        %v5239 = vld [vmem:[%s13 + $0xa0] sm:$0xff]
        %v5240 = vld [vmem:[%s13 + $0xa8] sm:$0xff]
        %v5241 = vld [vmem:[%s13 + $0xb0] sm:$0xff]
        %v5242 = vld [vmem:[%s13 + $0xb8] sm:$0xff]
        %v5243 = vld [vmem:[%s13 + $0xc0] sm:$0xff]
        %v5244 = vld [vmem:[%s13 + $0xc8] sm:$0xff]
        %v5245 = vld [vmem:[%s13 + $0xd0] sm:$0xff]
        %v5246 = vld [vmem:[%s13 + $0xd8] sm:$0xff]
        %v5247 = vld [vmem:[%s13 + $0xe0] sm:$0xff]
        %v5248 = vld [vmem:[%s13 + $0xe8] sm:$0xff]
        %v5249 = vld [vmem:[%s13 + $0xf0] sm:$0xff]
        %v5250 = vld [vmem:[%s13 + $0xf8] sm:$0xff]
        %v5251 = vld [vmem:[%s13 + $0x100] sm:$0xff]
        %v5252 = vld [vmem:[%s13 + $0x108] sm:$0xff]
        %v5253 = vld [vmem:[%s13 + $0x110] sm:$0xff]
        %v5254 = vld [vmem:[%s13 + $0x118] sm:$0xff]
        %v5255 = vld [vmem:[%s13 + $0x120] sm:$0xff]
        %v5256 = vld [vmem:[%s13 + $0x128] sm:$0xff]
        %v5257 = vld [vmem:[%s13 + $0x130] sm:$0xff]
        %v5258 = vld [vmem:[%s13 + $0x138] sm:$0xff]
        %v5259 = vld [vmem:[%s13 + $0x140] sm:$0xff]
        %v5260 = vld [vmem:[%s13 + $0x148] sm:$0xff]
        %v5261 = vld [vmem:[%s13 + $0x150] sm:$0xff]
        %v5262 = vld [vmem:[%s13 + $0x158] sm:$0xff]
        %v5263 = vld [vmem:[%s13 + $0x160] sm:$0xff]
        %v5264 = vld [vmem:[%s13 + $0x168] sm:$0xff]
        %v5265 = vld [vmem:[%s13 + $0x170] sm:$0xff]
        %v5266 = vld [vmem:[%s13 + $0x178] sm:$0xff]
        %v5267 = vld [vmem:[%s13 + $0x180] sm:$0xff]
        %v5268 = vld [vmem:[%s13 + $0x188] sm:$0xff]
        %v5269 = vld [vmem:[%s13 + $0x190] sm:$0xff]
        %v5270 = vld [vmem:[%s13 + $0x198] sm:$0xff]
        %v5271 = vld [vmem:[%s13 + $0x1a0] sm:$0xff]
        %v5272 = vld [vmem:[%s13 + $0x1a8] sm:$0xff]
        %v5273 = vld [vmem:[%s13 + $0x1b0] sm:$0xff]
        %v5274 = vld [vmem:[%s13 + $0x1b8] sm:$0xff]
        %v5275 = vld [vmem:[%s13 + $0x1c0] sm:$0xff]
        %v5276 = vld [vmem:[%s13 + $0x1c8] sm:$0xff]
        %v5277 = vld [vmem:[%s13 + $0x1d0] sm:$0xff]
        %v5278 = vld [vmem:[%s13 + $0x1d8] sm:$0xff]
        %v5279 = vld [vmem:[%s13 + $0x1e0] sm:$0xff]
        %v5280 = vld [vmem:[%s13 + $0x1e8] sm:$0xff]
        %v5281 = vld [vmem:[%s13 + $0x1f0] sm:$0xff]
        %v5282 = vld [vmem:[%s13 + $0x1f8] sm:$0xff]
        %v5283 = vld [vmem:[%s13 + $0x200] sm:$0xff]
        %v5284 = vld [vmem:[%s13 + $0x208] sm:$0xff]
        %v5285 = vld [vmem:[%s13 + $0x210] sm:$0xff]
        %v5286 = vld [vmem:[%s13 + $0x218] sm:$0xff]
        %v5287 = vld [vmem:[%s13 + $0x220] sm:$0xff]
        %v5288 = vld [vmem:[%s13 + $0x228] sm:$0xff]
        %v5289 = vld [vmem:[%s13 + $0x230] sm:$0xff]
        %v5290 = vld [vmem:[%s13 + $0x238] sm:$0xff]
        %v5291 = vld [vmem:[%s13 + $0x240] sm:$0xff]
        %v5292 = vld [vmem:[%s13 + $0x248] sm:$0xff]
        %v5293 = vld [vmem:[%s13 + $0x250] sm:$0xff]
        %v5294 = vld [vmem:[%s13 + $0x258] sm:$0xff]
        %v5295 = vld [vmem:[%s13 + $0x260] sm:$0xff]
        %v5296 = vld [vmem:[%s13 + $0x268] sm:$0xff]
        %v5297 = vld [vmem:[%s13 + $0x270] sm:$0xff]
        %v5298 = vld [vmem:[%s13 + $0x278] sm:$0xff]
        %v5299 = vld [vmem:[%s13 + $0x280] sm:$0xff]
        %v5300 = vld [vmem:[%s13 + $0x288] sm:$0xff]
        %v5301 = vld [vmem:[%s13 + $0x290] sm:$0xff]
        %v5302 = vld [vmem:[%s13 + $0x298] sm:$0xff]
        %v5303 = vld [vmem:[%s13 + $0x2a0] sm:$0xff]
        %v5304 = vld [vmem:[%s13 + $0x2a8] sm:$0xff]
        %v5305 = vld [vmem:[%s13 + $0x2b0] sm:$0xff]
        %v5306 = vld [vmem:[%s13 + $0x2b8] sm:$0xff]
        %v5307 = vld [vmem:[%s13 + $0x2c0] sm:$0xff]
        %v5308 = vld [vmem:[%s13 + $0x2c8] sm:$0xff]
        %v5309 = vld [vmem:[%s13 + $0x2d0] sm:$0xff]
        %v5310 = vld [vmem:[%s13 + $0x2d8] sm:$0xff]
        %v5311 = vld [vmem:[%s13 + $0x2e0] sm:$0xff]
        %v5312 = vld [vmem:[%s13 + $0x2e8] sm:$0xff]
        %v5313 = vld [vmem:[%s13 + $0x2f0] sm:$0xff]
        %v5314 = vld [vmem:[%s13 + $0x2f8] sm:$0xff]
        %v5315 = vld [vmem:[%s13 + $0x300] sm:$0xff]
        %v5316 = vld [vmem:[%s13 + $0x308] sm:$0xff]
        %v5415 = vunpack.c.l.b16 %v5219
        %v5416 = vunpack.c.h.b16 %v5219
        %v5417 = vunpack.c.l.b16 %v5220
        %v5418 = vunpack.c.h.b16 %v5220
        %v5419 = vunpack.c.l.b16 %v5221
        %v5420 = vunpack.c.h.b16 %v5221
        %v5421 = vunpack.c.l.b16 %v5222
        %v5422 = vunpack.c.h.b16 %v5222
        %v5423 = vunpack.c.l.b16 %v5223
        %v5424 = vunpack.c.h.b16 %v5223
        %v5425 = vunpack.c.l.b16 %v5224
        %v5426 = vunpack.c.h.b16 %v5224
        %v5427 = vunpack.c.l.b16 %v5225
        %v5428 = vunpack.c.h.b16 %v5225
        %v5429 = vunpack.c.l.b16 %v5226
        %v5430 = vunpack.c.h.b16 %v5226
        %v5431 = vunpack.c.l.b16 %v5227
        %v5432 = vunpack.c.h.b16 %v5227
        %v5433 = vunpack.c.l.b16 %v5228
        %v5434 = vunpack.c.h.b16 %v5228
        %v5435 = vunpack.c.l.b16 %v5229
        %v5436 = vunpack.c.h.b16 %v5229
        %v5437 = vunpack.c.l.b16 %v5230
        %v5438 = vunpack.c.h.b16 %v5230
        %v5439 = vunpack.c.l.b16 %v5231
        %v5440 = vunpack.c.h.b16 %v5231
        %v5441 = vunpack.c.l.b16 %v5232
        %v5442 = vunpack.c.h.b16 %v5232
        %v5443 = vunpack.c.l.b16 %v5233
        %v5444 = vunpack.c.h.b16 %v5233
        %v5445 = vunpack.c.l.b16 %v5234
        %v5446 = vunpack.c.h.b16 %v5234
        %v5447 = vunpack.c.l.b16 %v5235
        %v5448 = vunpack.c.h.b16 %v5235
        %v5449 = vunpack.c.l.b16 %v5236
        %v5450 = vunpack.c.h.b16 %v5236
        %v5451 = vunpack.c.l.b16 %v5237
        %v5452 = vunpack.c.h.b16 %v5237
        %v5453 = vunpack.c.l.b16 %v5238
        %v5454 = vunpack.c.h.b16 %v5238
        %v5455 = vunpack.c.l.b16 %v5239
        %v5456 = vunpack.c.h.b16 %v5239
        %v5457 = vunpack.c.l.b16 %v5240
        %v5458 = vunpack.c.h.b16 %v5240
        %v5459 = vunpack.c.l.b16 %v5241
        %v5460 = vunpack.c.h.b16 %v5241
        %v5461 = vunpack.c.l.b16 %v5242
        %v5462 = vunpack.c.h.b16 %v5242
        %v5463 = vunpack.c.l.b16 %v5243
        %v5464 = vunpack.c.h.b16 %v5243
        %v5465 = vunpack.c.l.b16 %v5244
        %v5466 = vunpack.c.h.b16 %v5244
        %v5467 = vunpack.c.l.b16 %v5245
        %v5468 = vunpack.c.h.b16 %v5245
        %v5469 = vunpack.c.l.b16 %v5246
        %v5470 = vunpack.c.h.b16 %v5246
        %v5471 = vunpack.c.l.b16 %v5247
        %v5472 = vunpack.c.h.b16 %v5247
        %v5473 = vunpack.c.l.b16 %v5248
        %v5474 = vunpack.c.h.b16 %v5248
        %v5475 = vunpack.c.l.b16 %v5249
        %v5476 = vunpack.c.h.b16 %v5249
        %v5477 = vunpack.c.l.b16 %v5250
        %v5478 = vunpack.c.h.b16 %v5250
        %v5479 = vunpack.c.l.b16 %v5251
        %v5480 = vunpack.c.h.b16 %v5251
        %v5481 = vunpack.c.l.b16 %v5252
        %v5482 = vunpack.c.h.b16 %v5252
        %v5483 = vunpack.c.l.b16 %v5253
        %v5484 = vunpack.c.h.b16 %v5253
        %v5485 = vunpack.c.l.b16 %v5254
        %v5486 = vunpack.c.h.b16 %v5254
        %v5487 = vunpack.c.l.b16 %v5255
        %v5488 = vunpack.c.h.b16 %v5255
        %v5489 = vunpack.c.l.b16 %v5256
        %v5490 = vunpack.c.h.b16 %v5256
        %v5491 = vunpack.c.l.b16 %v5257
        %v5492 = vunpack.c.h.b16 %v5257
        %v5493 = vunpack.c.l.b16 %v5258
        %v5494 = vunpack.c.h.b16 %v5258
        %v5495 = vunpack.c.l.b16 %v5259
        %v5496 = vunpack.c.h.b16 %v5259
        %v5497 = vunpack.c.l.b16 %v5260
        %v5498 = vunpack.c.h.b16 %v5260
        %v5499 = vunpack.c.l.b16 %v5261
        %v5500 = vunpack.c.h.b16 %v5261
        %v5501 = vunpack.c.l.b16 %v5262
        %v5502 = vunpack.c.h.b16 %v5262
        %v5503 = vunpack.c.l.b16 %v5263
        %v5504 = vunpack.c.h.b16 %v5263
        %v5505 = vunpack.c.l.b16 %v5264
        %v5506 = vunpack.c.h.b16 %v5264
        %v5507 = vunpack.c.l.b16 %v5265
        %v5508 = vunpack.c.h.b16 %v5265
        %v5509 = vunpack.c.l.b16 %v5266
        %v5510 = vunpack.c.h.b16 %v5266
        %v5511 = vunpack.c.l.b16 %v5267
        %v5512 = vunpack.c.h.b16 %v5267
        %v5513 = vunpack.c.l.b16 %v5268
        %v5514 = vunpack.c.h.b16 %v5268
        %v5515 = vunpack.c.l.b16 %v5269
        %v5516 = vunpack.c.h.b16 %v5269
        %v5517 = vunpack.c.l.b16 %v5270
        %v5518 = vunpack.c.h.b16 %v5270
        %v5519 = vunpack.c.l.b16 %v5271
        %v5520 = vunpack.c.h.b16 %v5271
        %v5521 = vunpack.c.l.b16 %v5272
        %v5522 = vunpack.c.h.b16 %v5272
        %v5523 = vunpack.c.l.b16 %v5273
        %v5524 = vunpack.c.h.b16 %v5273
        %v5525 = vunpack.c.l.b16 %v5274
        %v5526 = vunpack.c.h.b16 %v5274
        %v5527 = vunpack.c.l.b16 %v5275
        %v5528 = vunpack.c.h.b16 %v5275
        %v5529 = vunpack.c.l.b16 %v5276
        %v5530 = vunpack.c.h.b16 %v5276
        %v5531 = vunpack.c.l.b16 %v5277
        %v5532 = vunpack.c.h.b16 %v5277
        %v5533 = vunpack.c.l.b16 %v5278
        %v5534 = vunpack.c.h.b16 %v5278
        %v5535 = vunpack.c.l.b16 %v5279
        %v5536 = vunpack.c.h.b16 %v5279
        %v5537 = vunpack.c.l.b16 %v5280
        %v5538 = vunpack.c.h.b16 %v5280
        %v5539 = vunpack.c.l.b16 %v5281
        %v5540 = vunpack.c.h.b16 %v5281
        %v5541 = vunpack.c.l.b16 %v5282
        %v5542 = vunpack.c.h.b16 %v5282
        %v5543 = vunpack.c.l.b16 %v5283
        %v5544 = vunpack.c.h.b16 %v5283
        %v5545 = vunpack.c.l.b16 %v5284
        %v5546 = vunpack.c.h.b16 %v5284
        %v5547 = vunpack.c.l.b16 %v5285
        %v5548 = vunpack.c.h.b16 %v5285
        %v5549 = vunpack.c.l.b16 %v5286
        %v5550 = vunpack.c.h.b16 %v5286
        %v5551 = vunpack.c.l.b16 %v5287
        %v5552 = vunpack.c.h.b16 %v5287
        %v5553 = vunpack.c.l.b16 %v5288
        %v5554 = vunpack.c.h.b16 %v5288
        %v5555 = vunpack.c.l.b16 %v5289
        %v5556 = vunpack.c.h.b16 %v5289
        %v5557 = vunpack.c.l.b16 %v5290
        %v5558 = vunpack.c.h.b16 %v5290
        %v5559 = vunpack.c.l.b16 %v5291
        %v5560 = vunpack.c.h.b16 %v5291
        %v5561 = vunpack.c.l.b16 %v5292
        %v5562 = vunpack.c.h.b16 %v5292
        %v5563 = vunpack.c.l.b16 %v5293
        %v5564 = vunpack.c.h.b16 %v5293
        %v5565 = vunpack.c.l.b16 %v5294
        %v5566 = vunpack.c.h.b16 %v5294
        %v5567 = vunpack.c.l.b16 %v5295
        %v5568 = vunpack.c.h.b16 %v5295
        %v5569 = vunpack.c.l.b16 %v5296
        %v5570 = vunpack.c.h.b16 %v5296
        %v5571 = vunpack.c.l.b16 %v5297
        %v5572 = vunpack.c.h.b16 %v5297
        %v5573 = vunpack.c.l.b16 %v5298
        %v5574 = vunpack.c.h.b16 %v5298
        %v5575 = vunpack.c.l.b16 %v5299
        %v5576 = vunpack.c.h.b16 %v5299
        %v5577 = vunpack.c.l.b16 %v5300
        %v5578 = vunpack.c.h.b16 %v5300
        %v5579 = vunpack.c.l.b16 %v5301
        %v5580 = vunpack.c.h.b16 %v5301
        %v5581 = vunpack.c.l.b16 %v5302
        %v5582 = vunpack.c.h.b16 %v5302
        %v5583 = vunpack.c.l.b16 %v5303
        %v5584 = vunpack.c.h.b16 %v5303
        %v5585 = vunpack.c.l.b16 %v5304
        %v5586 = vunpack.c.h.b16 %v5304
        %v5587 = vunpack.c.l.b16 %v5305
        %v5588 = vunpack.c.h.b16 %v5305
        %v5589 = vunpack.c.l.b16 %v5306
        %v5590 = vunpack.c.h.b16 %v5306
        %v5591 = vunpack.c.l.b16 %v5307
        %v5592 = vunpack.c.h.b16 %v5307
        %v5593 = vunpack.c.l.b16 %v5308
        %v5594 = vunpack.c.h.b16 %v5308
        %v5595 = vunpack.c.l.b16 %v5309
        %v5596 = vunpack.c.h.b16 %v5309
        %v5597 = vunpack.c.l.b16 %v5310
        %v5598 = vunpack.c.h.b16 %v5310
        %v5599 = vunpack.c.l.b16 %v5311
        %v5600 = vunpack.c.h.b16 %v5311
        %v5601 = vunpack.c.l.b16 %v5312
        %v5602 = vunpack.c.h.b16 %v5312
        %v5603 = vunpack.c.l.b16 %v5313
        %v5604 = vunpack.c.h.b16 %v5313
        %v5605 = vunpack.c.l.b16 %v5314
        %v5606 = vunpack.c.h.b16 %v5314
        %v5607 = vunpack.c.l.b16 %v5315
        %v5608 = vunpack.c.h.b16 %v5315
        %v5609 = vunpack.c.l.b16 %v5316
        %v5610 = vunpack.c.h.b16 %v5316
        %v5611 = vpack.c.b16 %v5417, %v5415
        %v5612 = vpack.c.b16 %v5418, %v5416
        %v5613 = vpack.c.b16 %v5421, %v5419
        %v5614 = vpack.c.b16 %v5422, %v5420
        %v5615 = vpack.c.b16 %v5425, %v5423
        %v5616 = vpack.c.b16 %v5426, %v5424
        %v5617 = vpack.c.b16 %v5429, %v5427
        %v5618 = vpack.c.b16 %v5430, %v5428
        %v5619 = vpack.c.b16 %v5433, %v5431
        %v5620 = vpack.c.b16 %v5434, %v5432
        %v5621 = vpack.c.b16 %v5437, %v5435
        %v5622 = vpack.c.b16 %v5438, %v5436
        %v5623 = vpack.c.b16 %v5441, %v5439
        %v5624 = vpack.c.b16 %v5442, %v5440
        %v5625 = vpack.c.b16 %v5445, %v5443
        %v5626 = vpack.c.b16 %v5446, %v5444
        %v5627 = vpack.c.b16 %v5449, %v5447
        %v5628 = vpack.c.b16 %v5450, %v5448
        %v5629 = vpack.c.b16 %v5453, %v5451
        %v5630 = vpack.c.b16 %v5454, %v5452
        %v5631 = vpack.c.b16 %v5457, %v5455
        %v5632 = vpack.c.b16 %v5458, %v5456
        %v5633 = vpack.c.b16 %v5461, %v5459
        %v5634 = vpack.c.b16 %v5462, %v5460
        %v5635 = vpack.c.b16 %v5465, %v5463
        %v5636 = vpack.c.b16 %v5466, %v5464
        %v5637 = vpack.c.b16 %v5469, %v5467
        %v5638 = vpack.c.b16 %v5470, %v5468
        %v5639 = vpack.c.b16 %v5473, %v5471
        %v5640 = vpack.c.b16 %v5474, %v5472
        %v5641 = vpack.c.b16 %v5477, %v5475
        %v5642 = vpack.c.b16 %v5478, %v5476
        %v5643 = vpack.c.b16 %v5481, %v5479
        %v5644 = vpack.c.b16 %v5482, %v5480
        %v5645 = vpack.c.b16 %v5485, %v5483
        %v5646 = vpack.c.b16 %v5486, %v5484
        %v5647 = vpack.c.b16 %v5489, %v5487
        %v5648 = vpack.c.b16 %v5490, %v5488
        %v5649 = vpack.c.b16 %v5493, %v5491
        %v5650 = vpack.c.b16 %v5494, %v5492
        %v5651 = vpack.c.b16 %v5497, %v5495
        %v5652 = vpack.c.b16 %v5498, %v5496
        %v5653 = vpack.c.b16 %v5501, %v5499
        %v5654 = vpack.c.b16 %v5502, %v5500
        %v5655 = vpack.c.b16 %v5505, %v5503
        %v5656 = vpack.c.b16 %v5506, %v5504
        %v5657 = vpack.c.b16 %v5509, %v5507
        %v5658 = vpack.c.b16 %v5510, %v5508
        %v5659 = vpack.c.b16 %v5513, %v5511
        %v5660 = vpack.c.b16 %v5514, %v5512
        %v5661 = vpack.c.b16 %v5517, %v5515
        %v5662 = vpack.c.b16 %v5518, %v5516
        %v5663 = vpack.c.b16 %v5521, %v5519
        %v5664 = vpack.c.b16 %v5522, %v5520
        %v5665 = vpack.c.b16 %v5525, %v5523
        %v5666 = vpack.c.b16 %v5526, %v5524
        %v5667 = vpack.c.b16 %v5529, %v5527
        %v5668 = vpack.c.b16 %v5530, %v5528
        %v5669 = vpack.c.b16 %v5533, %v5531
        %v5670 = vpack.c.b16 %v5534, %v5532
        %v5671 = vpack.c.b16 %v5537, %v5535
        %v5672 = vpack.c.b16 %v5538, %v5536
        %v5673 = vpack.c.b16 %v5541, %v5539
        %v5674 = vpack.c.b16 %v5542, %v5540
        %v5675 = vpack.c.b16 %v5545, %v5543
        %v5676 = vpack.c.b16 %v5546, %v5544
        %v5677 = vpack.c.b16 %v5549, %v5547
        %v5678 = vpack.c.b16 %v5550, %v5548
        %v5679 = vpack.c.b16 %v5553, %v5551
        %v5680 = vpack.c.b16 %v5554, %v5552
        %v5681 = vpack.c.b16 %v5557, %v5555
        %v5682 = vpack.c.b16 %v5558, %v5556
        %v5683 = vpack.c.b16 %v5561, %v5559
        %v5684 = vpack.c.b16 %v5562, %v5560
        %v5685 = vpack.c.b16 %v5565, %v5563
        %v5686 = vpack.c.b16 %v5566, %v5564
        %v5687 = vpack.c.b16 %v5569, %v5567
        %v5688 = vpack.c.b16 %v5570, %v5568
        %v5689 = vpack.c.b16 %v5573, %v5571
        %v5690 = vpack.c.b16 %v5574, %v5572
        %v5691 = vpack.c.b16 %v5577, %v5575
        %v5692 = vpack.c.b16 %v5578, %v5576
        %v5693 = vpack.c.b16 %v5581, %v5579
        %v5694 = vpack.c.b16 %v5582, %v5580
        %v5695 = vpack.c.b16 %v5585, %v5583
        %v5696 = vpack.c.b16 %v5586, %v5584
        %v5697 = vpack.c.b16 %v5589, %v5587
        %v5698 = vpack.c.b16 %v5590, %v5588
        %v5699 = vpack.c.b16 %v5593, %v5591
        %v5700 = vpack.c.b16 %v5594, %v5592
        %v5701 = vpack.c.b16 %v5597, %v5595
        %v5702 = vpack.c.b16 %v5598, %v5596
        %v5703 = vpack.c.b16 %v5601, %v5599
        %v5704 = vpack.c.b16 %v5602, %v5600
        %v5705 = vpack.c.b16 %v5605, %v5603
        %v5706 = vpack.c.b16 %v5606, %v5604
        %v5707 = vpack.c.b16 %v5609, %v5607
        %v5708 = vpack.c.b16 %v5610, %v5608
        %vm5807 = vcmask 130048
        %v5809 = vsel %vm5807, %v5218, 0
        %5811 = vmatprep.subr.bf16.mxu0 %v5626
        %5812 = vmatpush1.bf16.msra.mxu0 %v5625
        %5813 = vmatprep.subr.bf16.mxu0 %v5624
        %5814 = vmatpush1.bf16.msra.mxu0 %v5623
        %5815 = vmatprep.subr.bf16.mxu0 %v5622
        %5816 = vmatpush1.bf16.msra.mxu0 %v5621
        %5817 = vmatprep.subr.bf16.mxu0 %v5620
        %5818 = vmatpush1.bf16.msra.mxu0 %v5619
        %5819 = vmatprep.subr.bf16.mxu0 %v5618
        %5820 = vmatpush1.bf16.msra.mxu0 %v5617
        %5821 = vmatprep.subr.bf16.mxu0 %v5616
        %5822 = vmatpush1.bf16.msra.mxu0 %v5615
        %5823 = vmatprep.subr.bf16.mxu0 %v5614
        %5824 = vmatpush1.bf16.msra.mxu0 %v5613
        %5825 = vmatprep.subr.bf16.mxu0 %v5612
        %5826 = vmatpush1.bf16.msra.mxu0 %v5611
        %5827 = vmatprep.subr.bf16.mxu0 %v5642
        %5828 = vmatpush2.bf16.msra.mxu0 %v5641
        %5829 = vmatprep.subr.bf16.mxu0 %v5640
        %5830 = vmatpush2.bf16.msra.mxu0 %v5639
        %5831 = vmatprep.subr.bf16.mxu0 %v5638
        %5832 = vmatpush2.bf16.msra.mxu0 %v5637
        %5833 = vmatprep.subr.bf16.mxu0 %v5636
        %5834 = vmatpush2.bf16.msra.mxu0 %v5635
        %5835 = vmatprep.subr.bf16.mxu0 %v5634
        %5836 = vmatpush2.bf16.msra.mxu0 %v5633
        %5837 = vmatprep.subr.bf16.mxu0 %v5632
        %5838 = vmatpush2.bf16.msra.mxu0 %v5631
        %5839 = vmatprep.subr.bf16.mxu0 %v5630
        %5840 = vmatpush2.bf16.msra.mxu0 %v5629
        %5841 = vmatprep.subr.bf16.mxu0 %v5628
        %5842 = vmatpush2.bf16.msra.mxu0 %v5627
        %5843 = vmatprep.mubr.bf16.mxu0 %v5213
        %5844 = vmatmul.mubr.bf16.gmra.mxu0 %v5212
        %v5845 = vpop.f32.mrf.mxu0
        %v5846 = vadd.f32 0.0, %v5845
        %v5847 = vpop.f32.mrf.mxu0
        %v5848 = vadd.f32 0.0, %v5847
        %v5849 = vpop.f32.mrf.mxu0
        %v5850 = vpop.f32.mrf.mxu0
        %5851 = vdwg.mxu0
        %5852 = vmatprep.subr.bf16.mxu0 %v5658
        %5853 = vmatpush1.bf16.msra.mxu0 %v5657
        %5854 = vmatprep.subr.bf16.mxu0 %v5656
        %5855 = vmatpush1.bf16.msra.mxu0 %v5655
        %5856 = vmatprep.subr.bf16.mxu0 %v5654
        %5857 = vmatpush1.bf16.msra.mxu0 %v5653
        %5858 = vmatprep.subr.bf16.mxu0 %v5652
        %5859 = vmatpush1.bf16.msra.mxu0 %v5651
        %5860 = vmatprep.subr.bf16.mxu0 %v5650
        %5861 = vmatpush1.bf16.msra.mxu0 %v5649
        %5862 = vmatprep.subr.bf16.mxu0 %v5648
        %5863 = vmatpush1.bf16.msra.mxu0 %v5647
        %5864 = vmatprep.subr.bf16.mxu0 %v5646
        %5865 = vmatpush1.bf16.msra.mxu0 %v5645
        %5866 = vmatprep.subr.bf16.mxu0 %v5644
        %5867 = vmatpush1.bf16.msra.mxu0 %v5643
        %5868 = vmatprep.subr.bf16.mxu0 %v5674
        %5869 = vmatpush2.bf16.msra.mxu0 %v5673
        %5870 = vmatprep.subr.bf16.mxu0 %v5672
        %5871 = vmatpush2.bf16.msra.mxu0 %v5671
        %5872 = vmatprep.subr.bf16.mxu0 %v5670
        %5873 = vmatpush2.bf16.msra.mxu0 %v5669
        %5874 = vmatprep.subr.bf16.mxu0 %v5668
        %5875 = vmatpush2.bf16.msra.mxu0 %v5667
        %5876 = vmatprep.subr.bf16.mxu0 %v5666
        %5877 = vmatpush2.bf16.msra.mxu0 %v5665
        %5878 = vmatprep.subr.bf16.mxu0 %v5664
        %5879 = vmatpush2.bf16.msra.mxu0 %v5663
        %5880 = vmatprep.subr.bf16.mxu0 %v5662
        %5881 = vmatpush2.bf16.msra.mxu0 %v5661
        %5882 = vmatprep.subr.bf16.mxu0 %v5660
        %5883 = vmatpush2.bf16.msra.mxu0 %v5659
        %5884 = vmatprep.mubr.bf16.mxu0 %v5215
        %5885 = vmatmul.mubr.bf16.gmra.mxu0 %v5214
        %v5886 = vpop.f32.mrf.mxu0
        %v5887 = vadd.f32 %v5846, %v5886
        %v5888 = vpop.f32.mrf.mxu0
        %v5889 = vadd.f32 %v5848, %v5888
        %v5890 = vpop.f32.mrf.mxu0
        %v5891 = vpop.f32.mrf.mxu0
        %5892 = vdwg.mxu0
        %5893 = vmatprep.subr.bf16.mxu0 %v5690
        %5894 = vmatpush1.bf16.msra.mxu0 %v5689
        %5895 = vmatprep.subr.bf16.mxu0 %v5688
        %5896 = vmatpush1.bf16.msra.mxu0 %v5687
        %5897 = vmatprep.subr.bf16.mxu0 %v5686
        %5898 = vmatpush1.bf16.msra.mxu0 %v5685
        %5899 = vmatprep.subr.bf16.mxu0 %v5684
        %5900 = vmatpush1.bf16.msra.mxu0 %v5683
        %5901 = vmatprep.subr.bf16.mxu0 %v5682
        %5902 = vmatpush1.bf16.msra.mxu0 %v5681
        %5903 = vmatprep.subr.bf16.mxu0 %v5680
        %5904 = vmatpush1.bf16.msra.mxu0 %v5679
        %5905 = vmatprep.subr.bf16.mxu0 %v5678
        %5906 = vmatpush1.bf16.msra.mxu0 %v5677
        %5907 = vmatprep.subr.bf16.mxu0 %v5676
        %5908 = vmatpush1.bf16.msra.mxu0 %v5675
        %5909 = vmatprep.subr.bf16.mxu0 %v5706
        %5910 = vmatpush2.bf16.msra.mxu0 %v5705
        %5911 = vmatprep.subr.bf16.mxu0 %v5704
        %5912 = vmatpush2.bf16.msra.mxu0 %v5703
        %5913 = vmatprep.subr.bf16.mxu0 %v5702
        %5914 = vmatpush2.bf16.msra.mxu0 %v5701
        %5915 = vmatprep.subr.bf16.mxu0 %v5700
        %5916 = vmatpush2.bf16.msra.mxu0 %v5699
        %5917 = vmatprep.subr.bf16.mxu0 %v5698
        %5918 = vmatpush2.bf16.msra.mxu0 %v5697
        %5919 = vmatprep.subr.bf16.mxu0 %v5696
        %5920 = vmatpush2.bf16.msra.mxu0 %v5695
        %5921 = vmatprep.subr.bf16.mxu0 %v5694
        %5922 = vmatpush2.bf16.msra.mxu0 %v5693
        %5923 = vmatprep.subr.bf16.mxu0 %v5692
        %5924 = vmatpush2.bf16.msra.mxu0 %v5691
        %5925 = vmatprep.mubr.bf16.mxu0 %v5217
        %5926 = vmatmul.mubr.bf16.gmra.mxu0 %v5216
        %v5927 = vpop.f32.mrf.mxu0
        %v5928 = vadd.f32 %v5887, %v5927
        %v5929 = vpop.f32.mrf.mxu0
        %v5930 = vadd.f32 %v5889, %v5929
        %v5931 = vpop.f32.mrf.mxu0
        %v5932 = vpop.f32.mrf.mxu0
        %5933 = vdwg.mxu0
        %5934 = vmatprep.subr.bf16.mxu0 0
        %5935 = vmatpush1.bf16.msra.mxu0 0
        %5936 = vmatprep.subr.bf16.mxu0 0
        %5937 = vmatpush1.bf16.msra.mxu0 0
        %5938 = vmatprep.subr.bf16.mxu0 0
        %5939 = vmatpush1.bf16.msra.mxu0 0
        %5940 = vmatprep.subr.bf16.mxu0 0
        %5941 = vmatpush1.bf16.msra.mxu0 0
        %5942 = vmatprep.subr.bf16.mxu0 0
        %5943 = vmatpush1.bf16.msra.mxu0 0
        %5944 = vmatprep.subr.bf16.mxu0 0
        %5945 = vmatpush1.bf16.msra.mxu0 0
        %5946 = vmatprep.subr.bf16.mxu0 0
        %5947 = vmatpush1.bf16.msra.mxu0 0
        %5948 = vmatprep.subr.bf16.mxu0 %v5708
        %5949 = vmatpush1.bf16.msra.mxu0 %v5707
        %5950 = vmatprep.subr.bf16.mxu0 0
        %5951 = vmatpush2.bf16.msra.mxu0 0
        %5952 = vmatprep.subr.bf16.mxu0 0
        %5953 = vmatpush2.bf16.msra.mxu0 0
        %5954 = vmatprep.subr.bf16.mxu0 0
        %5955 = vmatpush2.bf16.msra.mxu0 0
        %5956 = vmatprep.subr.bf16.mxu0 0
        %5957 = vmatpush2.bf16.msra.mxu0 0
        %5958 = vmatprep.subr.bf16.mxu0 0
        %5959 = vmatpush2.bf16.msra.mxu0 0
        %5960 = vmatprep.subr.bf16.mxu0 0
        %5961 = vmatpush2.bf16.msra.mxu0 0
        %5962 = vmatprep.subr.bf16.mxu0 0
        %5963 = vmatpush2.bf16.msra.mxu0 0
        %5964 = vmatprep.subr.bf16.mxu0 0
        %5965 = vmatpush2.bf16.msra.mxu0 0
        %5966 = vmatprep.mubr.bf16.mxu0 0
        %5967 = vmatmul.mubr.bf16.gmra.mxu0 %v5809
        %v5968 = vpop.f32.mrf.mxu0
        %v5969 = vadd.f32 %v5928, %v5968
        %v5970 = vpop.f32.mrf.mxu0
        %v5971 = vadd.f32 %v5930, %v5970
        %v5972 = vpop.f32.mrf.mxu0
        %v5973 = vpop.f32.mrf.mxu0
        %5974 = vdwg.mxu0
        %5977 = vrot.lane.b32.xlu0 %v5969, 32
        %v5978 = vpop.permute.xlu0 %5977
        %5979 = vrot.lane.b32.xlu0 %v5971, 32
        %v5980 = vpop.permute.xlu0 %5979
        %v5981 = vsel %vm518, %v5978, %v5980
        %v5984 = vsel %vm518, 0.0, %v5978
        %vm5985 = vcmask 818176
        %v5986 = vsel %vm5985, %v5981, 0.0
        %v5987 = vld [vmem:[%s12] sm:$0xf]
        %v5989 = vlaneseq
        %v5990 = vshrl.u32 %v5989, 7
        %v5991 = vsub.s32 0, %v5990
        %v5992 = vrot.slane %v5987, %v5991
        %v5993 = vlaneseq
        %v5994 = vshrl.u32 %v5993, 7
        %v5995 = vsub.s32 2, %v5994
        %v5996 = vrot.slane %v5987, %v5995
        %v5999 = vlaneseq
        %v6000 = vshrl.u32 %v5999, 7
        %v6001 = vsub.s32 0, %v6000
        %v6002 = vrot.slane %v5992, %v6001
        %v6003 = vlaneseq
        %v6004 = vshrl.u32 %v6003, 7
        %v6005 = vsub.s32 0, %v6004
        %v6006 = vrot.slane %v5996, %v6005
        %6009 = vrot.lane.b32.xlu0 %v6002, 17
        %v6010 = vpop.permute.xlu0 %6009
        %6011 = vrot.lane.b32.xlu0 %v6006, 17
        %v6012 = vpop.permute.xlu0 %6011
        %vm6013 = vcmask 138240
        %v6014 = vsel %vm6013, %v6010, %v6012
        %v6017 = vmul.f32 %v5984, %v6010
        %v6018 = vmul.f32 %v5986, %v6014
        %v6019 = vld [vmem:[%s5] sm:$0xf]
        %v6020 = vpack.c.bf16 %v6017, %v6017
        %v6021 = vpack.c.bf16 %v6018, %v6018
        %s6022 = scalar_lea.vmem %s5, 4
        %v6023 = vld [vmem:[%s6022] sm:$0xf]
        %v6024 = vpack.c.bf16 %v5984, %v5984
        %v6025 = vpack.c.bf16 %v5986, %v5986
        %6028 = vrot.lane.b32.xlu0 %v6024, 110
        %v6029 = vpop.permute.xlu0 %6028
        %6030 = vrot.lane.b32.xlu0 %v6025, 110
        %v6031 = vpop.permute.xlu0 %6030
        %vm6032 = vcmask 900096
        %v6033 = vsel %vm6032, %v6029, %v6031
        %v6035 = vsel %vm3034, %v6023, 0
        %v6038 = vsel %vm3038, %v6033, 0
        %v6041 = vsel %vm3038, %v6031, 0
        %6043 = vmatprep.subr.bf16.mxu0 0
        %6044 = vmatpush1.bf16.msra.mxu0 0
        %6045 = vmatprep.subr.bf16.mxu0 0
        %6046 = vmatpush1.bf16.msra.mxu0 0
        %6047 = vmatprep.subr.bf16.mxu0 0
        %6048 = vmatpush1.bf16.msra.mxu0 0
        %6049 = vmatprep.subr.bf16.mxu0 0
        %6050 = vmatpush1.bf16.msra.mxu0 0
        %6051 = vmatprep.subr.bf16.mxu0 0
        %6052 = vmatpush1.bf16.msra.mxu0 0
        %6053 = vmatprep.subr.bf16.mxu0 0
        %6054 = vmatpush1.bf16.msra.mxu0 0
        %6055 = vmatprep.subr.bf16.mxu0 0
        %6056 = vmatpush1.bf16.msra.mxu0 0
        %6057 = vmatprep.subr.bf16.mxu0 %v6041
        %6058 = vmatpush1.bf16.msra.mxu0 %v6038
        %6059 = vmatprep.subr.bf16.mxu0 0
        %6060 = vmatpush2.bf16.msra.mxu0 0
        %6061 = vmatprep.subr.bf16.mxu0 0
        %6062 = vmatpush2.bf16.msra.mxu0 0
        %6063 = vmatprep.subr.bf16.mxu0 0
        %6064 = vmatpush2.bf16.msra.mxu0 0
        %6065 = vmatprep.subr.bf16.mxu0 0
        %6066 = vmatpush2.bf16.msra.mxu0 0
        %6067 = vmatprep.subr.bf16.mxu0 0
        %6068 = vmatpush2.bf16.msra.mxu0 0
        %6069 = vmatprep.subr.bf16.mxu0 0
        %6070 = vmatpush2.bf16.msra.mxu0 0
        %6071 = vmatprep.subr.bf16.mxu0 0
        %6072 = vmatpush2.bf16.msra.mxu0 0
        %6073 = vmatprep.subr.bf16.mxu0 0
        %6074 = vmatpush2.bf16.msra.mxu0 0
        %6075 = vmatprep.mubr.bf16.mxu0 0
        %6076 = vmatmul.mubr.bf16.gmra.mxu0 %v6035
        %v6077 = vpop.f32.mrf.mxu0
        %v6078 = vadd.f32 0.0, %v6077
        %v6079 = vpop.f32.mrf.mxu0
        %v6080 = vadd.f32 0.0, %v6079
        %v6081 = vpop.f32.mrf.mxu0
        %v6082 = vpop.f32.mrf.mxu0
        %6083 = vdwg.mxu0
        %6086 = vrot.lane.b32.xlu0 %v6020, 111
        %v6087 = vpop.permute.xlu0 %6086
        %6088 = vrot.lane.b32.xlu0 %v6021, 111
        %v6089 = vpop.permute.xlu0 %6088
        %vm6090 = vcmask 908288
        %v6091 = vsel %vm6090, %v6087, %v6089
        %v6093 = vsel %vm3034, %v6019, 0
        %v6096 = vsel %vm3038, %v6091, 0
        %v6099 = vsel %vm3038, %v6089, 0
        %6101 = vmatprep.subr.bf16.mxu0 0
        %6102 = vmatpush1.bf16.msra.mxu0 0
        %6103 = vmatprep.subr.bf16.mxu0 0
        %6104 = vmatpush1.bf16.msra.mxu0 0
        %6105 = vmatprep.subr.bf16.mxu0 0
        %6106 = vmatpush1.bf16.msra.mxu0 0
        %6107 = vmatprep.subr.bf16.mxu0 0
        %6108 = vmatpush1.bf16.msra.mxu0 0
        %6109 = vmatprep.subr.bf16.mxu0 0
        %6110 = vmatpush1.bf16.msra.mxu0 0
        %6111 = vmatprep.subr.bf16.mxu0 0
        %6112 = vmatpush1.bf16.msra.mxu0 0
        %6113 = vmatprep.subr.bf16.mxu0 0
        %6114 = vmatpush1.bf16.msra.mxu0 0
        %6115 = vmatprep.subr.bf16.mxu0 %v6099
        %6116 = vmatpush1.bf16.msra.mxu0 %v6096
        %6117 = vmatprep.subr.bf16.mxu0 0
        %6118 = vmatpush2.bf16.msra.mxu0 0
        %6119 = vmatprep.subr.bf16.mxu0 0
        %6120 = vmatpush2.bf16.msra.mxu0 0
        %6121 = vmatprep.subr.bf16.mxu0 0
        %6122 = vmatpush2.bf16.msra.mxu0 0
        %6123 = vmatprep.subr.bf16.mxu0 0
        %6124 = vmatpush2.bf16.msra.mxu0 0
        %6125 = vmatprep.subr.bf16.mxu0 0
        %6126 = vmatpush2.bf16.msra.mxu0 0
        %6127 = vmatprep.subr.bf16.mxu0 0
        %6128 = vmatpush2.bf16.msra.mxu0 0
        %6129 = vmatprep.subr.bf16.mxu0 0
        %6130 = vmatpush2.bf16.msra.mxu0 0
        %6131 = vmatprep.subr.bf16.mxu0 0
        %6132 = vmatpush2.bf16.msra.mxu0 0
        %6133 = vmatprep.mubr.bf16.mxu0 0
        %6134 = vmatmul.mubr.bf16.gmra.mxu0 %v6093
        %v6135 = vpop.f32.mrf.mxu0
        %v6136 = vadd.f32 %v6078, %v6135
        %v6137 = vpop.f32.mrf.mxu0
        %v6138 = vadd.f32 %v6080, %v6137
        %v6139 = vpop.f32.mrf.mxu0
        %v6140 = vpop.f32.mrf.mxu0
        %6141 = vdwg.mxu0
        %v6142 = vlaneseq
        %v6143 = vshrl.u32 %v6142, 7
        %v6144 = vsub.s32 1, %v6143
        %v6145 = vrot.slane %v5987, %v6144
        %v6146 = vlaneseq
        %v6147 = vshrl.u32 %v6146, 7
        %v6148 = vsub.s32 3, %v6147
        %v6149 = vrot.slane %v5987, %v6148
        %v6152 = vlaneseq
        %v6153 = vshrl.u32 %v6152, 7
        %v6154 = vsub.s32 1, %v6153
        %v6155 = vrot.slane %v6145, %v6154
        %v6156 = vlaneseq
        %v6157 = vshrl.u32 %v6156, 7
        %v6158 = vsub.s32 1, %v6157
        %v6159 = vrot.slane %v6149, %v6158
        %6162 = vrot.lane.b32.xlu0 %v6155, 19
        %v6163 = vpop.permute.xlu0 %6162
        %6164 = vrot.lane.b32.xlu0 %v6159, 19
        %v6165 = vpop.permute.xlu0 %6164
        %vm6166 = vcmask 154624
        %v6167 = vsel %vm6166, %v6163, %v6165
        %v6170 = vmul.f32 %v5984, %v6163
        %v6171 = vmul.f32 %v5986, %v6167
        %s6172 = scalar_lea.vmem %s5, 8
        %v6173 = vld [vmem:[%s6172] sm:$0xf]
        %v6174 = vpack.c.bf16 %v6170, %v6170
        %v6175 = vpack.c.bf16 %v6171, %v6171
        %6178 = vrot.lane.b32.xlu0 %v6174, 109
        %v6179 = vpop.permute.xlu0 %6178
        %6180 = vrot.lane.b32.xlu0 %v6175, 109
        %v6181 = vpop.permute.xlu0 %6180
        %vm6182 = vcmask 891904
        %v6183 = vsel %vm6182, %v6179, %v6181
        %v6185 = vsel %vm3034, %v6173, 0
        %v6188 = vsel %vm3038, %v6183, 0
        %v6191 = vsel %vm3038, %v6181, 0
        %6193 = vmatprep.subr.bf16.mxu0 0
        %6194 = vmatpush1.bf16.msra.mxu0 0
        %6195 = vmatprep.subr.bf16.mxu0 0
        %6196 = vmatpush1.bf16.msra.mxu0 0
        %6197 = vmatprep.subr.bf16.mxu0 0
        %6198 = vmatpush1.bf16.msra.mxu0 0
        %6199 = vmatprep.subr.bf16.mxu0 0
        %6200 = vmatpush1.bf16.msra.mxu0 0
        %6201 = vmatprep.subr.bf16.mxu0 0
        %6202 = vmatpush1.bf16.msra.mxu0 0
        %6203 = vmatprep.subr.bf16.mxu0 0
        %6204 = vmatpush1.bf16.msra.mxu0 0
        %6205 = vmatprep.subr.bf16.mxu0 0
        %6206 = vmatpush1.bf16.msra.mxu0 0
        %6207 = vmatprep.subr.bf16.mxu0 %v6191
        %6208 = vmatpush1.bf16.msra.mxu0 %v6188
        %6209 = vmatprep.subr.bf16.mxu0 0
        %6210 = vmatpush2.bf16.msra.mxu0 0
        %6211 = vmatprep.subr.bf16.mxu0 0
        %6212 = vmatpush2.bf16.msra.mxu0 0
        %6213 = vmatprep.subr.bf16.mxu0 0
        %6214 = vmatpush2.bf16.msra.mxu0 0
        %6215 = vmatprep.subr.bf16.mxu0 0
        %6216 = vmatpush2.bf16.msra.mxu0 0
        %6217 = vmatprep.subr.bf16.mxu0 0
        %6218 = vmatpush2.bf16.msra.mxu0 0
        %6219 = vmatprep.subr.bf16.mxu0 0
        %6220 = vmatpush2.bf16.msra.mxu0 0
        %6221 = vmatprep.subr.bf16.mxu0 0
        %6222 = vmatpush2.bf16.msra.mxu0 0
        %6223 = vmatprep.subr.bf16.mxu0 0
        %6224 = vmatpush2.bf16.msra.mxu0 0
        %6225 = vmatprep.mubr.bf16.mxu0 0
        %6226 = vmatmul.mubr.bf16.gmra.mxu0 %v6185
        %v6227 = vpop.f32.mrf.mxu0
        %v6228 = vadd.f32 0.0, %v6227
        %v6229 = vpop.f32.mrf.mxu0
        %v6230 = vadd.f32 0.0, %v6229
        %v6231 = vpop.f32.mrf.mxu0
        %v6232 = vpop.f32.mrf.mxu0
        %6233 = vdwg.mxu0
        %v6234 = vadd.f32 %v6136, %v6228
        %v6235 = vadd.f32 %v6138, %v6230
        %6236 = vrot.lane.b32.xlu0 %v6002, 31
        %v6237 = vpop.permute.xlu0 %6236
        %6238 = vrot.lane.b32.xlu0 %v6006, 31
        %v6239 = vpop.permute.xlu0 %6238
        %v6240 = vsel %vm1443, %v6237, %v6239
        %v6243 = vmul.f32 %v5984, %v6237
        %v6244 = vmul.f32 %v5986, %v6240
        %s6245 = scalar_lea.vmem %s5, 12
        %v6246 = vld [vmem:[%s6245] sm:$0xf]
        %v6247 = vpack.c.bf16 %v6243, %v6243
        %v6248 = vpack.c.bf16 %v6244, %v6244
        %6251 = vrot.lane.b32.xlu0 %v6247, 97
        %v6252 = vpop.permute.xlu0 %6251
        %6253 = vrot.lane.b32.xlu0 %v6248, 97
        %v6254 = vpop.permute.xlu0 %6253
        %v6255 = vsel %vm1494, %v6252, %v6254
        %v6257 = vsel %vm3034, %v6246, 0
        %v6260 = vsel %vm3038, %v6255, 0
        %v6263 = vsel %vm3038, %v6254, 0
        %6265 = vmatprep.subr.bf16.mxu0 0
        %6266 = vmatpush1.bf16.msra.mxu0 0
        %6267 = vmatprep.subr.bf16.mxu0 0
        %6268 = vmatpush1.bf16.msra.mxu0 0
        %6269 = vmatprep.subr.bf16.mxu0 0
        %6270 = vmatpush1.bf16.msra.mxu0 0
        %6271 = vmatprep.subr.bf16.mxu0 0
        %6272 = vmatpush1.bf16.msra.mxu0 0
        %6273 = vmatprep.subr.bf16.mxu0 0
        %6274 = vmatpush1.bf16.msra.mxu0 0
        %6275 = vmatprep.subr.bf16.mxu0 0
        %6276 = vmatpush1.bf16.msra.mxu0 0
        %6277 = vmatprep.subr.bf16.mxu0 0
        %6278 = vmatpush1.bf16.msra.mxu0 0
        %6279 = vmatprep.subr.bf16.mxu0 %v6263
        %6280 = vmatpush1.bf16.msra.mxu0 %v6260
        %6281 = vmatprep.subr.bf16.mxu0 0
        %6282 = vmatpush2.bf16.msra.mxu0 0
        %6283 = vmatprep.subr.bf16.mxu0 0
        %6284 = vmatpush2.bf16.msra.mxu0 0
        %6285 = vmatprep.subr.bf16.mxu0 0
        %6286 = vmatpush2.bf16.msra.mxu0 0
        %6287 = vmatprep.subr.bf16.mxu0 0
        %6288 = vmatpush2.bf16.msra.mxu0 0
        %6289 = vmatprep.subr.bf16.mxu0 0
        %6290 = vmatpush2.bf16.msra.mxu0 0
        %6291 = vmatprep.subr.bf16.mxu0 0
        %6292 = vmatpush2.bf16.msra.mxu0 0
        %6293 = vmatprep.subr.bf16.mxu0 0
        %6294 = vmatpush2.bf16.msra.mxu0 0
        %6295 = vmatprep.subr.bf16.mxu0 0
        %6296 = vmatpush2.bf16.msra.mxu0 0
        %6297 = vmatprep.mubr.bf16.mxu0 0
        %6298 = vmatmul.mubr.bf16.gmra.mxu0 %v6257
        %v6299 = vpop.f32.mrf.mxu0
        %v6300 = vadd.f32 0.0, %v6299
        %v6301 = vpop.f32.mrf.mxu0
        %v6302 = vadd.f32 0.0, %v6301
        %v6303 = vpop.f32.mrf.mxu0
        %v6304 = vpop.f32.mrf.mxu0
        %6305 = vdwg.mxu0
        %v6306 = vadd.f32 %v6234, %v6300
        %v6307 = vadd.f32 %v6235, %v6302
        %s6308 = scalar_lea.vmem %s5, 16
        %v6309 = vld [vmem:[%s6308] sm:$0xf]
        %6310 = vrot.lane.b32.xlu0 %v6024, 96
        %v6311 = vpop.permute.xlu0 %6310
        %6312 = vrot.lane.b32.xlu0 %v6025, 96
        %v6313 = vpop.permute.xlu0 %6312
        %v6314 = vsel %vm1711, %v6311, %v6313
        %v6316 = vsel %vm3034, %v6309, 0
        %v6319 = vsel %vm3038, %v6314, 0
        %v6322 = vsel %vm3038, %v6313, 0
        %6324 = vmatprep.subr.bf16.mxu0 0
        %6325 = vmatpush1.bf16.msra.mxu0 0
        %6326 = vmatprep.subr.bf16.mxu0 0
        %6327 = vmatpush1.bf16.msra.mxu0 0
        %6328 = vmatprep.subr.bf16.mxu0 0
        %6329 = vmatpush1.bf16.msra.mxu0 0
        %6330 = vmatprep.subr.bf16.mxu0 0
        %6331 = vmatpush1.bf16.msra.mxu0 0
        %6332 = vmatprep.subr.bf16.mxu0 0
        %6333 = vmatpush1.bf16.msra.mxu0 0
        %6334 = vmatprep.subr.bf16.mxu0 0
        %6335 = vmatpush1.bf16.msra.mxu0 0
        %6336 = vmatprep.subr.bf16.mxu0 0
        %6337 = vmatpush1.bf16.msra.mxu0 0
        %6338 = vmatprep.subr.bf16.mxu0 %v6322
        %6339 = vmatpush1.bf16.msra.mxu0 %v6319
        %6340 = vmatprep.subr.bf16.mxu0 0
        %6341 = vmatpush2.bf16.msra.mxu0 0
        %6342 = vmatprep.subr.bf16.mxu0 0
        %6343 = vmatpush2.bf16.msra.mxu0 0
        %6344 = vmatprep.subr.bf16.mxu0 0
        %6345 = vmatpush2.bf16.msra.mxu0 0
        %6346 = vmatprep.subr.bf16.mxu0 0
        %6347 = vmatpush2.bf16.msra.mxu0 0
        %6348 = vmatprep.subr.bf16.mxu0 0
        %6349 = vmatpush2.bf16.msra.mxu0 0
        %6350 = vmatprep.subr.bf16.mxu0 0
        %6351 = vmatpush2.bf16.msra.mxu0 0
        %6352 = vmatprep.subr.bf16.mxu0 0
        %6353 = vmatpush2.bf16.msra.mxu0 0
        %6354 = vmatprep.subr.bf16.mxu0 0
        %6355 = vmatpush2.bf16.msra.mxu0 0
        %6356 = vmatprep.mubr.bf16.mxu0 0
        %6357 = vmatmul.mubr.bf16.gmra.mxu0 %v6316
        %v6358 = vpop.f32.mrf.mxu0
        %v6359 = vadd.f32 0.0, %v6358
        %v6360 = vpop.f32.mrf.mxu0
        %v6361 = vadd.f32 0.0, %v6360
        %v6362 = vpop.f32.mrf.mxu0
        %v6363 = vpop.f32.mrf.mxu0
        %6364 = vdwg.mxu0
        %v6365 = vadd.f32 %v6306, %v6359
        %v6366 = vadd.f32 %v6307, %v6361
        %6367 = vrot.lane.b32.xlu0 %v6155, 33
        %v6368 = vpop.permute.xlu0 %6367
        %6369 = vrot.lane.b32.xlu0 %v6159, 33
        %v6370 = vpop.permute.xlu0 %6369
        %v6371 = vsel %vm1926, %v6368, %v6370
        %v6374 = vmul.f32 %v5984, %v6368
        %v6375 = vmul.f32 %v5986, %v6371
        %s6376 = scalar_lea.vmem %s5, 20
        %v6377 = vld [vmem:[%s6376] sm:$0xf]
        %v6378 = vpack.c.bf16 %v6374, %v6374
        %v6379 = vpack.c.bf16 %v6375, %v6375
        %6382 = vrot.lane.b32.xlu0 %v6378, 95
        %v6383 = vpop.permute.xlu0 %6382
        %6384 = vrot.lane.b32.xlu0 %v6379, 95
        %v6385 = vpop.permute.xlu0 %6384
        %v6386 = vsel %vm1977, %v6383, %v6385
        %v6388 = vsel %vm3034, %v6377, 0
        %v6391 = vsel %vm3038, %v6386, 0
        %v6394 = vsel %vm3038, %v6385, 0
        %6396 = vmatprep.subr.bf16.mxu0 0
        %6397 = vmatpush1.bf16.msra.mxu0 0
        %6398 = vmatprep.subr.bf16.mxu0 0
        %6399 = vmatpush1.bf16.msra.mxu0 0
        %6400 = vmatprep.subr.bf16.mxu0 0
        %6401 = vmatpush1.bf16.msra.mxu0 0
        %6402 = vmatprep.subr.bf16.mxu0 0
        %6403 = vmatpush1.bf16.msra.mxu0 0
        %6404 = vmatprep.subr.bf16.mxu0 0
        %6405 = vmatpush1.bf16.msra.mxu0 0
        %6406 = vmatprep.subr.bf16.mxu0 0
        %6407 = vmatpush1.bf16.msra.mxu0 0
        %6408 = vmatprep.subr.bf16.mxu0 0
        %6409 = vmatpush1.bf16.msra.mxu0 0
        %6410 = vmatprep.subr.bf16.mxu0 %v6394
        %6411 = vmatpush1.bf16.msra.mxu0 %v6391
        %6412 = vmatprep.subr.bf16.mxu0 0
        %6413 = vmatpush2.bf16.msra.mxu0 0
        %6414 = vmatprep.subr.bf16.mxu0 0
        %6415 = vmatpush2.bf16.msra.mxu0 0
        %6416 = vmatprep.subr.bf16.mxu0 0
        %6417 = vmatpush2.bf16.msra.mxu0 0
        %6418 = vmatprep.subr.bf16.mxu0 0
        %6419 = vmatpush2.bf16.msra.mxu0 0
        %6420 = vmatprep.subr.bf16.mxu0 0
        %6421 = vmatpush2.bf16.msra.mxu0 0
        %6422 = vmatprep.subr.bf16.mxu0 0
        %6423 = vmatpush2.bf16.msra.mxu0 0
        %6424 = vmatprep.subr.bf16.mxu0 0
        %6425 = vmatpush2.bf16.msra.mxu0 0
        %6426 = vmatprep.subr.bf16.mxu0 0
        %6427 = vmatpush2.bf16.msra.mxu0 0
        %6428 = vmatprep.mubr.bf16.mxu0 0
        %6429 = vmatmul.mubr.bf16.gmra.mxu0 %v6388
        %v6430 = vpop.f32.mrf.mxu0
        %v6431 = vadd.f32 0.0, %v6430
        %v6432 = vpop.f32.mrf.mxu0
        %v6433 = vadd.f32 0.0, %v6432
        %v6434 = vpop.f32.mrf.mxu0
        %v6435 = vpop.f32.mrf.mxu0
        %6436 = vdwg.mxu0
        %v6437 = vadd.f32 %v6365, %v6431
        %v6438 = vadd.f32 %v6366, %v6433
        %6439 = vrot.lane.b32.xlu0 %v6002, 45
        %v6440 = vpop.permute.xlu0 %6439
        %6441 = vrot.lane.b32.xlu0 %v6006, 45
        %v6442 = vpop.permute.xlu0 %6441
        %vm6443 = vcmask 367616
        %v6444 = vsel %vm6443, %v6440, %v6442
        %v6447 = vmul.f32 %v5984, %v6440
        %v6448 = vmul.f32 %v5986, %v6444
        %s6449 = scalar_lea.vmem %s5, 24
        %v6450 = vld [vmem:[%s6449] sm:$0xf]
        %v6451 = vpack.c.bf16 %v6447, %v6447
        %v6452 = vpack.c.bf16 %v6448, %v6448
        %6455 = vrot.lane.b32.xlu0 %v6451, 83
        %v6456 = vpop.permute.xlu0 %6455
        %6457 = vrot.lane.b32.xlu0 %v6452, 83
        %v6458 = vpop.permute.xlu0 %6457
        %vm6459 = vcmask 678912
        %v6460 = vsel %vm6459, %v6456, %v6458
        %v6462 = vsel %vm3034, %v6450, 0
        %v6465 = vsel %vm3038, %v6460, 0
        %v6468 = vsel %vm3038, %v6458, 0
        %6470 = vmatprep.subr.bf16.mxu0 0
        %6471 = vmatpush1.bf16.msra.mxu0 0
        %6472 = vmatprep.subr.bf16.mxu0 0
        %6473 = vmatpush1.bf16.msra.mxu0 0
        %6474 = vmatprep.subr.bf16.mxu0 0
        %6475 = vmatpush1.bf16.msra.mxu0 0
        %6476 = vmatprep.subr.bf16.mxu0 0
        %6477 = vmatpush1.bf16.msra.mxu0 0
        %6478 = vmatprep.subr.bf16.mxu0 0
        %6479 = vmatpush1.bf16.msra.mxu0 0
        %6480 = vmatprep.subr.bf16.mxu0 0
        %6481 = vmatpush1.bf16.msra.mxu0 0
        %6482 = vmatprep.subr.bf16.mxu0 0
        %6483 = vmatpush1.bf16.msra.mxu0 0
        %6484 = vmatprep.subr.bf16.mxu0 %v6468
        %6485 = vmatpush1.bf16.msra.mxu0 %v6465
        %6486 = vmatprep.subr.bf16.mxu0 0
        %6487 = vmatpush2.bf16.msra.mxu0 0
        %6488 = vmatprep.subr.bf16.mxu0 0
        %6489 = vmatpush2.bf16.msra.mxu0 0
        %6490 = vmatprep.subr.bf16.mxu0 0
        %6491 = vmatpush2.bf16.msra.mxu0 0
        %6492 = vmatprep.subr.bf16.mxu0 0
        %6493 = vmatpush2.bf16.msra.mxu0 0
        %6494 = vmatprep.subr.bf16.mxu0 0
        %6495 = vmatpush2.bf16.msra.mxu0 0
        %6496 = vmatprep.subr.bf16.mxu0 0
        %6497 = vmatpush2.bf16.msra.mxu0 0
        %6498 = vmatprep.subr.bf16.mxu0 0
        %6499 = vmatpush2.bf16.msra.mxu0 0
        %6500 = vmatprep.subr.bf16.mxu0 0
        %6501 = vmatpush2.bf16.msra.mxu0 0
        %6502 = vmatprep.mubr.bf16.mxu0 0
        %6503 = vmatmul.mubr.bf16.gmra.mxu0 %v6462
        %v6504 = vpop.f32.mrf.mxu0
        %v6505 = vadd.f32 0.0, %v6504
        %v6506 = vpop.f32.mrf.mxu0
        %v6507 = vadd.f32 0.0, %v6506
        %v6508 = vpop.f32.mrf.mxu0
        %v6509 = vpop.f32.mrf.mxu0
        %6510 = vdwg.mxu0
        %v6511 = vadd.f32 %v6437, %v6505
        %v6512 = vadd.f32 %v6438, %v6507
        %s6513 = scalar_lea.vmem %s5, 28
        %v6514 = vld [vmem:[%s6513] sm:$0xf]
        %6515 = vrot.lane.b32.xlu0 %v6024, 82
        %v6516 = vpop.permute.xlu0 %6515
        %6517 = vrot.lane.b32.xlu0 %v6025, 82
        %v6518 = vpop.permute.xlu0 %6517
        %vm6519 = vcmask 670720
        %v6520 = vsel %vm6519, %v6516, %v6518
        %v6522 = vsel %vm3034, %v6514, 0
        %v6525 = vsel %vm3038, %v6520, 0
        %v6528 = vsel %vm3038, %v6518, 0
        %6530 = vmatprep.subr.bf16.mxu0 0
        %6531 = vmatpush1.bf16.msra.mxu0 0
        %6532 = vmatprep.subr.bf16.mxu0 0
        %6533 = vmatpush1.bf16.msra.mxu0 0
        %6534 = vmatprep.subr.bf16.mxu0 0
        %6535 = vmatpush1.bf16.msra.mxu0 0
        %6536 = vmatprep.subr.bf16.mxu0 0
        %6537 = vmatpush1.bf16.msra.mxu0 0
        %6538 = vmatprep.subr.bf16.mxu0 0
        %6539 = vmatpush1.bf16.msra.mxu0 0
        %6540 = vmatprep.subr.bf16.mxu0 0
        %6541 = vmatpush1.bf16.msra.mxu0 0
        %6542 = vmatprep.subr.bf16.mxu0 0
        %6543 = vmatpush1.bf16.msra.mxu0 0
        %6544 = vmatprep.subr.bf16.mxu0 %v6528
        %6545 = vmatpush1.bf16.msra.mxu0 %v6525
        %6546 = vmatprep.subr.bf16.mxu0 0
        %6547 = vmatpush2.bf16.msra.mxu0 0
        %6548 = vmatprep.subr.bf16.mxu0 0
        %6549 = vmatpush2.bf16.msra.mxu0 0
        %6550 = vmatprep.subr.bf16.mxu0 0
        %6551 = vmatpush2.bf16.msra.mxu0 0
        %6552 = vmatprep.subr.bf16.mxu0 0
        %6553 = vmatpush2.bf16.msra.mxu0 0
        %6554 = vmatprep.subr.bf16.mxu0 0
        %6555 = vmatpush2.bf16.msra.mxu0 0
        %6556 = vmatprep.subr.bf16.mxu0 0
        %6557 = vmatpush2.bf16.msra.mxu0 0
        %6558 = vmatprep.subr.bf16.mxu0 0
        %6559 = vmatpush2.bf16.msra.mxu0 0
        %6560 = vmatprep.subr.bf16.mxu0 0
        %6561 = vmatpush2.bf16.msra.mxu0 0
        %6562 = vmatprep.mubr.bf16.mxu0 0
        %6563 = vmatmul.mubr.bf16.gmra.mxu0 %v6522
        %v6564 = vpop.f32.mrf.mxu0
        %v6565 = vadd.f32 0.0, %v6564
        %v6566 = vpop.f32.mrf.mxu0
        %v6567 = vadd.f32 0.0, %v6566
        %v6568 = vpop.f32.mrf.mxu0
        %v6569 = vpop.f32.mrf.mxu0
        %6570 = vdwg.mxu0
        %v6571 = vadd.f32 %v6511, %v6565
        %v6572 = vadd.f32 %v6512, %v6567
        %6573 = vrot.lane.b32.xlu0 %v6155, 47
        %v6574 = vpop.permute.xlu0 %6573
        %6575 = vrot.lane.b32.xlu0 %v6159, 47
        %v6576 = vpop.permute.xlu0 %6575
        %vm6577 = vcmask 384000
        %v6578 = vsel %vm6577, %v6574, %v6576
        %v6581 = vmul.f32 %v5984, %v6574
        %v6582 = vmul.f32 %v5986, %v6578
        %s6583 = scalar_lea.vmem %s5, 32
        %v6584 = vld [vmem:[%s6583] sm:$0xf]
        %v6585 = vpack.c.bf16 %v6581, %v6581
        %v6586 = vpack.c.bf16 %v6582, %v6582
        %6589 = vrot.lane.b32.xlu0 %v6585, 81
        %v6590 = vpop.permute.xlu0 %6589
        %6591 = vrot.lane.b32.xlu0 %v6586, 81
        %v6592 = vpop.permute.xlu0 %6591
        %vm6593 = vcmask 662528
        %v6594 = vsel %vm6593, %v6590, %v6592
        %v6596 = vsel %vm3034, %v6584, 0
        %v6599 = vsel %vm3038, %v6594, 0
        %v6602 = vsel %vm3038, %v6592, 0
        %6604 = vmatprep.subr.bf16.mxu0 0
        %6605 = vmatpush1.bf16.msra.mxu0 0
        %6606 = vmatprep.subr.bf16.mxu0 0
        %6607 = vmatpush1.bf16.msra.mxu0 0
        %6608 = vmatprep.subr.bf16.mxu0 0
        %6609 = vmatpush1.bf16.msra.mxu0 0
        %6610 = vmatprep.subr.bf16.mxu0 0
        %6611 = vmatpush1.bf16.msra.mxu0 0
        %6612 = vmatprep.subr.bf16.mxu0 0
        %6613 = vmatpush1.bf16.msra.mxu0 0
        %6614 = vmatprep.subr.bf16.mxu0 0
        %6615 = vmatpush1.bf16.msra.mxu0 0
        %6616 = vmatprep.subr.bf16.mxu0 0
        %6617 = vmatpush1.bf16.msra.mxu0 0
        %6618 = vmatprep.subr.bf16.mxu0 %v6602
        %6619 = vmatpush1.bf16.msra.mxu0 %v6599
        %6620 = vmatprep.subr.bf16.mxu0 0
        %6621 = vmatpush2.bf16.msra.mxu0 0
        %6622 = vmatprep.subr.bf16.mxu0 0
        %6623 = vmatpush2.bf16.msra.mxu0 0
        %6624 = vmatprep.subr.bf16.mxu0 0
        %6625 = vmatpush2.bf16.msra.mxu0 0
        %6626 = vmatprep.subr.bf16.mxu0 0
        %6627 = vmatpush2.bf16.msra.mxu0 0
        %6628 = vmatprep.subr.bf16.mxu0 0
        %6629 = vmatpush2.bf16.msra.mxu0 0
        %6630 = vmatprep.subr.bf16.mxu0 0
        %6631 = vmatpush2.bf16.msra.mxu0 0
        %6632 = vmatprep.subr.bf16.mxu0 0
        %6633 = vmatpush2.bf16.msra.mxu0 0
        %6634 = vmatprep.subr.bf16.mxu0 0
        %6635 = vmatpush2.bf16.msra.mxu0 0
        %6636 = vmatprep.mubr.bf16.mxu0 0
        %6637 = vmatmul.mubr.bf16.gmra.mxu0 %v6596
        %v6638 = vpop.f32.mrf.mxu0
        %v6639 = vadd.f32 0.0, %v6638
        %v6640 = vpop.f32.mrf.mxu0
        %v6641 = vadd.f32 0.0, %v6640
        %v6642 = vpop.f32.mrf.mxu0
        %v6643 = vpop.f32.mrf.mxu0
        %6644 = vdwg.mxu0
        %v6645 = vadd.f32 %v6571, %v6639
        %v6646 = vadd.f32 %v6572, %v6641
        %v6647 = vld [vmem:[%s6] sm:$0xff]
        %6649 = vset.pattern.permute.xlu0 0
        %6650 = vperm.xlu0 %6649, %v6647
        %v6651 = vpop.permute.xlu0 %6650
        %v6653 = vadd.f32 %v6645, %v6651
        %v6654 = vadd.f32 %v6646, %v6651
        %v6655 = vmax.f32 %v6653, 0.0
        %v6656 = vmax.f32 %v6654, 0.0
        %6659 = vrot.lane.b32.xlu0 %v6655, 32
        %v6660 = vpop.permute.xlu0 %6659
        %6661 = vrot.lane.b32.xlu0 %v6656, 32
        %v6662 = vpop.permute.xlu0 %6661
        %v6663 = vsel %vm518, %v6660, %v6662
        %v6666 = vsel %vm518, 0.0, %v6660
        %v6667 = vsel %vm5985, %v6663, 0.0
        %v6668 = vmul.f32 %v6666, %v6010
        %v6669 = vmul.f32 %v6667, %v6014
        %v6670 = vld [vmem:[%s7] sm:$0xf]
        %v6671 = vpack.c.bf16 %v6668, %v6668
        %v6672 = vpack.c.bf16 %v6669, %v6669
        %s6673 = scalar_lea.vmem %s7, 4
        %v6674 = vld [vmem:[%s6673] sm:$0xf]
        %v6675 = vpack.c.bf16 %v6666, %v6666
        %v6676 = vpack.c.bf16 %v6667, %v6667
        %6679 = vrot.lane.b32.xlu0 %v6675, 110
        %v6680 = vpop.permute.xlu0 %6679
        %6681 = vrot.lane.b32.xlu0 %v6676, 110
        %v6682 = vpop.permute.xlu0 %6681
        %v6683 = vsel %vm6032, %v6680, %v6682
        %v6685 = vsel %vm3034, %v6674, 0
        %v6688 = vsel %vm3038, %v6683, 0
        %v6691 = vsel %vm3038, %v6682, 0
        %6693 = vmatprep.subr.bf16.mxu0 0
        %6694 = vmatpush1.bf16.msra.mxu0 0
        %6695 = vmatprep.subr.bf16.mxu0 0
        %6696 = vmatpush1.bf16.msra.mxu0 0
        %6697 = vmatprep.subr.bf16.mxu0 0
        %6698 = vmatpush1.bf16.msra.mxu0 0
        %6699 = vmatprep.subr.bf16.mxu0 0
        %6700 = vmatpush1.bf16.msra.mxu0 0
        %6701 = vmatprep.subr.bf16.mxu0 0
        %6702 = vmatpush1.bf16.msra.mxu0 0
        %6703 = vmatprep.subr.bf16.mxu0 0
        %6704 = vmatpush1.bf16.msra.mxu0 0
        %6705 = vmatprep.subr.bf16.mxu0 0
        %6706 = vmatpush1.bf16.msra.mxu0 0
        %6707 = vmatprep.subr.bf16.mxu0 %v6691
        %6708 = vmatpush1.bf16.msra.mxu0 %v6688
        %6709 = vmatprep.subr.bf16.mxu0 0
        %6710 = vmatpush2.bf16.msra.mxu0 0
        %6711 = vmatprep.subr.bf16.mxu0 0
        %6712 = vmatpush2.bf16.msra.mxu0 0
        %6713 = vmatprep.subr.bf16.mxu0 0
        %6714 = vmatpush2.bf16.msra.mxu0 0
        %6715 = vmatprep.subr.bf16.mxu0 0
        %6716 = vmatpush2.bf16.msra.mxu0 0
        %6717 = vmatprep.subr.bf16.mxu0 0
        %6718 = vmatpush2.bf16.msra.mxu0 0
        %6719 = vmatprep.subr.bf16.mxu0 0
        %6720 = vmatpush2.bf16.msra.mxu0 0
        %6721 = vmatprep.subr.bf16.mxu0 0
        %6722 = vmatpush2.bf16.msra.mxu0 0
        %6723 = vmatprep.subr.bf16.mxu0 0
        %6724 = vmatpush2.bf16.msra.mxu0 0
        %6725 = vmatprep.mubr.bf16.mxu0 0
        %6726 = vmatmul.mubr.bf16.gmra.mxu0 %v6685
        %v6727 = vpop.f32.mrf.mxu0
        %v6728 = vadd.f32 0.0, %v6727
        %v6729 = vpop.f32.mrf.mxu0
        %v6730 = vadd.f32 0.0, %v6729
        %v6731 = vpop.f32.mrf.mxu0
        %v6732 = vpop.f32.mrf.mxu0
        %6733 = vdwg.mxu0
        %6736 = vrot.lane.b32.xlu0 %v6671, 111
        %v6737 = vpop.permute.xlu0 %6736
        %6738 = vrot.lane.b32.xlu0 %v6672, 111
        %v6739 = vpop.permute.xlu0 %6738
        %v6740 = vsel %vm6090, %v6737, %v6739
        %v6742 = vsel %vm3034, %v6670, 0
        %v6745 = vsel %vm3038, %v6740, 0
        %v6748 = vsel %vm3038, %v6739, 0
        %6750 = vmatprep.subr.bf16.mxu0 0
        %6751 = vmatpush1.bf16.msra.mxu0 0
        %6752 = vmatprep.subr.bf16.mxu0 0
        %6753 = vmatpush1.bf16.msra.mxu0 0
        %6754 = vmatprep.subr.bf16.mxu0 0
        %6755 = vmatpush1.bf16.msra.mxu0 0
        %6756 = vmatprep.subr.bf16.mxu0 0
        %6757 = vmatpush1.bf16.msra.mxu0 0
        %6758 = vmatprep.subr.bf16.mxu0 0
        %6759 = vmatpush1.bf16.msra.mxu0 0
        %6760 = vmatprep.subr.bf16.mxu0 0
        %6761 = vmatpush1.bf16.msra.mxu0 0
        %6762 = vmatprep.subr.bf16.mxu0 0
        %6763 = vmatpush1.bf16.msra.mxu0 0
        %6764 = vmatprep.subr.bf16.mxu0 %v6748
        %6765 = vmatpush1.bf16.msra.mxu0 %v6745
        %6766 = vmatprep.subr.bf16.mxu0 0
        %6767 = vmatpush2.bf16.msra.mxu0 0
        %6768 = vmatprep.subr.bf16.mxu0 0
        %6769 = vmatpush2.bf16.msra.mxu0 0
        %6770 = vmatprep.subr.bf16.mxu0 0
        %6771 = vmatpush2.bf16.msra.mxu0 0
        %6772 = vmatprep.subr.bf16.mxu0 0
        %6773 = vmatpush2.bf16.msra.mxu0 0
        %6774 = vmatprep.subr.bf16.mxu0 0
        %6775 = vmatpush2.bf16.msra.mxu0 0
        %6776 = vmatprep.subr.bf16.mxu0 0
        %6777 = vmatpush2.bf16.msra.mxu0 0
        %6778 = vmatprep.subr.bf16.mxu0 0
        %6779 = vmatpush2.bf16.msra.mxu0 0
        %6780 = vmatprep.subr.bf16.mxu0 0
        %6781 = vmatpush2.bf16.msra.mxu0 0
        %6782 = vmatprep.mubr.bf16.mxu0 0
        %6783 = vmatmul.mubr.bf16.gmra.mxu0 %v6742
        %v6784 = vpop.f32.mrf.mxu0
        %v6785 = vadd.f32 %v6728, %v6784
        %v6786 = vpop.f32.mrf.mxu0
        %v6787 = vadd.f32 %v6730, %v6786
        %v6788 = vpop.f32.mrf.mxu0
        %v6789 = vpop.f32.mrf.mxu0
        %6790 = vdwg.mxu0
        %v6791 = vmul.f32 %v6666, %v6163
        %v6792 = vmul.f32 %v6667, %v6167
        %s6793 = scalar_lea.vmem %s7, 8
        %v6794 = vld [vmem:[%s6793] sm:$0xf]
        %v6795 = vpack.c.bf16 %v6791, %v6791
        %v6796 = vpack.c.bf16 %v6792, %v6792
        %6799 = vrot.lane.b32.xlu0 %v6795, 109
        %v6800 = vpop.permute.xlu0 %6799
        %6801 = vrot.lane.b32.xlu0 %v6796, 109
        %v6802 = vpop.permute.xlu0 %6801
        %v6803 = vsel %vm6182, %v6800, %v6802
        %v6805 = vsel %vm3034, %v6794, 0
        %v6808 = vsel %vm3038, %v6803, 0
        %v6811 = vsel %vm3038, %v6802, 0
        %6813 = vmatprep.subr.bf16.mxu0 0
        %6814 = vmatpush1.bf16.msra.mxu0 0
        %6815 = vmatprep.subr.bf16.mxu0 0
        %6816 = vmatpush1.bf16.msra.mxu0 0
        %6817 = vmatprep.subr.bf16.mxu0 0
        %6818 = vmatpush1.bf16.msra.mxu0 0
        %6819 = vmatprep.subr.bf16.mxu0 0
        %6820 = vmatpush1.bf16.msra.mxu0 0
        %6821 = vmatprep.subr.bf16.mxu0 0
        %6822 = vmatpush1.bf16.msra.mxu0 0
        %6823 = vmatprep.subr.bf16.mxu0 0
        %6824 = vmatpush1.bf16.msra.mxu0 0
        %6825 = vmatprep.subr.bf16.mxu0 0
        %6826 = vmatpush1.bf16.msra.mxu0 0
        %6827 = vmatprep.subr.bf16.mxu0 %v6811
        %6828 = vmatpush1.bf16.msra.mxu0 %v6808
        %6829 = vmatprep.subr.bf16.mxu0 0
        %6830 = vmatpush2.bf16.msra.mxu0 0
        %6831 = vmatprep.subr.bf16.mxu0 0
        %6832 = vmatpush2.bf16.msra.mxu0 0
        %6833 = vmatprep.subr.bf16.mxu0 0
        %6834 = vmatpush2.bf16.msra.mxu0 0
        %6835 = vmatprep.subr.bf16.mxu0 0
        %6836 = vmatpush2.bf16.msra.mxu0 0
        %6837 = vmatprep.subr.bf16.mxu0 0
        %6838 = vmatpush2.bf16.msra.mxu0 0
        %6839 = vmatprep.subr.bf16.mxu0 0
        %6840 = vmatpush2.bf16.msra.mxu0 0
        %6841 = vmatprep.subr.bf16.mxu0 0
        %6842 = vmatpush2.bf16.msra.mxu0 0
        %6843 = vmatprep.subr.bf16.mxu0 0
        %6844 = vmatpush2.bf16.msra.mxu0 0
        %6845 = vmatprep.mubr.bf16.mxu0 0
        %6846 = vmatmul.mubr.bf16.gmra.mxu0 %v6805
        %v6847 = vpop.f32.mrf.mxu0
        %v6848 = vadd.f32 0.0, %v6847
        %v6849 = vpop.f32.mrf.mxu0
        %v6850 = vadd.f32 0.0, %v6849
        %v6851 = vpop.f32.mrf.mxu0
        %v6852 = vpop.f32.mrf.mxu0
        %6853 = vdwg.mxu0
        %v6854 = vadd.f32 %v6785, %v6848
        %v6855 = vadd.f32 %v6787, %v6850
        %v6856 = vmul.f32 %v6666, %v6237
        %v6857 = vmul.f32 %v6667, %v6240
        %s6858 = scalar_lea.vmem %s7, 12
        %v6859 = vld [vmem:[%s6858] sm:$0xf]
        %v6860 = vpack.c.bf16 %v6856, %v6856
        %v6861 = vpack.c.bf16 %v6857, %v6857
        %6864 = vrot.lane.b32.xlu0 %v6860, 97
        %v6865 = vpop.permute.xlu0 %6864
        %6866 = vrot.lane.b32.xlu0 %v6861, 97
        %v6867 = vpop.permute.xlu0 %6866
        %v6868 = vsel %vm1494, %v6865, %v6867
        %v6870 = vsel %vm3034, %v6859, 0
        %v6873 = vsel %vm3038, %v6868, 0
        %v6876 = vsel %vm3038, %v6867, 0
        %6878 = vmatprep.subr.bf16.mxu0 0
        %6879 = vmatpush1.bf16.msra.mxu0 0
        %6880 = vmatprep.subr.bf16.mxu0 0
        %6881 = vmatpush1.bf16.msra.mxu0 0
        %6882 = vmatprep.subr.bf16.mxu0 0
        %6883 = vmatpush1.bf16.msra.mxu0 0
        %6884 = vmatprep.subr.bf16.mxu0 0
        %6885 = vmatpush1.bf16.msra.mxu0 0
        %6886 = vmatprep.subr.bf16.mxu0 0
        %6887 = vmatpush1.bf16.msra.mxu0 0
        %6888 = vmatprep.subr.bf16.mxu0 0
        %6889 = vmatpush1.bf16.msra.mxu0 0
        %6890 = vmatprep.subr.bf16.mxu0 0
        %6891 = vmatpush1.bf16.msra.mxu0 0
        %6892 = vmatprep.subr.bf16.mxu0 %v6876
        %6893 = vmatpush1.bf16.msra.mxu0 %v6873
        %6894 = vmatprep.subr.bf16.mxu0 0
        %6895 = vmatpush2.bf16.msra.mxu0 0
        %6896 = vmatprep.subr.bf16.mxu0 0
        %6897 = vmatpush2.bf16.msra.mxu0 0
        %6898 = vmatprep.subr.bf16.mxu0 0
        %6899 = vmatpush2.bf16.msra.mxu0 0
        %6900 = vmatprep.subr.bf16.mxu0 0
        %6901 = vmatpush2.bf16.msra.mxu0 0
        %6902 = vmatprep.subr.bf16.mxu0 0
        %6903 = vmatpush2.bf16.msra.mxu0 0
        %6904 = vmatprep.subr.bf16.mxu0 0
        %6905 = vmatpush2.bf16.msra.mxu0 0
        %6906 = vmatprep.subr.bf16.mxu0 0
        %6907 = vmatpush2.bf16.msra.mxu0 0
        %6908 = vmatprep.subr.bf16.mxu0 0
        %6909 = vmatpush2.bf16.msra.mxu0 0
        %6910 = vmatprep.mubr.bf16.mxu0 0
        %6911 = vmatmul.mubr.bf16.gmra.mxu0 %v6870
        %v6912 = vpop.f32.mrf.mxu0
        %v6913 = vadd.f32 0.0, %v6912
        %v6914 = vpop.f32.mrf.mxu0
        %v6915 = vadd.f32 0.0, %v6914
        %v6916 = vpop.f32.mrf.mxu0
        %v6917 = vpop.f32.mrf.mxu0
        %6918 = vdwg.mxu0
        %v6919 = vadd.f32 %v6854, %v6913
        %v6920 = vadd.f32 %v6855, %v6915
        %s6921 = scalar_lea.vmem %s7, 16
        %v6922 = vld [vmem:[%s6921] sm:$0xf]
        %6923 = vrot.lane.b32.xlu0 %v6675, 96
        %v6924 = vpop.permute.xlu0 %6923
        %6925 = vrot.lane.b32.xlu0 %v6676, 96
        %v6926 = vpop.permute.xlu0 %6925
        %v6927 = vsel %vm1711, %v6924, %v6926
        %v6929 = vsel %vm3034, %v6922, 0
        %v6932 = vsel %vm3038, %v6927, 0
        %v6935 = vsel %vm3038, %v6926, 0
        %6937 = vmatprep.subr.bf16.mxu0 0
        %6938 = vmatpush1.bf16.msra.mxu0 0
        %6939 = vmatprep.subr.bf16.mxu0 0
        %6940 = vmatpush1.bf16.msra.mxu0 0
        %6941 = vmatprep.subr.bf16.mxu0 0
        %6942 = vmatpush1.bf16.msra.mxu0 0
        %6943 = vmatprep.subr.bf16.mxu0 0
        %6944 = vmatpush1.bf16.msra.mxu0 0
        %6945 = vmatprep.subr.bf16.mxu0 0
        %6946 = vmatpush1.bf16.msra.mxu0 0
        %6947 = vmatprep.subr.bf16.mxu0 0
        %6948 = vmatpush1.bf16.msra.mxu0 0
        %6949 = vmatprep.subr.bf16.mxu0 0
        %6950 = vmatpush1.bf16.msra.mxu0 0
        %6951 = vmatprep.subr.bf16.mxu0 %v6935
        %6952 = vmatpush1.bf16.msra.mxu0 %v6932
        %6953 = vmatprep.subr.bf16.mxu0 0
        %6954 = vmatpush2.bf16.msra.mxu0 0
        %6955 = vmatprep.subr.bf16.mxu0 0
        %6956 = vmatpush2.bf16.msra.mxu0 0
        %6957 = vmatprep.subr.bf16.mxu0 0
        %6958 = vmatpush2.bf16.msra.mxu0 0
        %6959 = vmatprep.subr.bf16.mxu0 0
        %6960 = vmatpush2.bf16.msra.mxu0 0
        %6961 = vmatprep.subr.bf16.mxu0 0
        %6962 = vmatpush2.bf16.msra.mxu0 0
        %6963 = vmatprep.subr.bf16.mxu0 0
        %6964 = vmatpush2.bf16.msra.mxu0 0
        %6965 = vmatprep.subr.bf16.mxu0 0
        %6966 = vmatpush2.bf16.msra.mxu0 0
        %6967 = vmatprep.subr.bf16.mxu0 0
        %6968 = vmatpush2.bf16.msra.mxu0 0
        %6969 = vmatprep.mubr.bf16.mxu0 0
        %6970 = vmatmul.mubr.bf16.gmra.mxu0 %v6929
        %v6971 = vpop.f32.mrf.mxu0
        %v6972 = vadd.f32 0.0, %v6971
        %v6973 = vpop.f32.mrf.mxu0
        %v6974 = vadd.f32 0.0, %v6973
        %v6975 = vpop.f32.mrf.mxu0
        %v6976 = vpop.f32.mrf.mxu0
        %6977 = vdwg.mxu0
        %v6978 = vadd.f32 %v6919, %v6972
        %v6979 = vadd.f32 %v6920, %v6974
        %v6980 = vmul.f32 %v6666, %v6368
        %v6981 = vmul.f32 %v6667, %v6371
        %s6982 = scalar_lea.vmem %s7, 20
        %v6983 = vld [vmem:[%s6982] sm:$0xf]
        %v6984 = vpack.c.bf16 %v6980, %v6980
        %v6985 = vpack.c.bf16 %v6981, %v6981
        %6988 = vrot.lane.b32.xlu0 %v6984, 95
        %v6989 = vpop.permute.xlu0 %6988
        %6990 = vrot.lane.b32.xlu0 %v6985, 95
        %v6991 = vpop.permute.xlu0 %6990
        %v6992 = vsel %vm1977, %v6989, %v6991
        %v6994 = vsel %vm3034, %v6983, 0
        %v6997 = vsel %vm3038, %v6992, 0
        %v7000 = vsel %vm3038, %v6991, 0
        %7002 = vmatprep.subr.bf16.mxu0 0
        %7003 = vmatpush1.bf16.msra.mxu0 0
        %7004 = vmatprep.subr.bf16.mxu0 0
        %7005 = vmatpush1.bf16.msra.mxu0 0
        %7006 = vmatprep.subr.bf16.mxu0 0
        %7007 = vmatpush1.bf16.msra.mxu0 0
        %7008 = vmatprep.subr.bf16.mxu0 0
        %7009 = vmatpush1.bf16.msra.mxu0 0
        %7010 = vmatprep.subr.bf16.mxu0 0
        %7011 = vmatpush1.bf16.msra.mxu0 0
        %7012 = vmatprep.subr.bf16.mxu0 0
        %7013 = vmatpush1.bf16.msra.mxu0 0
        %7014 = vmatprep.subr.bf16.mxu0 0
        %7015 = vmatpush1.bf16.msra.mxu0 0
        %7016 = vmatprep.subr.bf16.mxu0 %v7000
        %7017 = vmatpush1.bf16.msra.mxu0 %v6997
        %7018 = vmatprep.subr.bf16.mxu0 0
        %7019 = vmatpush2.bf16.msra.mxu0 0
        %7020 = vmatprep.subr.bf16.mxu0 0
        %7021 = vmatpush2.bf16.msra.mxu0 0
        %7022 = vmatprep.subr.bf16.mxu0 0
        %7023 = vmatpush2.bf16.msra.mxu0 0
        %7024 = vmatprep.subr.bf16.mxu0 0
        %7025 = vmatpush2.bf16.msra.mxu0 0
        %7026 = vmatprep.subr.bf16.mxu0 0
        %7027 = vmatpush2.bf16.msra.mxu0 0
        %7028 = vmatprep.subr.bf16.mxu0 0
        %7029 = vmatpush2.bf16.msra.mxu0 0
        %7030 = vmatprep.subr.bf16.mxu0 0
        %7031 = vmatpush2.bf16.msra.mxu0 0
        %7032 = vmatprep.subr.bf16.mxu0 0
        %7033 = vmatpush2.bf16.msra.mxu0 0
        %7034 = vmatprep.mubr.bf16.mxu0 0
        %7035 = vmatmul.mubr.bf16.gmra.mxu0 %v6994
        %v7036 = vpop.f32.mrf.mxu0
        %v7037 = vadd.f32 0.0, %v7036
        %v7038 = vpop.f32.mrf.mxu0
        %v7039 = vadd.f32 0.0, %v7038
        %v7040 = vpop.f32.mrf.mxu0
        %v7041 = vpop.f32.mrf.mxu0
        %7042 = vdwg.mxu0
        %v7043 = vadd.f32 %v6978, %v7037
        %v7044 = vadd.f32 %v6979, %v7039
        %v7045 = vmul.f32 %v6666, %v6440
        %v7046 = vmul.f32 %v6667, %v6444
        %s7047 = scalar_lea.vmem %s7, 24
        %v7048 = vld [vmem:[%s7047] sm:$0xf]
        %v7049 = vpack.c.bf16 %v7045, %v7045
        %v7050 = vpack.c.bf16 %v7046, %v7046
        %7053 = vrot.lane.b32.xlu0 %v7049, 83
        %v7054 = vpop.permute.xlu0 %7053
        %7055 = vrot.lane.b32.xlu0 %v7050, 83
        %v7056 = vpop.permute.xlu0 %7055
        %v7057 = vsel %vm6459, %v7054, %v7056
        %v7059 = vsel %vm3034, %v7048, 0
        %v7062 = vsel %vm3038, %v7057, 0
        %v7065 = vsel %vm3038, %v7056, 0
        %7067 = vmatprep.subr.bf16.mxu0 0
        %7068 = vmatpush1.bf16.msra.mxu0 0
        %7069 = vmatprep.subr.bf16.mxu0 0
        %7070 = vmatpush1.bf16.msra.mxu0 0
        %7071 = vmatprep.subr.bf16.mxu0 0
        %7072 = vmatpush1.bf16.msra.mxu0 0
        %7073 = vmatprep.subr.bf16.mxu0 0
        %7074 = vmatpush1.bf16.msra.mxu0 0
        %7075 = vmatprep.subr.bf16.mxu0 0
        %7076 = vmatpush1.bf16.msra.mxu0 0
        %7077 = vmatprep.subr.bf16.mxu0 0
        %7078 = vmatpush1.bf16.msra.mxu0 0
        %7079 = vmatprep.subr.bf16.mxu0 0
        %7080 = vmatpush1.bf16.msra.mxu0 0
        %7081 = vmatprep.subr.bf16.mxu0 %v7065
        %7082 = vmatpush1.bf16.msra.mxu0 %v7062
        %7083 = vmatprep.subr.bf16.mxu0 0
        %7084 = vmatpush2.bf16.msra.mxu0 0
        %7085 = vmatprep.subr.bf16.mxu0 0
        %7086 = vmatpush2.bf16.msra.mxu0 0
        %7087 = vmatprep.subr.bf16.mxu0 0
        %7088 = vmatpush2.bf16.msra.mxu0 0
        %7089 = vmatprep.subr.bf16.mxu0 0
        %7090 = vmatpush2.bf16.msra.mxu0 0
        %7091 = vmatprep.subr.bf16.mxu0 0
        %7092 = vmatpush2.bf16.msra.mxu0 0
        %7093 = vmatprep.subr.bf16.mxu0 0
        %7094 = vmatpush2.bf16.msra.mxu0 0
        %7095 = vmatprep.subr.bf16.mxu0 0
        %7096 = vmatpush2.bf16.msra.mxu0 0
        %7097 = vmatprep.subr.bf16.mxu0 0
        %7098 = vmatpush2.bf16.msra.mxu0 0
        %7099 = vmatprep.mubr.bf16.mxu0 0
        %7100 = vmatmul.mubr.bf16.gmra.mxu0 %v7059
        %v7101 = vpop.f32.mrf.mxu0
        %v7102 = vadd.f32 0.0, %v7101
        %v7103 = vpop.f32.mrf.mxu0
        %v7104 = vadd.f32 0.0, %v7103
        %v7105 = vpop.f32.mrf.mxu0
        %v7106 = vpop.f32.mrf.mxu0
        %7107 = vdwg.mxu0
        %v7108 = vadd.f32 %v7043, %v7102
        %v7109 = vadd.f32 %v7044, %v7104
        %s7110 = scalar_lea.vmem %s7, 28
        %v7111 = vld [vmem:[%s7110] sm:$0xf]
        %7112 = vrot.lane.b32.xlu0 %v6675, 82
        %v7113 = vpop.permute.xlu0 %7112
        %7114 = vrot.lane.b32.xlu0 %v6676, 82
        %v7115 = vpop.permute.xlu0 %7114
        %v7116 = vsel %vm6519, %v7113, %v7115
        %v7118 = vsel %vm3034, %v7111, 0
        %v7121 = vsel %vm3038, %v7116, 0
        %v7124 = vsel %vm3038, %v7115, 0
        %7126 = vmatprep.subr.bf16.mxu0 0
        %7127 = vmatpush1.bf16.msra.mxu0 0
        %7128 = vmatprep.subr.bf16.mxu0 0
        %7129 = vmatpush1.bf16.msra.mxu0 0
        %7130 = vmatprep.subr.bf16.mxu0 0
        %7131 = vmatpush1.bf16.msra.mxu0 0
        %7132 = vmatprep.subr.bf16.mxu0 0
        %7133 = vmatpush1.bf16.msra.mxu0 0
        %7134 = vmatprep.subr.bf16.mxu0 0
        %7135 = vmatpush1.bf16.msra.mxu0 0
        %7136 = vmatprep.subr.bf16.mxu0 0
        %7137 = vmatpush1.bf16.msra.mxu0 0
        %7138 = vmatprep.subr.bf16.mxu0 0
        %7139 = vmatpush1.bf16.msra.mxu0 0
        %7140 = vmatprep.subr.bf16.mxu0 %v7124
        %7141 = vmatpush1.bf16.msra.mxu0 %v7121
        %7142 = vmatprep.subr.bf16.mxu0 0
        %7143 = vmatpush2.bf16.msra.mxu0 0
        %7144 = vmatprep.subr.bf16.mxu0 0
        %7145 = vmatpush2.bf16.msra.mxu0 0
        %7146 = vmatprep.subr.bf16.mxu0 0
        %7147 = vmatpush2.bf16.msra.mxu0 0
        %7148 = vmatprep.subr.bf16.mxu0 0
        %7149 = vmatpush2.bf16.msra.mxu0 0
        %7150 = vmatprep.subr.bf16.mxu0 0
        %7151 = vmatpush2.bf16.msra.mxu0 0
        %7152 = vmatprep.subr.bf16.mxu0 0
        %7153 = vmatpush2.bf16.msra.mxu0 0
        %7154 = vmatprep.subr.bf16.mxu0 0
        %7155 = vmatpush2.bf16.msra.mxu0 0
        %7156 = vmatprep.subr.bf16.mxu0 0
        %7157 = vmatpush2.bf16.msra.mxu0 0
        %7158 = vmatprep.mubr.bf16.mxu0 0
        %7159 = vmatmul.mubr.bf16.gmra.mxu0 %v7118
        %v7160 = vpop.f32.mrf.mxu0
        %v7161 = vadd.f32 0.0, %v7160
        %v7162 = vpop.f32.mrf.mxu0
        %v7163 = vadd.f32 0.0, %v7162
        %v7164 = vpop.f32.mrf.mxu0
        %v7165 = vpop.f32.mrf.mxu0
        %7166 = vdwg.mxu0
        %v7167 = vadd.f32 %v7108, %v7161
        %v7168 = vadd.f32 %v7109, %v7163
        %v7169 = vmul.f32 %v6666, %v6574
        %v7170 = vmul.f32 %v6667, %v6578
        %s7171 = scalar_lea.vmem %s7, 32
        %v7172 = vld [vmem:[%s7171] sm:$0xf]
        %v7173 = vpack.c.bf16 %v7169, %v7169
        %v7174 = vpack.c.bf16 %v7170, %v7170
        %7177 = vrot.lane.b32.xlu0 %v7173, 81
        %v7178 = vpop.permute.xlu0 %7177
        %7179 = vrot.lane.b32.xlu0 %v7174, 81
        %v7180 = vpop.permute.xlu0 %7179
        %v7181 = vsel %vm6593, %v7178, %v7180
        %v7183 = vsel %vm3034, %v7172, 0
        %v7186 = vsel %vm3038, %v7181, 0
        %v7189 = vsel %vm3038, %v7180, 0
        %7191 = vmatprep.subr.bf16.mxu0 0
        %7192 = vmatpush1.bf16.msra.mxu0 0
        %7193 = vmatprep.subr.bf16.mxu0 0
        %7194 = vmatpush1.bf16.msra.mxu0 0
        %7195 = vmatprep.subr.bf16.mxu0 0
        %7196 = vmatpush1.bf16.msra.mxu0 0
        %7197 = vmatprep.subr.bf16.mxu0 0
        %7198 = vmatpush1.bf16.msra.mxu0 0
        %7199 = vmatprep.subr.bf16.mxu0 0
        %7200 = vmatpush1.bf16.msra.mxu0 0
        %7201 = vmatprep.subr.bf16.mxu0 0
        %7202 = vmatpush1.bf16.msra.mxu0 0
        %7203 = vmatprep.subr.bf16.mxu0 0
        %7204 = vmatpush1.bf16.msra.mxu0 0
        %7205 = vmatprep.subr.bf16.mxu0 %v7189
        %7206 = vmatpush1.bf16.msra.mxu0 %v7186
        %7207 = vmatprep.subr.bf16.mxu0 0
        %7208 = vmatpush2.bf16.msra.mxu0 0
        %7209 = vmatprep.subr.bf16.mxu0 0
        %7210 = vmatpush2.bf16.msra.mxu0 0
        %7211 = vmatprep.subr.bf16.mxu0 0
        %7212 = vmatpush2.bf16.msra.mxu0 0
        %7213 = vmatprep.subr.bf16.mxu0 0
        %7214 = vmatpush2.bf16.msra.mxu0 0
        %7215 = vmatprep.subr.bf16.mxu0 0
        %7216 = vmatpush2.bf16.msra.mxu0 0
        %7217 = vmatprep.subr.bf16.mxu0 0
        %7218 = vmatpush2.bf16.msra.mxu0 0
        %7219 = vmatprep.subr.bf16.mxu0 0
        %7220 = vmatpush2.bf16.msra.mxu0 0
        %7221 = vmatprep.subr.bf16.mxu0 0
        %7222 = vmatpush2.bf16.msra.mxu0 0
        %7223 = vmatprep.mubr.bf16.mxu0 0
        %7224 = vmatmul.mubr.bf16.gmra.mxu0 %v7183
        %v7225 = vpop.f32.mrf.mxu0
        %v7226 = vadd.f32 0.0, %v7225
        %v7227 = vpop.f32.mrf.mxu0
        %v7228 = vadd.f32 0.0, %v7227
        %v7229 = vpop.f32.mrf.mxu0
        %v7230 = vpop.f32.mrf.mxu0
        %7231 = vdwg.mxu0
        %v7232 = vadd.f32 %v7167, %v7226
        %v7233 = vadd.f32 %v7168, %v7228
        %v7234 = vld [vmem:[%s8] sm:$0xff]
        %7236 = vset.pattern.permute.xlu0 0
        %7237 = vperm.xlu0 %7236, %v7234
        %v7238 = vpop.permute.xlu0 %7237
        %v7240 = vadd.f32 %v7232, %v7238
        %v7241 = vadd.f32 %v7233, %v7238
        %v7242 = vmax.f32 %v7240, 0.0
        %v7243 = vmax.f32 %v7241, 0.0
        %7246 = vrot.lane.b32.xlu0 %v7242, 32
        %v7247 = vpop.permute.xlu0 %7246
        %7248 = vrot.lane.b32.xlu0 %v7243, 32
        %v7249 = vpop.permute.xlu0 %7248
        %v7250 = vsel %vm518, %v7247, %v7249
        %v7253 = vsel %vm518, 0.0, %v7247
        %v7254 = vsel %vm5985, %v7250, 0.0
        %7257 = vrot.lane.b32.xlu0 %v7253, 95
        %v7258 = vpop.permute.xlu0 %7257
        %7259 = vrot.lane.b32.xlu0 %v7254, 95
        %v7260 = vpop.permute.xlu0 %7259
        %v7261 = vsel %vm5121, %v7258, %v7260
        %v7264 = vmax.f32 %v7242, %v7261
        %v7265 = vmax.f32 %v7243, %v7260
        %7266 = vrot.lane.b32.xlu0 %v7253, 82
        %v7267 = vpop.permute.xlu0 %7266
        %7268 = vrot.lane.b32.xlu0 %v7254, 82
        %v7269 = vpop.permute.xlu0 %7268
        %vm7270 = vcmask 670720
        %v7271 = vsel %vm7270, %v7267, %v7269
        %v7274 = vmax.f32 %v7264, %v7271
        %v7275 = vmax.f32 %v7265, %v7269
        %7276 = vrot.lane.b32.xlu0 %v7253, 81
        %v7277 = vpop.permute.xlu0 %7276
        %7278 = vrot.lane.b32.xlu0 %v7254, 81
        %v7279 = vpop.permute.xlu0 %7278
        %vm7280 = vcmask 662528
        %v7281 = vsel %vm7280, %v7277, %v7279
        %v7284 = vmax.f32 %v7274, %v7281
        %v7285 = vmax.f32 %v7275, %v7279
        %v7286 = vpack.c.bf16 %v7284, %v7284
        %v7287 = vpack.c.bf16 %v7285, %v7285
        %v7288 = vld [vmem:[%s14] sm:$0xf]
        %v7289 = vld [vmem:[%s14 + $0x4] sm:$0xf]
        %v7290 = vld [vmem:[%s14 + $0x8] sm:$0xf]
        %v7291 = vld [vmem:[%s14 + $0xc] sm:$0xf]
        %v7292 = vld [vmem:[%s14 + $0x10] sm:$0xf]
        %v7293 = vld [vmem:[%s14 + $0x14] sm:$0xf]
        %v7294 = vld [vmem:[%s14 + $0x18] sm:$0xf]
        %v7295 = vld [vmem:[%s14 + $0x1c] sm:$0xf]
        %v7296 = vld [vmem:[%s14 + $0x20] sm:$0xf]
        %v7297 = vld [vmem:[%s14 + $0x24] sm:$0xf]
        %v7298 = vld [vmem:[%s14 + $0x28] sm:$0xf]
        %v7299 = vld [vmem:[%s14 + $0x2c] sm:$0xf]
        %v7300 = vld [vmem:[%s14 + $0x30] sm:$0xf]
        %v7301 = vld [vmem:[%s14 + $0x34] sm:$0xf]
        %v7302 = vld [vmem:[%s14 + $0x38] sm:$0xf]
        %v7303 = vld [vmem:[%s14 + $0x3c] sm:$0xf]
        %v7304 = vld [vmem:[%s14 + $0x40] sm:$0xf]
        %v7305 = vld [vmem:[%s14 + $0x44] sm:$0xf]
        %v7306 = vld [vmem:[%s14 + $0x48] sm:$0xf]
        %v7307 = vld [vmem:[%s14 + $0x4c] sm:$0xf]
        %v7308 = vld [vmem:[%s14 + $0x50] sm:$0xf]
        %v7309 = vld [vmem:[%s14 + $0x54] sm:$0xf]
        %v7310 = vld [vmem:[%s14 + $0x58] sm:$0xf]
        %v7311 = vld [vmem:[%s14 + $0x5c] sm:$0xf]
        %v7312 = vld [vmem:[%s14 + $0x60] sm:$0x3]
        %v7338 = vunpack.c.l.b16 %v7288
        %v7339 = vunpack.c.l.b16 %v7289
        %v7340 = vunpack.c.l.b16 %v7290
        %v7341 = vunpack.c.l.b16 %v7291
        %v7342 = vunpack.c.l.b16 %v7292
        %v7343 = vunpack.c.l.b16 %v7293
        %v7344 = vunpack.c.l.b16 %v7294
        %v7345 = vunpack.c.l.b16 %v7295
        %v7346 = vunpack.c.l.b16 %v7296
        %v7347 = vunpack.c.l.b16 %v7297
        %v7348 = vunpack.c.l.b16 %v7298
        %v7349 = vunpack.c.l.b16 %v7299
        %v7350 = vunpack.c.l.b16 %v7300
        %v7351 = vunpack.c.l.b16 %v7301
        %v7352 = vunpack.c.l.b16 %v7302
        %v7353 = vunpack.c.l.b16 %v7303
        %v7354 = vunpack.c.l.b16 %v7304
        %v7355 = vunpack.c.l.b16 %v7305
        %v7356 = vunpack.c.l.b16 %v7306
        %v7357 = vunpack.c.l.b16 %v7307
        %v7358 = vunpack.c.l.b16 %v7308
        %v7359 = vunpack.c.l.b16 %v7309
        %v7360 = vunpack.c.l.b16 %v7310
        %v7361 = vunpack.c.l.b16 %v7311
        %v7362 = vunpack.c.l.b16 %v7312
        %v7363 = vpack.c.b16 %v7339, %v7338
        %v7364 = vpack.c.b16 %v7341, %v7340
        %v7365 = vpack.c.b16 %v7343, %v7342
        %v7366 = vpack.c.b16 %v7345, %v7344
        %v7367 = vpack.c.b16 %v7347, %v7346
        %v7368 = vpack.c.b16 %v7349, %v7348
        %v7369 = vpack.c.b16 %v7351, %v7350
        %v7370 = vpack.c.b16 %v7353, %v7352
        %v7371 = vpack.c.b16 %v7355, %v7354
        %v7372 = vpack.c.b16 %v7357, %v7356
        %v7373 = vpack.c.b16 %v7359, %v7358
        %v7374 = vpack.c.b16 %v7361, %v7360
        %v7375 = vpack.c.b16 %v7362, %v7362
        %v7389 = vsel %vm5156, %v7287, 0
        %v7392 = vsel %vm693, %v7375, 0
        %7394 = vmatprep.subr.bf16.mxu0 0
        %7395 = vmatpush1.bf16.msra.mxu0 %v7370
        %7396 = vmatprep.subr.bf16.mxu0 0
        %7397 = vmatpush1.bf16.msra.mxu0 %v7369
        %7398 = vmatprep.subr.bf16.mxu0 0
        %7399 = vmatpush1.bf16.msra.mxu0 %v7368
        %7400 = vmatprep.subr.bf16.mxu0 0
        %7401 = vmatpush1.bf16.msra.mxu0 %v7367
        %7402 = vmatprep.subr.bf16.mxu0 0
        %7403 = vmatpush1.bf16.msra.mxu0 %v7366
        %7404 = vmatprep.subr.bf16.mxu0 0
        %7405 = vmatpush1.bf16.msra.mxu0 %v7365
        %7406 = vmatprep.subr.bf16.mxu0 0
        %7407 = vmatpush1.bf16.msra.mxu0 %v7364
        %7408 = vmatprep.subr.bf16.mxu0 0
        %7409 = vmatpush1.bf16.msra.mxu0 %v7363
        %7410 = vmatprep.subr.bf16.mxu0 0
        %7411 = vmatpush2.bf16.msra.mxu0 0
        %7412 = vmatprep.subr.bf16.mxu0 0
        %7413 = vmatpush2.bf16.msra.mxu0 0
        %7414 = vmatprep.subr.bf16.mxu0 0
        %7415 = vmatpush2.bf16.msra.mxu0 0
        %7416 = vmatprep.subr.bf16.mxu0 0
        %7417 = vmatpush2.bf16.msra.mxu0 %v7392
        %7418 = vmatprep.subr.bf16.mxu0 0
        %7419 = vmatpush2.bf16.msra.mxu0 %v7374
        %7420 = vmatprep.subr.bf16.mxu0 0
        %7421 = vmatpush2.bf16.msra.mxu0 %v7373
        %7422 = vmatprep.subr.bf16.mxu0 0
        %7423 = vmatpush2.bf16.msra.mxu0 %v7372
        %7424 = vmatprep.subr.bf16.mxu0 0
        %7425 = vmatpush2.bf16.msra.mxu0 %v7371
        %7426 = vmatprep.mubr.bf16.mxu0 %v7389
        %7427 = vmatmul.mubr.bf16.gmra.mxu0 %v7286
        %v7428 = vpop.f32.mrf.mxu0
        %v7429 = vadd.f32 0.0, %v7428
        %v7430 = vpop.f32.mrf.mxu0
        %v7431 = vpop.f32.mrf.mxu0
        %v7432 = vpop.f32.mrf.mxu0
        %7433 = vdwg.mxu0
        %v7434 = vld [vmem:[%s10] sm:$0x1]
        %v7435 = vpack.c.bf16 %v7429, %v7429
        %v7436 = vld [vmem:[%s9] sm:$0xf]
        %v7437 = vld [vmem:[%s9 + $0x4] sm:$0xf]
        %v7438 = vld [vmem:[%s9 + $0x8] sm:$0xf]
        %v7439 = vld [vmem:[%s9 + $0xc] sm:$0xf]
        %v7440 = vld [vmem:[%s9 + $0x10] sm:$0xf]
        %v7441 = vld [vmem:[%s9 + $0x14] sm:$0xf]
        %v7442 = vld [vmem:[%s9 + $0x18] sm:$0x1]
        %v7450 = vunpack.c.l.b16 %v7436
        %v7451 = vunpack.c.l.b16 %v7437
        %v7452 = vunpack.c.l.b16 %v7438
        %v7453 = vunpack.c.l.b16 %v7439
        %v7454 = vunpack.c.l.b16 %v7440
        %v7455 = vunpack.c.l.b16 %v7441
        %v7456 = vunpack.c.l.b16 %v7442
        %v7457 = vpack.c.b16 %v7451, %v7450
        %v7458 = vpack.c.b16 %v7453, %v7452
        %v7459 = vpack.c.b16 %v7455, %v7454
        %v7460 = vpack.c.b16 %v7456, %v7456
        %vm7464 = vcmask 400384
        %v7466 = vsel %vm7464, %v7435, 0
        %vm7468 = vcmask 1040384
        %v7469 = vsel 0, 4294967295, 65535
        %v7470 = vsel %vm7468, %v7469, 0
        %v7472 = vand.u32 %v7460, %v7470
        %7474 = vmatprep.subr.bf16.mxu0 0
        %7475 = vmatpush1.bf16.msra.mxu0 0
        %7476 = vmatprep.subr.bf16.mxu0 0
        %7477 = vmatpush1.bf16.msra.mxu0 0
        %7478 = vmatprep.subr.bf16.mxu0 0
        %7479 = vmatpush1.bf16.msra.mxu0 0
        %7480 = vmatprep.subr.bf16.mxu0 0
        %7481 = vmatpush1.bf16.msra.mxu0 0
        %7482 = vmatprep.subr.bf16.mxu0 0
        %7483 = vmatpush1.bf16.msra.mxu0 %v7472
        %7484 = vmatprep.subr.bf16.mxu0 0
        %7485 = vmatpush1.bf16.msra.mxu0 %v7459
        %7486 = vmatprep.subr.bf16.mxu0 0
        %7487 = vmatpush1.bf16.msra.mxu0 %v7458
        %7488 = vmatprep.subr.bf16.mxu0 0
        %7489 = vmatpush1.bf16.msra.mxu0 %v7457
        %7490 = vmatprep.subr.bf16.mxu0 0
        %7491 = vmatpush2.bf16.msra.mxu0 0
        %7492 = vmatprep.subr.bf16.mxu0 0
        %7493 = vmatpush2.bf16.msra.mxu0 0
        %7494 = vmatprep.subr.bf16.mxu0 0
        %7495 = vmatpush2.bf16.msra.mxu0 0
        %7496 = vmatprep.subr.bf16.mxu0 0
        %7497 = vmatpush2.bf16.msra.mxu0 0
        %7498 = vmatprep.subr.bf16.mxu0 0
        %7499 = vmatpush2.bf16.msra.mxu0 0
        %7500 = vmatprep.subr.bf16.mxu0 0
        %7501 = vmatpush2.bf16.msra.mxu0 0
        %7502 = vmatprep.subr.bf16.mxu0 0
        %7503 = vmatpush2.bf16.msra.mxu0 0
        %7504 = vmatprep.subr.bf16.mxu0 0
        %7505 = vmatpush2.bf16.msra.mxu0 0
        %7506 = vmatprep.mubr.bf16.mxu0 0
        %7507 = vmatmul.mubr.bf16.gmra.mxu0 %v7466
        %v7508 = vpop.f32.mrf.mxu0
        %v7509 = vadd.f32 0.0, %v7508
        %v7510 = vpop.f32.mrf.mxu0
        %v7511 = vpop.f32.mrf.mxu0
        %v7512 = vpop.f32.mrf.mxu0
        %7513 = vdwg.mxu0
        %v7514 = vadd.f32 %v7434, %v7509
        %s7515 = scalar_lea.vmem %s9, 28
        %v7516 = vld [vmem:[%s7515] sm:$0xf]
        %v7517 = vld [vmem:[%s7515 + $0x4] sm:$0xf]
        %v7518 = vld [vmem:[%s7515 + $0x8] sm:$0xf]
        %v7519 = vld [vmem:[%s7515 + $0xc] sm:$0xf]
        %v7520 = vld [vmem:[%s7515 + $0x10] sm:$0xf]
        %v7521 = vld [vmem:[%s7515 + $0x14] sm:$0xf]
        %v7522 = vld [vmem:[%s7515 + $0x18] sm:$0x1]
        %v7523 = vshrl.u32 %v7435, 16
        %v7532 = vunpack.c.l.b16 %v7516
        %v7533 = vunpack.c.l.b16 %v7517
        %v7534 = vunpack.c.l.b16 %v7518
        %v7535 = vunpack.c.l.b16 %v7519
        %v7536 = vunpack.c.l.b16 %v7520
        %v7537 = vunpack.c.l.b16 %v7521
        %v7538 = vunpack.c.l.b16 %v7522
        %v7539 = vpack.c.b16 %v7533, %v7532
        %v7540 = vpack.c.b16 %v7535, %v7534
        %v7541 = vpack.c.b16 %v7537, %v7536
        %v7542 = vpack.c.b16 %v7538, %v7538
        %v7547 = vsel %vm7464, %v7523, 0
        %v7550 = vand.u32 %v7542, %v7470
        %7552 = vmatprep.subr.bf16.mxu0 0
        %7553 = vmatpush1.bf16.msra.mxu0 0
        %7554 = vmatprep.subr.bf16.mxu0 0
        %7555 = vmatpush1.bf16.msra.mxu0 0
        %7556 = vmatprep.subr.bf16.mxu0 0
        %7557 = vmatpush1.bf16.msra.mxu0 0
        %7558 = vmatprep.subr.bf16.mxu0 0
        %7559 = vmatpush1.bf16.msra.mxu0 0
        %7560 = vmatprep.subr.bf16.mxu0 0
        %7561 = vmatpush1.bf16.msra.mxu0 %v7550
        %7562 = vmatprep.subr.bf16.mxu0 0
        %7563 = vmatpush1.bf16.msra.mxu0 %v7541
        %7564 = vmatprep.subr.bf16.mxu0 0
        %7565 = vmatpush1.bf16.msra.mxu0 %v7540
        %7566 = vmatprep.subr.bf16.mxu0 0
        %7567 = vmatpush1.bf16.msra.mxu0 %v7539
        %7568 = vmatprep.subr.bf16.mxu0 0
        %7569 = vmatpush2.bf16.msra.mxu0 0
        %7570 = vmatprep.subr.bf16.mxu0 0
        %7571 = vmatpush2.bf16.msra.mxu0 0
        %7572 = vmatprep.subr.bf16.mxu0 0
        %7573 = vmatpush2.bf16.msra.mxu0 0
        %7574 = vmatprep.subr.bf16.mxu0 0
        %7575 = vmatpush2.bf16.msra.mxu0 0
        %7576 = vmatprep.subr.bf16.mxu0 0
        %7577 = vmatpush2.bf16.msra.mxu0 0
        %7578 = vmatprep.subr.bf16.mxu0 0
        %7579 = vmatpush2.bf16.msra.mxu0 0
        %7580 = vmatprep.subr.bf16.mxu0 0
        %7581 = vmatpush2.bf16.msra.mxu0 0
        %7582 = vmatprep.subr.bf16.mxu0 0
        %7583 = vmatpush2.bf16.msra.mxu0 0
        %7584 = vmatprep.mubr.bf16.mxu0 0
        %7585 = vmatmul.mubr.bf16.gmra.mxu0 %v7547
        %v7586 = vpop.f32.mrf.mxu0
        %v7587 = vadd.f32 0.0, %v7586
        %v7588 = vpop.f32.mrf.mxu0
        %v7589 = vpop.f32.mrf.mxu0
        %v7590 = vpop.f32.mrf.mxu0
        %7591 = vdwg.mxu0
        %v7592 = vadd.f32 %v7514, %v7587
        %s7593 = scalar_lea.vmem %s9, 56
        %v7594 = vld [vmem:[%s7593] sm:$0xf]
        %v7595 = vld [vmem:[%s7593 + $0x4] sm:$0xf]
        %v7596 = vld [vmem:[%s7593 + $0x8] sm:$0xf]
        %v7597 = vld [vmem:[%s7593 + $0xc] sm:$0xf]
        %v7598 = vld [vmem:[%s7593 + $0x10] sm:$0xf]
        %v7599 = vld [vmem:[%s7593 + $0x14] sm:$0xf]
        %v7600 = vld [vmem:[%s7593 + $0x18] sm:$0x1]
        %v7602 = vrot.slane %v7435, 1
        %v7610 = vunpack.c.l.b16 %v7594
        %v7611 = vunpack.c.l.b16 %v7595
        %v7612 = vunpack.c.l.b16 %v7596
        %v7613 = vunpack.c.l.b16 %v7597
        %v7614 = vunpack.c.l.b16 %v7598
        %v7615 = vunpack.c.l.b16 %v7599
        %v7616 = vunpack.c.l.b16 %v7600
        %v7617 = vpack.c.b16 %v7611, %v7610
        %v7618 = vpack.c.b16 %v7613, %v7612
        %v7619 = vpack.c.b16 %v7615, %v7614
        %v7620 = vpack.c.b16 %v7616, %v7616
        %v7625 = vsel %vm7464, %v7602, 0
        %v7628 = vand.u32 %v7620, %v7470
        %7630 = vmatprep.subr.bf16.mxu0 0
        %7631 = vmatpush1.bf16.msra.mxu0 0
        %7632 = vmatprep.subr.bf16.mxu0 0
        %7633 = vmatpush1.bf16.msra.mxu0 0
        %7634 = vmatprep.subr.bf16.mxu0 0
        %7635 = vmatpush1.bf16.msra.mxu0 0
        %7636 = vmatprep.subr.bf16.mxu0 0
        %7637 = vmatpush1.bf16.msra.mxu0 0
        %7638 = vmatprep.subr.bf16.mxu0 0
        %7639 = vmatpush1.bf16.msra.mxu0 %v7628
        %7640 = vmatprep.subr.bf16.mxu0 0
        %7641 = vmatpush1.bf16.msra.mxu0 %v7619
        %7642 = vmatprep.subr.bf16.mxu0 0
        %7643 = vmatpush1.bf16.msra.mxu0 %v7618
        %7644 = vmatprep.subr.bf16.mxu0 0
        %7645 = vmatpush1.bf16.msra.mxu0 %v7617
        %7646 = vmatprep.subr.bf16.mxu0 0
        %7647 = vmatpush2.bf16.msra.mxu0 0
        %7648 = vmatprep.subr.bf16.mxu0 0
        %7649 = vmatpush2.bf16.msra.mxu0 0
        %7650 = vmatprep.subr.bf16.mxu0 0
        %7651 = vmatpush2.bf16.msra.mxu0 0
        %7652 = vmatprep.subr.bf16.mxu0 0
        %7653 = vmatpush2.bf16.msra.mxu0 0
        %7654 = vmatprep.subr.bf16.mxu0 0
        %7655 = vmatpush2.bf16.msra.mxu0 0
        %7656 = vmatprep.subr.bf16.mxu0 0
        %7657 = vmatpush2.bf16.msra.mxu0 0
        %7658 = vmatprep.subr.bf16.mxu0 0
        %7659 = vmatpush2.bf16.msra.mxu0 0
        %7660 = vmatprep.subr.bf16.mxu0 0
        %7661 = vmatpush2.bf16.msra.mxu0 0
        %7662 = vmatprep.mubr.bf16.mxu0 0
        %7663 = vmatmul.mubr.bf16.gmra.mxu0 %v7625
        %v7664 = vpop.f32.mrf.mxu0
        %v7665 = vadd.f32 0.0, %v7664
        %v7666 = vpop.f32.mrf.mxu0
        %v7667 = vpop.f32.mrf.mxu0
        %v7668 = vpop.f32.mrf.mxu0
        %7669 = vdwg.mxu0
        %v7670 = vadd.f32 %v7592, %v7665
        %s7671 = scalar_lea.vmem %s9, 84
        %v7672 = vld [vmem:[%s7671] sm:$0xf]
        %v7673 = vld [vmem:[%s7671 + $0x4] sm:$0xf]
        %v7674 = vld [vmem:[%s7671 + $0x8] sm:$0xf]
        %v7675 = vld [vmem:[%s7671 + $0xc] sm:$0xf]
        %v7676 = vld [vmem:[%s7671 + $0x10] sm:$0xf]
        %v7677 = vld [vmem:[%s7671 + $0x14] sm:$0xf]
        %v7678 = vld [vmem:[%s7671 + $0x18] sm:$0x1]
        %v7679 = vrot.slane %v7523, 1
        %v7687 = vunpack.c.l.b16 %v7672
        %v7688 = vunpack.c.l.b16 %v7673
        %v7689 = vunpack.c.l.b16 %v7674
        %v7690 = vunpack.c.l.b16 %v7675
        %v7691 = vunpack.c.l.b16 %v7676
        %v7692 = vunpack.c.l.b16 %v7677
        %v7693 = vunpack.c.l.b16 %v7678
        %v7694 = vpack.c.b16 %v7688, %v7687
        %v7695 = vpack.c.b16 %v7690, %v7689
        %v7696 = vpack.c.b16 %v7692, %v7691
        %v7697 = vpack.c.b16 %v7693, %v7693
        %v7702 = vsel %vm7464, %v7679, 0
        %v7705 = vand.u32 %v7697, %v7470
        %7707 = vmatprep.subr.bf16.mxu0 0
        %7708 = vmatpush1.bf16.msra.mxu0 0
        %7709 = vmatprep.subr.bf16.mxu0 0
        %7710 = vmatpush1.bf16.msra.mxu0 0
        %7711 = vmatprep.subr.bf16.mxu0 0
        %7712 = vmatpush1.bf16.msra.mxu0 0
        %7713 = vmatprep.subr.bf16.mxu0 0
        %7714 = vmatpush1.bf16.msra.mxu0 0
        %7715 = vmatprep.subr.bf16.mxu0 0
        %7716 = vmatpush1.bf16.msra.mxu0 %v7705
        %7717 = vmatprep.subr.bf16.mxu0 0
        %7718 = vmatpush1.bf16.msra.mxu0 %v7696
        %7719 = vmatprep.subr.bf16.mxu0 0
        %7720 = vmatpush1.bf16.msra.mxu0 %v7695
        %7721 = vmatprep.subr.bf16.mxu0 0
        %7722 = vmatpush1.bf16.msra.mxu0 %v7694
        %7723 = vmatprep.subr.bf16.mxu0 0
        %7724 = vmatpush2.bf16.msra.mxu0 0
        %7725 = vmatprep.subr.bf16.mxu0 0
        %7726 = vmatpush2.bf16.msra.mxu0 0
        %7727 = vmatprep.subr.bf16.mxu0 0
        %7728 = vmatpush2.bf16.msra.mxu0 0
        %7729 = vmatprep.subr.bf16.mxu0 0
        %7730 = vmatpush2.bf16.msra.mxu0 0
        %7731 = vmatprep.subr.bf16.mxu0 0
        %7732 = vmatpush2.bf16.msra.mxu0 0
        %7733 = vmatprep.subr.bf16.mxu0 0
        %7734 = vmatpush2.bf16.msra.mxu0 0
        %7735 = vmatprep.subr.bf16.mxu0 0
        %7736 = vmatpush2.bf16.msra.mxu0 0
        %7737 = vmatprep.subr.bf16.mxu0 0
        %7738 = vmatpush2.bf16.msra.mxu0 0
        %7739 = vmatprep.mubr.bf16.mxu0 0
        %7740 = vmatmul.mubr.bf16.gmra.mxu0 %v7702
        %v7741 = vpop.f32.mrf.mxu0
        %v7742 = vadd.f32 0.0, %v7741
        %v7743 = vpop.f32.mrf.mxu0
        %v7744 = vpop.f32.mrf.mxu0
        %v7745 = vpop.f32.mrf.mxu0
        %7746 = vdwg.mxu0
        %v7747 = vadd.f32 %v7670, %v7742
        %s7748 = scalar_lea.vmem %s9, 112
        %v7749 = vld [vmem:[%s7748] sm:$0xf]
        %v7750 = vld [vmem:[%s7748 + $0x4] sm:$0xf]
        %v7751 = vld [vmem:[%s7748 + $0x8] sm:$0xf]
        %v7752 = vld [vmem:[%s7748 + $0xc] sm:$0xf]
        %v7753 = vld [vmem:[%s7748 + $0x10] sm:$0xf]
        %v7754 = vld [vmem:[%s7748 + $0x14] sm:$0xf]
        %v7755 = vld [vmem:[%s7748 + $0x18] sm:$0x1]
        %v7756 = vrot.slane %v7435, 2
        %v7764 = vunpack.c.l.b16 %v7749
        %v7765 = vunpack.c.l.b16 %v7750
        %v7766 = vunpack.c.l.b16 %v7751
        %v7767 = vunpack.c.l.b16 %v7752
        %v7768 = vunpack.c.l.b16 %v7753
        %v7769 = vunpack.c.l.b16 %v7754
        %v7770 = vunpack.c.l.b16 %v7755
        %v7771 = vpack.c.b16 %v7765, %v7764
        %v7772 = vpack.c.b16 %v7767, %v7766
        %v7773 = vpack.c.b16 %v7769, %v7768
        %v7774 = vpack.c.b16 %v7770, %v7770
        %v7779 = vsel %vm7464, %v7756, 0
        %v7782 = vand.u32 %v7774, %v7470
        %7784 = vmatprep.subr.bf16.mxu0 0
        %7785 = vmatpush1.bf16.msra.mxu0 0
        %7786 = vmatprep.subr.bf16.mxu0 0
        %7787 = vmatpush1.bf16.msra.mxu0 0
        %7788 = vmatprep.subr.bf16.mxu0 0
        %7789 = vmatpush1.bf16.msra.mxu0 0
        %7790 = vmatprep.subr.bf16.mxu0 0
        %7791 = vmatpush1.bf16.msra.mxu0 0
        %7792 = vmatprep.subr.bf16.mxu0 0
        %7793 = vmatpush1.bf16.msra.mxu0 %v7782
        %7794 = vmatprep.subr.bf16.mxu0 0
        %7795 = vmatpush1.bf16.msra.mxu0 %v7773
        %7796 = vmatprep.subr.bf16.mxu0 0
        %7797 = vmatpush1.bf16.msra.mxu0 %v7772
        %7798 = vmatprep.subr.bf16.mxu0 0
        %7799 = vmatpush1.bf16.msra.mxu0 %v7771
        %7800 = vmatprep.subr.bf16.mxu0 0
        %7801 = vmatpush2.bf16.msra.mxu0 0
        %7802 = vmatprep.subr.bf16.mxu0 0
        %7803 = vmatpush2.bf16.msra.mxu0 0
        %7804 = vmatprep.subr.bf16.mxu0 0
        %7805 = vmatpush2.bf16.msra.mxu0 0
        %7806 = vmatprep.subr.bf16.mxu0 0
        %7807 = vmatpush2.bf16.msra.mxu0 0
        %7808 = vmatprep.subr.bf16.mxu0 0
        %7809 = vmatpush2.bf16.msra.mxu0 0
        %7810 = vmatprep.subr.bf16.mxu0 0
        %7811 = vmatpush2.bf16.msra.mxu0 0
        %7812 = vmatprep.subr.bf16.mxu0 0
        %7813 = vmatpush2.bf16.msra.mxu0 0
        %7814 = vmatprep.subr.bf16.mxu0 0
        %7815 = vmatpush2.bf16.msra.mxu0 0
        %7816 = vmatprep.mubr.bf16.mxu0 0
        %7817 = vmatmul.mubr.bf16.gmra.mxu0 %v7779
        %v7818 = vpop.f32.mrf.mxu0
        %v7819 = vadd.f32 0.0, %v7818
        %v7820 = vpop.f32.mrf.mxu0
        %v7821 = vpop.f32.mrf.mxu0
        %v7822 = vpop.f32.mrf.mxu0
        %7823 = vdwg.mxu0
        %v7824 = vadd.f32 %v7747, %v7819
        %s7825 = scalar_lea.vmem %s9, 140
        %v7826 = vld [vmem:[%s7825] sm:$0xf]
        %v7827 = vld [vmem:[%s7825 + $0x4] sm:$0xf]
        %v7828 = vld [vmem:[%s7825 + $0x8] sm:$0xf]
        %v7829 = vld [vmem:[%s7825 + $0xc] sm:$0xf]
        %v7830 = vld [vmem:[%s7825 + $0x10] sm:$0xf]
        %v7831 = vld [vmem:[%s7825 + $0x14] sm:$0xf]
        %v7832 = vld [vmem:[%s7825 + $0x18] sm:$0x1]
        %v7833 = vrot.slane %v7523, 2
        %v7841 = vunpack.c.l.b16 %v7826
        %v7842 = vunpack.c.l.b16 %v7827
        %v7843 = vunpack.c.l.b16 %v7828
        %v7844 = vunpack.c.l.b16 %v7829
        %v7845 = vunpack.c.l.b16 %v7830
        %v7846 = vunpack.c.l.b16 %v7831
        %v7847 = vunpack.c.l.b16 %v7832
        %v7848 = vpack.c.b16 %v7842, %v7841
        %v7849 = vpack.c.b16 %v7844, %v7843
        %v7850 = vpack.c.b16 %v7846, %v7845
        %v7851 = vpack.c.b16 %v7847, %v7847
        %v7856 = vsel %vm7464, %v7833, 0
        %v7859 = vand.u32 %v7851, %v7470
        %7861 = vmatprep.subr.bf16.mxu0 0
        %7862 = vmatpush1.bf16.msra.mxu0 0
        %7863 = vmatprep.subr.bf16.mxu0 0
        %7864 = vmatpush1.bf16.msra.mxu0 0
        %7865 = vmatprep.subr.bf16.mxu0 0
        %7866 = vmatpush1.bf16.msra.mxu0 0
        %7867 = vmatprep.subr.bf16.mxu0 0
        %7868 = vmatpush1.bf16.msra.mxu0 0
        %7869 = vmatprep.subr.bf16.mxu0 0
        %7870 = vmatpush1.bf16.msra.mxu0 %v7859
        %7871 = vmatprep.subr.bf16.mxu0 0
        %7872 = vmatpush1.bf16.msra.mxu0 %v7850
        %7873 = vmatprep.subr.bf16.mxu0 0
        %7874 = vmatpush1.bf16.msra.mxu0 %v7849
        %7875 = vmatprep.subr.bf16.mxu0 0
        %7876 = vmatpush1.bf16.msra.mxu0 %v7848
        %7877 = vmatprep.subr.bf16.mxu0 0
        %7878 = vmatpush2.bf16.msra.mxu0 0
        %7879 = vmatprep.subr.bf16.mxu0 0
        %7880 = vmatpush2.bf16.msra.mxu0 0
        %7881 = vmatprep.subr.bf16.mxu0 0
        %7882 = vmatpush2.bf16.msra.mxu0 0
        %7883 = vmatprep.subr.bf16.mxu0 0
        %7884 = vmatpush2.bf16.msra.mxu0 0
        %7885 = vmatprep.subr.bf16.mxu0 0
        %7886 = vmatpush2.bf16.msra.mxu0 0
        %7887 = vmatprep.subr.bf16.mxu0 0
        %7888 = vmatpush2.bf16.msra.mxu0 0
        %7889 = vmatprep.subr.bf16.mxu0 0
        %7890 = vmatpush2.bf16.msra.mxu0 0
        %7891 = vmatprep.subr.bf16.mxu0 0
        %7892 = vmatpush2.bf16.msra.mxu0 0
        %7893 = vmatprep.mubr.bf16.mxu0 0
        %7894 = vmatmul.mubr.bf16.gmra.mxu0 %v7856
        %v7895 = vpop.f32.mrf.mxu0
        %v7896 = vadd.f32 0.0, %v7895
        %v7897 = vpop.f32.mrf.mxu0
        %v7898 = vpop.f32.mrf.mxu0
        %v7899 = vpop.f32.mrf.mxu0
        %7900 = vdwg.mxu0
        %v7901 = vadd.f32 %v7824, %v7896
        %s7902 = scalar_lea.vmem %s9, 168
        %v7903 = vld [vmem:[%s7902] sm:$0xf]
        %v7904 = vld [vmem:[%s7902 + $0x4] sm:$0xf]
        %v7905 = vld [vmem:[%s7902 + $0x8] sm:$0xf]
        %v7906 = vld [vmem:[%s7902 + $0xc] sm:$0xf]
        %v7907 = vld [vmem:[%s7902 + $0x10] sm:$0xf]
        %v7908 = vld [vmem:[%s7902 + $0x14] sm:$0xf]
        %v7909 = vld [vmem:[%s7902 + $0x18] sm:$0x1]
        %v7910 = vrot.slane %v7435, 3
        %v7918 = vunpack.c.l.b16 %v7903
        %v7919 = vunpack.c.l.b16 %v7904
        %v7920 = vunpack.c.l.b16 %v7905
        %v7921 = vunpack.c.l.b16 %v7906
        %v7922 = vunpack.c.l.b16 %v7907
        %v7923 = vunpack.c.l.b16 %v7908
        %v7924 = vunpack.c.l.b16 %v7909
        %v7925 = vpack.c.b16 %v7919, %v7918
        %v7926 = vpack.c.b16 %v7921, %v7920
        %v7927 = vpack.c.b16 %v7923, %v7922
        %v7928 = vpack.c.b16 %v7924, %v7924
        %v7933 = vsel %vm7464, %v7910, 0
        %v7936 = vand.u32 %v7928, %v7470
        %7938 = vmatprep.subr.bf16.mxu0 0
        %7939 = vmatpush1.bf16.msra.mxu0 0
        %7940 = vmatprep.subr.bf16.mxu0 0
        %7941 = vmatpush1.bf16.msra.mxu0 0
        %7942 = vmatprep.subr.bf16.mxu0 0
        %7943 = vmatpush1.bf16.msra.mxu0 0
        %7944 = vmatprep.subr.bf16.mxu0 0
        %7945 = vmatpush1.bf16.msra.mxu0 0
        %7946 = vmatprep.subr.bf16.mxu0 0
        %7947 = vmatpush1.bf16.msra.mxu0 %v7936
        %7948 = vmatprep.subr.bf16.mxu0 0
        %7949 = vmatpush1.bf16.msra.mxu0 %v7927
        %7950 = vmatprep.subr.bf16.mxu0 0
        %7951 = vmatpush1.bf16.msra.mxu0 %v7926
        %7952 = vmatprep.subr.bf16.mxu0 0
        %7953 = vmatpush1.bf16.msra.mxu0 %v7925
        %7954 = vmatprep.subr.bf16.mxu0 0
        %7955 = vmatpush2.bf16.msra.mxu0 0
        %7956 = vmatprep.subr.bf16.mxu0 0
        %7957 = vmatpush2.bf16.msra.mxu0 0
        %7958 = vmatprep.subr.bf16.mxu0 0
        %7959 = vmatpush2.bf16.msra.mxu0 0
        %7960 = vmatprep.subr.bf16.mxu0 0
        %7961 = vmatpush2.bf16.msra.mxu0 0
        %7962 = vmatprep.subr.bf16.mxu0 0
        %7963 = vmatpush2.bf16.msra.mxu0 0
        %7964 = vmatprep.subr.bf16.mxu0 0
        %7965 = vmatpush2.bf16.msra.mxu0 0
        %7966 = vmatprep.subr.bf16.mxu0 0
        %7967 = vmatpush2.bf16.msra.mxu0 0
        %7968 = vmatprep.subr.bf16.mxu0 0
        %7969 = vmatpush2.bf16.msra.mxu0 0
        %7970 = vmatprep.mubr.bf16.mxu0 0
        %7971 = vmatmul.mubr.bf16.gmra.mxu0 %v7933
        %v7972 = vpop.f32.mrf.mxu0
        %v7973 = vadd.f32 0.0, %v7972
        %v7974 = vpop.f32.mrf.mxu0
        %v7975 = vpop.f32.mrf.mxu0
        %v7976 = vpop.f32.mrf.mxu0
        %7977 = vdwg.mxu0
        %v7978 = vadd.f32 %v7901, %v7973
        %s7979 = scalar_lea.vmem %s9, 196
        %v7980 = vld [vmem:[%s7979] sm:$0xf]
        %v7981 = vld [vmem:[%s7979 + $0x4] sm:$0xf]
        %v7982 = vld [vmem:[%s7979 + $0x8] sm:$0xf]
        %v7983 = vld [vmem:[%s7979 + $0xc] sm:$0xf]
        %v7984 = vld [vmem:[%s7979 + $0x10] sm:$0xf]
        %v7985 = vld [vmem:[%s7979 + $0x14] sm:$0xf]
        %v7986 = vld [vmem:[%s7979 + $0x18] sm:$0x1]
        %v7987 = vrot.slane %v7523, 3
        %v7995 = vunpack.c.l.b16 %v7980
        %v7996 = vunpack.c.l.b16 %v7981
        %v7997 = vunpack.c.l.b16 %v7982
        %v7998 = vunpack.c.l.b16 %v7983
        %v7999 = vunpack.c.l.b16 %v7984
        %v8000 = vunpack.c.l.b16 %v7985
        %v8001 = vunpack.c.l.b16 %v7986
        %v8002 = vpack.c.b16 %v7996, %v7995
        %v8003 = vpack.c.b16 %v7998, %v7997
        %v8004 = vpack.c.b16 %v8000, %v7999
        %v8005 = vpack.c.b16 %v8001, %v8001
        %v8010 = vsel %vm7464, %v7987, 0
        %v8013 = vand.u32 %v8005, %v7470
        %8015 = vmatprep.subr.bf16.mxu0 0
        %8016 = vmatpush1.bf16.msra.mxu0 0
        %8017 = vmatprep.subr.bf16.mxu0 0
        %8018 = vmatpush1.bf16.msra.mxu0 0
        %8019 = vmatprep.subr.bf16.mxu0 0
        %8020 = vmatpush1.bf16.msra.mxu0 0
        %8021 = vmatprep.subr.bf16.mxu0 0
        %8022 = vmatpush1.bf16.msra.mxu0 0
        %8023 = vmatprep.subr.bf16.mxu0 0
        %8024 = vmatpush1.bf16.msra.mxu0 %v8013
        %8025 = vmatprep.subr.bf16.mxu0 0
        %8026 = vmatpush1.bf16.msra.mxu0 %v8004
        %8027 = vmatprep.subr.bf16.mxu0 0
        %8028 = vmatpush1.bf16.msra.mxu0 %v8003
        %8029 = vmatprep.subr.bf16.mxu0 0
        %8030 = vmatpush1.bf16.msra.mxu0 %v8002
        %8031 = vmatprep.subr.bf16.mxu0 0
        %8032 = vmatpush2.bf16.msra.mxu0 0
        %8033 = vmatprep.subr.bf16.mxu0 0
        %8034 = vmatpush2.bf16.msra.mxu0 0
        %8035 = vmatprep.subr.bf16.mxu0 0
        %8036 = vmatpush2.bf16.msra.mxu0 0
        %8037 = vmatprep.subr.bf16.mxu0 0
        %8038 = vmatpush2.bf16.msra.mxu0 0
        %8039 = vmatprep.subr.bf16.mxu0 0
        %8040 = vmatpush2.bf16.msra.mxu0 0
        %8041 = vmatprep.subr.bf16.mxu0 0
        %8042 = vmatpush2.bf16.msra.mxu0 0
        %8043 = vmatprep.subr.bf16.mxu0 0
        %8044 = vmatpush2.bf16.msra.mxu0 0
        %8045 = vmatprep.subr.bf16.mxu0 0
        %8046 = vmatpush2.bf16.msra.mxu0 0
        %8047 = vmatprep.mubr.bf16.mxu0 0
        %8048 = vmatmul.mubr.bf16.gmra.mxu0 %v8010
        %v8049 = vpop.f32.mrf.mxu0
        %v8050 = vadd.f32 0.0, %v8049
        %v8051 = vpop.f32.mrf.mxu0
        %v8052 = vpop.f32.mrf.mxu0
        %v8053 = vpop.f32.mrf.mxu0
        %8054 = vdwg.mxu0
        %v8055 = vadd.f32 %v7978, %v8050
        %vm8056 = vcmask 73728
        %8057 = vst.msk [vmem:[%s486] sm:$0x1] %vm8056, %v8055
        %s8058 = sand.u32 %s357, 1
        %s8059 = scalar_lea.sflag [#allocation3], %s8058
        %s8060 = sand.u32 %s357, 1
        %s8061 = scalar_lea.vmem [#allocation2], %s8060
        // Predicated region
        $region81: #{classification_forward.1} parent=79 // pred_check
          %p8062 = pneg %p367
        $region82: #{classification_forward.1} parent=79 // pred_check_branch
          %8064 = sbr.rel (%p8062) target = $region84
        $region83: #{classification_forward.1} parent=79 // pred_region
          %s8066 = ssub.s32 16, 16
          %8067 = vsyncadd %s8059, %s8066
          %s8068 = smul.addr %s29, 16
          %s8069 = scalar_lea.hbm %s15, %s8068
          %s8071 = sshll.u32 %s8061, 4
          %s8072 = int_to_ptr.vmem [resolvable:$true] %s8071
          %8074 = dma.vmem_to_hbm [thread:$0]  %s8072, 16, %s8069, %s8059
        $region84: #{classification_forward.1} parent=79 // pred_fallthru
          _
      $region80: #{classification_forward.1} parent=5 // pred_fallthru
        _
      %p8075 = scmp.le.s32.totalorder 2, %s24
      // Predicated region
      $region85: #{classification_forward.1} parent=5 // pred_check
        %p8076 = pneg %p8075
      $region86: #{classification_forward.1} parent=5 // pred_check_branch
        %8078 = sbr.rel (%p8076) target = $region88
      $region87: #{classification_forward.1} parent=5 // pred_region
        %s8079 = ssub.s32 %s24, 2
        // Predicated region
        $region89: #{classification_forward.1} parent=87 // pred_check
          %p8080 = pneg %p373
        $region90: #{classification_forward.1} parent=87 // pred_check_branch
          %8082 = sbr.rel (%p8080) target = $region92
        $region91: #{classification_forward.1} parent=87 // pred_region
          %s8083 = sand.u32 %s358, 1
          %s8084 = scalar_lea.sflag [#allocation3], %s8083
          %s8085 = sand.u32 %s358, 1
          %s8086 = scalar_lea.vmem [#allocation2], %s8085
          %8087 = dma.done %s8084, 16
        $region92: #{classification_forward.1} parent=87 // pred_fallthru
          _
      $region88: #{classification_forward.1} parent=5 // pred_fallthru
        _
    $region6: #{classification_forward.1} parent=1 // loop_footer
      %s28 = sadd.s32 1, %s24
    $region7: #{classification_forward.1} parent=1 // loop_footer_branch
      %23 = sbr.rel target = $region3
    $region8: #{classification_forward.1} parent=1 // loop_exit
      _
    %8088 = vsyncpa [#allocation3], 1
    %s8089 = scalar_lea.sflag [#allocation3], 1
    %8090 = vsyncpa %s8089, 1

</llo_original>
